<compile_context>
chip_gen: v7x
topology: tpu7x:2x2x1
jax: 0.10.0
libtpu: 0.0.40
codegen_flags: <defaults>
</compile_context>

<pallas_src>
import math
from functools import partial

import numpy as np
import jax
import jax.numpy as jnp
from jax import lax
from jax.experimental import pallas as pl
from jax.experimental.pallas import tpu as pltpu


def _pair(v):
    return tuple(v) if isinstance(v, (tuple, list)) else (v, v)


# ---------------------------------------------------------------------------
# SRI ring-index matrix (kernel_shape='o'), mirrors SRI_Conv2d._make_weight_index_mat
# ---------------------------------------------------------------------------
def make_weight_index_mat(kernel_size, ri_k, force_circular=False):
    kH, kW = kernel_size
    hh = np.arange(kH)[:, None] - kH // 2
    ww = np.arange(kW)[None, :] - kW // 2
    # distance to the center pixel == distance_transform_edt of the center mask
    D = np.sqrt((hh * hh + ww * ww).astype(np.float64))
    max_dist = kH // 2 + 0.5 if force_circular else D.max()
    num_levels = ri_k + 1 if force_circular else ri_k
    levels = np.linspace(D.min(), max_dist, num=num_levels)
    mats = []
    for i in range(num_levels):
        if i == num_levels - 1:
            if force_circular:
                continue
            idx = (D == levels[i]).astype(np.float32)
        else:
            idx = ((D >= levels[i]) & (D < levels[i + 1])).astype(np.float32)
        mats.append(idx.reshape(-1))
    return jnp.asarray(np.stack(mats, axis=0), dtype=jnp.float32)  # (ri_k, kH*kW)


# ---------------------------------------------------------------------------
# Fused Pallas kernel: one TH-row block of ALL phases for one (n, g)
# ---------------------------------------------------------------------------
def _fused_kernel(x_ref, w_ref, b_ref, o_ref, *,
                  TH, KH_r, KW_r, sH, sW, Cog, nWu, Wpad,
                  oh_base, ow_base, slot_pairs):
    # x_ref: (1, 1, Cig, Hp, Wp)   padded input of one (n, g); W lane-dense
    # w_ref: (1, Mz, Cig)          fused phase/tap weight, Mz = sH*KH_r*sW*KW_r*Cog
    # b_ref: (1, Cog, 1)
    # o_ref: (1, 1, TH, sH, Cog, Wpad)   W-interleaved output rows of this block
    row0 = pl.program_id(2) * TH
    wz = w_ref[0]                                    # (Mz, Cig)
    TJ = TH + KH_r - 1

    # --- per-input-row channel x tap contraction (whole lane-dense rows) ---
    z_list = []
    for j in range(TJ):                              # static python loop
        xr = x_ref[0, 0, :, row0 + oh_base + j, :]   # (Cig, Wp)
        z_list.append(jnp.dot(wz, xr, preferred_element_type=jnp.float32))
    zarr = jnp.stack(z_list, axis=0)                 # (TJ, Mz, Wp)

    # --- width-phase scatter matrices (built from iota; MXU does the lane scatter)
    e_mats = None
    if sW > 1:
        bw_idx = lax.broadcasted_iota(jnp.int32, (nWu, Wpad), 0)
        wo_idx = lax.broadcasted_iota(jnp.int32, (nWu, Wpad), 1)
        e_mats = [(wo_idx == bw_idx * sW + rw).astype(jnp.float32)
                  for rw in range(sW)]

    # --- combine tap slots per phase, interleave W phases, stack H phases ---
    rows3d = []
    for rh in range(sH):
        acc_per_rw = []
        for rw in range(sW):
            acc = None
            for (jh, jw) in slot_pairs[rh][rw]:      # static, actual taps only
                s = ((rh * KH_r + jh) * sW + rw) * KW_r + jw
                m0 = s * Cog
                term = zarr[jh:jh + TH, m0:m0 + Cog,
                            ow_base + jw:ow_base + jw + nWu]      # (TH, Cog, nWu)
                acc = term if acc is None else acc + term
            if acc is None:                          # phase with no taps -> bias only
                acc = jnp.zeros((TH, Cog, nWu), jnp.float32)
            acc_per_rw.append(acc)
        if sW == 1:
            r3 = acc_per_rw[0]                       # (TH, Cog, Wpad) ; Wpad == nWu
        else:
            r2 = None
            for rw in range(sW):
                a2 = acc_per_rw[rw].reshape(TH * Cog, nWu)
                t = jnp.dot(a2, e_mats[rw], preferred_element_type=jnp.float32)
                r2 = t if r2 is None else r2 + t     # (TH*Cog, Wpad)
            r3 = r2.reshape(TH, Cog, Wpad)
        rows3d.append(r3)
    tile = jnp.stack(rows3d, axis=1)                 # (TH, sH, Cog, Wpad)
    tile = tile + b_ref[0][None, None, :, :]         # bias broadcast over rows/lanes
    o_ref[0, 0] = tile.astype(o_ref.dtype)


# ---------------------------------------------------------------------------
# Module port
# ---------------------------------------------------------------------------
class SRIConvTranspose2dPallas:
    """JAX/Pallas port of SRI_ConvTranspose2d forward semantics."""

    def __init__(self, in_channels, out_channels, kernel_size, stride=1,
                 padding=0, dilation=1, groups=1, bias=True,
                 kernel_shape='o', ri_k=None, force_circular=False, key=None):
        if key is None:
            key = jax.random.PRNGKey(0)
        assert in_channels % groups == 0 and out_channels % groups == 0
        assert kernel_shape == 'o', "only default kernel_shape='o' implemented"
        self.in_channels = in_channels
        self.out_channels = out_channels
        self.kernel_size = _pair(kernel_size)
        self.stride = _pair(stride)
        self.padding = _pair(padding)
        self.dilation = _pair(dilation)
        self.groups = groups
        # As in the PyTorch module: output_padding defaults to self.padding.
        self.output_padding = self.padding

        kH, kW = self.kernel_size
        rk = kH // 2 + 1
        if kernel_shape == 'o' and not force_circular:
            rk += 1
        self.ri_k = rk if ri_k is None else ri_k

        # transposed branch: weight is (in_channels, out_channels // groups, ri_k)
        self.weight_matrix_shape = (in_channels, out_channels // groups, kH, kW)
        fan_in_mat = (out_channels // groups) * kH * kW      # fan_in of weight_matrix_shape
        gain = math.sqrt(2.0 / (1.0 + 5.0))                  # leaky_relu gain, a=sqrt(5)
        bound_w = math.sqrt(3.0) * gain / math.sqrt(fan_in_mat)
        kw_key, kb_key = jax.random.split(key)
        self.weight = jax.random.uniform(
            kw_key, (in_channels, out_channels // groups, self.ri_k),
            dtype=jnp.float32, minval=-bound_w, maxval=bound_w)
        if bias:
            fan_in_w = (out_channels // groups) * self.ri_k  # fan_in of self.weight
            bound_b = 1.0 / math.sqrt(fan_in_w)
            self.bias = jax.random.uniform(kb_key, (out_channels,),
                                           dtype=jnp.float32,
                                           minval=-bound_b, maxval=bound_b)
        else:
            self.bias = None

        self.weight_index_mat = make_weight_index_mat(
            self.kernel_size, self.ri_k, force_circular)     # (ri_k, kH*kW)

    def make_weight_matrix(self):
        # einsum('ijkw,ijk->ijw') with index matrix broadcast over (i, j)
        w = jnp.einsum('ijk,kw->ijw', self.weight, self.weight_index_mat)
        return w.reshape(self.weight_matrix_shape)           # (Cin, Cout/g, kH, kW)

    def __call__(self, x):
        # x: (N, Cin, H, W) float32 -> (N, Cout, Hout, Wout)
        N, Ci, H, W = x.shape
        assert Ci == self.in_channels
        kH, kW = self.kernel_size
        sH, sW = self.stride
        pH, pW = self.padding
        dH, dW = self.dilation
        opH, opW = self.output_padding
        G = self.groups
        Cig = Ci // G
        Cog = self.out_channels // G
        Co = self.out_channels
        # Same constraint PyTorch's conv_transpose2d enforces.
        assert opH < max(sH, dH) and opW < max(sW, dW), \
            "output_padding must be smaller than stride or dilation"

        Hout = (H - 1) * sH - 2 * pH + dH * (kH - 1) + opH + 1
        Wout = (W - 1) * sW - 2 * pW + dW * (kW - 1) + opW + 1
        assert Hout > 0 and Wout > 0
        nHu = -(-Hout // sH)                  # per-phase rows
        nWu = -(-Wout // sW)                  # per-phase cols
        Wpad = nWu * sW

        # Phase taps (direct form): output (bh*s + r) reads input row bh + off,
        # off = (r + p - k*d)/s when divisible; weight index is k (no flip needed).
        h_taps = {rh: [(kh, (rh + pH - kh * dH) // sH)
                       for kh in range(kH) if (rh + pH - kh * dH) % sH == 0]
                  for rh in range(sH)}
        w_taps = {rw: [(kw, (rw + pW - kw * dW) // sW)
                       for kw in range(kW) if (rw + pW - kw * dW) % sW == 0]
                  for rw in range(sW)}
        all_offh = [o for lst in h_taps.values() for (_, o) in lst] or [0]
        all_offw = [o for lst in w_taps.values() for (_, o) in lst] or [0]
        ohmin, ohmax = min(all_offh), max(all_offh)
        owmin, owmax = min(all_offw), max(all_offw)
        KH_r = ohmax - ohmin + 1
        KW_r = owmax - owmin + 1
        oh_base = max(ohmin, 0)
        ow_base = max(owmin, 0)

        # Zero padding of the input covering all tap offsets and the padded grid.
        nH_pad = nHu
        padTop = max(0, -ohmin)
        padLeft = max(0, -owmin)
        Hp_needed = nH_pad + oh_base + KH_r - 1
        Wp_needed = nWu + ow_base + KW_r - 1
        padBot = max(0, Hp_needed - (H + padTop))
        padRight = max(0, Wp_needed - (W + padLeft))
        x5 = x.reshape(N, G, Cig, H, W)
        x_pad = jnp.pad(x5, ((0, 0), (0, 0), (0, 0),
                             (padTop, padBot), (padLeft, padRight)))
        Hp, Wp = x_pad.shape[3], x_pad.shape[4]

        # Fused weight Wz (G, Mz, Cig): zero-padded tap slots, built with one einsum.
        w_mat = self.make_weight_matrix()                     # (Cin, Cog, kH, kW)
        w_grp = w_mat.reshape(G, Cig, Cog, kH, kW)
        S = sH * KH_r * sW * KW_r
        Mz = S * Cog
        sel = np.zeros((S, kH, kW), np.float32)
        slot_pairs = []
        for rh in range(sH):
            hmap = {off - ohmin: kh for (kh, off) in h_taps[rh]}
            row_pairs = []
            for rw in range(sW):
                wmap = {off - owmin: kw for (kw, off) in w_taps[rw]}
                pairs = []
                for jh, kh in hmap.items():
                    for jw, kw in wmap.items():
                        s_idx = ((rh * KH_r + jh) * sW + rw) * KW_r + jw
                        sel[s_idx, kh, kw] = 1.0
                        pairs.append((jh, jw))
                row_pairs.append(tuple(pairs))
            slot_pairs.append(tuple(row_pairs))
        slot_pairs = tuple(slot_pairs)
        wz = jnp.einsum('skl,gcokl->gsoc', jnp.asarray(sel), w_grp)
        wz = wz.reshape(G, Mz, Cig)

        bias = self.bias if self.bias is not None else jnp.zeros((Co,), jnp.float32)
        b3 = bias.reshape(G, Cog, 1)

        # Row-block size: largest divisor of nHu within a VMEM-friendly budget.
        cap = max(1, min(nHu, 64, (4 << 20) // max(1, Mz * Wp * 4)))
        TH = 1
        for cand in range(cap, 0, -1):
            if nHu % cand == 0:
                TH = cand
                break
        nblocks = nHu // TH

        kernel = partial(_fused_kernel, TH=TH, KH_r=KH_r, KW_r=KW_r, sH=sH, sW=sW,
                         Cog=Cog, nWu=nWu, Wpad=Wpad, oh_base=oh_base,
                         ow_base=ow_base, slot_pairs=slot_pairs)

        in_bytes = Cig * Hp * Wp * 4
        out_bytes = TH * sH * Cog * Wpad * 4
        z_bytes = (TH + KH_r - 1) * Mz * Wp * 4
        vmem_limit = int(min(64 * 2 ** 20,
                             max(32 * 2 ** 20,
                                 2 * (in_bytes + out_bytes) + 2 * z_bytes
                                 + Mz * Cig * 4 + (4 << 20))))

        out6 = pl.pallas_call(
            kernel,
            out_shape=jax.ShapeDtypeStruct((N, G, nH_pad, sH, Cog, Wpad), x.dtype),
            grid_spec=pltpu.PrefetchScalarGridSpec(
                num_scalar_prefetch=0,
                grid=(N, G, nblocks),
                in_specs=[
                    # full padded image of one (n, g): constant across the inner axis
                    pl.BlockSpec((1, 1, Cig, Hp, Wp),
                                 lambda n, g, hb: (n, g, 0, 0, 0)),
                    pl.BlockSpec((1, Mz, Cig), lambda n, g, hb: (g, 0, 0)),
                    pl.BlockSpec((1, Cog, 1), lambda n, g, hb: (g, 0, 0)),
                ],
                out_specs=pl.BlockSpec((1, 1, TH, sH, Cog, Wpad),
                                       lambda n, g, hb: (n, g, hb, 0, 0, 0)),
            ),
            compiler_params=pltpu.CompilerParams(
                dimension_semantics=("parallel", "parallel", "arbitrary"),
                vmem_limit_bytes=vmem_limit),
        )(x_pad, wz, b3)

        # W is already interleaved in-kernel; only an outer-dim transpose (W stays
        # minor), a free reshape and the final crop remain in XLA.
        y = jnp.transpose(out6, (0, 1, 4, 2, 3, 5))
        y = y.reshape(N, Co, nH_pad * sH, Wpad)
        return y[:, :, :Hout, :Wout]


# ---------------------------------------------------------------------------
# Pure-JAX reference (lax.conv_general_dilated) for validation
# ---------------------------------------------------------------------------
def reference_conv_transpose(x, w_mat, bias, stride, padding, output_padding,
                             dilation, groups):
    Ci = x.shape[1]
    cig = Ci // groups
    rhs = []
    for g in range(groups):
        w_g = w_mat[g * cig:(g + 1) * cig]
        rhs.append(jnp.transpose(w_g[:, :, ::-1, ::-1], (1, 0, 2, 3)))  # (cog, cig, kH, kW)
    rhs = jnp.concatenate(rhs, axis=0)
    kH, kW = w_mat.shape[2], w_mat.shape[3]
    pH = dilation[0] * (kH - 1) - padding[0]
    pW = dilation[1] * (kW - 1) - padding[1]
    out = lax.conv_general_dilated(
        x, rhs, window_strides=(1, 1),
        padding=((pH, pH + output_padding[0]), (pW, pW + output_padding[1])),
        lhs_dilation=stride, rhs_dilation=dilation,
        dimension_numbers=('NCHW', 'OIHW', 'NCHW'),
        feature_group_count=groups)
    if bias is not None:
        out = out + bias[None, :, None, None]
    return out


def _check(mod, x, expect_shape):
    fwd = jax.jit(lambda inp: mod(inp))
    out = jax.block_until_ready(fwd(x))
    assert out.shape == expect_shape, (out.shape, expect_shape)
    ref = reference_conv_transpose(x, mod.make_weight_matrix(), mod.bias,
                                   mod.stride, mod.padding, mod.output_padding,
                                   mod.dilation, mod.groups)
    ref = jax.block_until_ready(ref)
    err = float(jnp.max(jnp.abs(out - ref)))
    assert jnp.allclose(out, ref, atol=2e-4, rtol=2e-4), err


if __name__ == "__main__":
    key = jax.random.PRNGKey(0)
    k1, k2, k3, kx1, kx2, kx3 = jax.random.split(key, 6)

    # Config 1: the canonical small test (stride-2 upsampling).
    mod1 = SRIConvTranspose2dPallas(in_channels=4, out_channels=6, kernel_size=3,
                                    stride=2, padding=1, dilation=1, groups=1,
                                    bias=True, key=k1)
    x1 = jax.random.normal(kx1, (2, 4, 16, 16), dtype=jnp.float32)
    _check(mod1, x1, (2, 6, 32, 32))

    # Config 2: groups=2, kernel=5 (grouped grid + negative tap offsets).
    mod2 = SRIConvTranspose2dPallas(in_channels=6, out_channels=4, kernel_size=5,
                                    stride=2, padding=1, dilation=1, groups=2,
                                    bias=True, key=k2)
    x2 = jax.random.normal(kx2, (1, 6, 9, 9), dtype=jnp.float32)
    _check(mod2, x2, (1, 4, 20, 20))

    # Config 3: stride=1, dilation=2, no bias (single phase, dilated taps).
    mod3 = SRIConvTranspose2dPallas(in_channels=4, out_channels=8, kernel_size=3,
                                    stride=1, padding=0, dilation=2, groups=1,
                                    bias=False, key=k3)
    x3 = jax.random.normal(kx3, (1, 4, 12, 12), dtype=jnp.float32)
    _check(mod3, x3, (1, 8, 16, 16))

    print("KERNEL_OK")
</pallas_src>

<mosaic_0001>
module attributes {stable_mosaic.version = 11 : i64} {
  func.func @_fused_kernel(%arg0: i32, %arg1: i32, %arg2: i32, %arg3: memref<1x1x4x17x17xf32, #tpu.memory_space<vmem>>, %arg4: memref<1x96x4xf32, #tpu.memory_space<vmem>>, %arg5: memref<1x6x1xf32, #tpu.memory_space<vmem>>, %arg6: memref<1x1x16x2x6x32xf32, #tpu.memory_space<vmem>>) attributes {dimension_semantics = [#tpu.dimension_semantics<parallel>, #tpu.dimension_semantics<parallel>, #tpu.dimension_semantics<arbitrary>], iteration_bounds = array<i64: 2, 1, 1>, scalar_prefetch = 0 : i64, scratch_operands = 0 : i64, tpu.core_type = #tpu.core_type<tc>, window_params = [{transform_indices = @transform_0, window_bounds = array<i64: 1, 1, 4, 17, 17>}, {transform_indices = @transform_1, window_bounds = array<i64: 1, 96, 4>}, {transform_indices = @transform_2, window_bounds = array<i64: 1, 6, 1>}, {transform_indices = @transform_3, window_bounds = array<i64: 1, 1, 16, 2, 6, 32>}]} {
    %c16_i32 = arith.constant 16 : i32
    %0 = arith.muli %arg2, %c16_i32 : i32
    %c0 = arith.constant 0 : index
    %c0_0 = arith.constant 0 : index
    %c0_1 = arith.constant 0 : index
    %1 = vector.load %arg4[%c0, %c0_0, %c0_1] : memref<1x96x4xf32, #tpu.memory_space<vmem>>, vector<1x96x4xf32>
    %2 = vector.shape_cast %1 : vector<1x96x4xf32> to vector<96x4xf32>
    %c0_i32 = arith.constant 0 : i32
    %3 = arith.addi %0, %c0_i32 : i32
    %c0_i32_2 = arith.constant 0 : i32
    %4 = arith.addi %3, %c0_i32_2 : i32
    %c0_3 = arith.constant 0 : index
    %c0_4 = arith.constant 0 : index
    %c0_5 = arith.constant 0 : index
    %5 = arith.index_cast %4 : i32 to index
    %c0_6 = arith.constant 0 : index
    %6 = vector.load %arg3[%c0_3, %c0_4, %c0_5, %5, %c0_6] : memref<1x1x4x17x17xf32, #tpu.memory_space<vmem>>, vector<1x1x4x1x17xf32>
    %7 = vector.shape_cast %6 : vector<1x1x4x1x17xf32> to vector<4x17xf32>
    %cst = arith.constant dense<0.000000e+00> : vector<96x17xf32>
    %8 = tpu.matmul %2, %7, %cst {dimension_numbers = #tpu.dot_dimension_numbers<[1], [0], [0], [1], [0, 0, 1, 1], [], []>} : vector<96x4xf32>, vector<4x17xf32>, vector<96x17xf32> -> vector<96x17xf32>
    %c0_i32_7 = arith.constant 0 : i32
    %9 = arith.addi %0, %c0_i32_7 : i32
    %c1_i32 = arith.constant 1 : i32
    %10 = arith.addi %9, %c1_i32 : i32
    %c0_8 = arith.constant 0 : index
    %c0_9 = arith.constant 0 : index
    %c0_10 = arith.constant 0 : index
    %11 = arith.index_cast %10 : i32 to index
    %c0_11 = arith.constant 0 : index
    %12 = vector.load %arg3[%c0_8, %c0_9, %c0_10, %11, %c0_11] : memref<1x1x4x17x17xf32, #tpu.memory_space<vmem>>, vector<1x1x4x1x17xf32>
    %13 = vector.shape_cast %12 : vector<1x1x4x1x17xf32> to vector<4x17xf32>
    %cst_12 = arith.constant dense<0.000000e+00> : vector<96x17xf32>
    %14 = tpu.matmul %2, %13, %cst_12 {dimension_numbers = #tpu.dot_dimension_numbers<[1], [0], [0], [1], [0, 0, 1, 1], [], []>} : vector<96x4xf32>, vector<4x17xf32>, vector<96x17xf32> -> vector<96x17xf32>
    %c0_i32_13 = arith.constant 0 : i32
    %15 = arith.addi %0, %c0_i32_13 : i32
    %c2_i32 = arith.constant 2 : i32
    %16 = arith.addi %15, %c2_i32 : i32
    %c0_14 = arith.constant 0 : index
    %c0_15 = arith.constant 0 : index
    %c0_16 = arith.constant 0 : index
    %17 = arith.index_cast %16 : i32 to index
    %c0_17 = arith.constant 0 : index
    %18 = vector.load %arg3[%c0_14, %c0_15, %c0_16, %17, %c0_17] : memref<1x1x4x17x17xf32, #tpu.memory_space<vmem>>, vector<1x1x4x1x17xf32>
    %19 = vector.shape_cast %18 : vector<1x1x4x1x17xf32> to vector<4x17xf32>
    %cst_18 = arith.constant dense<0.000000e+00> : vector<96x17xf32>
    %20 = tpu.matmul %2, %19, %cst_18 {dimension_numbers = #tpu.dot_dimension_numbers<[1], [0], [0], [1], [0, 0, 1, 1], [], []>} : vector<96x4xf32>, vector<4x17xf32>, vector<96x17xf32> -> vector<96x17xf32>
    %c0_i32_19 = arith.constant 0 : i32
    %21 = arith.addi %0, %c0_i32_19 : i32
    %c3_i32 = arith.constant 3 : i32
    %22 = arith.addi %21, %c3_i32 : i32
    %c0_20 = arith.constant 0 : index
    %c0_21 = arith.constant 0 : index
    %c0_22 = arith.constant 0 : index
    %23 = arith.index_cast %22 : i32 to index
    %c0_23 = arith.constant 0 : index
    %24 = vector.load %arg3[%c0_20, %c0_21, %c0_22, %23, %c0_23] : memref<1x1x4x17x17xf32, #tpu.memory_space<vmem>>, vector<1x1x4x1x17xf32>
    %25 = vector.shape_cast %24 : vector<1x1x4x1x17xf32> to vector<4x17xf32>
    %cst_24 = arith.constant dense<0.000000e+00> : vector<96x17xf32>
    %26 = tpu.matmul %2, %25, %cst_24 {dimension_numbers = #tpu.dot_dimension_numbers<[1], [0], [0], [1], [0, 0, 1, 1], [], []>} : vector<96x4xf32>, vector<4x17xf32>, vector<96x17xf32> -> vector<96x17xf32>
    %c0_i32_25 = arith.constant 0 : i32
    %27 = arith.addi %0, %c0_i32_25 : i32
    %c4_i32 = arith.constant 4 : i32
    %28 = arith.addi %27, %c4_i32 : i32
    %c0_26 = arith.constant 0 : index
    %c0_27 = arith.constant 0 : index
    %c0_28 = arith.constant 0 : index
    %29 = arith.index_cast %28 : i32 to index
    %c0_29 = arith.constant 0 : index
    %30 = vector.load %arg3[%c0_26, %c0_27, %c0_28, %29, %c0_29] : memref<1x1x4x17x17xf32, #tpu.memory_space<vmem>>, vector<1x1x4x1x17xf32>
    %31 = vector.shape_cast %30 : vector<1x1x4x1x17xf32> to vector<4x17xf32>
    %cst_30 = arith.constant dense<0.000000e+00> : vector<96x17xf32>
    %32 = tpu.matmul %2, %31, %cst_30 {dimension_numbers = #tpu.dot_dimension_numbers<[1], [0], [0], [1], [0, 0, 1, 1], [], []>} : vector<96x4xf32>, vector<4x17xf32>, vector<96x17xf32> -> vector<96x17xf32>
    %c0_i32_31 = arith.constant 0 : i32
    %33 = arith.addi %0, %c0_i32_31 : i32
    %c5_i32 = arith.constant 5 : i32
    %34 = arith.addi %33, %c5_i32 : i32
    %c0_32 = arith.constant 0 : index
    %c0_33 = arith.constant 0 : index
    %c0_34 = arith.constant 0 : index
    %35 = arith.index_cast %34 : i32 to index
    %c0_35 = arith.constant 0 : index
    %36 = vector.load %arg3[%c0_32, %c0_33, %c0_34, %35, %c0_35] : memref<1x1x4x17x17xf32, #tpu.memory_space<vmem>>, vector<1x1x4x1x17xf32>
    %37 = vector.shape_cast %36 : vector<1x1x4x1x17xf32> to vector<4x17xf32>
    %cst_36 = arith.constant dense<0.000000e+00> : vector<96x17xf32>
    %38 = tpu.matmul %2, %37, %cst_36 {dimension_numbers = #tpu.dot_dimension_numbers<[1], [0], [0], [1], [0, 0, 1, 1], [], []>} : vector<96x4xf32>, vector<4x17xf32>, vector<96x17xf32> -> vector<96x17xf32>
    %c0_i32_37 = arith.constant 0 : i32
    %39 = arith.addi %0, %c0_i32_37 : i32
    %c6_i32 = arith.constant 6 : i32
    %40 = arith.addi %39, %c6_i32 : i32
    %c0_38 = arith.constant 0 : index
    %c0_39 = arith.constant 0 : index
    %c0_40 = arith.constant 0 : index
    %41 = arith.index_cast %40 : i32 to index
    %c0_41 = arith.constant 0 : index
    %42 = vector.load %arg3[%c0_38, %c0_39, %c0_40, %41, %c0_41] : memref<1x1x4x17x17xf32, #tpu.memory_space<vmem>>, vector<1x1x4x1x17xf32>
    %43 = vector.shape_cast %42 : vector<1x1x4x1x17xf32> to vector<4x17xf32>
    %cst_42 = arith.constant dense<0.000000e+00> : vector<96x17xf32>
    %44 = tpu.matmul %2, %43, %cst_42 {dimension_numbers = #tpu.dot_dimension_numbers<[1], [0], [0], [1], [0, 0, 1, 1], [], []>} : vector<96x4xf32>, vector<4x17xf32>, vector<96x17xf32> -> vector<96x17xf32>
    %c0_i32_43 = arith.constant 0 : i32
    %45 = arith.addi %0, %c0_i32_43 : i32
    %c7_i32 = arith.constant 7 : i32
    %46 = arith.addi %45, %c7_i32 : i32
    %c0_44 = arith.constant 0 : index
    %c0_45 = arith.constant 0 : index
    %c0_46 = arith.constant 0 : index
    %47 = arith.index_cast %46 : i32 to index
    %c0_47 = arith.constant 0 : index
    %48 = vector.load %arg3[%c0_44, %c0_45, %c0_46, %47, %c0_47] : memref<1x1x4x17x17xf32, #tpu.memory_space<vmem>>, vector<1x1x4x1x17xf32>
    %49 = vector.shape_cast %48 : vector<1x1x4x1x17xf32> to vector<4x17xf32>
    %cst_48 = arith.constant dense<0.000000e+00> : vector<96x17xf32>
    %50 = tpu.matmul %2, %49, %cst_48 {dimension_numbers = #tpu.dot_dimension_numbers<[1], [0], [0], [1], [0, 0, 1, 1], [], []>} : vector<96x4xf32>, vector<4x17xf32>, vector<96x17xf32> -> vector<96x17xf32>
    %c0_i32_49 = arith.constant 0 : i32
    %51 = arith.addi %0, %c0_i32_49 : i32
    %c8_i32 = arith.constant 8 : i32
    %52 = arith.addi %51, %c8_i32 : i32
    %c0_50 = arith.constant 0 : index
    %c0_51 = arith.constant 0 : index
    %c0_52 = arith.constant 0 : index
    %53 = arith.index_cast %52 : i32 to index
    %c0_53 = arith.constant 0 : index
    %54 = vector.load %arg3[%c0_50, %c0_51, %c0_52, %53, %c0_53] : memref<1x1x4x17x17xf32, #tpu.memory_space<vmem>>, vector<1x1x4x1x17xf32>
    %55 = vector.shape_cast %54 : vector<1x1x4x1x17xf32> to vector<4x17xf32>
    %cst_54 = arith.constant dense<0.000000e+00> : vector<96x17xf32>
    %56 = tpu.matmul %2, %55, %cst_54 {dimension_numbers = #tpu.dot_dimension_numbers<[1], [0], [0], [1], [0, 0, 1, 1], [], []>} : vector<96x4xf32>, vector<4x17xf32>, vector<96x17xf32> -> vector<96x17xf32>
    %c0_i32_55 = arith.constant 0 : i32
    %57 = arith.addi %0, %c0_i32_55 : i32
    %c9_i32 = arith.constant 9 : i32
    %58 = arith.addi %57, %c9_i32 : i32
    %c0_56 = arith.constant 0 : index
    %c0_57 = arith.constant 0 : index
    %c0_58 = arith.constant 0 : index
    %59 = arith.index_cast %58 : i32 to index
    %c0_59 = arith.constant 0 : index
    %60 = vector.load %arg3[%c0_56, %c0_57, %c0_58, %59, %c0_59] : memref<1x1x4x17x17xf32, #tpu.memory_space<vmem>>, vector<1x1x4x1x17xf32>
    %61 = vector.shape_cast %60 : vector<1x1x4x1x17xf32> to vector<4x17xf32>
    %cst_60 = arith.constant dense<0.000000e+00> : vector<96x17xf32>
    %62 = tpu.matmul %2, %61, %cst_60 {dimension_numbers = #tpu.dot_dimension_numbers<[1], [0], [0], [1], [0, 0, 1, 1], [], []>} : vector<96x4xf32>, vector<4x17xf32>, vector<96x17xf32> -> vector<96x17xf32>
    %c0_i32_61 = arith.constant 0 : i32
    %63 = arith.addi %0, %c0_i32_61 : i32
    %c10_i32 = arith.constant 10 : i32
    %64 = arith.addi %63, %c10_i32 : i32
    %c0_62 = arith.constant 0 : index
    %c0_63 = arith.constant 0 : index
    %c0_64 = arith.constant 0 : index
    %65 = arith.index_cast %64 : i32 to index
    %c0_65 = arith.constant 0 : index
    %66 = vector.load %arg3[%c0_62, %c0_63, %c0_64, %65, %c0_65] : memref<1x1x4x17x17xf32, #tpu.memory_space<vmem>>, vector<1x1x4x1x17xf32>
    %67 = vector.shape_cast %66 : vector<1x1x4x1x17xf32> to vector<4x17xf32>
    %cst_66 = arith.constant dense<0.000000e+00> : vector<96x17xf32>
    %68 = tpu.matmul %2, %67, %cst_66 {dimension_numbers = #tpu.dot_dimension_numbers<[1], [0], [0], [1], [0, 0, 1, 1], [], []>} : vector<96x4xf32>, vector<4x17xf32>, vector<96x17xf32> -> vector<96x17xf32>
    %c0_i32_67 = arith.constant 0 : i32
    %69 = arith.addi %0, %c0_i32_67 : i32
    %c11_i32 = arith.constant 11 : i32
    %70 = arith.addi %69, %c11_i32 : i32
    %c0_68 = arith.constant 0 : index
    %c0_69 = arith.constant 0 : index
    %c0_70 = arith.constant 0 : index
    %71 = arith.index_cast %70 : i32 to index
    %c0_71 = arith.constant 0 : index
    %72 = vector.load %arg3[%c0_68, %c0_69, %c0_70, %71, %c0_71] : memref<1x1x4x17x17xf32, #tpu.memory_space<vmem>>, vector<1x1x4x1x17xf32>
    %73 = vector.shape_cast %72 : vector<1x1x4x1x17xf32> to vector<4x17xf32>
    %cst_72 = arith.constant dense<0.000000e+00> : vector<96x17xf32>
    %74 = tpu.matmul %2, %73, %cst_72 {dimension_numbers = #tpu.dot_dimension_numbers<[1], [0], [0], [1], [0, 0, 1, 1], [], []>} : vector<96x4xf32>, vector<4x17xf32>, vector<96x17xf32> -> vector<96x17xf32>
    %c0_i32_73 = arith.constant 0 : i32
    %75 = arith.addi %0, %c0_i32_73 : i32
    %c12_i32 = arith.constant 12 : i32
    %76 = arith.addi %75, %c12_i32 : i32
    %c0_74 = arith.constant 0 : index
    %c0_75 = arith.constant 0 : index
    %c0_76 = arith.constant 0 : index
    %77 = arith.index_cast %76 : i32 to index
    %c0_77 = arith.constant 0 : index
    %78 = vector.load %arg3[%c0_74, %c0_75, %c0_76, %77, %c0_77] : memref<1x1x4x17x17xf32, #tpu.memory_space<vmem>>, vector<1x1x4x1x17xf32>
    %79 = vector.shape_cast %78 : vector<1x1x4x1x17xf32> to vector<4x17xf32>
    %cst_78 = arith.constant dense<0.000000e+00> : vector<96x17xf32>
    %80 = tpu.matmul %2, %79, %cst_78 {dimension_numbers = #tpu.dot_dimension_numbers<[1], [0], [0], [1], [0, 0, 1, 1], [], []>} : vector<96x4xf32>, vector<4x17xf32>, vector<96x17xf32> -> vector<96x17xf32>
    %c0_i32_79 = arith.constant 0 : i32
    %81 = arith.addi %0, %c0_i32_79 : i32
    %c13_i32 = arith.constant 13 : i32
    %82 = arith.addi %81, %c13_i32 : i32
    %c0_80 = arith.constant 0 : index
    %c0_81 = arith.constant 0 : index
    %c0_82 = arith.constant 0 : index
    %83 = arith.index_cast %82 : i32 to index
    %c0_83 = arith.constant 0 : index
    %84 = vector.load %arg3[%c0_80, %c0_81, %c0_82, %83, %c0_83] : memref<1x1x4x17x17xf32, #tpu.memory_space<vmem>>, vector<1x1x4x1x17xf32>
    %85 = vector.shape_cast %84 : vector<1x1x4x1x17xf32> to vector<4x17xf32>
    %cst_84 = arith.constant dense<0.000000e+00> : vector<96x17xf32>
    %86 = tpu.matmul %2, %85, %cst_84 {dimension_numbers = #tpu.dot_dimension_numbers<[1], [0], [0], [1], [0, 0, 1, 1], [], []>} : vector<96x4xf32>, vector<4x17xf32>, vector<96x17xf32> -> vector<96x17xf32>
    %c0_i32_85 = arith.constant 0 : i32
    %87 = arith.addi %0, %c0_i32_85 : i32
    %c14_i32 = arith.constant 14 : i32
    %88 = arith.addi %87, %c14_i32 : i32
    %c0_86 = arith.constant 0 : index
    %c0_87 = arith.constant 0 : index
    %c0_88 = arith.constant 0 : index
    %89 = arith.index_cast %88 : i32 to index
    %c0_89 = arith.constant 0 : index
    %90 = vector.load %arg3[%c0_86, %c0_87, %c0_88, %89, %c0_89] : memref<1x1x4x17x17xf32, #tpu.memory_space<vmem>>, vector<1x1x4x1x17xf32>
    %91 = vector.shape_cast %90 : vector<1x1x4x1x17xf32> to vector<4x17xf32>
    %cst_90 = arith.constant dense<0.000000e+00> : vector<96x17xf32>
    %92 = tpu.matmul %2, %91, %cst_90 {dimension_numbers = #tpu.dot_dimension_numbers<[1], [0], [0], [1], [0, 0, 1, 1], [], []>} : vector<96x4xf32>, vector<4x17xf32>, vector<96x17xf32> -> vector<96x17xf32>
    %c0_i32_91 = arith.constant 0 : i32
    %93 = arith.addi %0, %c0_i32_91 : i32
    %c15_i32 = arith.constant 15 : i32
    %94 = arith.addi %93, %c15_i32 : i32
    %c0_92 = arith.constant 0 : index
    %c0_93 = arith.constant 0 : index
    %c0_94 = arith.constant 0 : index
    %95 = arith.index_cast %94 : i32 to index
    %c0_95 = arith.constant 0 : index
    %96 = vector.load %arg3[%c0_92, %c0_93, %c0_94, %95, %c0_95] : memref<1x1x4x17x17xf32, #tpu.memory_space<vmem>>, vector<1x1x4x1x17xf32>
    %97 = vector.shape_cast %96 : vector<1x1x4x1x17xf32> to vector<4x17xf32>
    %cst_96 = arith.constant dense<0.000000e+00> : vector<96x17xf32>
    %98 = tpu.matmul %2, %97, %cst_96 {dimension_numbers = #tpu.dot_dimension_numbers<[1], [0], [0], [1], [0, 0, 1, 1], [], []>} : vector<96x4xf32>, vector<4x17xf32>, vector<96x17xf32> -> vector<96x17xf32>
    %c0_i32_97 = arith.constant 0 : i32
    %99 = arith.addi %0, %c0_i32_97 : i32
    %c16_i32_98 = arith.constant 16 : i32
    %100 = arith.addi %99, %c16_i32_98 : i32
    %c0_99 = arith.constant 0 : index
    %c0_100 = arith.constant 0 : index
    %c0_101 = arith.constant 0 : index
    %101 = arith.index_cast %100 : i32 to index
    %c0_102 = arith.constant 0 : index
    %102 = vector.load %arg3[%c0_99, %c0_100, %c0_101, %101, %c0_102] : memref<1x1x4x17x17xf32, #tpu.memory_space<vmem>>, vector<1x1x4x1x17xf32>
    %103 = vector.shape_cast %102 : vector<1x1x4x1x17xf32> to vector<4x17xf32>
    %cst_103 = arith.constant dense<0.000000e+00> : vector<96x17xf32>
    %104 = tpu.matmul %2, %103, %cst_103 {dimension_numbers = #tpu.dot_dimension_numbers<[1], [0], [0], [1], [0, 0, 1, 1], [], []>} : vector<96x4xf32>, vector<4x17xf32>, vector<96x17xf32> -> vector<96x17xf32>
    %105 = vector.shape_cast %8 : vector<96x17xf32> to vector<1x96x17xf32>
    %106 = vector.shape_cast %14 : vector<96x17xf32> to vector<1x96x17xf32>
    %107 = vector.shape_cast %20 : vector<96x17xf32> to vector<1x96x17xf32>
    %108 = vector.shape_cast %26 : vector<96x17xf32> to vector<1x96x17xf32>
    %109 = vector.shape_cast %32 : vector<96x17xf32> to vector<1x96x17xf32>
    %110 = vector.shape_cast %38 : vector<96x17xf32> to vector<1x96x17xf32>
    %111 = vector.shape_cast %44 : vector<96x17xf32> to vector<1x96x17xf32>
    %112 = vector.shape_cast %50 : vector<96x17xf32> to vector<1x96x17xf32>
    %113 = vector.shape_cast %56 : vector<96x17xf32> to vector<1x96x17xf32>
    %114 = vector.shape_cast %62 : vector<96x17xf32> to vector<1x96x17xf32>
    %115 = vector.shape_cast %68 : vector<96x17xf32> to vector<1x96x17xf32>
    %116 = vector.shape_cast %74 : vector<96x17xf32> to vector<1x96x17xf32>
    %117 = vector.shape_cast %80 : vector<96x17xf32> to vector<1x96x17xf32>
    %118 = vector.shape_cast %86 : vector<96x17xf32> to vector<1x96x17xf32>
    %119 = vector.shape_cast %92 : vector<96x17xf32> to vector<1x96x17xf32>
    %120 = vector.shape_cast %98 : vector<96x17xf32> to vector<1x96x17xf32>
    %121 = vector.shape_cast %104 : vector<96x17xf32> to vector<1x96x17xf32>
    %122 = tpu.concatenate %105, %106, %107, %108, %109, %110, %111, %112, %113, %114, %115, %116, %117, %118, %119, %120 in 0 : vector<1x96x17xf32>, vector<1x96x17xf32>, vector<1x96x17xf32>, vector<1x96x17xf32>, vector<1x96x17xf32>, vector<1x96x17xf32>, vector<1x96x17xf32>, vector<1x96x17xf32>, vector<1x96x17xf32>, vector<1x96x17xf32>, vector<1x96x17xf32>, vector<1x96x17xf32>, vector<1x96x17xf32>, vector<1x96x17xf32>, vector<1x96x17xf32>, vector<1x96x17xf32> -> vector<16x96x17xf32>
    %123 = tpu.concatenate %122, %121 in 0 : vector<16x96x17xf32>, vector<1x96x17xf32> -> vector<17x96x17xf32>
    %124 = tpu.iota {dimensions = array<i32: 0>} : vector<16x32xi32>
    %125 = tpu.iota {dimensions = array<i32: 1>} : vector<16x32xi32>
    %c2_i32_104 = arith.constant 2 : i32
    %126 = vector.broadcast %c2_i32_104 : i32 to vector<16x32xi32>
    %127 = arith.muli %124, %126 : vector<16x32xi32>
    %c0_i32_105 = arith.constant 0 : i32
    %128 = vector.broadcast %c0_i32_105 : i32 to vector<16x32xi32>
    %129 = arith.addi %127, %128 : vector<16x32xi32>
    %130 = arith.cmpi eq, %125, %129 : vector<16x32xi32>
    %131 = arith.extui %130 : vector<16x32xi1> to vector<16x32xi32>
    %132 = arith.sitofp %131 : vector<16x32xi32> to vector<16x32xf32>
    %c2_i32_106 = arith.constant 2 : i32
    %133 = vector.broadcast %c2_i32_106 : i32 to vector<16x32xi32>
    %134 = arith.muli %124, %133 : vector<16x32xi32>
    %c1_i32_107 = arith.constant 1 : i32
    %135 = vector.broadcast %c1_i32_107 : i32 to vector<16x32xi32>
    %136 = arith.addi %134, %135 : vector<16x32xi32>
    %137 = arith.cmpi eq, %125, %136 : vector<16x32xi32>
    %138 = arith.extui %137 : vector<16x32xi1> to vector<16x32xi32>
    %139 = arith.sitofp %138 : vector<16x32xi32> to vector<16x32xf32>
    %140 = vector.extract_strided_slice %123 {offsets = [0, 0, 0], sizes = [16, 6, 16], strides = [1, 1, 1]} : vector<17x96x17xf32> to vector<16x6x16xf32>
    %141 = vector.extract_strided_slice %123 {offsets = [0, 18, 1], sizes = [16, 6, 16], strides = [1, 1, 1]} : vector<17x96x17xf32> to vector<16x6x16xf32>
    %142 = vector.extract_strided_slice %123 {offsets = [0, 12, 0], sizes = [16, 6, 16], strides = [1, 1, 1]} : vector<17x96x17xf32> to vector<16x6x16xf32>
    %143 = arith.addf %141, %142 : vector<16x6x16xf32>
    %144 = vector.shape_cast %140 : vector<16x6x16xf32> to vector<96x16xf32>
    %cst_108 = arith.constant dense<0.000000e+00> : vector<96x32xf32>
    %145 = tpu.matmul %144, %132, %cst_108 {dimension_numbers = #tpu.dot_dimension_numbers<[1], [0], [0], [1], [0, 0, 1, 1], [], []>} : vector<96x16xf32>, vector<16x32xf32>, vector<96x32xf32> -> vector<96x32xf32>
    %146 = vector.shape_cast %143 : vector<16x6x16xf32> to vector<96x16xf32>
    %cst_109 = arith.constant dense<0.000000e+00> : vector<96x32xf32>
    %147 = tpu.matmul %146, %139, %cst_109 {dimension_numbers = #tpu.dot_dimension_numbers<[1], [0], [0], [1], [0, 0, 1, 1], [], []>} : vector<96x16xf32>, vector<16x32xf32>, vector<96x32xf32> -> vector<96x32xf32>
    %148 = arith.addf %145, %147 : vector<96x32xf32>
    %149 = vector.shape_cast %148 : vector<96x32xf32> to vector<16x6x32xf32>
    %150 = vector.extract_strided_slice %123 {offsets = [1, 72, 0], sizes = [16, 6, 16], strides = [1, 1, 1]} : vector<17x96x17xf32> to vector<16x6x16xf32>
    %151 = vector.extract_strided_slice %123 {offsets = [0, 48, 0], sizes = [16, 6, 16], strides = [1, 1, 1]} : vector<17x96x17xf32> to vector<16x6x16xf32>
    %152 = arith.addf %150, %151 : vector<16x6x16xf32>
    %153 = vector.extract_strided_slice %123 {offsets = [1, 90, 1], sizes = [16, 6, 16], strides = [1, 1, 1]} : vector<17x96x17xf32> to vector<16x6x16xf32>
    %154 = vector.extract_strided_slice %123 {offsets = [1, 84, 0], sizes = [16, 6, 16], strides = [1, 1, 1]} : vector<17x96x17xf32> to vector<16x6x16xf32>
    %155 = arith.addf %153, %154 : vector<16x6x16xf32>
    %156 = vector.extract_strided_slice %123 {offsets = [0, 66, 1], sizes = [16, 6, 16], strides = [1, 1, 1]} : vector<17x96x17xf32> to vector<16x6x16xf32>
    %157 = arith.addf %155, %156 : vector<16x6x16xf32>
    %158 = vector.extract_strided_slice %123 {offsets = [0, 60, 0], sizes = [16, 6, 16], strides = [1, 1, 1]} : vector<17x96x17xf32> to vector<16x6x16xf32>
    %159 = arith.addf %157, %158 : vector<16x6x16xf32>
    %160 = vector.shape_cast %152 : vector<16x6x16xf32> to vector<96x16xf32>
    %cst_110 = arith.constant dense<0.000000e+00> : vector<96x32xf32>
    %161 = tpu.matmul %160, %132, %cst_110 {dimension_numbers = #tpu.dot_dimension_numbers<[1], [0], [0], [1], [0, 0, 1, 1], [], []>} : vector<96x16xf32>, vector<16x32xf32>, vector<96x32xf32> -> vector<96x32xf32>
    %162 = vector.shape_cast %159 : vector<16x6x16xf32> to vector<96x16xf32>
    %cst_111 = arith.constant dense<0.000000e+00> : vector<96x32xf32>
    %163 = tpu.matmul %162, %139, %cst_111 {dimension_numbers = #tpu.dot_dimension_numbers<[1], [0], [0], [1], [0, 0, 1, 1], [], []>} : vector<96x16xf32>, vector<16x32xf32>, vector<96x32xf32> -> vector<96x32xf32>
    %164 = arith.addf %161, %163 : vector<96x32xf32>
    %165 = vector.shape_cast %164 : vector<96x32xf32> to vector<16x6x32xf32>
    %166 = vector.shape_cast %149 : vector<16x6x32xf32> to vector<16x1x6x32xf32>
    %167 = vector.shape_cast %165 : vector<16x6x32xf32> to vector<16x1x6x32xf32>
    %168 = tpu.concatenate %166, %167 in 1 : vector<16x1x6x32xf32>, vector<16x1x6x32xf32> -> vector<16x2x6x32xf32>
    %c0_112 = arith.constant 0 : index
    %c0_113 = arith.constant 0 : index
    %c0_114 = arith.constant 0 : index
    %169 = vector.load %arg5[%c0_112, %c0_113, %c0_114] : memref<1x6x1xf32, #tpu.memory_space<vmem>>, vector<1x6x1xf32>
    %170 = vector.shape_cast %169 : vector<1x6x1xf32> to vector<6x1xf32>
    %171 = vector.shape_cast %170 : vector<6x1xf32> to vector<1x1x6x1xf32>
    %172 = vector.broadcast %171 : vector<1x1x6x1xf32> to vector<16x2x6x32xf32>
    %173 = arith.addf %168, %172 : vector<16x2x6x32xf32>
    %c0_115 = arith.constant 0 : index
    %c0_116 = arith.constant 0 : index
    %c0_117 = arith.constant 0 : index
    %c0_118 = arith.constant 0 : index
    %c0_119 = arith.constant 0 : index
    %c0_120 = arith.constant 0 : index
    %174 = vector.load %arg6[%c0_115, %c0_116, %c0_117, %c0_118, %c0_119, %c0_120] : memref<1x1x16x2x6x32xf32, #tpu.memory_space<vmem>>, vector<1x1x16x2x6x32xf32>
    %175 = vector.shape_cast %174 : vector<1x1x16x2x6x32xf32> to vector<16x2x6x32xf32>
    %176 = vector.shape_cast %173 : vector<16x2x6x32xf32> to vector<1x1x16x2x6x32xf32>
    tpu.vector_store %arg6[%c0_115, %c0_116, %c0_117, %c0_118, %c0_119, %c0_120], %176 {strides = array<i32>} : memref<1x1x16x2x6x32xf32, #tpu.memory_space<vmem>>, vector<1x1x16x2x6x32xf32>,
    return
  }
  func.func @transform_0(%arg0: i32, %arg1: i32, %arg2: i32) -> (i32, i32, i32, i32, i32) {
    %c0_i32 = arith.constant 0 : i32
    %c0_i32_0 = arith.constant 0 : i32
    %c0_i32_1 = arith.constant 0 : i32
    %c0_i32_2 = arith.constant 0 : i32
    return %arg0, %arg1, %c0_i32, %c0_i32_0, %c0_i32_1 : i32, i32, i32, i32, i32
  }
  func.func @transform_1(%arg0: i32, %arg1: i32, %arg2: i32) -> (i32, i32, i32) {
    %c0_i32 = arith.constant 0 : i32
    %c0_i32_0 = arith.constant 0 : i32
    %c0_i32_1 = arith.constant 0 : i32
    return %arg1, %c0_i32, %c0_i32_0 : i32, i32, i32
  }
  func.func @transform_2(%arg0: i32, %arg1: i32, %arg2: i32) -> (i32, i32, i32) {
    %c0_i32 = arith.constant 0 : i32
    %c0_i32_0 = arith.constant 0 : i32
    %c0_i32_1 = arith.constant 0 : i32
    return %arg1, %c0_i32, %c0_i32_0 : i32, i32, i32
  }
  func.func @transform_3(%arg0: i32, %arg1: i32, %arg2: i32) -> (i32, i32, i32, i32, i32, i32) {
    %c0_i32 = arith.constant 0 : i32
    %c0_i32_0 = arith.constant 0 : i32
    %c0_i32_1 = arith.constant 0 : i32
    %c0_i32_2 = arith.constant 0 : i32
    return %arg0, %arg1, %arg2, %c0_i32, %c0_i32_0, %c0_i32_1 : i32, i32, i32, i32, i32, i32
  }
}

</mosaic_0001>

<llo_original>
// kernel: _lambda_.1
$region0: #{_lambda_.1}
  #allocation0 [shape = 'u32[]', space=smem, size = 0x4, offset = 0x4, fixed_abs, tag = 'smem constant byte address 0x4 - core index']
  #allocation1 [shape = 'u32[144,128]{1,0:T(1,128)}', space=vmem, size = 0x12000, scoped, tag = 'internal scratch']
  %s0 = inlined_call_operand.vmem [shape: f32[2,1,4,17,17], index: 0, kind: input, shape index: {}]
  %s1 = inlined_call_operand.vmem [shape: f32[1,96,4], index: 1, kind: input, shape index: {}]
  %s2 = inlined_call_operand.vmem [shape: f32[1,6,1], index: 2, kind: input, shape index: {}]
  %s3 = inlined_call_operand.vmem [shape: f32[2,1,16,2,6,32], index: 3, kind: output, shape index: {}]
  %s4 = sld [smem:[#allocation0]]
  $region45: #{_lambda_.1} parent=0
    _
  %s6 = ssub.s32 1, %s4
  %s7 = scalar_select 0, %s6, %s4
  loop: start=0, step=1, limit=4
  $region2: #{_lambda_.1} parent=0 // loop_pre_header
    _
  $region3: #{_lambda_.1} parent=0 // loop_header
    %s9 = sphi 0, %s13
    %p10 = scmp.ge.s32.totalorder %s9, 4
    %s16 = sphi 0, %s35
    %s17 = sphi 0, %s31
    %s18 = sphi 0, %s27
    %s19 = sphi 0, %s16
    %s20 = sphi 0, %s17
    %s21 = sphi 0, %s18
    %s22 = sphi 0, %s19
    %s23 = sphi 0, %s20
    %s24 = sphi 0, %s21
    %s40 = sphi 0, %s42
    %s43 = sphi 0, %s40
    %s44 = sphi 0, %s43
    %s60 = sphi 0, %s44
    %s66 = sphi 0, %s68
    %s69 = sphi 0, %s66
    %s70 = sphi 0, %s69
    %s86 = sphi 0, %s70
    %s92 = sphi 0, %s94
    %s95 = sphi 0, %s92
    %s96 = sphi 0, %s95
    %s112 = sphi 0, %s96
    %s122 = sphi 0, %s124
    %s125 = sphi 0, %s122
    %s126 = sphi 0, %s125
    %s142 = sphi 0, %s126
  $region4: #{_lambda_.1} parent=0 // loop_header_branch
    %12 = sbr.rel (%p10) target = $region8
  $region5: #{_lambda_.1} parent=0 // loop_body
    %s14 = ssub.s32 %s9, 1
    %s15 = ssub.s32 %s9, 2
    %s25 = sadd.s32 1, %s18
    %p26 = scmp.ge.s32.totalorder %s25, 1
    %s27 = scalar_select %p26, 0, %s25
    %s28 = sadd.s32 1, %s17
    %s29 = scalar_select %p26, %s28, %s17
    %p30 = scmp.ge.s32.totalorder %s29, 1
    %s31 = scalar_select %p30, 0, %s29
    %s32 = sadd.s32 1, %s16
    %s33 = scalar_select %p30, %s32, %s16
    %p34 = scmp.ge.s32.totalorder %s33, 2
    %s35 = scalar_select %p34, 0, %s33
    %s36 = ssub.s32 %s16, %s35
    %s37 = ssub.s32 %s17, %s31
    %s38 = sor.u32 %s36, %s37
    %p39 = scmp.eq.s32.totalorder %s38, 0
    %s41 = sadd.s32 %s40, 1
    %s42 = scalar_select %p39, %s40, %s41
    %p45 = pneg %p39
    %p46 = scmp.eq.s32.totalorder %s9, 1
    %p47 = por %p45, %p46
    %p48 = scmp.ne.s32.totalorder %s40, %s43
    %p49 = scmp.eq.s32.totalorder %s9, 0
    %p50 = por %p48, %p49
    %p51 = scmp.ne.s32.totalorder %s40, %s43
    %p52 = scmp.eq.s32.totalorder %s14, 1
    %p53 = por %p51, %p52
    %p54 = scmp.ne.s32.totalorder %s43, %s44
    %p55 = scmp.eq.s32.totalorder %s14, 0
    %p56 = por %p54, %p55
    %p57 = scmp.ne.s32.totalorder %s43, %s44
    %p58 = scmp.eq.s32.totalorder %s15, 1
    %p59 = por %p57, %p58
    %p61 = scmp.ne.s32.totalorder %s44, %s60
    %p62 = scmp.eq.s32.totalorder %s15, 0
    %p63 = por %p61, %p62
    %s64 = ssub.s32 %s17, %s31
    %p65 = scmp.eq.s32.totalorder %s64, 0
    %s67 = sadd.s32 %s66, 1
    %s68 = scalar_select %p65, %s66, %s67
    %p71 = pneg %p65
    %p72 = scmp.eq.s32.totalorder %s9, 1
    %p73 = por %p71, %p72
    %p74 = scmp.ne.s32.totalorder %s66, %s69
    %p75 = scmp.eq.s32.totalorder %s9, 0
    %p76 = por %p74, %p75
    %p77 = scmp.ne.s32.totalorder %s66, %s69
    %p78 = scmp.eq.s32.totalorder %s14, 1
    %p79 = por %p77, %p78
    %p80 = scmp.ne.s32.totalorder %s69, %s70
    %p81 = scmp.eq.s32.totalorder %s14, 0
    %p82 = por %p80, %p81
    %p83 = scmp.ne.s32.totalorder %s69, %s70
    %p84 = scmp.eq.s32.totalorder %s15, 1
    %p85 = por %p83, %p84
    %p87 = scmp.ne.s32.totalorder %s70, %s86
    %p88 = scmp.eq.s32.totalorder %s15, 0
    %p89 = por %p87, %p88
    %s90 = ssub.s32 %s17, %s31
    %p91 = scmp.eq.s32.totalorder %s90, 0
    %s93 = sadd.s32 %s92, 1
    %s94 = scalar_select %p91, %s92, %s93
    %p97 = pneg %p91
    %p98 = scmp.eq.s32.totalorder %s9, 1
    %p99 = por %p97, %p98
    %p100 = scmp.ne.s32.totalorder %s92, %s95
    %p101 = scmp.eq.s32.totalorder %s9, 0
    %p102 = por %p100, %p101
    %p103 = scmp.ne.s32.totalorder %s92, %s95
    %p104 = scmp.eq.s32.totalorder %s14, 1
    %p105 = por %p103, %p104
    %p106 = scmp.ne.s32.totalorder %s95, %s96
    %p107 = scmp.eq.s32.totalorder %s14, 0
    %p108 = por %p106, %p107
    %p109 = scmp.ne.s32.totalorder %s95, %s96
    %p110 = scmp.eq.s32.totalorder %s15, 1
    %p111 = por %p109, %p110
    %p113 = scmp.ne.s32.totalorder %s96, %s112
    %p114 = scmp.eq.s32.totalorder %s15, 0
    %p115 = por %p113, %p114
    %s116 = ssub.s32 %s16, %s35
    %s117 = ssub.s32 %s17, %s31
    %s118 = sor.u32 %s116, %s117
    %s119 = ssub.s32 %s18, %s27
    %s120 = sor.u32 %s118, %s119
    %p121 = scmp.eq.s32.totalorder %s120, 0
    %s123 = sadd.s32 %s122, 1
    %s124 = scalar_select %p121, %s122, %s123
    %p127 = pneg %p121
    %p128 = scmp.eq.s32.totalorder %s9, 1
    %p129 = por %p127, %p128
    %p130 = scmp.ne.s32.totalorder %s122, %s125
    %p131 = scmp.eq.s32.totalorder %s9, 0
    %p132 = por %p130, %p131
    %p133 = scmp.ne.s32.totalorder %s122, %s125
    %p134 = scmp.eq.s32.totalorder %s14, 1
    %p135 = por %p133, %p134
    %p136 = scmp.ne.s32.totalorder %s125, %s126
    %p137 = scmp.eq.s32.totalorder %s14, 0
    %p138 = por %p136, %p137
    %p139 = scmp.ne.s32.totalorder %s125, %s126
    %p140 = scmp.eq.s32.totalorder %s15, 1
    %p141 = por %p139, %p140
    %p143 = scmp.ne.s32.totalorder %s126, %s142
    %p144 = scmp.eq.s32.totalorder %s15, 0
    %p145 = por %p143, %p144
    %p146 = scmp.le.s32.totalorder 1, %s9
    %p147 = scmp.lt.s32.totalorder %s9, 3
    %p148 = pnand %p146, %p147
    %p149 = pneg %p148
    // Predicated region
    $region9: #{_lambda_.1} parent=5 // pred_check
      _
    $region10: #{_lambda_.1} parent=5 // pred_check_branch
      %151 = sbr.rel (%p148) target = $region12
    $region11: #{_lambda_.1} parent=5 // pred_region
      %s152 = ssub.s32 %s9, 1
      // Predicated region
      $region13: #{_lambda_.1} parent=11 // pred_check
        %p153 = pneg %p82
      $region14: #{_lambda_.1} parent=11 // pred_check_branch
        %155 = sbr.rel (%p153) target = $region16
      $region15: #{_lambda_.1} parent=11 // pred_region
        %p156 = scmp.lt.s32.totalorder %s20, 0
        %s157 = scalar_select %p156, %s20, 0
        %s158 = smul.addr %s157, 12
        %s159 = smul.addr %s158, 8
        %s160 = scalar_lea.vmem %s1, %s159
      $region16: #{_lambda_.1} parent=11 // pred_fallthru
        _
      // Predicated region
      $region17: #{_lambda_.1} parent=11 // pred_check
        %p161 = pneg %p108
      $region18: #{_lambda_.1} parent=11 // pred_check_branch
        %163 = sbr.rel (%p161) target = $region20
      $region19: #{_lambda_.1} parent=11 // pred_region
        %p164 = scmp.lt.s32.totalorder %s20, 0
        %s165 = scalar_select %p164, %s20, 0
        %s166 = smul.addr %s165, 8
        %s167 = scalar_lea.vmem %s2, %s166
      $region20: #{_lambda_.1} parent=11 // pred_fallthru
        _
    $region12: #{_lambda_.1} parent=5 // pred_fallthru
      _
    %p168 = scmp.lt.s32.totalorder %s9, 2
    // Predicated region
    $region21: #{_lambda_.1} parent=5 // pred_check
      %p169 = pneg %p168
    $region22: #{_lambda_.1} parent=5 // pred_check_branch
      %171 = sbr.rel (%p169) target = $region24
    $region23: #{_lambda_.1} parent=5 // pred_region
      // Predicated region
      $region25: #{_lambda_.1} parent=23 // pred_check
        %p172 = pneg %p50
      $region26: #{_lambda_.1} parent=23 // pred_check_branch
        %174 = sbr.rel (%p172) target = $region28
      $region27: #{_lambda_.1} parent=23 // pred_region
        %p175 = scmp.lt.s32.totalorder %s16, 1
        %s176 = scalar_select %p175, %s16, 1
        %p177 = scmp.lt.s32.totalorder %s17, 0
        %s178 = scalar_select %p177, %s17, 0
        %s179 = smul.addr %s178, 12
        %s180 = smul.addr %s176, 12
        %s181 = sadd.s32 %s179, %s180
        %s182 = smul.addr %s181, 8
        %s183 = scalar_lea.vmem %s0, %s182
      $region28: #{_lambda_.1} parent=23 // pred_fallthru
        _
    $region24: #{_lambda_.1} parent=5 // pred_fallthru
      _
    %p184 = scmp.le.s32.totalorder 1, %s9
    %p185 = scmp.lt.s32.totalorder %s9, 3
    %p186 = pnand %p184, %p185
    %p187 = pneg %p186
    // Predicated region
    $region29: #{_lambda_.1} parent=5 // pred_check
      _
    $region30: #{_lambda_.1} parent=5 // pred_check_branch
      %189 = sbr.rel (%p186) target = $region32
    $region31: #{_lambda_.1} parent=5 // pred_region
      %s190 = ssub.s32 %s9, 1
      %p191 = scmp.lt.s32.totalorder %s19, 1
      %s192 = scalar_select %p191, %s19, 1
      %p193 = scmp.lt.s32.totalorder %s20, 0
      %s194 = scalar_select %p193, %s20, 0
      %s195 = smul.addr %s194, 12
      %s196 = smul.addr %s192, 12
      %s197 = sadd.s32 %s195, %s196
      %s198 = smul.addr %s197, 8
      %s199 = scalar_lea.vmem %s0, %s198
      %p200 = pneg %p56
      %p201 = pneg %p53
      %p202 = scmp.lt.s32.totalorder %s20, 0
      %s203 = scalar_select %p202, %s20, 0
      %s204 = smul.addr %s203, 12
      %s205 = smul.addr %s204, 8
      %s206 = scalar_lea.vmem %s1, %s205
      %p207 = pneg %p82
      %p208 = pneg %p79
      %p209 = scmp.lt.s32.totalorder %s20, 0
      %s210 = scalar_select %p209, %s20, 0
      %s211 = smul.addr %s210, 8
      %s212 = scalar_lea.vmem %s2, %s211
      %p213 = pneg %p108
      %p214 = pneg %p105
      %p215 = pneg %p138
      %p216 = pneg %p135
      %s217 = smul.u32 16, %s21
      %p218 = scmp.lt.s32.totalorder %s19, 1
      %s219 = scalar_select %p218, %s19, 1
      %p220 = scmp.lt.s32.totalorder %s20, 0
      %s221 = scalar_select %p220, %s20, 0
      %p222 = scmp.lt.s32.totalorder %s217, 15
      %s223 = scalar_select %p222, %s217, 15
      %s224 = smul.addr %s223, 2
      %s225 = smul.addr %s221, 32
      %s226 = sadd.s32 %s224, %s225
      %s227 = smul.addr %s219, 32
      %s228 = sadd.s32 %s226, %s227
      %s229 = smul.addr %s228, 8
      %s230 = scalar_lea.vmem %s3, %s229
      %p231 = scmp.lt.s32.totalorder %s19, 1
      %s232 = scalar_select %p231, %s19, 1
      %p233 = scmp.lt.s32.totalorder %s20, 0
      %s234 = scalar_select %p233, %s20, 0
      %s235 = smul.addr %s234, 12
      %s236 = smul.addr %s232, 12
      %s237 = sadd.s32 %s235, %s236
      %s238 = smul.addr %s237, 8
      %s239 = scalar_lea.vmem %s0, %s238
      %p240 = scmp.lt.s32.totalorder %s20, 0
      %s241 = scalar_select %p240, %s20, 0
      %s242 = smul.addr %s241, 12
      %s243 = smul.addr %s242, 8
      %s244 = scalar_lea.vmem %s1, %s243
      %p245 = scmp.lt.s32.totalorder %s20, 0
      %s246 = scalar_select %p245, %s20, 0
      %s247 = smul.addr %s246, 8
      %s248 = scalar_lea.vmem %s2, %s247
      %s249 = smul.u32 16, %s21
      %p250 = scmp.lt.s32.totalorder %s19, 1
      %s251 = scalar_select %p250, %s19, 1
      %p252 = scmp.lt.s32.totalorder %s20, 0
      %s253 = scalar_select %p252, %s20, 0
      %p254 = scmp.lt.s32.totalorder %s249, 15
      %s255 = scalar_select %p254, %s249, 15
      %s256 = smul.addr %s255, 2
      %s257 = smul.addr %s253, 32
      %s258 = sadd.s32 %s256, %s257
      %s259 = smul.addr %s251, 32
      %s260 = sadd.s32 %s258, %s259
      %s261 = smul.addr %s260, 8
      %s262 = scalar_lea.vmem %s3, %s261
      %s263 = smul.u32 16, %s21
      %s264 = smul.u32 %s21, 16
      %v265 = vld [vmem:[%s244] sm:$0xff]
      %v266 = vld [vmem:[%s244 + $0x8] sm:$0xff]
      %v267 = vld [vmem:[%s244 + $0x10] sm:$0xff]
      %v268 = vld [vmem:[%s244 + $0x18] sm:$0xff]
      %v269 = vld [vmem:[%s244 + $0x20] sm:$0xff]
      %v270 = vld [vmem:[%s244 + $0x28] sm:$0xff]
      %v271 = vld [vmem:[%s244 + $0x30] sm:$0xff]
      %v272 = vld [vmem:[%s244 + $0x38] sm:$0xff]
      %v273 = vld [vmem:[%s244 + $0x40] sm:$0xff]
      %v274 = vld [vmem:[%s244 + $0x48] sm:$0xff]
      %v275 = vld [vmem:[%s244 + $0x50] sm:$0xff]
      %v276 = vld [vmem:[%s244 + $0x58] sm:$0xff]
      %s277 = scalar_lea.vmem %s239, %s264
      %v278 = vld [vmem:[%s277] sm:$0x1]
      %v279 = vld [vmem:[%s277 + $0x18] sm:$0x1]
      %v280 = vld [vmem:[%s277 + $0x30] sm:$0x1]
      %v281 = vld [vmem:[%s277 + $0x48] sm:$0x1]
      %v286 = vrot.slane %v279, 7
      %vm287 = vcmask 1041409
      %v288 = vsel %vm287, %v286, %v278
      %v289 = vrot.slane %v280, 6
      %vm290 = vcmask 1042434
      %v291 = vsel %vm290, %v289, %v288
      %v292 = vrot.slane %v281, 5
      %vm293 = vcmask 1043459
      %v294 = vsel %vm293, %v292, %v291
      %vm295 = vcmask 31744
      %v297 = vsel %vm295, %v265, 0
      %v300 = vsel %vm295, %v266, 0
      %v303 = vsel %vm295, %v267, 0
      %v306 = vsel %vm295, %v268, 0
      %v309 = vsel %vm295, %v269, 0
      %v312 = vsel %vm295, %v270, 0
      %v315 = vsel %vm295, %v271, 0
      %v318 = vsel %vm295, %v272, 0
      %v321 = vsel %vm295, %v273, 0
      %v324 = vsel %vm295, %v274, 0
      %v327 = vsel %vm295, %v275, 0
      %v330 = vsel %vm295, %v276, 0
      %vm332 = vcmask 1043456
      %v333 = vsel %vm332, %v294, 0
      %335 = vmatprep.subr.mxu0 0.0
      %336 = vmatpush1.msra.mxu0 %v333
      %337 = vmatprep.subr.mxu0 0.0
      %338 = vmatpush1.msra.mxu0 0.0
      %339 = vmatprep.subr.mxu0 0.0
      %340 = vmatpush1.msra.mxu0 0.0
      %341 = vmatprep.subr.mxu0 0.0
      %342 = vmatpush1.msra.mxu0 0.0
      %343 = vmatprep.subr.mxu0 0.0
      %344 = vmatpush1.msra.mxu0 0.0
      %345 = vmatprep.subr.mxu0 0.0
      %346 = vmatpush1.msra.mxu0 0.0
      %347 = vmatprep.subr.mxu0 0.0
      %348 = vmatpush1.msra.mxu0 0.0
      %349 = vmatprep.subr.mxu0 0.0
      %350 = vmatpush1.msra.mxu0 0.0
      %351 = vmatprep.subr.mxu0 0.0
      %352 = vmatpush1.msra.mxu0 0.0
      %353 = vmatprep.subr.mxu0 0.0
      %354 = vmatpush1.msra.mxu0 0.0
      %355 = vmatprep.subr.mxu0 0.0
      %356 = vmatpush1.msra.mxu0 0.0
      %357 = vmatprep.subr.mxu0 0.0
      %358 = vmatpush1.msra.mxu0 0.0
      %359 = vmatprep.subr.mxu0 0.0
      %360 = vmatpush1.msra.mxu0 0.0
      %361 = vmatprep.subr.mxu0 0.0
      %362 = vmatpush1.msra.mxu0 0.0
      %363 = vmatprep.subr.mxu0 0.0
      %364 = vmatpush1.msra.mxu0 0.0
      %365 = vmatprep.subr.mxu0 0.0
      %366 = vmatpush1.msra.mxu0 0.0
      %367 = vmatprep.subr.mxu0 0.0
      %368 = vmatpush1.msra.mxu0 0.0
      %369 = vmatprep.subr.mxu0 0.0
      %370 = vmatpush1.msra.mxu0 0.0
      %371 = vmatprep.subr.mxu0 0.0
      %372 = vmatpush1.msra.mxu0 0.0
      %373 = vmatprep.subr.mxu0 0.0
      %374 = vmatpush1.msra.mxu0 0.0
      %375 = vmatprep.subr.mxu0 0.0
      %376 = vmatpush1.msra.mxu0 0.0
      %377 = vmatprep.subr.mxu0 0.0
      %378 = vmatpush1.msra.mxu0 0.0
      %379 = vmatprep.subr.mxu0 0.0
      %380 = vmatpush1.msra.mxu0 0.0
      %381 = vmatprep.subr.mxu0 0.0
      %382 = vmatpush1.msra.mxu0 0.0
      %383 = vmatprep.subr.mxu0 0.0
      %384 = vmatpush1.msra.mxu0 0.0
      %385 = vmatprep.subr.mxu0 0.0
      %386 = vmatpush1.msra.mxu0 0.0
      %387 = vmatprep.subr.mxu0 0.0
      %388 = vmatpush1.msra.mxu0 0.0
      %389 = vmatprep.subr.mxu0 0.0
      %390 = vmatpush1.msra.mxu0 0.0
      %391 = vmatprep.subr.mxu0 0.0
      %392 = vmatpush1.msra.mxu0 0.0
      %393 = vmatprep.subr.mxu0 0.0
      %394 = vmatpush1.msra.mxu0 0.0
      %395 = vmatprep.subr.mxu0 0.0
      %396 = vmatpush1.msra.mxu0 0.0
      %397 = vmatprep.subr.mxu0 0.0
      %398 = vmatpush1.msra.mxu0 0.0
      %399 = vmatprep.mubr.f32.mxu0 0.0
      %400 = vmatmul.mubr.f32.gmra.mrb[0].mxu0 %v297
      %v401 = vpop.f32.mrb[0].mxu0
      %v402 = vadd.f32 0.0, %v401
      %v403 = vpop.f32.mrb[0].mxu0
      %404 = vmatprep.mubr.f32.mxu0 0.0
      %405 = vmatmul.mubr.f32.gmra.mrb[0].mxu0 %v300
      %v406 = vpop.f32.mrb[0].mxu0
      %v407 = vadd.f32 0.0, %v406
      %v408 = vpop.f32.mrb[0].mxu0
      %409 = vmatprep.mubr.f32.mxu0 0.0
      %410 = vmatmul.mubr.f32.gmra.mrb[0].mxu0 %v303
      %v411 = vpop.f32.mrb[0].mxu0
      %v412 = vadd.f32 0.0, %v411
      %v413 = vpop.f32.mrb[0].mxu0
      %414 = vmatprep.mubr.f32.mxu0 0.0
      %415 = vmatmul.mubr.f32.gmra.mrb[0].mxu0 %v306
      %v416 = vpop.f32.mrb[0].mxu0
      %v417 = vpop.f32.mrb[0].mxu0
      %418 = vmatprep.mubr.f32.mxu0 0.0
      %419 = vmatmul.mubr.f32.gmra.mrb[0].mxu0 %v309
      %v420 = vpop.f32.mrb[0].mxu0
      %v421 = vpop.f32.mrb[0].mxu0
      %422 = vmatprep.mubr.f32.mxu0 0.0
      %423 = vmatmul.mubr.f32.gmra.mrb[0].mxu0 %v312
      %v424 = vpop.f32.mrb[0].mxu0
      %v425 = vpop.f32.mrb[0].mxu0
      %426 = vmatprep.mubr.f32.mxu0 0.0
      %427 = vmatmul.mubr.f32.gmra.mrb[0].mxu0 %v315
      %v428 = vpop.f32.mrb[0].mxu0
      %v429 = vadd.f32 0.0, %v428
      %v430 = vpop.f32.mrb[0].mxu0
      %431 = vmatprep.mubr.f32.mxu0 0.0
      %432 = vmatmul.mubr.f32.gmra.mrb[0].mxu0 %v318
      %v433 = vpop.f32.mrb[0].mxu0
      %v434 = vadd.f32 0.0, %v433
      %v435 = vpop.f32.mrb[0].mxu0
      %436 = vmatprep.mubr.f32.mxu0 0.0
      %437 = vmatmul.mubr.f32.gmra.mrb[0].mxu0 %v321
      %v438 = vpop.f32.mrb[0].mxu0
      %v439 = vadd.f32 0.0, %v438
      %v440 = vpop.f32.mrb[0].mxu0
      %441 = vmatprep.mubr.f32.mxu0 0.0
      %442 = vmatmul.mubr.f32.gmra.mrb[0].mxu0 %v324
      %v443 = vpop.f32.mrb[0].mxu0
      %v444 = vpop.f32.mrb[0].mxu0
      %445 = vmatprep.mubr.f32.mxu0 0.0
      %446 = vmatmul.mubr.f32.gmra.mrb[0].mxu0 %v327
      %v447 = vpop.f32.mrb[0].mxu0
      %v448 = vpop.f32.mrb[0].mxu0
      %449 = vmatprep.mubr.f32.mxu0 0.0
      %450 = vmatmul.mubr.f32.gmra.mrb[0].mxu0 %v330
      %v451 = vpop.f32.mrb[0].mxu0
      %v452 = vpop.f32.mrb[0].mxu0
      %453 = vdwg.mxu0
      %s454 = sadd.s32 %s264, 1
      %s455 = scalar_lea.vmem %s239, %s454
      %v456 = vld [vmem:[%s455] sm:$0x1]
      %v457 = vld [vmem:[%s455 + $0x18] sm:$0x1]
      %v458 = vld [vmem:[%s455 + $0x30] sm:$0x1]
      %v459 = vld [vmem:[%s455 + $0x48] sm:$0x1]
      %v464 = vrot.slane %v457, 7
      %v465 = vsel %vm287, %v464, %v456
      %v466 = vrot.slane %v458, 6
      %v467 = vsel %vm290, %v466, %v465
      %v468 = vrot.slane %v459, 5
      %v469 = vsel %vm293, %v468, %v467
      %v470 = vsel %vm332, %v469, 0
      %472 = vmatprep.subr.mxu0 0.0
      %473 = vmatpush1.msra.mxu0 %v470
      %474 = vmatprep.subr.mxu0 0.0
      %475 = vmatpush1.msra.mxu0 0.0
      %476 = vmatprep.subr.mxu0 0.0
      %477 = vmatpush1.msra.mxu0 0.0
      %478 = vmatprep.subr.mxu0 0.0
      %479 = vmatpush1.msra.mxu0 0.0
      %480 = vmatprep.subr.mxu0 0.0
      %481 = vmatpush1.msra.mxu0 0.0
      %482 = vmatprep.subr.mxu0 0.0
      %483 = vmatpush1.msra.mxu0 0.0
      %484 = vmatprep.subr.mxu0 0.0
      %485 = vmatpush1.msra.mxu0 0.0
      %486 = vmatprep.subr.mxu0 0.0
      %487 = vmatpush1.msra.mxu0 0.0
      %488 = vmatprep.subr.mxu0 0.0
      %489 = vmatpush1.msra.mxu0 0.0
      %490 = vmatprep.subr.mxu0 0.0
      %491 = vmatpush1.msra.mxu0 0.0
      %492 = vmatprep.subr.mxu0 0.0
      %493 = vmatpush1.msra.mxu0 0.0
      %494 = vmatprep.subr.mxu0 0.0
      %495 = vmatpush1.msra.mxu0 0.0
      %496 = vmatprep.subr.mxu0 0.0
      %497 = vmatpush1.msra.mxu0 0.0
      %498 = vmatprep.subr.mxu0 0.0
      %499 = vmatpush1.msra.mxu0 0.0
      %500 = vmatprep.subr.mxu0 0.0
      %501 = vmatpush1.msra.mxu0 0.0
      %502 = vmatprep.subr.mxu0 0.0
      %503 = vmatpush1.msra.mxu0 0.0
      %504 = vmatprep.subr.mxu0 0.0
      %505 = vmatpush1.msra.mxu0 0.0
      %506 = vmatprep.subr.mxu0 0.0
      %507 = vmatpush1.msra.mxu0 0.0
      %508 = vmatprep.subr.mxu0 0.0
      %509 = vmatpush1.msra.mxu0 0.0
      %510 = vmatprep.subr.mxu0 0.0
      %511 = vmatpush1.msra.mxu0 0.0
      %512 = vmatprep.subr.mxu0 0.0
      %513 = vmatpush1.msra.mxu0 0.0
      %514 = vmatprep.subr.mxu0 0.0
      %515 = vmatpush1.msra.mxu0 0.0
      %516 = vmatprep.subr.mxu0 0.0
      %517 = vmatpush1.msra.mxu0 0.0
      %518 = vmatprep.subr.mxu0 0.0
      %519 = vmatpush1.msra.mxu0 0.0
      %520 = vmatprep.subr.mxu0 0.0
      %521 = vmatpush1.msra.mxu0 0.0
      %522 = vmatprep.subr.mxu0 0.0
      %523 = vmatpush1.msra.mxu0 0.0
      %524 = vmatprep.subr.mxu0 0.0
      %525 = vmatpush1.msra.mxu0 0.0
      %526 = vmatprep.subr.mxu0 0.0
      %527 = vmatpush1.msra.mxu0 0.0
      %528 = vmatprep.subr.mxu0 0.0
      %529 = vmatpush1.msra.mxu0 0.0
      %530 = vmatprep.subr.mxu0 0.0
      %531 = vmatpush1.msra.mxu0 0.0
      %532 = vmatprep.subr.mxu0 0.0
      %533 = vmatpush1.msra.mxu0 0.0
      %534 = vmatprep.subr.mxu0 0.0
      %535 = vmatpush1.msra.mxu0 0.0
      %536 = vmatprep.mubr.f32.mxu0 0.0
      %537 = vmatmul.mubr.f32.gmra.mrb[0].mxu0 %v297
      %v538 = vpop.f32.mrb[0].mxu0
      %v539 = vadd.f32 0.0, %v538
      %v540 = vpop.f32.mrb[0].mxu0
      %541 = vmatprep.mubr.f32.mxu0 0.0
      %542 = vmatmul.mubr.f32.gmra.mrb[0].mxu0 %v300
      %v543 = vpop.f32.mrb[0].mxu0
      %v544 = vadd.f32 0.0, %v543
      %v545 = vpop.f32.mrb[0].mxu0
      %546 = vmatprep.mubr.f32.mxu0 0.0
      %547 = vmatmul.mubr.f32.gmra.mrb[0].mxu0 %v303
      %v548 = vpop.f32.mrb[0].mxu0
      %v549 = vadd.f32 0.0, %v548
      %v550 = vpop.f32.mrb[0].mxu0
      %551 = vmatprep.mubr.f32.mxu0 0.0
      %552 = vmatmul.mubr.f32.gmra.mrb[0].mxu0 %v306
      %v553 = vpop.f32.mrb[0].mxu0
      %v554 = vpop.f32.mrb[0].mxu0
      %555 = vmatprep.mubr.f32.mxu0 0.0
      %556 = vmatmul.mubr.f32.gmra.mrb[0].mxu0 %v309
      %v557 = vpop.f32.mrb[0].mxu0
      %v558 = vpop.f32.mrb[0].mxu0
      %559 = vmatprep.mubr.f32.mxu0 0.0
      %560 = vmatmul.mubr.f32.gmra.mrb[0].mxu0 %v312
      %v561 = vpop.f32.mrb[0].mxu0
      %v562 = vpop.f32.mrb[0].mxu0
      %563 = vmatprep.mubr.f32.mxu0 0.0
      %564 = vmatmul.mubr.f32.gmra.mrb[0].mxu0 %v315
      %v565 = vpop.f32.mrb[0].mxu0
      %v566 = vadd.f32 0.0, %v565
      %v567 = vpop.f32.mrb[0].mxu0
      %568 = vmatprep.mubr.f32.mxu0 0.0
      %569 = vmatmul.mubr.f32.gmra.mrb[0].mxu0 %v318
      %v570 = vpop.f32.mrb[0].mxu0
      %v571 = vadd.f32 0.0, %v570
      %v572 = vpop.f32.mrb[0].mxu0
      %573 = vmatprep.mubr.f32.mxu0 0.0
      %574 = vmatmul.mubr.f32.gmra.mrb[0].mxu0 %v321
      %v575 = vpop.f32.mrb[0].mxu0
      %v576 = vadd.f32 0.0, %v575
      %v577 = vpop.f32.mrb[0].mxu0
      %578 = vmatprep.mubr.f32.mxu0 0.0
      %579 = vmatmul.mubr.f32.gmra.mrb[0].mxu0 %v324
      %v580 = vpop.f32.mrb[0].mxu0
      %v581 = vadd.f32 0.0, %v580
      %v582 = vpop.f32.mrb[0].mxu0
      %583 = vmatprep.mubr.f32.mxu0 0.0
      %584 = vmatmul.mubr.f32.gmra.mrb[0].mxu0 %v327
      %v585 = vpop.f32.mrb[0].mxu0
      %v586 = vadd.f32 0.0, %v585
      %v587 = vpop.f32.mrb[0].mxu0
      %588 = vmatprep.mubr.f32.mxu0 0.0
      %589 = vmatmul.mubr.f32.gmra.mrb[0].mxu0 %v330
      %v590 = vpop.f32.mrb[0].mxu0
      %v591 = vadd.f32 0.0, %v590
      %v592 = vpop.f32.mrb[0].mxu0
      %593 = vdwg.mxu0
      %s594 = sadd.s32 %s264, 2
      %s595 = scalar_lea.vmem %s239, %s594
      %v596 = vld [vmem:[%s595] sm:$0x1]
      %v597 = vld [vmem:[%s595 + $0x18] sm:$0x1]
      %v598 = vld [vmem:[%s595 + $0x30] sm:$0x1]
      %v599 = vld [vmem:[%s595 + $0x48] sm:$0x1]
      %v604 = vrot.slane %v597, 7
      %v605 = vsel %vm287, %v604, %v596
      %v606 = vrot.slane %v598, 6
      %v607 = vsel %vm290, %v606, %v605
      %v608 = vrot.slane %v599, 5
      %v609 = vsel %vm293, %v608, %v607
      %v610 = vsel %vm332, %v609, 0
      %612 = vmatprep.subr.mxu0 0.0
      %613 = vmatpush1.msra.mxu0 %v610
      %614 = vmatprep.subr.mxu0 0.0
      %615 = vmatpush1.msra.mxu0 0.0
      %616 = vmatprep.subr.mxu0 0.0
      %617 = vmatpush1.msra.mxu0 0.0
      %618 = vmatprep.subr.mxu0 0.0
      %619 = vmatpush1.msra.mxu0 0.0
      %620 = vmatprep.subr.mxu0 0.0
      %621 = vmatpush1.msra.mxu0 0.0
      %622 = vmatprep.subr.mxu0 0.0
      %623 = vmatpush1.msra.mxu0 0.0
      %624 = vmatprep.subr.mxu0 0.0
      %625 = vmatpush1.msra.mxu0 0.0
      %626 = vmatprep.subr.mxu0 0.0
      %627 = vmatpush1.msra.mxu0 0.0
      %628 = vmatprep.subr.mxu0 0.0
      %629 = vmatpush1.msra.mxu0 0.0
      %630 = vmatprep.subr.mxu0 0.0
      %631 = vmatpush1.msra.mxu0 0.0
      %632 = vmatprep.subr.mxu0 0.0
      %633 = vmatpush1.msra.mxu0 0.0
      %634 = vmatprep.subr.mxu0 0.0
      %635 = vmatpush1.msra.mxu0 0.0
      %636 = vmatprep.subr.mxu0 0.0
      %637 = vmatpush1.msra.mxu0 0.0
      %638 = vmatprep.subr.mxu0 0.0
      %639 = vmatpush1.msra.mxu0 0.0
      %640 = vmatprep.subr.mxu0 0.0
      %641 = vmatpush1.msra.mxu0 0.0
      %642 = vmatprep.subr.mxu0 0.0
      %643 = vmatpush1.msra.mxu0 0.0
      %644 = vmatprep.subr.mxu0 0.0
      %645 = vmatpush1.msra.mxu0 0.0
      %646 = vmatprep.subr.mxu0 0.0
      %647 = vmatpush1.msra.mxu0 0.0
      %648 = vmatprep.subr.mxu0 0.0
      %649 = vmatpush1.msra.mxu0 0.0
      %650 = vmatprep.subr.mxu0 0.0
      %651 = vmatpush1.msra.mxu0 0.0
      %652 = vmatprep.subr.mxu0 0.0
      %653 = vmatpush1.msra.mxu0 0.0
      %654 = vmatprep.subr.mxu0 0.0
      %655 = vmatpush1.msra.mxu0 0.0
      %656 = vmatprep.subr.mxu0 0.0
      %657 = vmatpush1.msra.mxu0 0.0
      %658 = vmatprep.subr.mxu0 0.0
      %659 = vmatpush1.msra.mxu0 0.0
      %660 = vmatprep.subr.mxu0 0.0
      %661 = vmatpush1.msra.mxu0 0.0
      %662 = vmatprep.subr.mxu0 0.0
      %663 = vmatpush1.msra.mxu0 0.0
      %664 = vmatprep.subr.mxu0 0.0
      %665 = vmatpush1.msra.mxu0 0.0
      %666 = vmatprep.subr.mxu0 0.0
      %667 = vmatpush1.msra.mxu0 0.0
      %668 = vmatprep.subr.mxu0 0.0
      %669 = vmatpush1.msra.mxu0 0.0
      %670 = vmatprep.subr.mxu0 0.0
      %671 = vmatpush1.msra.mxu0 0.0
      %672 = vmatprep.subr.mxu0 0.0
      %673 = vmatpush1.msra.mxu0 0.0
      %674 = vmatprep.subr.mxu0 0.0
      %675 = vmatpush1.msra.mxu0 0.0
      %676 = vmatprep.mubr.f32.mxu0 0.0
      %677 = vmatmul.mubr.f32.gmra.mrb[0].mxu0 %v297
      %v678 = vpop.f32.mrb[0].mxu0
      %v679 = vadd.f32 0.0, %v678
      %v680 = vpop.f32.mrb[0].mxu0
      %681 = vmatprep.mubr.f32.mxu0 0.0
      %682 = vmatmul.mubr.f32.gmra.mrb[0].mxu0 %v300
      %v683 = vpop.f32.mrb[0].mxu0
      %v684 = vadd.f32 0.0, %v683
      %v685 = vpop.f32.mrb[0].mxu0
      %686 = vmatprep.mubr.f32.mxu0 0.0
      %687 = vmatmul.mubr.f32.gmra.mrb[0].mxu0 %v303
      %v688 = vpop.f32.mrb[0].mxu0
      %v689 = vadd.f32 0.0, %v688
      %v690 = vpop.f32.mrb[0].mxu0
      %691 = vmatprep.mubr.f32.mxu0 0.0
      %692 = vmatmul.mubr.f32.gmra.mrb[0].mxu0 %v306
      %v693 = vpop.f32.mrb[0].mxu0
      %v694 = vpop.f32.mrb[0].mxu0
      %695 = vmatprep.mubr.f32.mxu0 0.0
      %696 = vmatmul.mubr.f32.gmra.mrb[0].mxu0 %v309
      %v697 = vpop.f32.mrb[0].mxu0
      %v698 = vpop.f32.mrb[0].mxu0
      %699 = vmatprep.mubr.f32.mxu0 0.0
      %700 = vmatmul.mubr.f32.gmra.mrb[0].mxu0 %v312
      %v701 = vpop.f32.mrb[0].mxu0
      %v702 = vpop.f32.mrb[0].mxu0
      %703 = vmatprep.mubr.f32.mxu0 0.0
      %704 = vmatmul.mubr.f32.gmra.mrb[0].mxu0 %v315
      %v705 = vpop.f32.mrb[0].mxu0
      %v706 = vadd.f32 0.0, %v705
      %v707 = vpop.f32.mrb[0].mxu0
      %708 = vmatprep.mubr.f32.mxu0 0.0
      %709 = vmatmul.mubr.f32.gmra.mrb[0].mxu0 %v318
      %v710 = vpop.f32.mrb[0].mxu0
      %v711 = vadd.f32 0.0, %v710
      %v712 = vpop.f32.mrb[0].mxu0
      %713 = vmatprep.mubr.f32.mxu0 0.0
      %714 = vmatmul.mubr.f32.gmra.mrb[0].mxu0 %v321
      %v715 = vpop.f32.mrb[0].mxu0
      %v716 = vadd.f32 0.0, %v715
      %v717 = vpop.f32.mrb[0].mxu0
      %718 = vmatprep.mubr.f32.mxu0 0.0
      %719 = vmatmul.mubr.f32.gmra.mrb[0].mxu0 %v324
      %v720 = vpop.f32.mrb[0].mxu0
      %v721 = vadd.f32 0.0, %v720
      %v722 = vpop.f32.mrb[0].mxu0
      %723 = vmatprep.mubr.f32.mxu0 0.0
      %724 = vmatmul.mubr.f32.gmra.mrb[0].mxu0 %v327
      %v725 = vpop.f32.mrb[0].mxu0
      %v726 = vadd.f32 0.0, %v725
      %v727 = vpop.f32.mrb[0].mxu0
      %728 = vmatprep.mubr.f32.mxu0 0.0
      %729 = vmatmul.mubr.f32.gmra.mrb[0].mxu0 %v330
      %v730 = vpop.f32.mrb[0].mxu0
      %v731 = vadd.f32 0.0, %v730
      %v732 = vpop.f32.mrb[0].mxu0
      %733 = vdwg.mxu0
      %s734 = sadd.s32 %s264, 3
      %s735 = scalar_lea.vmem %s239, %s734
      %v736 = vld [vmem:[%s735] sm:$0x1]
      %v737 = vld [vmem:[%s735 + $0x18] sm:$0x1]
      %v738 = vld [vmem:[%s735 + $0x30] sm:$0x1]
      %v739 = vld [vmem:[%s735 + $0x48] sm:$0x1]
      %v744 = vrot.slane %v737, 7
      %v745 = vsel %vm287, %v744, %v736
      %v746 = vrot.slane %v738, 6
      %v747 = vsel %vm290, %v746, %v745
      %v748 = vrot.slane %v739, 5
      %v749 = vsel %vm293, %v748, %v747
      %v750 = vsel %vm332, %v749, 0
      %752 = vmatprep.subr.mxu0 0.0
      %753 = vmatpush1.msra.mxu0 %v750
      %754 = vmatprep.subr.mxu0 0.0
      %755 = vmatpush1.msra.mxu0 0.0
      %756 = vmatprep.subr.mxu0 0.0
      %757 = vmatpush1.msra.mxu0 0.0
      %758 = vmatprep.subr.mxu0 0.0
      %759 = vmatpush1.msra.mxu0 0.0
      %760 = vmatprep.subr.mxu0 0.0
      %761 = vmatpush1.msra.mxu0 0.0
      %762 = vmatprep.subr.mxu0 0.0
      %763 = vmatpush1.msra.mxu0 0.0
      %764 = vmatprep.subr.mxu0 0.0
      %765 = vmatpush1.msra.mxu0 0.0
      %766 = vmatprep.subr.mxu0 0.0
      %767 = vmatpush1.msra.mxu0 0.0
      %768 = vmatprep.subr.mxu0 0.0
      %769 = vmatpush1.msra.mxu0 0.0
      %770 = vmatprep.subr.mxu0 0.0
      %771 = vmatpush1.msra.mxu0 0.0
      %772 = vmatprep.subr.mxu0 0.0
      %773 = vmatpush1.msra.mxu0 0.0
      %774 = vmatprep.subr.mxu0 0.0
      %775 = vmatpush1.msra.mxu0 0.0
      %776 = vmatprep.subr.mxu0 0.0
      %777 = vmatpush1.msra.mxu0 0.0
      %778 = vmatprep.subr.mxu0 0.0
      %779 = vmatpush1.msra.mxu0 0.0
      %780 = vmatprep.subr.mxu0 0.0
      %781 = vmatpush1.msra.mxu0 0.0
      %782 = vmatprep.subr.mxu0 0.0
      %783 = vmatpush1.msra.mxu0 0.0
      %784 = vmatprep.subr.mxu0 0.0
      %785 = vmatpush1.msra.mxu0 0.0
      %786 = vmatprep.subr.mxu0 0.0
      %787 = vmatpush1.msra.mxu0 0.0
      %788 = vmatprep.subr.mxu0 0.0
      %789 = vmatpush1.msra.mxu0 0.0
      %790 = vmatprep.subr.mxu0 0.0
      %791 = vmatpush1.msra.mxu0 0.0
      %792 = vmatprep.subr.mxu0 0.0
      %793 = vmatpush1.msra.mxu0 0.0
      %794 = vmatprep.subr.mxu0 0.0
      %795 = vmatpush1.msra.mxu0 0.0
      %796 = vmatprep.subr.mxu0 0.0
      %797 = vmatpush1.msra.mxu0 0.0
      %798 = vmatprep.subr.mxu0 0.0
      %799 = vmatpush1.msra.mxu0 0.0
      %800 = vmatprep.subr.mxu0 0.0
      %801 = vmatpush1.msra.mxu0 0.0
      %802 = vmatprep.subr.mxu0 0.0
      %803 = vmatpush1.msra.mxu0 0.0
      %804 = vmatprep.subr.mxu0 0.0
      %805 = vmatpush1.msra.mxu0 0.0
      %806 = vmatprep.subr.mxu0 0.0
      %807 = vmatpush1.msra.mxu0 0.0
      %808 = vmatprep.subr.mxu0 0.0
      %809 = vmatpush1.msra.mxu0 0.0
      %810 = vmatprep.subr.mxu0 0.0
      %811 = vmatpush1.msra.mxu0 0.0
      %812 = vmatprep.subr.mxu0 0.0
      %813 = vmatpush1.msra.mxu0 0.0
      %814 = vmatprep.subr.mxu0 0.0
      %815 = vmatpush1.msra.mxu0 0.0
      %816 = vmatprep.mubr.f32.mxu0 0.0
      %817 = vmatmul.mubr.f32.gmra.mrb[0].mxu0 %v297
      %v818 = vpop.f32.mrb[0].mxu0
      %v819 = vadd.f32 0.0, %v818
      %v820 = vpop.f32.mrb[0].mxu0
      %821 = vmatprep.mubr.f32.mxu0 0.0
      %822 = vmatmul.mubr.f32.gmra.mrb[0].mxu0 %v300
      %v823 = vpop.f32.mrb[0].mxu0
      %v824 = vadd.f32 0.0, %v823
      %v825 = vpop.f32.mrb[0].mxu0
      %826 = vmatprep.mubr.f32.mxu0 0.0
      %827 = vmatmul.mubr.f32.gmra.mrb[0].mxu0 %v303
      %v828 = vpop.f32.mrb[0].mxu0
      %v829 = vadd.f32 0.0, %v828
      %v830 = vpop.f32.mrb[0].mxu0
      %831 = vmatprep.mubr.f32.mxu0 0.0
      %832 = vmatmul.mubr.f32.gmra.mrb[0].mxu0 %v306
      %v833 = vpop.f32.mrb[0].mxu0
      %v834 = vpop.f32.mrb[0].mxu0
      %835 = vmatprep.mubr.f32.mxu0 0.0
      %836 = vmatmul.mubr.f32.gmra.mrb[0].mxu0 %v309
      %v837 = vpop.f32.mrb[0].mxu0
      %v838 = vpop.f32.mrb[0].mxu0
      %839 = vmatprep.mubr.f32.mxu0 0.0
      %840 = vmatmul.mubr.f32.gmra.mrb[0].mxu0 %v312
      %v841 = vpop.f32.mrb[0].mxu0
      %v842 = vpop.f32.mrb[0].mxu0
      %843 = vmatprep.mubr.f32.mxu0 0.0
      %844 = vmatmul.mubr.f32.gmra.mrb[0].mxu0 %v315
      %v845 = vpop.f32.mrb[0].mxu0
      %v846 = vadd.f32 0.0, %v845
      %v847 = vpop.f32.mrb[0].mxu0
      %848 = vmatprep.mubr.f32.mxu0 0.0
      %849 = vmatmul.mubr.f32.gmra.mrb[0].mxu0 %v318
      %v850 = vpop.f32.mrb[0].mxu0
      %v851 = vadd.f32 0.0, %v850
      %v852 = vpop.f32.mrb[0].mxu0
      %853 = vmatprep.mubr.f32.mxu0 0.0
      %854 = vmatmul.mubr.f32.gmra.mrb[0].mxu0 %v321
      %v855 = vpop.f32.mrb[0].mxu0
      %v856 = vadd.f32 0.0, %v855
      %v857 = vpop.f32.mrb[0].mxu0
      %858 = vmatprep.mubr.f32.mxu0 0.0
      %859 = vmatmul.mubr.f32.gmra.mrb[0].mxu0 %v324
      %v860 = vpop.f32.mrb[0].mxu0
      %v861 = vadd.f32 0.0, %v860
      %v862 = vpop.f32.mrb[0].mxu0
      %863 = vmatprep.mubr.f32.mxu0 0.0
      %864 = vmatmul.mubr.f32.gmra.mrb[0].mxu0 %v327
      %v865 = vpop.f32.mrb[0].mxu0
      %v866 = vadd.f32 0.0, %v865
      %v867 = vpop.f32.mrb[0].mxu0
      %868 = vmatprep.mubr.f32.mxu0 0.0
      %869 = vmatmul.mubr.f32.gmra.mrb[0].mxu0 %v330
      %v870 = vpop.f32.mrb[0].mxu0
      %v871 = vadd.f32 0.0, %v870
      %v872 = vpop.f32.mrb[0].mxu0
      %873 = vdwg.mxu0
      %s874 = sadd.s32 %s264, 4
      %s875 = scalar_lea.vmem %s239, %s874
      %v876 = vld [vmem:[%s875] sm:$0x1]
      %v877 = vld [vmem:[%s875 + $0x18] sm:$0x1]
      %v878 = vld [vmem:[%s875 + $0x30] sm:$0x1]
      %v879 = vld [vmem:[%s875 + $0x48] sm:$0x1]
      %v884 = vrot.slane %v877, 7
      %v885 = vsel %vm287, %v884, %v876
      %v886 = vrot.slane %v878, 6
      %v887 = vsel %vm290, %v886, %v885
      %v888 = vrot.slane %v879, 5
      %v889 = vsel %vm293, %v888, %v887
      %v890 = vsel %vm332, %v889, 0
      %892 = vmatprep.subr.mxu0 0.0
      %893 = vmatpush1.msra.mxu0 %v890
      %894 = vmatprep.subr.mxu0 0.0
      %895 = vmatpush1.msra.mxu0 0.0
      %896 = vmatprep.subr.mxu0 0.0
      %897 = vmatpush1.msra.mxu0 0.0
      %898 = vmatprep.subr.mxu0 0.0
      %899 = vmatpush1.msra.mxu0 0.0
      %900 = vmatprep.subr.mxu0 0.0
      %901 = vmatpush1.msra.mxu0 0.0
      %902 = vmatprep.subr.mxu0 0.0
      %903 = vmatpush1.msra.mxu0 0.0
      %904 = vmatprep.subr.mxu0 0.0
      %905 = vmatpush1.msra.mxu0 0.0
      %906 = vmatprep.subr.mxu0 0.0
      %907 = vmatpush1.msra.mxu0 0.0
      %908 = vmatprep.subr.mxu0 0.0
      %909 = vmatpush1.msra.mxu0 0.0
      %910 = vmatprep.subr.mxu0 0.0
      %911 = vmatpush1.msra.mxu0 0.0
      %912 = vmatprep.subr.mxu0 0.0
      %913 = vmatpush1.msra.mxu0 0.0
      %914 = vmatprep.subr.mxu0 0.0
      %915 = vmatpush1.msra.mxu0 0.0
      %916 = vmatprep.subr.mxu0 0.0
      %917 = vmatpush1.msra.mxu0 0.0
      %918 = vmatprep.subr.mxu0 0.0
      %919 = vmatpush1.msra.mxu0 0.0
      %920 = vmatprep.subr.mxu0 0.0
      %921 = vmatpush1.msra.mxu0 0.0
      %922 = vmatprep.subr.mxu0 0.0
      %923 = vmatpush1.msra.mxu0 0.0
      %924 = vmatprep.subr.mxu0 0.0
      %925 = vmatpush1.msra.mxu0 0.0
      %926 = vmatprep.subr.mxu0 0.0
      %927 = vmatpush1.msra.mxu0 0.0
      %928 = vmatprep.subr.mxu0 0.0
      %929 = vmatpush1.msra.mxu0 0.0
      %930 = vmatprep.subr.mxu0 0.0
      %931 = vmatpush1.msra.mxu0 0.0
      %932 = vmatprep.subr.mxu0 0.0
      %933 = vmatpush1.msra.mxu0 0.0
      %934 = vmatprep.subr.mxu0 0.0
      %935 = vmatpush1.msra.mxu0 0.0
      %936 = vmatprep.subr.mxu0 0.0
      %937 = vmatpush1.msra.mxu0 0.0
      %938 = vmatprep.subr.mxu0 0.0
      %939 = vmatpush1.msra.mxu0 0.0
      %940 = vmatprep.subr.mxu0 0.0
      %941 = vmatpush1.msra.mxu0 0.0
      %942 = vmatprep.subr.mxu0 0.0
      %943 = vmatpush1.msra.mxu0 0.0
      %944 = vmatprep.subr.mxu0 0.0
      %945 = vmatpush1.msra.mxu0 0.0
      %946 = vmatprep.subr.mxu0 0.0
      %947 = vmatpush1.msra.mxu0 0.0
      %948 = vmatprep.subr.mxu0 0.0
      %949 = vmatpush1.msra.mxu0 0.0
      %950 = vmatprep.subr.mxu0 0.0
      %951 = vmatpush1.msra.mxu0 0.0
      %952 = vmatprep.subr.mxu0 0.0
      %953 = vmatpush1.msra.mxu0 0.0
      %954 = vmatprep.subr.mxu0 0.0
      %955 = vmatpush1.msra.mxu0 0.0
      %956 = vmatprep.mubr.f32.mxu0 0.0
      %957 = vmatmul.mubr.f32.gmra.mrb[0].mxu0 %v297
      %v958 = vpop.f32.mrb[0].mxu0
      %v959 = vadd.f32 0.0, %v958
      %v960 = vpop.f32.mrb[0].mxu0
      %961 = vmatprep.mubr.f32.mxu0 0.0
      %962 = vmatmul.mubr.f32.gmra.mrb[0].mxu0 %v300
      %v963 = vpop.f32.mrb[0].mxu0
      %v964 = vadd.f32 0.0, %v963
      %v965 = vpop.f32.mrb[0].mxu0
      %966 = vmatprep.mubr.f32.mxu0 0.0
      %967 = vmatmul.mubr.f32.gmra.mrb[0].mxu0 %v303
      %v968 = vpop.f32.mrb[0].mxu0
      %v969 = vadd.f32 0.0, %v968
      %v970 = vpop.f32.mrb[0].mxu0
      %971 = vmatprep.mubr.f32.mxu0 0.0
      %972 = vmatmul.mubr.f32.gmra.mrb[0].mxu0 %v306
      %v973 = vpop.f32.mrb[0].mxu0
      %v974 = vpop.f32.mrb[0].mxu0
      %975 = vmatprep.mubr.f32.mxu0 0.0
      %976 = vmatmul.mubr.f32.gmra.mrb[0].mxu0 %v309
      %v977 = vpop.f32.mrb[0].mxu0
      %v978 = vpop.f32.mrb[0].mxu0
      %979 = vmatprep.mubr.f32.mxu0 0.0
      %980 = vmatmul.mubr.f32.gmra.mrb[0].mxu0 %v312
      %v981 = vpop.f32.mrb[0].mxu0
      %v982 = vpop.f32.mrb[0].mxu0
      %983 = vmatprep.mubr.f32.mxu0 0.0
      %984 = vmatmul.mubr.f32.gmra.mrb[0].mxu0 %v315
      %v985 = vpop.f32.mrb[0].mxu0
      %v986 = vadd.f32 0.0, %v985
      %v987 = vpop.f32.mrb[0].mxu0
      %988 = vmatprep.mubr.f32.mxu0 0.0
      %989 = vmatmul.mubr.f32.gmra.mrb[0].mxu0 %v318
      %v990 = vpop.f32.mrb[0].mxu0
      %v991 = vadd.f32 0.0, %v990
      %v992 = vpop.f32.mrb[0].mxu0
      %993 = vmatprep.mubr.f32.mxu0 0.0
      %994 = vmatmul.mubr.f32.gmra.mrb[0].mxu0 %v321
      %v995 = vpop.f32.mrb[0].mxu0
      %v996 = vadd.f32 0.0, %v995
      %v997 = vpop.f32.mrb[0].mxu0
      %998 = vmatprep.mubr.f32.mxu0 0.0
      %999 = vmatmul.mubr.f32.gmra.mrb[0].mxu0 %v324
      %v1000 = vpop.f32.mrb[0].mxu0
      %v1001 = vadd.f32 0.0, %v1000
      %v1002 = vpop.f32.mrb[0].mxu0
      %1003 = vmatprep.mubr.f32.mxu0 0.0
      %1004 = vmatmul.mubr.f32.gmra.mrb[0].mxu0 %v327
      %v1005 = vpop.f32.mrb[0].mxu0
      %v1006 = vadd.f32 0.0, %v1005
      %v1007 = vpop.f32.mrb[0].mxu0
      %1008 = vmatprep.mubr.f32.mxu0 0.0
      %1009 = vmatmul.mubr.f32.gmra.mrb[0].mxu0 %v330
      %v1010 = vpop.f32.mrb[0].mxu0
      %v1011 = vadd.f32 0.0, %v1010
      %v1012 = vpop.f32.mrb[0].mxu0
      %1013 = vdwg.mxu0
      %s1014 = sadd.s32 %s264, 5
      %s1015 = scalar_lea.vmem %s239, %s1014
      %v1016 = vld [vmem:[%s1015] sm:$0x1]
      %v1017 = vld [vmem:[%s1015 + $0x18] sm:$0x1]
      %v1018 = vld [vmem:[%s1015 + $0x30] sm:$0x1]
      %v1019 = vld [vmem:[%s1015 + $0x48] sm:$0x1]
      %v1024 = vrot.slane %v1017, 7
      %v1025 = vsel %vm287, %v1024, %v1016
      %v1026 = vrot.slane %v1018, 6
      %v1027 = vsel %vm290, %v1026, %v1025
      %v1028 = vrot.slane %v1019, 5
      %v1029 = vsel %vm293, %v1028, %v1027
      %v1030 = vsel %vm332, %v1029, 0
      %1032 = vmatprep.subr.mxu0 0.0
      %1033 = vmatpush1.msra.mxu0 %v1030
      %1034 = vmatprep.subr.mxu0 0.0
      %1035 = vmatpush1.msra.mxu0 0.0
      %1036 = vmatprep.subr.mxu0 0.0
      %1037 = vmatpush1.msra.mxu0 0.0
      %1038 = vmatprep.subr.mxu0 0.0
      %1039 = vmatpush1.msra.mxu0 0.0
      %1040 = vmatprep.subr.mxu0 0.0
      %1041 = vmatpush1.msra.mxu0 0.0
      %1042 = vmatprep.subr.mxu0 0.0
      %1043 = vmatpush1.msra.mxu0 0.0
      %1044 = vmatprep.subr.mxu0 0.0
      %1045 = vmatpush1.msra.mxu0 0.0
      %1046 = vmatprep.subr.mxu0 0.0
      %1047 = vmatpush1.msra.mxu0 0.0
      %1048 = vmatprep.subr.mxu0 0.0
      %1049 = vmatpush1.msra.mxu0 0.0
      %1050 = vmatprep.subr.mxu0 0.0
      %1051 = vmatpush1.msra.mxu0 0.0
      %1052 = vmatprep.subr.mxu0 0.0
      %1053 = vmatpush1.msra.mxu0 0.0
      %1054 = vmatprep.subr.mxu0 0.0
      %1055 = vmatpush1.msra.mxu0 0.0
      %1056 = vmatprep.subr.mxu0 0.0
      %1057 = vmatpush1.msra.mxu0 0.0
      %1058 = vmatprep.subr.mxu0 0.0
      %1059 = vmatpush1.msra.mxu0 0.0
      %1060 = vmatprep.subr.mxu0 0.0
      %1061 = vmatpush1.msra.mxu0 0.0
      %1062 = vmatprep.subr.mxu0 0.0
      %1063 = vmatpush1.msra.mxu0 0.0
      %1064 = vmatprep.subr.mxu0 0.0
      %1065 = vmatpush1.msra.mxu0 0.0
      %1066 = vmatprep.subr.mxu0 0.0
      %1067 = vmatpush1.msra.mxu0 0.0
      %1068 = vmatprep.subr.mxu0 0.0
      %1069 = vmatpush1.msra.mxu0 0.0
      %1070 = vmatprep.subr.mxu0 0.0
      %1071 = vmatpush1.msra.mxu0 0.0
      %1072 = vmatprep.subr.mxu0 0.0
      %1073 = vmatpush1.msra.mxu0 0.0
      %1074 = vmatprep.subr.mxu0 0.0
      %1075 = vmatpush1.msra.mxu0 0.0
      %1076 = vmatprep.subr.mxu0 0.0
      %1077 = vmatpush1.msra.mxu0 0.0
      %1078 = vmatprep.subr.mxu0 0.0
      %1079 = vmatpush1.msra.mxu0 0.0
      %1080 = vmatprep.subr.mxu0 0.0
      %1081 = vmatpush1.msra.mxu0 0.0
      %1082 = vmatprep.subr.mxu0 0.0
      %1083 = vmatpush1.msra.mxu0 0.0
      %1084 = vmatprep.subr.mxu0 0.0
      %1085 = vmatpush1.msra.mxu0 0.0
      %1086 = vmatprep.subr.mxu0 0.0
      %1087 = vmatpush1.msra.mxu0 0.0
      %1088 = vmatprep.subr.mxu0 0.0
      %1089 = vmatpush1.msra.mxu0 0.0
      %1090 = vmatprep.subr.mxu0 0.0
      %1091 = vmatpush1.msra.mxu0 0.0
      %1092 = vmatprep.subr.mxu0 0.0
      %1093 = vmatpush1.msra.mxu0 0.0
      %1094 = vmatprep.subr.mxu0 0.0
      %1095 = vmatpush1.msra.mxu0 0.0
      %1096 = vmatprep.mubr.f32.mxu0 0.0
      %1097 = vmatmul.mubr.f32.gmra.mrb[0].mxu0 %v297
      %v1098 = vpop.f32.mrb[0].mxu0
      %v1099 = vadd.f32 0.0, %v1098
      %v1100 = vpop.f32.mrb[0].mxu0
      %1101 = vmatprep.mubr.f32.mxu0 0.0
      %1102 = vmatmul.mubr.f32.gmra.mrb[0].mxu0 %v300
      %v1103 = vpop.f32.mrb[0].mxu0
      %v1104 = vadd.f32 0.0, %v1103
      %v1105 = vpop.f32.mrb[0].mxu0
      %1106 = vmatprep.mubr.f32.mxu0 0.0
      %1107 = vmatmul.mubr.f32.gmra.mrb[0].mxu0 %v303
      %v1108 = vpop.f32.mrb[0].mxu0
      %v1109 = vadd.f32 0.0, %v1108
      %v1110 = vpop.f32.mrb[0].mxu0
      %1111 = vmatprep.mubr.f32.mxu0 0.0
      %1112 = vmatmul.mubr.f32.gmra.mrb[0].mxu0 %v306
      %v1113 = vpop.f32.mrb[0].mxu0
      %v1114 = vpop.f32.mrb[0].mxu0
      %1115 = vmatprep.mubr.f32.mxu0 0.0
      %1116 = vmatmul.mubr.f32.gmra.mrb[0].mxu0 %v309
      %v1117 = vpop.f32.mrb[0].mxu0
      %v1118 = vpop.f32.mrb[0].mxu0
      %1119 = vmatprep.mubr.f32.mxu0 0.0
      %1120 = vmatmul.mubr.f32.gmra.mrb[0].mxu0 %v312
      %v1121 = vpop.f32.mrb[0].mxu0
      %v1122 = vpop.f32.mrb[0].mxu0
      %1123 = vmatprep.mubr.f32.mxu0 0.0
      %1124 = vmatmul.mubr.f32.gmra.mrb[0].mxu0 %v315
      %v1125 = vpop.f32.mrb[0].mxu0
      %v1126 = vadd.f32 0.0, %v1125
      %v1127 = vpop.f32.mrb[0].mxu0
      %1128 = vmatprep.mubr.f32.mxu0 0.0
      %1129 = vmatmul.mubr.f32.gmra.mrb[0].mxu0 %v318
      %v1130 = vpop.f32.mrb[0].mxu0
      %v1131 = vadd.f32 0.0, %v1130
      %v1132 = vpop.f32.mrb[0].mxu0
      %1133 = vmatprep.mubr.f32.mxu0 0.0
      %1134 = vmatmul.mubr.f32.gmra.mrb[0].mxu0 %v321
      %v1135 = vpop.f32.mrb[0].mxu0
      %v1136 = vadd.f32 0.0, %v1135
      %v1137 = vpop.f32.mrb[0].mxu0
      %1138 = vmatprep.mubr.f32.mxu0 0.0
      %1139 = vmatmul.mubr.f32.gmra.mrb[0].mxu0 %v324
      %v1140 = vpop.f32.mrb[0].mxu0
      %v1141 = vadd.f32 0.0, %v1140
      %v1142 = vpop.f32.mrb[0].mxu0
      %1143 = vmatprep.mubr.f32.mxu0 0.0
      %1144 = vmatmul.mubr.f32.gmra.mrb[0].mxu0 %v327
      %v1145 = vpop.f32.mrb[0].mxu0
      %v1146 = vadd.f32 0.0, %v1145
      %v1147 = vpop.f32.mrb[0].mxu0
      %1148 = vmatprep.mubr.f32.mxu0 0.0
      %1149 = vmatmul.mubr.f32.gmra.mrb[0].mxu0 %v330
      %v1150 = vpop.f32.mrb[0].mxu0
      %v1151 = vadd.f32 0.0, %v1150
      %v1152 = vpop.f32.mrb[0].mxu0
      %1153 = vdwg.mxu0
      %s1154 = sadd.s32 %s264, 6
      %s1155 = scalar_lea.vmem %s239, %s1154
      %v1156 = vld [vmem:[%s1155] sm:$0x1]
      %v1157 = vld [vmem:[%s1155 + $0x18] sm:$0x1]
      %v1158 = vld [vmem:[%s1155 + $0x30] sm:$0x1]
      %v1159 = vld [vmem:[%s1155 + $0x48] sm:$0x1]
      %v1164 = vrot.slane %v1157, 7
      %v1165 = vsel %vm287, %v1164, %v1156
      %v1166 = vrot.slane %v1158, 6
      %v1167 = vsel %vm290, %v1166, %v1165
      %v1168 = vrot.slane %v1159, 5
      %v1169 = vsel %vm293, %v1168, %v1167
      %v1170 = vsel %vm332, %v1169, 0
      %1172 = vmatprep.subr.mxu0 0.0
      %1173 = vmatpush1.msra.mxu0 %v1170
      %1174 = vmatprep.subr.mxu0 0.0
      %1175 = vmatpush1.msra.mxu0 0.0
      %1176 = vmatprep.subr.mxu0 0.0
      %1177 = vmatpush1.msra.mxu0 0.0
      %1178 = vmatprep.subr.mxu0 0.0
      %1179 = vmatpush1.msra.mxu0 0.0
      %1180 = vmatprep.subr.mxu0 0.0
      %1181 = vmatpush1.msra.mxu0 0.0
      %1182 = vmatprep.subr.mxu0 0.0
      %1183 = vmatpush1.msra.mxu0 0.0
      %1184 = vmatprep.subr.mxu0 0.0
      %1185 = vmatpush1.msra.mxu0 0.0
      %1186 = vmatprep.subr.mxu0 0.0
      %1187 = vmatpush1.msra.mxu0 0.0
      %1188 = vmatprep.subr.mxu0 0.0
      %1189 = vmatpush1.msra.mxu0 0.0
      %1190 = vmatprep.subr.mxu0 0.0
      %1191 = vmatpush1.msra.mxu0 0.0
      %1192 = vmatprep.subr.mxu0 0.0
      %1193 = vmatpush1.msra.mxu0 0.0
      %1194 = vmatprep.subr.mxu0 0.0
      %1195 = vmatpush1.msra.mxu0 0.0
      %1196 = vmatprep.subr.mxu0 0.0
      %1197 = vmatpush1.msra.mxu0 0.0
      %1198 = vmatprep.subr.mxu0 0.0
      %1199 = vmatpush1.msra.mxu0 0.0
      %1200 = vmatprep.subr.mxu0 0.0
      %1201 = vmatpush1.msra.mxu0 0.0
      %1202 = vmatprep.subr.mxu0 0.0
      %1203 = vmatpush1.msra.mxu0 0.0
      %1204 = vmatprep.subr.mxu0 0.0
      %1205 = vmatpush1.msra.mxu0 0.0
      %1206 = vmatprep.subr.mxu0 0.0
      %1207 = vmatpush1.msra.mxu0 0.0
      %1208 = vmatprep.subr.mxu0 0.0
      %1209 = vmatpush1.msra.mxu0 0.0
      %1210 = vmatprep.subr.mxu0 0.0
      %1211 = vmatpush1.msra.mxu0 0.0
      %1212 = vmatprep.subr.mxu0 0.0
      %1213 = vmatpush1.msra.mxu0 0.0
      %1214 = vmatprep.subr.mxu0 0.0
      %1215 = vmatpush1.msra.mxu0 0.0
      %1216 = vmatprep.subr.mxu0 0.0
      %1217 = vmatpush1.msra.mxu0 0.0
      %1218 = vmatprep.subr.mxu0 0.0
      %1219 = vmatpush1.msra.mxu0 0.0
      %1220 = vmatprep.subr.mxu0 0.0
      %1221 = vmatpush1.msra.mxu0 0.0
      %1222 = vmatprep.subr.mxu0 0.0
      %1223 = vmatpush1.msra.mxu0 0.0
      %1224 = vmatprep.subr.mxu0 0.0
      %1225 = vmatpush1.msra.mxu0 0.0
      %1226 = vmatprep.subr.mxu0 0.0
      %1227 = vmatpush1.msra.mxu0 0.0
      %1228 = vmatprep.subr.mxu0 0.0
      %1229 = vmatpush1.msra.mxu0 0.0
      %1230 = vmatprep.subr.mxu0 0.0
      %1231 = vmatpush1.msra.mxu0 0.0
      %1232 = vmatprep.subr.mxu0 0.0
      %1233 = vmatpush1.msra.mxu0 0.0
      %1234 = vmatprep.subr.mxu0 0.0
      %1235 = vmatpush1.msra.mxu0 0.0
      %1236 = vmatprep.mubr.f32.mxu0 0.0
      %1237 = vmatmul.mubr.f32.gmra.mrb[0].mxu0 %v297
      %v1238 = vpop.f32.mrb[0].mxu0
      %v1239 = vadd.f32 0.0, %v1238
      %v1240 = vpop.f32.mrb[0].mxu0
      %1241 = vmatprep.mubr.f32.mxu0 0.0
      %1242 = vmatmul.mubr.f32.gmra.mrb[0].mxu0 %v300
      %v1243 = vpop.f32.mrb[0].mxu0
      %v1244 = vadd.f32 0.0, %v1243
      %v1245 = vpop.f32.mrb[0].mxu0
      %1246 = vmatprep.mubr.f32.mxu0 0.0
      %1247 = vmatmul.mubr.f32.gmra.mrb[0].mxu0 %v303
      %v1248 = vpop.f32.mrb[0].mxu0
      %v1249 = vadd.f32 0.0, %v1248
      %v1250 = vpop.f32.mrb[0].mxu0
      %1251 = vmatprep.mubr.f32.mxu0 0.0
      %1252 = vmatmul.mubr.f32.gmra.mrb[0].mxu0 %v306
      %v1253 = vpop.f32.mrb[0].mxu0
      %v1254 = vpop.f32.mrb[0].mxu0
      %1255 = vmatprep.mubr.f32.mxu0 0.0
      %1256 = vmatmul.mubr.f32.gmra.mrb[0].mxu0 %v309
      %v1257 = vpop.f32.mrb[0].mxu0
      %v1258 = vpop.f32.mrb[0].mxu0
      %1259 = vmatprep.mubr.f32.mxu0 0.0
      %1260 = vmatmul.mubr.f32.gmra.mrb[0].mxu0 %v312
      %v1261 = vpop.f32.mrb[0].mxu0
      %v1262 = vpop.f32.mrb[0].mxu0
      %1263 = vmatprep.mubr.f32.mxu0 0.0
      %1264 = vmatmul.mubr.f32.gmra.mrb[0].mxu0 %v315
      %v1265 = vpop.f32.mrb[0].mxu0
      %v1266 = vadd.f32 0.0, %v1265
      %v1267 = vpop.f32.mrb[0].mxu0
      %1268 = vmatprep.mubr.f32.mxu0 0.0
      %1269 = vmatmul.mubr.f32.gmra.mrb[0].mxu0 %v318
      %v1270 = vpop.f32.mrb[0].mxu0
      %v1271 = vadd.f32 0.0, %v1270
      %v1272 = vpop.f32.mrb[0].mxu0
      %1273 = vmatprep.mubr.f32.mxu0 0.0
      %1274 = vmatmul.mubr.f32.gmra.mrb[0].mxu0 %v321
      %v1275 = vpop.f32.mrb[0].mxu0
      %v1276 = vadd.f32 0.0, %v1275
      %v1277 = vpop.f32.mrb[0].mxu0
      %1278 = vmatprep.mubr.f32.mxu0 0.0
      %1279 = vmatmul.mubr.f32.gmra.mrb[0].mxu0 %v324
      %v1280 = vpop.f32.mrb[0].mxu0
      %v1281 = vadd.f32 0.0, %v1280
      %v1282 = vpop.f32.mrb[0].mxu0
      %1283 = vmatprep.mubr.f32.mxu0 0.0
      %1284 = vmatmul.mubr.f32.gmra.mrb[0].mxu0 %v327
      %v1285 = vpop.f32.mrb[0].mxu0
      %v1286 = vadd.f32 0.0, %v1285
      %v1287 = vpop.f32.mrb[0].mxu0
      %1288 = vmatprep.mubr.f32.mxu0 0.0
      %1289 = vmatmul.mubr.f32.gmra.mrb[0].mxu0 %v330
      %v1290 = vpop.f32.mrb[0].mxu0
      %v1291 = vadd.f32 0.0, %v1290
      %v1292 = vpop.f32.mrb[0].mxu0
      %1293 = vdwg.mxu0
      %s1294 = sadd.s32 %s264, 7
      %s1295 = scalar_lea.vmem %s239, %s1294
      %v1296 = vld [vmem:[%s1295] sm:$0x1]
      %v1297 = vld [vmem:[%s1295 + $0x18] sm:$0x1]
      %v1298 = vld [vmem:[%s1295 + $0x30] sm:$0x1]
      %v1299 = vld [vmem:[%s1295 + $0x48] sm:$0x1]
      %v1304 = vrot.slane %v1297, 7
      %v1305 = vsel %vm287, %v1304, %v1296
      %v1306 = vrot.slane %v1298, 6
      %v1307 = vsel %vm290, %v1306, %v1305
      %v1308 = vrot.slane %v1299, 5
      %v1309 = vsel %vm293, %v1308, %v1307
      %v1310 = vsel %vm332, %v1309, 0
      %1312 = vmatprep.subr.mxu0 0.0
      %1313 = vmatpush1.msra.mxu0 %v1310
      %1314 = vmatprep.subr.mxu0 0.0
      %1315 = vmatpush1.msra.mxu0 0.0
      %1316 = vmatprep.subr.mxu0 0.0
      %1317 = vmatpush1.msra.mxu0 0.0
      %1318 = vmatprep.subr.mxu0 0.0
      %1319 = vmatpush1.msra.mxu0 0.0
      %1320 = vmatprep.subr.mxu0 0.0
      %1321 = vmatpush1.msra.mxu0 0.0
      %1322 = vmatprep.subr.mxu0 0.0
      %1323 = vmatpush1.msra.mxu0 0.0
      %1324 = vmatprep.subr.mxu0 0.0
      %1325 = vmatpush1.msra.mxu0 0.0
      %1326 = vmatprep.subr.mxu0 0.0
      %1327 = vmatpush1.msra.mxu0 0.0
      %1328 = vmatprep.subr.mxu0 0.0
      %1329 = vmatpush1.msra.mxu0 0.0
      %1330 = vmatprep.subr.mxu0 0.0
      %1331 = vmatpush1.msra.mxu0 0.0
      %1332 = vmatprep.subr.mxu0 0.0
      %1333 = vmatpush1.msra.mxu0 0.0
      %1334 = vmatprep.subr.mxu0 0.0
      %1335 = vmatpush1.msra.mxu0 0.0
      %1336 = vmatprep.subr.mxu0 0.0
      %1337 = vmatpush1.msra.mxu0 0.0
      %1338 = vmatprep.subr.mxu0 0.0
      %1339 = vmatpush1.msra.mxu0 0.0
      %1340 = vmatprep.subr.mxu0 0.0
      %1341 = vmatpush1.msra.mxu0 0.0
      %1342 = vmatprep.subr.mxu0 0.0
      %1343 = vmatpush1.msra.mxu0 0.0
      %1344 = vmatprep.subr.mxu0 0.0
      %1345 = vmatpush1.msra.mxu0 0.0
      %1346 = vmatprep.subr.mxu0 0.0
      %1347 = vmatpush1.msra.mxu0 0.0
      %1348 = vmatprep.subr.mxu0 0.0
      %1349 = vmatpush1.msra.mxu0 0.0
      %1350 = vmatprep.subr.mxu0 0.0
      %1351 = vmatpush1.msra.mxu0 0.0
      %1352 = vmatprep.subr.mxu0 0.0
      %1353 = vmatpush1.msra.mxu0 0.0
      %1354 = vmatprep.subr.mxu0 0.0
      %1355 = vmatpush1.msra.mxu0 0.0
      %1356 = vmatprep.subr.mxu0 0.0
      %1357 = vmatpush1.msra.mxu0 0.0
      %1358 = vmatprep.subr.mxu0 0.0
      %1359 = vmatpush1.msra.mxu0 0.0
      %1360 = vmatprep.subr.mxu0 0.0
      %1361 = vmatpush1.msra.mxu0 0.0
      %1362 = vmatprep.subr.mxu0 0.0
      %1363 = vmatpush1.msra.mxu0 0.0
      %1364 = vmatprep.subr.mxu0 0.0
      %1365 = vmatpush1.msra.mxu0 0.0
      %1366 = vmatprep.subr.mxu0 0.0
      %1367 = vmatpush1.msra.mxu0 0.0
      %1368 = vmatprep.subr.mxu0 0.0
      %1369 = vmatpush1.msra.mxu0 0.0
      %1370 = vmatprep.subr.mxu0 0.0
      %1371 = vmatpush1.msra.mxu0 0.0
      %1372 = vmatprep.subr.mxu0 0.0
      %1373 = vmatpush1.msra.mxu0 0.0
      %1374 = vmatprep.subr.mxu0 0.0
      %1375 = vmatpush1.msra.mxu0 0.0
      %1376 = vmatprep.mubr.f32.mxu0 0.0
      %1377 = vmatmul.mubr.f32.gmra.mrb[0].mxu0 %v297
      %v1378 = vpop.f32.mrb[0].mxu0
      %v1379 = vadd.f32 0.0, %v1378
      %v1380 = vpop.f32.mrb[0].mxu0
      %1381 = vmatprep.mubr.f32.mxu0 0.0
      %1382 = vmatmul.mubr.f32.gmra.mrb[0].mxu0 %v300
      %v1383 = vpop.f32.mrb[0].mxu0
      %v1384 = vadd.f32 0.0, %v1383
      %v1385 = vpop.f32.mrb[0].mxu0
      %1386 = vmatprep.mubr.f32.mxu0 0.0
      %1387 = vmatmul.mubr.f32.gmra.mrb[0].mxu0 %v303
      %v1388 = vpop.f32.mrb[0].mxu0
      %v1389 = vadd.f32 0.0, %v1388
      %v1390 = vpop.f32.mrb[0].mxu0
      %1391 = vmatprep.mubr.f32.mxu0 0.0
      %1392 = vmatmul.mubr.f32.gmra.mrb[0].mxu0 %v306
      %v1393 = vpop.f32.mrb[0].mxu0
      %v1394 = vpop.f32.mrb[0].mxu0
      %1395 = vmatprep.mubr.f32.mxu0 0.0
      %1396 = vmatmul.mubr.f32.gmra.mrb[0].mxu0 %v309
      %v1397 = vpop.f32.mrb[0].mxu0
      %v1398 = vpop.f32.mrb[0].mxu0
      %1399 = vmatprep.mubr.f32.mxu0 0.0
      %1400 = vmatmul.mubr.f32.gmra.mrb[0].mxu0 %v312
      %v1401 = vpop.f32.mrb[0].mxu0
      %v1402 = vpop.f32.mrb[0].mxu0
      %1403 = vmatprep.mubr.f32.mxu0 0.0
      %1404 = vmatmul.mubr.f32.gmra.mrb[0].mxu0 %v315
      %v1405 = vpop.f32.mrb[0].mxu0
      %v1406 = vadd.f32 0.0, %v1405
      %v1407 = vpop.f32.mrb[0].mxu0
      %1408 = vmatprep.mubr.f32.mxu0 0.0
      %1409 = vmatmul.mubr.f32.gmra.mrb[0].mxu0 %v318
      %v1410 = vpop.f32.mrb[0].mxu0
      %v1411 = vadd.f32 0.0, %v1410
      %v1412 = vpop.f32.mrb[0].mxu0
      %1413 = vmatprep.mubr.f32.mxu0 0.0
      %1414 = vmatmul.mubr.f32.gmra.mrb[0].mxu0 %v321
      %v1415 = vpop.f32.mrb[0].mxu0
      %v1416 = vadd.f32 0.0, %v1415
      %v1417 = vpop.f32.mrb[0].mxu0
      %1418 = vmatprep.mubr.f32.mxu0 0.0
      %1419 = vmatmul.mubr.f32.gmra.mrb[0].mxu0 %v324
      %v1420 = vpop.f32.mrb[0].mxu0
      %v1421 = vadd.f32 0.0, %v1420
      %v1422 = vpop.f32.mrb[0].mxu0
      %1423 = vmatprep.mubr.f32.mxu0 0.0
      %1424 = vmatmul.mubr.f32.gmra.mrb[0].mxu0 %v327
      %v1425 = vpop.f32.mrb[0].mxu0
      %v1426 = vadd.f32 0.0, %v1425
      %v1427 = vpop.f32.mrb[0].mxu0
      %1428 = vmatprep.mubr.f32.mxu0 0.0
      %1429 = vmatmul.mubr.f32.gmra.mrb[0].mxu0 %v330
      %v1430 = vpop.f32.mrb[0].mxu0
      %v1431 = vadd.f32 0.0, %v1430
      %v1432 = vpop.f32.mrb[0].mxu0
      %1433 = vdwg.mxu0
      %s1434 = sadd.s32 %s264, 8
      %s1435 = scalar_lea.vmem %s239, %s1434
      %v1436 = vld [vmem:[%s1435] sm:$0x1]
      %v1437 = vld [vmem:[%s1435 + $0x18] sm:$0x1]
      %v1438 = vld [vmem:[%s1435 + $0x30] sm:$0x1]
      %v1439 = vld [vmem:[%s1435 + $0x48] sm:$0x1]
      %v1444 = vrot.slane %v1437, 7
      %v1445 = vsel %vm287, %v1444, %v1436
      %v1446 = vrot.slane %v1438, 6
      %v1447 = vsel %vm290, %v1446, %v1445
      %v1448 = vrot.slane %v1439, 5
      %v1449 = vsel %vm293, %v1448, %v1447
      %v1450 = vsel %vm332, %v1449, 0
      %1452 = vmatprep.subr.mxu0 0.0
      %1453 = vmatpush1.msra.mxu0 %v1450
      %1454 = vmatprep.subr.mxu0 0.0
      %1455 = vmatpush1.msra.mxu0 0.0
      %1456 = vmatprep.subr.mxu0 0.0
      %1457 = vmatpush1.msra.mxu0 0.0
      %1458 = vmatprep.subr.mxu0 0.0
      %1459 = vmatpush1.msra.mxu0 0.0
      %1460 = vmatprep.subr.mxu0 0.0
      %1461 = vmatpush1.msra.mxu0 0.0
      %1462 = vmatprep.subr.mxu0 0.0
      %1463 = vmatpush1.msra.mxu0 0.0
      %1464 = vmatprep.subr.mxu0 0.0
      %1465 = vmatpush1.msra.mxu0 0.0
      %1466 = vmatprep.subr.mxu0 0.0
      %1467 = vmatpush1.msra.mxu0 0.0
      %1468 = vmatprep.subr.mxu0 0.0
      %1469 = vmatpush1.msra.mxu0 0.0
      %1470 = vmatprep.subr.mxu0 0.0
      %1471 = vmatpush1.msra.mxu0 0.0
      %1472 = vmatprep.subr.mxu0 0.0
      %1473 = vmatpush1.msra.mxu0 0.0
      %1474 = vmatprep.subr.mxu0 0.0
      %1475 = vmatpush1.msra.mxu0 0.0
      %1476 = vmatprep.subr.mxu0 0.0
      %1477 = vmatpush1.msra.mxu0 0.0
      %1478 = vmatprep.subr.mxu0 0.0
      %1479 = vmatpush1.msra.mxu0 0.0
      %1480 = vmatprep.subr.mxu0 0.0
      %1481 = vmatpush1.msra.mxu0 0.0
      %1482 = vmatprep.subr.mxu0 0.0
      %1483 = vmatpush1.msra.mxu0 0.0
      %1484 = vmatprep.subr.mxu0 0.0
      %1485 = vmatpush1.msra.mxu0 0.0
      %1486 = vmatprep.subr.mxu0 0.0
      %1487 = vmatpush1.msra.mxu0 0.0
      %1488 = vmatprep.subr.mxu0 0.0
      %1489 = vmatpush1.msra.mxu0 0.0
      %1490 = vmatprep.subr.mxu0 0.0
      %1491 = vmatpush1.msra.mxu0 0.0
      %1492 = vmatprep.subr.mxu0 0.0
      %1493 = vmatpush1.msra.mxu0 0.0
      %1494 = vmatprep.subr.mxu0 0.0
      %1495 = vmatpush1.msra.mxu0 0.0
      %1496 = vmatprep.subr.mxu0 0.0
      %1497 = vmatpush1.msra.mxu0 0.0
      %1498 = vmatprep.subr.mxu0 0.0
      %1499 = vmatpush1.msra.mxu0 0.0
      %1500 = vmatprep.subr.mxu0 0.0
      %1501 = vmatpush1.msra.mxu0 0.0
      %1502 = vmatprep.subr.mxu0 0.0
      %1503 = vmatpush1.msra.mxu0 0.0
      %1504 = vmatprep.subr.mxu0 0.0
      %1505 = vmatpush1.msra.mxu0 0.0
      %1506 = vmatprep.subr.mxu0 0.0
      %1507 = vmatpush1.msra.mxu0 0.0
      %1508 = vmatprep.subr.mxu0 0.0
      %1509 = vmatpush1.msra.mxu0 0.0
      %1510 = vmatprep.subr.mxu0 0.0
      %1511 = vmatpush1.msra.mxu0 0.0
      %1512 = vmatprep.subr.mxu0 0.0
      %1513 = vmatpush1.msra.mxu0 0.0
      %1514 = vmatprep.subr.mxu0 0.0
      %1515 = vmatpush1.msra.mxu0 0.0
      %1516 = vmatprep.mubr.f32.mxu0 0.0
      %1517 = vmatmul.mubr.f32.gmra.mrb[0].mxu0 %v297
      %v1518 = vpop.f32.mrb[0].mxu0
      %v1519 = vadd.f32 0.0, %v1518
      %v1520 = vpop.f32.mrb[0].mxu0
      %1521 = vmatprep.mubr.f32.mxu0 0.0
      %1522 = vmatmul.mubr.f32.gmra.mrb[0].mxu0 %v300
      %v1523 = vpop.f32.mrb[0].mxu0
      %v1524 = vadd.f32 0.0, %v1523
      %v1525 = vpop.f32.mrb[0].mxu0
      %1526 = vmatprep.mubr.f32.mxu0 0.0
      %1527 = vmatmul.mubr.f32.gmra.mrb[0].mxu0 %v303
      %v1528 = vpop.f32.mrb[0].mxu0
      %v1529 = vadd.f32 0.0, %v1528
      %v1530 = vpop.f32.mrb[0].mxu0
      %1531 = vmatprep.mubr.f32.mxu0 0.0
      %1532 = vmatmul.mubr.f32.gmra.mrb[0].mxu0 %v306
      %v1533 = vpop.f32.mrb[0].mxu0
      %v1534 = vpop.f32.mrb[0].mxu0
      %1535 = vmatprep.mubr.f32.mxu0 0.0
      %1536 = vmatmul.mubr.f32.gmra.mrb[0].mxu0 %v309
      %v1537 = vpop.f32.mrb[0].mxu0
      %v1538 = vpop.f32.mrb[0].mxu0
      %1539 = vmatprep.mubr.f32.mxu0 0.0
      %1540 = vmatmul.mubr.f32.gmra.mrb[0].mxu0 %v312
      %v1541 = vpop.f32.mrb[0].mxu0
      %v1542 = vpop.f32.mrb[0].mxu0
      %1543 = vmatprep.mubr.f32.mxu0 0.0
      %1544 = vmatmul.mubr.f32.gmra.mrb[0].mxu0 %v315
      %v1545 = vpop.f32.mrb[0].mxu0
      %v1546 = vadd.f32 0.0, %v1545
      %v1547 = vpop.f32.mrb[0].mxu0
      %1548 = vmatprep.mubr.f32.mxu0 0.0
      %1549 = vmatmul.mubr.f32.gmra.mrb[0].mxu0 %v318
      %v1550 = vpop.f32.mrb[0].mxu0
      %v1551 = vadd.f32 0.0, %v1550
      %v1552 = vpop.f32.mrb[0].mxu0
      %1553 = vmatprep.mubr.f32.mxu0 0.0
      %1554 = vmatmul.mubr.f32.gmra.mrb[0].mxu0 %v321
      %v1555 = vpop.f32.mrb[0].mxu0
      %v1556 = vadd.f32 0.0, %v1555
      %v1557 = vpop.f32.mrb[0].mxu0
      %1558 = vmatprep.mubr.f32.mxu0 0.0
      %1559 = vmatmul.mubr.f32.gmra.mrb[0].mxu0 %v324
      %v1560 = vpop.f32.mrb[0].mxu0
      %v1561 = vadd.f32 0.0, %v1560
      %v1562 = vpop.f32.mrb[0].mxu0
      %1563 = vmatprep.mubr.f32.mxu0 0.0
      %1564 = vmatmul.mubr.f32.gmra.mrb[0].mxu0 %v327
      %v1565 = vpop.f32.mrb[0].mxu0
      %v1566 = vadd.f32 0.0, %v1565
      %v1567 = vpop.f32.mrb[0].mxu0
      %1568 = vmatprep.mubr.f32.mxu0 0.0
      %1569 = vmatmul.mubr.f32.gmra.mrb[0].mxu0 %v330
      %v1570 = vpop.f32.mrb[0].mxu0
      %v1571 = vadd.f32 0.0, %v1570
      %v1572 = vpop.f32.mrb[0].mxu0
      %1573 = vdwg.mxu0
      %s1574 = sadd.s32 %s264, 9
      %s1575 = scalar_lea.vmem %s239, %s1574
      %v1576 = vld [vmem:[%s1575] sm:$0x1]
      %v1577 = vld [vmem:[%s1575 + $0x18] sm:$0x1]
      %v1578 = vld [vmem:[%s1575 + $0x30] sm:$0x1]
      %v1579 = vld [vmem:[%s1575 + $0x48] sm:$0x1]
      %v1584 = vrot.slane %v1577, 7
      %v1585 = vsel %vm287, %v1584, %v1576
      %v1586 = vrot.slane %v1578, 6
      %v1587 = vsel %vm290, %v1586, %v1585
      %v1588 = vrot.slane %v1579, 5
      %v1589 = vsel %vm293, %v1588, %v1587
      %v1590 = vsel %vm332, %v1589, 0
      %1592 = vmatprep.subr.mxu0 0.0
      %1593 = vmatpush1.msra.mxu0 %v1590
      %1594 = vmatprep.subr.mxu0 0.0
      %1595 = vmatpush1.msra.mxu0 0.0
      %1596 = vmatprep.subr.mxu0 0.0
      %1597 = vmatpush1.msra.mxu0 0.0
      %1598 = vmatprep.subr.mxu0 0.0
      %1599 = vmatpush1.msra.mxu0 0.0
      %1600 = vmatprep.subr.mxu0 0.0
      %1601 = vmatpush1.msra.mxu0 0.0
      %1602 = vmatprep.subr.mxu0 0.0
      %1603 = vmatpush1.msra.mxu0 0.0
      %1604 = vmatprep.subr.mxu0 0.0
      %1605 = vmatpush1.msra.mxu0 0.0
      %1606 = vmatprep.subr.mxu0 0.0
      %1607 = vmatpush1.msra.mxu0 0.0
      %1608 = vmatprep.subr.mxu0 0.0
      %1609 = vmatpush1.msra.mxu0 0.0
      %1610 = vmatprep.subr.mxu0 0.0
      %1611 = vmatpush1.msra.mxu0 0.0
      %1612 = vmatprep.subr.mxu0 0.0
      %1613 = vmatpush1.msra.mxu0 0.0
      %1614 = vmatprep.subr.mxu0 0.0
      %1615 = vmatpush1.msra.mxu0 0.0
      %1616 = vmatprep.subr.mxu0 0.0
      %1617 = vmatpush1.msra.mxu0 0.0
      %1618 = vmatprep.subr.mxu0 0.0
      %1619 = vmatpush1.msra.mxu0 0.0
      %1620 = vmatprep.subr.mxu0 0.0
      %1621 = vmatpush1.msra.mxu0 0.0
      %1622 = vmatprep.subr.mxu0 0.0
      %1623 = vmatpush1.msra.mxu0 0.0
      %1624 = vmatprep.subr.mxu0 0.0
      %1625 = vmatpush1.msra.mxu0 0.0
      %1626 = vmatprep.subr.mxu0 0.0
      %1627 = vmatpush1.msra.mxu0 0.0
      %1628 = vmatprep.subr.mxu0 0.0
      %1629 = vmatpush1.msra.mxu0 0.0
      %1630 = vmatprep.subr.mxu0 0.0
      %1631 = vmatpush1.msra.mxu0 0.0
      %1632 = vmatprep.subr.mxu0 0.0
      %1633 = vmatpush1.msra.mxu0 0.0
      %1634 = vmatprep.subr.mxu0 0.0
      %1635 = vmatpush1.msra.mxu0 0.0
      %1636 = vmatprep.subr.mxu0 0.0
      %1637 = vmatpush1.msra.mxu0 0.0
      %1638 = vmatprep.subr.mxu0 0.0
      %1639 = vmatpush1.msra.mxu0 0.0
      %1640 = vmatprep.subr.mxu0 0.0
      %1641 = vmatpush1.msra.mxu0 0.0
      %1642 = vmatprep.subr.mxu0 0.0
      %1643 = vmatpush1.msra.mxu0 0.0
      %1644 = vmatprep.subr.mxu0 0.0
      %1645 = vmatpush1.msra.mxu0 0.0
      %1646 = vmatprep.subr.mxu0 0.0
      %1647 = vmatpush1.msra.mxu0 0.0
      %1648 = vmatprep.subr.mxu0 0.0
      %1649 = vmatpush1.msra.mxu0 0.0
      %1650 = vmatprep.subr.mxu0 0.0
      %1651 = vmatpush1.msra.mxu0 0.0
      %1652 = vmatprep.subr.mxu0 0.0
      %1653 = vmatpush1.msra.mxu0 0.0
      %1654 = vmatprep.subr.mxu0 0.0
      %1655 = vmatpush1.msra.mxu0 0.0
      %1656 = vmatprep.mubr.f32.mxu0 0.0
      %1657 = vmatmul.mubr.f32.gmra.mrb[0].mxu0 %v297
      %v1658 = vpop.f32.mrb[0].mxu0
      %v1659 = vadd.f32 0.0, %v1658
      %v1660 = vpop.f32.mrb[0].mxu0
      %1661 = vmatprep.mubr.f32.mxu0 0.0
      %1662 = vmatmul.mubr.f32.gmra.mrb[0].mxu0 %v300
      %v1663 = vpop.f32.mrb[0].mxu0
      %v1664 = vadd.f32 0.0, %v1663
      %v1665 = vpop.f32.mrb[0].mxu0
      %1666 = vmatprep.mubr.f32.mxu0 0.0
      %1667 = vmatmul.mubr.f32.gmra.mrb[0].mxu0 %v303
      %v1668 = vpop.f32.mrb[0].mxu0
      %v1669 = vadd.f32 0.0, %v1668
      %v1670 = vpop.f32.mrb[0].mxu0
      %1671 = vmatprep.mubr.f32.mxu0 0.0
      %1672 = vmatmul.mubr.f32.gmra.mrb[0].mxu0 %v306
      %v1673 = vpop.f32.mrb[0].mxu0
      %v1674 = vpop.f32.mrb[0].mxu0
      %1675 = vmatprep.mubr.f32.mxu0 0.0
      %1676 = vmatmul.mubr.f32.gmra.mrb[0].mxu0 %v309
      %v1677 = vpop.f32.mrb[0].mxu0
      %v1678 = vpop.f32.mrb[0].mxu0
      %1679 = vmatprep.mubr.f32.mxu0 0.0
      %1680 = vmatmul.mubr.f32.gmra.mrb[0].mxu0 %v312
      %v1681 = vpop.f32.mrb[0].mxu0
      %v1682 = vpop.f32.mrb[0].mxu0
      %1683 = vmatprep.mubr.f32.mxu0 0.0
      %1684 = vmatmul.mubr.f32.gmra.mrb[0].mxu0 %v315
      %v1685 = vpop.f32.mrb[0].mxu0
      %v1686 = vadd.f32 0.0, %v1685
      %v1687 = vpop.f32.mrb[0].mxu0
      %1688 = vmatprep.mubr.f32.mxu0 0.0
      %1689 = vmatmul.mubr.f32.gmra.mrb[0].mxu0 %v318
      %v1690 = vpop.f32.mrb[0].mxu0
      %v1691 = vadd.f32 0.0, %v1690
      %v1692 = vpop.f32.mrb[0].mxu0
      %1693 = vmatprep.mubr.f32.mxu0 0.0
      %1694 = vmatmul.mubr.f32.gmra.mrb[0].mxu0 %v321
      %v1695 = vpop.f32.mrb[0].mxu0
      %v1696 = vadd.f32 0.0, %v1695
      %v1697 = vpop.f32.mrb[0].mxu0
      %1698 = vmatprep.mubr.f32.mxu0 0.0
      %1699 = vmatmul.mubr.f32.gmra.mrb[0].mxu0 %v324
      %v1700 = vpop.f32.mrb[0].mxu0
      %v1701 = vadd.f32 0.0, %v1700
      %v1702 = vpop.f32.mrb[0].mxu0
      %1703 = vmatprep.mubr.f32.mxu0 0.0
      %1704 = vmatmul.mubr.f32.gmra.mrb[0].mxu0 %v327
      %v1705 = vpop.f32.mrb[0].mxu0
      %v1706 = vadd.f32 0.0, %v1705
      %v1707 = vpop.f32.mrb[0].mxu0
      %1708 = vmatprep.mubr.f32.mxu0 0.0
      %1709 = vmatmul.mubr.f32.gmra.mrb[0].mxu0 %v330
      %v1710 = vpop.f32.mrb[0].mxu0
      %v1711 = vadd.f32 0.0, %v1710
      %v1712 = vpop.f32.mrb[0].mxu0
      %1713 = vdwg.mxu0
      %s1714 = sadd.s32 %s264, 10
      %s1715 = scalar_lea.vmem %s239, %s1714
      %v1716 = vld [vmem:[%s1715] sm:$0x1]
      %v1717 = vld [vmem:[%s1715 + $0x18] sm:$0x1]
      %v1718 = vld [vmem:[%s1715 + $0x30] sm:$0x1]
      %v1719 = vld [vmem:[%s1715 + $0x48] sm:$0x1]
      %v1724 = vrot.slane %v1717, 7
      %v1725 = vsel %vm287, %v1724, %v1716
      %v1726 = vrot.slane %v1718, 6
      %v1727 = vsel %vm290, %v1726, %v1725
      %v1728 = vrot.slane %v1719, 5
      %v1729 = vsel %vm293, %v1728, %v1727
      %v1730 = vsel %vm332, %v1729, 0
      %1732 = vmatprep.subr.mxu0 0.0
      %1733 = vmatpush1.msra.mxu0 %v1730
      %1734 = vmatprep.subr.mxu0 0.0
      %1735 = vmatpush1.msra.mxu0 0.0
      %1736 = vmatprep.subr.mxu0 0.0
      %1737 = vmatpush1.msra.mxu0 0.0
      %1738 = vmatprep.subr.mxu0 0.0
      %1739 = vmatpush1.msra.mxu0 0.0
      %1740 = vmatprep.subr.mxu0 0.0
      %1741 = vmatpush1.msra.mxu0 0.0
      %1742 = vmatprep.subr.mxu0 0.0
      %1743 = vmatpush1.msra.mxu0 0.0
      %1744 = vmatprep.subr.mxu0 0.0
      %1745 = vmatpush1.msra.mxu0 0.0
      %1746 = vmatprep.subr.mxu0 0.0
      %1747 = vmatpush1.msra.mxu0 0.0
      %1748 = vmatprep.subr.mxu0 0.0
      %1749 = vmatpush1.msra.mxu0 0.0
      %1750 = vmatprep.subr.mxu0 0.0
      %1751 = vmatpush1.msra.mxu0 0.0
      %1752 = vmatprep.subr.mxu0 0.0
      %1753 = vmatpush1.msra.mxu0 0.0
      %1754 = vmatprep.subr.mxu0 0.0
      %1755 = vmatpush1.msra.mxu0 0.0
      %1756 = vmatprep.subr.mxu0 0.0
      %1757 = vmatpush1.msra.mxu0 0.0
      %1758 = vmatprep.subr.mxu0 0.0
      %1759 = vmatpush1.msra.mxu0 0.0
      %1760 = vmatprep.subr.mxu0 0.0
      %1761 = vmatpush1.msra.mxu0 0.0
      %1762 = vmatprep.subr.mxu0 0.0
      %1763 = vmatpush1.msra.mxu0 0.0
      %1764 = vmatprep.subr.mxu0 0.0
      %1765 = vmatpush1.msra.mxu0 0.0
      %1766 = vmatprep.subr.mxu0 0.0
      %1767 = vmatpush1.msra.mxu0 0.0
      %1768 = vmatprep.subr.mxu0 0.0
      %1769 = vmatpush1.msra.mxu0 0.0
      %1770 = vmatprep.subr.mxu0 0.0
      %1771 = vmatpush1.msra.mxu0 0.0
      %1772 = vmatprep.subr.mxu0 0.0
      %1773 = vmatpush1.msra.mxu0 0.0
      %1774 = vmatprep.subr.mxu0 0.0
      %1775 = vmatpush1.msra.mxu0 0.0
      %1776 = vmatprep.subr.mxu0 0.0
      %1777 = vmatpush1.msra.mxu0 0.0
      %1778 = vmatprep.subr.mxu0 0.0
      %1779 = vmatpush1.msra.mxu0 0.0
      %1780 = vmatprep.subr.mxu0 0.0
      %1781 = vmatpush1.msra.mxu0 0.0
      %1782 = vmatprep.subr.mxu0 0.0
      %1783 = vmatpush1.msra.mxu0 0.0
      %1784 = vmatprep.subr.mxu0 0.0
      %1785 = vmatpush1.msra.mxu0 0.0
      %1786 = vmatprep.subr.mxu0 0.0
      %1787 = vmatpush1.msra.mxu0 0.0
      %1788 = vmatprep.subr.mxu0 0.0
      %1789 = vmatpush1.msra.mxu0 0.0
      %1790 = vmatprep.subr.mxu0 0.0
      %1791 = vmatpush1.msra.mxu0 0.0
      %1792 = vmatprep.subr.mxu0 0.0
      %1793 = vmatpush1.msra.mxu0 0.0
      %1794 = vmatprep.subr.mxu0 0.0
      %1795 = vmatpush1.msra.mxu0 0.0
      %1796 = vmatprep.mubr.f32.mxu0 0.0
      %1797 = vmatmul.mubr.f32.gmra.mrb[0].mxu0 %v297
      %v1798 = vpop.f32.mrb[0].mxu0
      %v1799 = vadd.f32 0.0, %v1798
      %v1800 = vpop.f32.mrb[0].mxu0
      %1801 = vmatprep.mubr.f32.mxu0 0.0
      %1802 = vmatmul.mubr.f32.gmra.mrb[0].mxu0 %v300
      %v1803 = vpop.f32.mrb[0].mxu0
      %v1804 = vadd.f32 0.0, %v1803
      %v1805 = vpop.f32.mrb[0].mxu0
      %1806 = vmatprep.mubr.f32.mxu0 0.0
      %1807 = vmatmul.mubr.f32.gmra.mrb[0].mxu0 %v303
      %v1808 = vpop.f32.mrb[0].mxu0
      %v1809 = vadd.f32 0.0, %v1808
      %v1810 = vpop.f32.mrb[0].mxu0
      %1811 = vmatprep.mubr.f32.mxu0 0.0
      %1812 = vmatmul.mubr.f32.gmra.mrb[0].mxu0 %v306
      %v1813 = vpop.f32.mrb[0].mxu0
      %v1814 = vpop.f32.mrb[0].mxu0
      %1815 = vmatprep.mubr.f32.mxu0 0.0
      %1816 = vmatmul.mubr.f32.gmra.mrb[0].mxu0 %v309
      %v1817 = vpop.f32.mrb[0].mxu0
      %v1818 = vpop.f32.mrb[0].mxu0
      %1819 = vmatprep.mubr.f32.mxu0 0.0
      %1820 = vmatmul.mubr.f32.gmra.mrb[0].mxu0 %v312
      %v1821 = vpop.f32.mrb[0].mxu0
      %v1822 = vpop.f32.mrb[0].mxu0
      %1823 = vmatprep.mubr.f32.mxu0 0.0
      %1824 = vmatmul.mubr.f32.gmra.mrb[0].mxu0 %v315
      %v1825 = vpop.f32.mrb[0].mxu0
      %v1826 = vadd.f32 0.0, %v1825
      %v1827 = vpop.f32.mrb[0].mxu0
      %1828 = vmatprep.mubr.f32.mxu0 0.0
      %1829 = vmatmul.mubr.f32.gmra.mrb[0].mxu0 %v318
      %v1830 = vpop.f32.mrb[0].mxu0
      %v1831 = vadd.f32 0.0, %v1830
      %v1832 = vpop.f32.mrb[0].mxu0
      %1833 = vmatprep.mubr.f32.mxu0 0.0
      %1834 = vmatmul.mubr.f32.gmra.mrb[0].mxu0 %v321
      %v1835 = vpop.f32.mrb[0].mxu0
      %v1836 = vadd.f32 0.0, %v1835
      %v1837 = vpop.f32.mrb[0].mxu0
      %1838 = vmatprep.mubr.f32.mxu0 0.0
      %1839 = vmatmul.mubr.f32.gmra.mrb[0].mxu0 %v324
      %v1840 = vpop.f32.mrb[0].mxu0
      %v1841 = vadd.f32 0.0, %v1840
      %v1842 = vpop.f32.mrb[0].mxu0
      %1843 = vmatprep.mubr.f32.mxu0 0.0
      %1844 = vmatmul.mubr.f32.gmra.mrb[0].mxu0 %v327
      %v1845 = vpop.f32.mrb[0].mxu0
      %v1846 = vadd.f32 0.0, %v1845
      %v1847 = vpop.f32.mrb[0].mxu0
      %1848 = vmatprep.mubr.f32.mxu0 0.0
      %1849 = vmatmul.mubr.f32.gmra.mrb[0].mxu0 %v330
      %v1850 = vpop.f32.mrb[0].mxu0
      %v1851 = vadd.f32 0.0, %v1850
      %v1852 = vpop.f32.mrb[0].mxu0
      %1853 = vdwg.mxu0
      %s1854 = sadd.s32 %s264, 11
      %s1855 = scalar_lea.vmem %s239, %s1854
      %v1856 = vld [vmem:[%s1855] sm:$0x1]
      %v1857 = vld [vmem:[%s1855 + $0x18] sm:$0x1]
      %v1858 = vld [vmem:[%s1855 + $0x30] sm:$0x1]
      %v1859 = vld [vmem:[%s1855 + $0x48] sm:$0x1]
      %v1864 = vrot.slane %v1857, 7
      %v1865 = vsel %vm287, %v1864, %v1856
      %v1866 = vrot.slane %v1858, 6
      %v1867 = vsel %vm290, %v1866, %v1865
      %v1868 = vrot.slane %v1859, 5
      %v1869 = vsel %vm293, %v1868, %v1867
      %v1870 = vsel %vm332, %v1869, 0
      %1872 = vmatprep.subr.mxu0 0.0
      %1873 = vmatpush1.msra.mxu0 %v1870
      %1874 = vmatprep.subr.mxu0 0.0
      %1875 = vmatpush1.msra.mxu0 0.0
      %1876 = vmatprep.subr.mxu0 0.0
      %1877 = vmatpush1.msra.mxu0 0.0
      %1878 = vmatprep.subr.mxu0 0.0
      %1879 = vmatpush1.msra.mxu0 0.0
      %1880 = vmatprep.subr.mxu0 0.0
      %1881 = vmatpush1.msra.mxu0 0.0
      %1882 = vmatprep.subr.mxu0 0.0
      %1883 = vmatpush1.msra.mxu0 0.0
      %1884 = vmatprep.subr.mxu0 0.0
      %1885 = vmatpush1.msra.mxu0 0.0
      %1886 = vmatprep.subr.mxu0 0.0
      %1887 = vmatpush1.msra.mxu0 0.0
      %1888 = vmatprep.subr.mxu0 0.0
      %1889 = vmatpush1.msra.mxu0 0.0
      %1890 = vmatprep.subr.mxu0 0.0
      %1891 = vmatpush1.msra.mxu0 0.0
      %1892 = vmatprep.subr.mxu0 0.0
      %1893 = vmatpush1.msra.mxu0 0.0
      %1894 = vmatprep.subr.mxu0 0.0
      %1895 = vmatpush1.msra.mxu0 0.0
      %1896 = vmatprep.subr.mxu0 0.0
      %1897 = vmatpush1.msra.mxu0 0.0
      %1898 = vmatprep.subr.mxu0 0.0
      %1899 = vmatpush1.msra.mxu0 0.0
      %1900 = vmatprep.subr.mxu0 0.0
      %1901 = vmatpush1.msra.mxu0 0.0
      %1902 = vmatprep.subr.mxu0 0.0
      %1903 = vmatpush1.msra.mxu0 0.0
      %1904 = vmatprep.subr.mxu0 0.0
      %1905 = vmatpush1.msra.mxu0 0.0
      %1906 = vmatprep.subr.mxu0 0.0
      %1907 = vmatpush1.msra.mxu0 0.0
      %1908 = vmatprep.subr.mxu0 0.0
      %1909 = vmatpush1.msra.mxu0 0.0
      %1910 = vmatprep.subr.mxu0 0.0
      %1911 = vmatpush1.msra.mxu0 0.0
      %1912 = vmatprep.subr.mxu0 0.0
      %1913 = vmatpush1.msra.mxu0 0.0
      %1914 = vmatprep.subr.mxu0 0.0
      %1915 = vmatpush1.msra.mxu0 0.0
      %1916 = vmatprep.subr.mxu0 0.0
      %1917 = vmatpush1.msra.mxu0 0.0
      %1918 = vmatprep.subr.mxu0 0.0
      %1919 = vmatpush1.msra.mxu0 0.0
      %1920 = vmatprep.subr.mxu0 0.0
      %1921 = vmatpush1.msra.mxu0 0.0
      %1922 = vmatprep.subr.mxu0 0.0
      %1923 = vmatpush1.msra.mxu0 0.0
      %1924 = vmatprep.subr.mxu0 0.0
      %1925 = vmatpush1.msra.mxu0 0.0
      %1926 = vmatprep.subr.mxu0 0.0
      %1927 = vmatpush1.msra.mxu0 0.0
      %1928 = vmatprep.subr.mxu0 0.0
      %1929 = vmatpush1.msra.mxu0 0.0
      %1930 = vmatprep.subr.mxu0 0.0
      %1931 = vmatpush1.msra.mxu0 0.0
      %1932 = vmatprep.subr.mxu0 0.0
      %1933 = vmatpush1.msra.mxu0 0.0
      %1934 = vmatprep.subr.mxu0 0.0
      %1935 = vmatpush1.msra.mxu0 0.0
      %1936 = vmatprep.mubr.f32.mxu0 0.0
      %1937 = vmatmul.mubr.f32.gmra.mrb[0].mxu0 %v297
      %v1938 = vpop.f32.mrb[0].mxu0
      %v1939 = vadd.f32 0.0, %v1938
      %v1940 = vpop.f32.mrb[0].mxu0
      %1941 = vmatprep.mubr.f32.mxu0 0.0
      %1942 = vmatmul.mubr.f32.gmra.mrb[0].mxu0 %v300
      %v1943 = vpop.f32.mrb[0].mxu0
      %v1944 = vadd.f32 0.0, %v1943
      %v1945 = vpop.f32.mrb[0].mxu0
      %1946 = vmatprep.mubr.f32.mxu0 0.0
      %1947 = vmatmul.mubr.f32.gmra.mrb[0].mxu0 %v303
      %v1948 = vpop.f32.mrb[0].mxu0
      %v1949 = vadd.f32 0.0, %v1948
      %v1950 = vpop.f32.mrb[0].mxu0
      %1951 = vmatprep.mubr.f32.mxu0 0.0
      %1952 = vmatmul.mubr.f32.gmra.mrb[0].mxu0 %v306
      %v1953 = vpop.f32.mrb[0].mxu0
      %v1954 = vpop.f32.mrb[0].mxu0
      %1955 = vmatprep.mubr.f32.mxu0 0.0
      %1956 = vmatmul.mubr.f32.gmra.mrb[0].mxu0 %v309
      %v1957 = vpop.f32.mrb[0].mxu0
      %v1958 = vpop.f32.mrb[0].mxu0
      %1959 = vmatprep.mubr.f32.mxu0 0.0
      %1960 = vmatmul.mubr.f32.gmra.mrb[0].mxu0 %v312
      %v1961 = vpop.f32.mrb[0].mxu0
      %v1962 = vpop.f32.mrb[0].mxu0
      %1963 = vmatprep.mubr.f32.mxu0 0.0
      %1964 = vmatmul.mubr.f32.gmra.mrb[0].mxu0 %v315
      %v1965 = vpop.f32.mrb[0].mxu0
      %v1966 = vadd.f32 0.0, %v1965
      %v1967 = vpop.f32.mrb[0].mxu0
      %1968 = vmatprep.mubr.f32.mxu0 0.0
      %1969 = vmatmul.mubr.f32.gmra.mrb[0].mxu0 %v318
      %v1970 = vpop.f32.mrb[0].mxu0
      %v1971 = vadd.f32 0.0, %v1970
      %v1972 = vpop.f32.mrb[0].mxu0
      %1973 = vmatprep.mubr.f32.mxu0 0.0
      %1974 = vmatmul.mubr.f32.gmra.mrb[0].mxu0 %v321
      %v1975 = vpop.f32.mrb[0].mxu0
      %v1976 = vadd.f32 0.0, %v1975
      %v1977 = vpop.f32.mrb[0].mxu0
      %1978 = vmatprep.mubr.f32.mxu0 0.0
      %1979 = vmatmul.mubr.f32.gmra.mrb[0].mxu0 %v324
      %v1980 = vpop.f32.mrb[0].mxu0
      %v1981 = vadd.f32 0.0, %v1980
      %v1982 = vpop.f32.mrb[0].mxu0
      %1983 = vmatprep.mubr.f32.mxu0 0.0
      %1984 = vmatmul.mubr.f32.gmra.mrb[0].mxu0 %v327
      %v1985 = vpop.f32.mrb[0].mxu0
      %v1986 = vadd.f32 0.0, %v1985
      %v1987 = vpop.f32.mrb[0].mxu0
      %1988 = vmatprep.mubr.f32.mxu0 0.0
      %1989 = vmatmul.mubr.f32.gmra.mrb[0].mxu0 %v330
      %v1990 = vpop.f32.mrb[0].mxu0
      %v1991 = vadd.f32 0.0, %v1990
      %v1992 = vpop.f32.mrb[0].mxu0
      %1993 = vdwg.mxu0
      %s1994 = sadd.s32 %s264, 12
      %s1995 = scalar_lea.vmem %s239, %s1994
      %v1996 = vld [vmem:[%s1995] sm:$0x1]
      %v1997 = vld [vmem:[%s1995 + $0x18] sm:$0x1]
      %v1998 = vld [vmem:[%s1995 + $0x30] sm:$0x1]
      %v1999 = vld [vmem:[%s1995 + $0x48] sm:$0x1]
      %v2004 = vrot.slane %v1997, 7
      %v2005 = vsel %vm287, %v2004, %v1996
      %v2006 = vrot.slane %v1998, 6
      %v2007 = vsel %vm290, %v2006, %v2005
      %v2008 = vrot.slane %v1999, 5
      %v2009 = vsel %vm293, %v2008, %v2007
      %v2010 = vsel %vm332, %v2009, 0
      %2012 = vmatprep.subr.mxu0 0.0
      %2013 = vmatpush1.msra.mxu0 %v2010
      %2014 = vmatprep.subr.mxu0 0.0
      %2015 = vmatpush1.msra.mxu0 0.0
      %2016 = vmatprep.subr.mxu0 0.0
      %2017 = vmatpush1.msra.mxu0 0.0
      %2018 = vmatprep.subr.mxu0 0.0
      %2019 = vmatpush1.msra.mxu0 0.0
      %2020 = vmatprep.subr.mxu0 0.0
      %2021 = vmatpush1.msra.mxu0 0.0
      %2022 = vmatprep.subr.mxu0 0.0
      %2023 = vmatpush1.msra.mxu0 0.0
      %2024 = vmatprep.subr.mxu0 0.0
      %2025 = vmatpush1.msra.mxu0 0.0
      %2026 = vmatprep.subr.mxu0 0.0
      %2027 = vmatpush1.msra.mxu0 0.0
      %2028 = vmatprep.subr.mxu0 0.0
      %2029 = vmatpush1.msra.mxu0 0.0
      %2030 = vmatprep.subr.mxu0 0.0
      %2031 = vmatpush1.msra.mxu0 0.0
      %2032 = vmatprep.subr.mxu0 0.0
      %2033 = vmatpush1.msra.mxu0 0.0
      %2034 = vmatprep.subr.mxu0 0.0
      %2035 = vmatpush1.msra.mxu0 0.0
      %2036 = vmatprep.subr.mxu0 0.0
      %2037 = vmatpush1.msra.mxu0 0.0
      %2038 = vmatprep.subr.mxu0 0.0
      %2039 = vmatpush1.msra.mxu0 0.0
      %2040 = vmatprep.subr.mxu0 0.0
      %2041 = vmatpush1.msra.mxu0 0.0
      %2042 = vmatprep.subr.mxu0 0.0
      %2043 = vmatpush1.msra.mxu0 0.0
      %2044 = vmatprep.subr.mxu0 0.0
      %2045 = vmatpush1.msra.mxu0 0.0
      %2046 = vmatprep.subr.mxu0 0.0
      %2047 = vmatpush1.msra.mxu0 0.0
      %2048 = vmatprep.subr.mxu0 0.0
      %2049 = vmatpush1.msra.mxu0 0.0
      %2050 = vmatprep.subr.mxu0 0.0
      %2051 = vmatpush1.msra.mxu0 0.0
      %2052 = vmatprep.subr.mxu0 0.0
      %2053 = vmatpush1.msra.mxu0 0.0
      %2054 = vmatprep.subr.mxu0 0.0
      %2055 = vmatpush1.msra.mxu0 0.0
      %2056 = vmatprep.subr.mxu0 0.0
      %2057 = vmatpush1.msra.mxu0 0.0
      %2058 = vmatprep.subr.mxu0 0.0
      %2059 = vmatpush1.msra.mxu0 0.0
      %2060 = vmatprep.subr.mxu0 0.0
      %2061 = vmatpush1.msra.mxu0 0.0
      %2062 = vmatprep.subr.mxu0 0.0
      %2063 = vmatpush1.msra.mxu0 0.0
      %2064 = vmatprep.subr.mxu0 0.0
      %2065 = vmatpush1.msra.mxu0 0.0
      %2066 = vmatprep.subr.mxu0 0.0
      %2067 = vmatpush1.msra.mxu0 0.0
      %2068 = vmatprep.subr.mxu0 0.0
      %2069 = vmatpush1.msra.mxu0 0.0
      %2070 = vmatprep.subr.mxu0 0.0
      %2071 = vmatpush1.msra.mxu0 0.0
      %2072 = vmatprep.subr.mxu0 0.0
      %2073 = vmatpush1.msra.mxu0 0.0
      %2074 = vmatprep.subr.mxu0 0.0
      %2075 = vmatpush1.msra.mxu0 0.0
      %2076 = vmatprep.mubr.f32.mxu0 0.0
      %2077 = vmatmul.mubr.f32.gmra.mrb[0].mxu0 %v297
      %v2078 = vpop.f32.mrb[0].mxu0
      %v2079 = vadd.f32 0.0, %v2078
      %v2080 = vpop.f32.mrb[0].mxu0
      %2081 = vmatprep.mubr.f32.mxu0 0.0
      %2082 = vmatmul.mubr.f32.gmra.mrb[0].mxu0 %v300
      %v2083 = vpop.f32.mrb[0].mxu0
      %v2084 = vadd.f32 0.0, %v2083
      %v2085 = vpop.f32.mrb[0].mxu0
      %2086 = vmatprep.mubr.f32.mxu0 0.0
      %2087 = vmatmul.mubr.f32.gmra.mrb[0].mxu0 %v303
      %v2088 = vpop.f32.mrb[0].mxu0
      %v2089 = vadd.f32 0.0, %v2088
      %v2090 = vpop.f32.mrb[0].mxu0
      %2091 = vmatprep.mubr.f32.mxu0 0.0
      %2092 = vmatmul.mubr.f32.gmra.mrb[0].mxu0 %v306
      %v2093 = vpop.f32.mrb[0].mxu0
      %v2094 = vpop.f32.mrb[0].mxu0
      %2095 = vmatprep.mubr.f32.mxu0 0.0
      %2096 = vmatmul.mubr.f32.gmra.mrb[0].mxu0 %v309
      %v2097 = vpop.f32.mrb[0].mxu0
      %v2098 = vpop.f32.mrb[0].mxu0
      %2099 = vmatprep.mubr.f32.mxu0 0.0
      %2100 = vmatmul.mubr.f32.gmra.mrb[0].mxu0 %v312
      %v2101 = vpop.f32.mrb[0].mxu0
      %v2102 = vpop.f32.mrb[0].mxu0
      %2103 = vmatprep.mubr.f32.mxu0 0.0
      %2104 = vmatmul.mubr.f32.gmra.mrb[0].mxu0 %v315
      %v2105 = vpop.f32.mrb[0].mxu0
      %v2106 = vadd.f32 0.0, %v2105
      %v2107 = vpop.f32.mrb[0].mxu0
      %2108 = vmatprep.mubr.f32.mxu0 0.0
      %2109 = vmatmul.mubr.f32.gmra.mrb[0].mxu0 %v318
      %v2110 = vpop.f32.mrb[0].mxu0
      %v2111 = vadd.f32 0.0, %v2110
      %v2112 = vpop.f32.mrb[0].mxu0
      %2113 = vmatprep.mubr.f32.mxu0 0.0
      %2114 = vmatmul.mubr.f32.gmra.mrb[0].mxu0 %v321
      %v2115 = vpop.f32.mrb[0].mxu0
      %v2116 = vadd.f32 0.0, %v2115
      %v2117 = vpop.f32.mrb[0].mxu0
      %2118 = vmatprep.mubr.f32.mxu0 0.0
      %2119 = vmatmul.mubr.f32.gmra.mrb[0].mxu0 %v324
      %v2120 = vpop.f32.mrb[0].mxu0
      %v2121 = vadd.f32 0.0, %v2120
      %v2122 = vpop.f32.mrb[0].mxu0
      %2123 = vmatprep.mubr.f32.mxu0 0.0
      %2124 = vmatmul.mubr.f32.gmra.mrb[0].mxu0 %v327
      %v2125 = vpop.f32.mrb[0].mxu0
      %v2126 = vadd.f32 0.0, %v2125
      %v2127 = vpop.f32.mrb[0].mxu0
      %2128 = vmatprep.mubr.f32.mxu0 0.0
      %2129 = vmatmul.mubr.f32.gmra.mrb[0].mxu0 %v330
      %v2130 = vpop.f32.mrb[0].mxu0
      %v2131 = vadd.f32 0.0, %v2130
      %v2132 = vpop.f32.mrb[0].mxu0
      %2133 = vdwg.mxu0
      %s2134 = sadd.s32 %s264, 13
      %s2135 = scalar_lea.vmem %s239, %s2134
      %v2136 = vld [vmem:[%s2135] sm:$0x1]
      %v2137 = vld [vmem:[%s2135 + $0x18] sm:$0x1]
      %v2138 = vld [vmem:[%s2135 + $0x30] sm:$0x1]
      %v2139 = vld [vmem:[%s2135 + $0x48] sm:$0x1]
      %v2144 = vrot.slane %v2137, 7
      %v2145 = vsel %vm287, %v2144, %v2136
      %v2146 = vrot.slane %v2138, 6
      %v2147 = vsel %vm290, %v2146, %v2145
      %v2148 = vrot.slane %v2139, 5
      %v2149 = vsel %vm293, %v2148, %v2147
      %v2150 = vsel %vm332, %v2149, 0
      %2152 = vmatprep.subr.mxu0 0.0
      %2153 = vmatpush1.msra.mxu0 %v2150
      %2154 = vmatprep.subr.mxu0 0.0
      %2155 = vmatpush1.msra.mxu0 0.0
      %2156 = vmatprep.subr.mxu0 0.0
      %2157 = vmatpush1.msra.mxu0 0.0
      %2158 = vmatprep.subr.mxu0 0.0
      %2159 = vmatpush1.msra.mxu0 0.0
      %2160 = vmatprep.subr.mxu0 0.0
      %2161 = vmatpush1.msra.mxu0 0.0
      %2162 = vmatprep.subr.mxu0 0.0
      %2163 = vmatpush1.msra.mxu0 0.0
      %2164 = vmatprep.subr.mxu0 0.0
      %2165 = vmatpush1.msra.mxu0 0.0
      %2166 = vmatprep.subr.mxu0 0.0
      %2167 = vmatpush1.msra.mxu0 0.0
      %2168 = vmatprep.subr.mxu0 0.0
      %2169 = vmatpush1.msra.mxu0 0.0
      %2170 = vmatprep.subr.mxu0 0.0
      %2171 = vmatpush1.msra.mxu0 0.0
      %2172 = vmatprep.subr.mxu0 0.0
      %2173 = vmatpush1.msra.mxu0 0.0
      %2174 = vmatprep.subr.mxu0 0.0
      %2175 = vmatpush1.msra.mxu0 0.0
      %2176 = vmatprep.subr.mxu0 0.0
      %2177 = vmatpush1.msra.mxu0 0.0
      %2178 = vmatprep.subr.mxu0 0.0
      %2179 = vmatpush1.msra.mxu0 0.0
      %2180 = vmatprep.subr.mxu0 0.0
      %2181 = vmatpush1.msra.mxu0 0.0
      %2182 = vmatprep.subr.mxu0 0.0
      %2183 = vmatpush1.msra.mxu0 0.0
      %2184 = vmatprep.subr.mxu0 0.0
      %2185 = vmatpush1.msra.mxu0 0.0
      %2186 = vmatprep.subr.mxu0 0.0
      %2187 = vmatpush1.msra.mxu0 0.0
      %2188 = vmatprep.subr.mxu0 0.0
      %2189 = vmatpush1.msra.mxu0 0.0
      %2190 = vmatprep.subr.mxu0 0.0
      %2191 = vmatpush1.msra.mxu0 0.0
      %2192 = vmatprep.subr.mxu0 0.0
      %2193 = vmatpush1.msra.mxu0 0.0
      %2194 = vmatprep.subr.mxu0 0.0
      %2195 = vmatpush1.msra.mxu0 0.0
      %2196 = vmatprep.subr.mxu0 0.0
      %2197 = vmatpush1.msra.mxu0 0.0
      %2198 = vmatprep.subr.mxu0 0.0
      %2199 = vmatpush1.msra.mxu0 0.0
      %2200 = vmatprep.subr.mxu0 0.0
      %2201 = vmatpush1.msra.mxu0 0.0
      %2202 = vmatprep.subr.mxu0 0.0
      %2203 = vmatpush1.msra.mxu0 0.0
      %2204 = vmatprep.subr.mxu0 0.0
      %2205 = vmatpush1.msra.mxu0 0.0
      %2206 = vmatprep.subr.mxu0 0.0
      %2207 = vmatpush1.msra.mxu0 0.0
      %2208 = vmatprep.subr.mxu0 0.0
      %2209 = vmatpush1.msra.mxu0 0.0
      %2210 = vmatprep.subr.mxu0 0.0
      %2211 = vmatpush1.msra.mxu0 0.0
      %2212 = vmatprep.subr.mxu0 0.0
      %2213 = vmatpush1.msra.mxu0 0.0
      %2214 = vmatprep.subr.mxu0 0.0
      %2215 = vmatpush1.msra.mxu0 0.0
      %2216 = vmatprep.mubr.f32.mxu0 0.0
      %2217 = vmatmul.mubr.f32.gmra.mrb[0].mxu0 %v297
      %v2218 = vpop.f32.mrb[0].mxu0
      %v2219 = vadd.f32 0.0, %v2218
      %v2220 = vpop.f32.mrb[0].mxu0
      %2221 = vmatprep.mubr.f32.mxu0 0.0
      %2222 = vmatmul.mubr.f32.gmra.mrb[0].mxu0 %v300
      %v2223 = vpop.f32.mrb[0].mxu0
      %v2224 = vadd.f32 0.0, %v2223
      %v2225 = vpop.f32.mrb[0].mxu0
      %2226 = vmatprep.mubr.f32.mxu0 0.0
      %2227 = vmatmul.mubr.f32.gmra.mrb[0].mxu0 %v303
      %v2228 = vpop.f32.mrb[0].mxu0
      %v2229 = vadd.f32 0.0, %v2228
      %v2230 = vpop.f32.mrb[0].mxu0
      %2231 = vmatprep.mubr.f32.mxu0 0.0
      %2232 = vmatmul.mubr.f32.gmra.mrb[0].mxu0 %v306
      %v2233 = vpop.f32.mrb[0].mxu0
      %v2234 = vpop.f32.mrb[0].mxu0
      %2235 = vmatprep.mubr.f32.mxu0 0.0
      %2236 = vmatmul.mubr.f32.gmra.mrb[0].mxu0 %v309
      %v2237 = vpop.f32.mrb[0].mxu0
      %v2238 = vpop.f32.mrb[0].mxu0
      %2239 = vmatprep.mubr.f32.mxu0 0.0
      %2240 = vmatmul.mubr.f32.gmra.mrb[0].mxu0 %v312
      %v2241 = vpop.f32.mrb[0].mxu0
      %v2242 = vpop.f32.mrb[0].mxu0
      %2243 = vmatprep.mubr.f32.mxu0 0.0
      %2244 = vmatmul.mubr.f32.gmra.mrb[0].mxu0 %v315
      %v2245 = vpop.f32.mrb[0].mxu0
      %v2246 = vadd.f32 0.0, %v2245
      %v2247 = vpop.f32.mrb[0].mxu0
      %2248 = vmatprep.mubr.f32.mxu0 0.0
      %2249 = vmatmul.mubr.f32.gmra.mrb[0].mxu0 %v318
      %v2250 = vpop.f32.mrb[0].mxu0
      %v2251 = vadd.f32 0.0, %v2250
      %v2252 = vpop.f32.mrb[0].mxu0
      %2253 = vmatprep.mubr.f32.mxu0 0.0
      %2254 = vmatmul.mubr.f32.gmra.mrb[0].mxu0 %v321
      %v2255 = vpop.f32.mrb[0].mxu0
      %v2256 = vadd.f32 0.0, %v2255
      %v2257 = vpop.f32.mrb[0].mxu0
      %2258 = vmatprep.mubr.f32.mxu0 0.0
      %2259 = vmatmul.mubr.f32.gmra.mrb[0].mxu0 %v324
      %v2260 = vpop.f32.mrb[0].mxu0
      %v2261 = vadd.f32 0.0, %v2260
      %v2262 = vpop.f32.mrb[0].mxu0
      %2263 = vmatprep.mubr.f32.mxu0 0.0
      %2264 = vmatmul.mubr.f32.gmra.mrb[0].mxu0 %v327
      %v2265 = vpop.f32.mrb[0].mxu0
      %v2266 = vadd.f32 0.0, %v2265
      %v2267 = vpop.f32.mrb[0].mxu0
      %2268 = vmatprep.mubr.f32.mxu0 0.0
      %2269 = vmatmul.mubr.f32.gmra.mrb[0].mxu0 %v330
      %v2270 = vpop.f32.mrb[0].mxu0
      %v2271 = vadd.f32 0.0, %v2270
      %v2272 = vpop.f32.mrb[0].mxu0
      %2273 = vdwg.mxu0
      %s2274 = sadd.s32 %s264, 14
      %s2275 = scalar_lea.vmem %s239, %s2274
      %v2276 = vld [vmem:[%s2275] sm:$0x1]
      %v2277 = vld [vmem:[%s2275 + $0x18] sm:$0x1]
      %v2278 = vld [vmem:[%s2275 + $0x30] sm:$0x1]
      %v2279 = vld [vmem:[%s2275 + $0x48] sm:$0x1]
      %v2284 = vrot.slane %v2277, 7
      %v2285 = vsel %vm287, %v2284, %v2276
      %v2286 = vrot.slane %v2278, 6
      %v2287 = vsel %vm290, %v2286, %v2285
      %v2288 = vrot.slane %v2279, 5
      %v2289 = vsel %vm293, %v2288, %v2287
      %v2290 = vsel %vm332, %v2289, 0
      %2292 = vmatprep.subr.mxu0 0.0
      %2293 = vmatpush1.msra.mxu0 %v2290
      %2294 = vmatprep.subr.mxu0 0.0
      %2295 = vmatpush1.msra.mxu0 0.0
      %2296 = vmatprep.subr.mxu0 0.0
      %2297 = vmatpush1.msra.mxu0 0.0
      %2298 = vmatprep.subr.mxu0 0.0
      %2299 = vmatpush1.msra.mxu0 0.0
      %2300 = vmatprep.subr.mxu0 0.0
      %2301 = vmatpush1.msra.mxu0 0.0
      %2302 = vmatprep.subr.mxu0 0.0
      %2303 = vmatpush1.msra.mxu0 0.0
      %2304 = vmatprep.subr.mxu0 0.0
      %2305 = vmatpush1.msra.mxu0 0.0
      %2306 = vmatprep.subr.mxu0 0.0
      %2307 = vmatpush1.msra.mxu0 0.0
      %2308 = vmatprep.subr.mxu0 0.0
      %2309 = vmatpush1.msra.mxu0 0.0
      %2310 = vmatprep.subr.mxu0 0.0
      %2311 = vmatpush1.msra.mxu0 0.0
      %2312 = vmatprep.subr.mxu0 0.0
      %2313 = vmatpush1.msra.mxu0 0.0
      %2314 = vmatprep.subr.mxu0 0.0
      %2315 = vmatpush1.msra.mxu0 0.0
      %2316 = vmatprep.subr.mxu0 0.0
      %2317 = vmatpush1.msra.mxu0 0.0
      %2318 = vmatprep.subr.mxu0 0.0
      %2319 = vmatpush1.msra.mxu0 0.0
      %2320 = vmatprep.subr.mxu0 0.0
      %2321 = vmatpush1.msra.mxu0 0.0
      %2322 = vmatprep.subr.mxu0 0.0
      %2323 = vmatpush1.msra.mxu0 0.0
      %2324 = vmatprep.subr.mxu0 0.0
      %2325 = vmatpush1.msra.mxu0 0.0
      %2326 = vmatprep.subr.mxu0 0.0
      %2327 = vmatpush1.msra.mxu0 0.0
      %2328 = vmatprep.subr.mxu0 0.0
      %2329 = vmatpush1.msra.mxu0 0.0
      %2330 = vmatprep.subr.mxu0 0.0
      %2331 = vmatpush1.msra.mxu0 0.0
      %2332 = vmatprep.subr.mxu0 0.0
      %2333 = vmatpush1.msra.mxu0 0.0
      %2334 = vmatprep.subr.mxu0 0.0
      %2335 = vmatpush1.msra.mxu0 0.0
      %2336 = vmatprep.subr.mxu0 0.0
      %2337 = vmatpush1.msra.mxu0 0.0
      %2338 = vmatprep.subr.mxu0 0.0
      %2339 = vmatpush1.msra.mxu0 0.0
      %2340 = vmatprep.subr.mxu0 0.0
      %2341 = vmatpush1.msra.mxu0 0.0
      %2342 = vmatprep.subr.mxu0 0.0
      %2343 = vmatpush1.msra.mxu0 0.0
      %2344 = vmatprep.subr.mxu0 0.0
      %2345 = vmatpush1.msra.mxu0 0.0
      %2346 = vmatprep.subr.mxu0 0.0
      %2347 = vmatpush1.msra.mxu0 0.0
      %2348 = vmatprep.subr.mxu0 0.0
      %2349 = vmatpush1.msra.mxu0 0.0
      %2350 = vmatprep.subr.mxu0 0.0
      %2351 = vmatpush1.msra.mxu0 0.0
      %2352 = vmatprep.subr.mxu0 0.0
      %2353 = vmatpush1.msra.mxu0 0.0
      %2354 = vmatprep.subr.mxu0 0.0
      %2355 = vmatpush1.msra.mxu0 0.0
      %2356 = vmatprep.mubr.f32.mxu0 0.0
      %2357 = vmatmul.mubr.f32.gmra.mrb[0].mxu0 %v297
      %v2358 = vpop.f32.mrb[0].mxu0
      %v2359 = vadd.f32 0.0, %v2358
      %v2360 = vpop.f32.mrb[0].mxu0
      %2361 = vmatprep.mubr.f32.mxu0 0.0
      %2362 = vmatmul.mubr.f32.gmra.mrb[0].mxu0 %v300
      %v2363 = vpop.f32.mrb[0].mxu0
      %v2364 = vadd.f32 0.0, %v2363
      %v2365 = vpop.f32.mrb[0].mxu0
      %2366 = vmatprep.mubr.f32.mxu0 0.0
      %2367 = vmatmul.mubr.f32.gmra.mrb[0].mxu0 %v303
      %v2368 = vpop.f32.mrb[0].mxu0
      %v2369 = vadd.f32 0.0, %v2368
      %v2370 = vpop.f32.mrb[0].mxu0
      %2371 = vmatprep.mubr.f32.mxu0 0.0
      %2372 = vmatmul.mubr.f32.gmra.mrb[0].mxu0 %v306
      %v2373 = vpop.f32.mrb[0].mxu0
      %v2374 = vpop.f32.mrb[0].mxu0
      %2375 = vmatprep.mubr.f32.mxu0 0.0
      %2376 = vmatmul.mubr.f32.gmra.mrb[0].mxu0 %v309
      %v2377 = vpop.f32.mrb[0].mxu0
      %v2378 = vpop.f32.mrb[0].mxu0
      %2379 = vmatprep.mubr.f32.mxu0 0.0
      %2380 = vmatmul.mubr.f32.gmra.mrb[0].mxu0 %v312
      %v2381 = vpop.f32.mrb[0].mxu0
      %v2382 = vpop.f32.mrb[0].mxu0
      %2383 = vmatprep.mubr.f32.mxu0 0.0
      %2384 = vmatmul.mubr.f32.gmra.mrb[0].mxu0 %v315
      %v2385 = vpop.f32.mrb[0].mxu0
      %v2386 = vadd.f32 0.0, %v2385
      %v2387 = vpop.f32.mrb[0].mxu0
      %2388 = vmatprep.mubr.f32.mxu0 0.0
      %2389 = vmatmul.mubr.f32.gmra.mrb[0].mxu0 %v318
      %v2390 = vpop.f32.mrb[0].mxu0
      %v2391 = vadd.f32 0.0, %v2390
      %v2392 = vpop.f32.mrb[0].mxu0
      %2393 = vmatprep.mubr.f32.mxu0 0.0
      %2394 = vmatmul.mubr.f32.gmra.mrb[0].mxu0 %v321
      %v2395 = vpop.f32.mrb[0].mxu0
      %v2396 = vadd.f32 0.0, %v2395
      %v2397 = vpop.f32.mrb[0].mxu0
      %2398 = vmatprep.mubr.f32.mxu0 0.0
      %2399 = vmatmul.mubr.f32.gmra.mrb[0].mxu0 %v324
      %v2400 = vpop.f32.mrb[0].mxu0
      %v2401 = vadd.f32 0.0, %v2400
      %v2402 = vpop.f32.mrb[0].mxu0
      %2403 = vmatprep.mubr.f32.mxu0 0.0
      %2404 = vmatmul.mubr.f32.gmra.mrb[0].mxu0 %v327
      %v2405 = vpop.f32.mrb[0].mxu0
      %v2406 = vadd.f32 0.0, %v2405
      %v2407 = vpop.f32.mrb[0].mxu0
      %2408 = vmatprep.mubr.f32.mxu0 0.0
      %2409 = vmatmul.mubr.f32.gmra.mrb[0].mxu0 %v330
      %v2410 = vpop.f32.mrb[0].mxu0
      %v2411 = vadd.f32 0.0, %v2410
      %v2412 = vpop.f32.mrb[0].mxu0
      %2413 = vdwg.mxu0
      %s2414 = sadd.s32 %s264, 15
      %s2415 = scalar_lea.vmem %s239, %s2414
      %v2416 = vld [vmem:[%s2415] sm:$0x1]
      %v2417 = vld [vmem:[%s2415 + $0x18] sm:$0x1]
      %v2418 = vld [vmem:[%s2415 + $0x30] sm:$0x1]
      %v2419 = vld [vmem:[%s2415 + $0x48] sm:$0x1]
      %v2424 = vrot.slane %v2417, 7
      %v2425 = vsel %vm287, %v2424, %v2416
      %v2426 = vrot.slane %v2418, 6
      %v2427 = vsel %vm290, %v2426, %v2425
      %v2428 = vrot.slane %v2419, 5
      %v2429 = vsel %vm293, %v2428, %v2427
      %v2430 = vsel %vm332, %v2429, 0
      %2432 = vmatprep.subr.mxu0 0.0
      %2433 = vmatpush1.msra.mxu0 %v2430
      %2434 = vmatprep.subr.mxu0 0.0
      %2435 = vmatpush1.msra.mxu0 0.0
      %2436 = vmatprep.subr.mxu0 0.0
      %2437 = vmatpush1.msra.mxu0 0.0
      %2438 = vmatprep.subr.mxu0 0.0
      %2439 = vmatpush1.msra.mxu0 0.0
      %2440 = vmatprep.subr.mxu0 0.0
      %2441 = vmatpush1.msra.mxu0 0.0
      %2442 = vmatprep.subr.mxu0 0.0
      %2443 = vmatpush1.msra.mxu0 0.0
      %2444 = vmatprep.subr.mxu0 0.0
      %2445 = vmatpush1.msra.mxu0 0.0
      %2446 = vmatprep.subr.mxu0 0.0
      %2447 = vmatpush1.msra.mxu0 0.0
      %2448 = vmatprep.subr.mxu0 0.0
      %2449 = vmatpush1.msra.mxu0 0.0
      %2450 = vmatprep.subr.mxu0 0.0
      %2451 = vmatpush1.msra.mxu0 0.0
      %2452 = vmatprep.subr.mxu0 0.0
      %2453 = vmatpush1.msra.mxu0 0.0
      %2454 = vmatprep.subr.mxu0 0.0
      %2455 = vmatpush1.msra.mxu0 0.0
      %2456 = vmatprep.subr.mxu0 0.0
      %2457 = vmatpush1.msra.mxu0 0.0
      %2458 = vmatprep.subr.mxu0 0.0
      %2459 = vmatpush1.msra.mxu0 0.0
      %2460 = vmatprep.subr.mxu0 0.0
      %2461 = vmatpush1.msra.mxu0 0.0
      %2462 = vmatprep.subr.mxu0 0.0
      %2463 = vmatpush1.msra.mxu0 0.0
      %2464 = vmatprep.subr.mxu0 0.0
      %2465 = vmatpush1.msra.mxu0 0.0
      %2466 = vmatprep.subr.mxu0 0.0
      %2467 = vmatpush1.msra.mxu0 0.0
      %2468 = vmatprep.subr.mxu0 0.0
      %2469 = vmatpush1.msra.mxu0 0.0
      %2470 = vmatprep.subr.mxu0 0.0
      %2471 = vmatpush1.msra.mxu0 0.0
      %2472 = vmatprep.subr.mxu0 0.0
      %2473 = vmatpush1.msra.mxu0 0.0
      %2474 = vmatprep.subr.mxu0 0.0
      %2475 = vmatpush1.msra.mxu0 0.0
      %2476 = vmatprep.subr.mxu0 0.0
      %2477 = vmatpush1.msra.mxu0 0.0
      %2478 = vmatprep.subr.mxu0 0.0
      %2479 = vmatpush1.msra.mxu0 0.0
      %2480 = vmatprep.subr.mxu0 0.0
      %2481 = vmatpush1.msra.mxu0 0.0
      %2482 = vmatprep.subr.mxu0 0.0
      %2483 = vmatpush1.msra.mxu0 0.0
      %2484 = vmatprep.subr.mxu0 0.0
      %2485 = vmatpush1.msra.mxu0 0.0
      %2486 = vmatprep.subr.mxu0 0.0
      %2487 = vmatpush1.msra.mxu0 0.0
      %2488 = vmatprep.subr.mxu0 0.0
      %2489 = vmatpush1.msra.mxu0 0.0
      %2490 = vmatprep.subr.mxu0 0.0
      %2491 = vmatpush1.msra.mxu0 0.0
      %2492 = vmatprep.subr.mxu0 0.0
      %2493 = vmatpush1.msra.mxu0 0.0
      %2494 = vmatprep.subr.mxu0 0.0
      %2495 = vmatpush1.msra.mxu0 0.0
      %2496 = vmatprep.mubr.f32.mxu0 0.0
      %2497 = vmatmul.mubr.f32.gmra.mrb[0].mxu0 %v297
      %v2498 = vpop.f32.mrb[0].mxu0
      %v2499 = vadd.f32 0.0, %v2498
      %v2500 = vpop.f32.mrb[0].mxu0
      %2501 = vmatprep.mubr.f32.mxu0 0.0
      %2502 = vmatmul.mubr.f32.gmra.mrb[0].mxu0 %v300
      %v2503 = vpop.f32.mrb[0].mxu0
      %v2504 = vadd.f32 0.0, %v2503
      %v2505 = vpop.f32.mrb[0].mxu0
      %2506 = vmatprep.mubr.f32.mxu0 0.0
      %2507 = vmatmul.mubr.f32.gmra.mrb[0].mxu0 %v303
      %v2508 = vpop.f32.mrb[0].mxu0
      %v2509 = vadd.f32 0.0, %v2508
      %v2510 = vpop.f32.mrb[0].mxu0
      %2511 = vmatprep.mubr.f32.mxu0 0.0
      %2512 = vmatmul.mubr.f32.gmra.mrb[0].mxu0 %v306
      %v2513 = vpop.f32.mrb[0].mxu0
      %v2514 = vpop.f32.mrb[0].mxu0
      %2515 = vmatprep.mubr.f32.mxu0 0.0
      %2516 = vmatmul.mubr.f32.gmra.mrb[0].mxu0 %v309
      %v2517 = vpop.f32.mrb[0].mxu0
      %v2518 = vpop.f32.mrb[0].mxu0
      %2519 = vmatprep.mubr.f32.mxu0 0.0
      %2520 = vmatmul.mubr.f32.gmra.mrb[0].mxu0 %v312
      %v2521 = vpop.f32.mrb[0].mxu0
      %v2522 = vpop.f32.mrb[0].mxu0
      %2523 = vmatprep.mubr.f32.mxu0 0.0
      %2524 = vmatmul.mubr.f32.gmra.mrb[0].mxu0 %v315
      %v2525 = vpop.f32.mrb[0].mxu0
      %v2526 = vadd.f32 0.0, %v2525
      %v2527 = vpop.f32.mrb[0].mxu0
      %2528 = vmatprep.mubr.f32.mxu0 0.0
      %2529 = vmatmul.mubr.f32.gmra.mrb[0].mxu0 %v318
      %v2530 = vpop.f32.mrb[0].mxu0
      %v2531 = vadd.f32 0.0, %v2530
      %v2532 = vpop.f32.mrb[0].mxu0
      %2533 = vmatprep.mubr.f32.mxu0 0.0
      %2534 = vmatmul.mubr.f32.gmra.mrb[0].mxu0 %v321
      %v2535 = vpop.f32.mrb[0].mxu0
      %v2536 = vadd.f32 0.0, %v2535
      %v2537 = vpop.f32.mrb[0].mxu0
      %2538 = vmatprep.mubr.f32.mxu0 0.0
      %2539 = vmatmul.mubr.f32.gmra.mrb[0].mxu0 %v324
      %v2540 = vpop.f32.mrb[0].mxu0
      %v2541 = vadd.f32 0.0, %v2540
      %v2542 = vpop.f32.mrb[0].mxu0
      %2543 = vmatprep.mubr.f32.mxu0 0.0
      %2544 = vmatmul.mubr.f32.gmra.mrb[0].mxu0 %v327
      %v2545 = vpop.f32.mrb[0].mxu0
      %v2546 = vadd.f32 0.0, %v2545
      %v2547 = vpop.f32.mrb[0].mxu0
      %2548 = vmatprep.mubr.f32.mxu0 0.0
      %2549 = vmatmul.mubr.f32.gmra.mrb[0].mxu0 %v330
      %v2550 = vpop.f32.mrb[0].mxu0
      %v2551 = vadd.f32 0.0, %v2550
      %v2552 = vpop.f32.mrb[0].mxu0
      %2553 = vdwg.mxu0
      %s2554 = sadd.s32 %s264, 16
      %s2555 = scalar_lea.vmem %s239, %s2554
      %v2556 = vld [vmem:[%s2555] sm:$0x1]
      %v2557 = vld [vmem:[%s2555 + $0x18] sm:$0x1]
      %v2558 = vld [vmem:[%s2555 + $0x30] sm:$0x1]
      %v2559 = vld [vmem:[%s2555 + $0x48] sm:$0x1]
      %v2564 = vrot.slane %v2557, 7
      %v2565 = vsel %vm287, %v2564, %v2556
      %v2566 = vrot.slane %v2558, 6
      %v2567 = vsel %vm290, %v2566, %v2565
      %v2568 = vrot.slane %v2559, 5
      %v2569 = vsel %vm293, %v2568, %v2567
      %v2570 = vsel %vm332, %v2569, 0
      %2572 = vmatprep.subr.mxu0 0.0
      %2573 = vmatpush1.msra.mxu0 %v2570
      %2574 = vmatprep.subr.mxu0 0.0
      %2575 = vmatpush1.msra.mxu0 0.0
      %2576 = vmatprep.subr.mxu0 0.0
      %2577 = vmatpush1.msra.mxu0 0.0
      %2578 = vmatprep.subr.mxu0 0.0
      %2579 = vmatpush1.msra.mxu0 0.0
      %2580 = vmatprep.subr.mxu0 0.0
      %2581 = vmatpush1.msra.mxu0 0.0
      %2582 = vmatprep.subr.mxu0 0.0
      %2583 = vmatpush1.msra.mxu0 0.0
      %2584 = vmatprep.subr.mxu0 0.0
      %2585 = vmatpush1.msra.mxu0 0.0
      %2586 = vmatprep.subr.mxu0 0.0
      %2587 = vmatpush1.msra.mxu0 0.0
      %2588 = vmatprep.subr.mxu0 0.0
      %2589 = vmatpush1.msra.mxu0 0.0
      %2590 = vmatprep.subr.mxu0 0.0
      %2591 = vmatpush1.msra.mxu0 0.0
      %2592 = vmatprep.subr.mxu0 0.0
      %2593 = vmatpush1.msra.mxu0 0.0
      %2594 = vmatprep.subr.mxu0 0.0
      %2595 = vmatpush1.msra.mxu0 0.0
      %2596 = vmatprep.subr.mxu0 0.0
      %2597 = vmatpush1.msra.mxu0 0.0
      %2598 = vmatprep.subr.mxu0 0.0
      %2599 = vmatpush1.msra.mxu0 0.0
      %2600 = vmatprep.subr.mxu0 0.0
      %2601 = vmatpush1.msra.mxu0 0.0
      %2602 = vmatprep.subr.mxu0 0.0
      %2603 = vmatpush1.msra.mxu0 0.0
      %2604 = vmatprep.subr.mxu0 0.0
      %2605 = vmatpush1.msra.mxu0 0.0
      %2606 = vmatprep.subr.mxu0 0.0
      %2607 = vmatpush1.msra.mxu0 0.0
      %2608 = vmatprep.subr.mxu0 0.0
      %2609 = vmatpush1.msra.mxu0 0.0
      %2610 = vmatprep.subr.mxu0 0.0
      %2611 = vmatpush1.msra.mxu0 0.0
      %2612 = vmatprep.subr.mxu0 0.0
      %2613 = vmatpush1.msra.mxu0 0.0
      %2614 = vmatprep.subr.mxu0 0.0
      %2615 = vmatpush1.msra.mxu0 0.0
      %2616 = vmatprep.subr.mxu0 0.0
      %2617 = vmatpush1.msra.mxu0 0.0
      %2618 = vmatprep.subr.mxu0 0.0
      %2619 = vmatpush1.msra.mxu0 0.0
      %2620 = vmatprep.subr.mxu0 0.0
      %2621 = vmatpush1.msra.mxu0 0.0
      %2622 = vmatprep.subr.mxu0 0.0
      %2623 = vmatpush1.msra.mxu0 0.0
      %2624 = vmatprep.subr.mxu0 0.0
      %2625 = vmatpush1.msra.mxu0 0.0
      %2626 = vmatprep.subr.mxu0 0.0
      %2627 = vmatpush1.msra.mxu0 0.0
      %2628 = vmatprep.subr.mxu0 0.0
      %2629 = vmatpush1.msra.mxu0 0.0
      %2630 = vmatprep.subr.mxu0 0.0
      %2631 = vmatpush1.msra.mxu0 0.0
      %2632 = vmatprep.subr.mxu0 0.0
      %2633 = vmatpush1.msra.mxu0 0.0
      %2634 = vmatprep.subr.mxu0 0.0
      %2635 = vmatpush1.msra.mxu0 0.0
      %2636 = vmatprep.mubr.f32.mxu0 0.0
      %2637 = vmatmul.mubr.f32.gmra.mrb[0].mxu0 %v297
      %v2638 = vpop.f32.mrb[0].mxu0
      %v2639 = vpop.f32.mrb[0].mxu0
      %2640 = vmatprep.mubr.f32.mxu0 0.0
      %2641 = vmatmul.mubr.f32.gmra.mrb[0].mxu0 %v300
      %v2642 = vpop.f32.mrb[0].mxu0
      %v2643 = vpop.f32.mrb[0].mxu0
      %2644 = vmatprep.mubr.f32.mxu0 0.0
      %2645 = vmatmul.mubr.f32.gmra.mrb[0].mxu0 %v303
      %v2646 = vpop.f32.mrb[0].mxu0
      %v2647 = vpop.f32.mrb[0].mxu0
      %2648 = vmatprep.mubr.f32.mxu0 0.0
      %2649 = vmatmul.mubr.f32.gmra.mrb[0].mxu0 %v306
      %v2650 = vpop.f32.mrb[0].mxu0
      %v2651 = vpop.f32.mrb[0].mxu0
      %2652 = vmatprep.mubr.f32.mxu0 0.0
      %2653 = vmatmul.mubr.f32.gmra.mrb[0].mxu0 %v309
      %v2654 = vpop.f32.mrb[0].mxu0
      %v2655 = vpop.f32.mrb[0].mxu0
      %2656 = vmatprep.mubr.f32.mxu0 0.0
      %2657 = vmatmul.mubr.f32.gmra.mrb[0].mxu0 %v312
      %v2658 = vpop.f32.mrb[0].mxu0
      %v2659 = vpop.f32.mrb[0].mxu0
      %2660 = vmatprep.mubr.f32.mxu0 0.0
      %2661 = vmatmul.mubr.f32.gmra.mrb[0].mxu0 %v315
      %v2662 = vpop.f32.mrb[0].mxu0
      %v2663 = vpop.f32.mrb[0].mxu0
      %2664 = vmatprep.mubr.f32.mxu0 0.0
      %2665 = vmatmul.mubr.f32.gmra.mrb[0].mxu0 %v318
      %v2666 = vpop.f32.mrb[0].mxu0
      %v2667 = vpop.f32.mrb[0].mxu0
      %2668 = vmatprep.mubr.f32.mxu0 0.0
      %2669 = vmatmul.mubr.f32.gmra.mrb[0].mxu0 %v321
      %v2670 = vpop.f32.mrb[0].mxu0
      %v2671 = vpop.f32.mrb[0].mxu0
      %2672 = vmatprep.mubr.f32.mxu0 0.0
      %2673 = vmatmul.mubr.f32.gmra.mrb[0].mxu0 %v324
      %v2674 = vpop.f32.mrb[0].mxu0
      %v2675 = vadd.f32 0.0, %v2674
      %v2676 = vpop.f32.mrb[0].mxu0
      %2677 = vmatprep.mubr.f32.mxu0 0.0
      %2678 = vmatmul.mubr.f32.gmra.mrb[0].mxu0 %v327
      %v2679 = vpop.f32.mrb[0].mxu0
      %v2680 = vadd.f32 0.0, %v2679
      %v2681 = vpop.f32.mrb[0].mxu0
      %2682 = vmatprep.mubr.f32.mxu0 0.0
      %2683 = vmatmul.mubr.f32.gmra.mrb[0].mxu0 %v330
      %v2684 = vpop.f32.mrb[0].mxu0
      %v2685 = vadd.f32 0.0, %v2684
      %v2686 = vpop.f32.mrb[0].mxu0
      %2687 = vdwg.mxu0
      %v2688 = vlaneseq
      %v2689 = vshrl.u32 %v2688, 7
      %v2690 = vadd.s32 %v2689, 8
      %v2691 = vlaneseq
      %v2692 = vand.u32 %v2691, 127
      %v2693 = vmul.u32 %v2689, 2
      %v2694 = vmul.u32 %v2690, 2
      %vm2695 = vcmp.eq.s32.totalorder %v2692, %v2693
      %vm2696 = vcmp.eq.s32.totalorder %v2692, %v2694
      %v2697 = vsel %vm2695, 1, 0
      %v2698 = vsel %vm2696, 1, 0
      %v2699 = vcvt.s32.f32 %v2697
      %v2700 = vcvt.s32.f32 %v2698
      %v2701 = vadd.s32 %v2693, 1
      %v2702 = vadd.s32 %v2694, 1
      %vm2703 = vcmp.eq.s32.totalorder %v2692, %v2701
      %vm2704 = vcmp.eq.s32.totalorder %v2692, %v2702
      %v2705 = vsel %vm2703, 1, 0
      %v2706 = vsel %vm2704, 1, 0
      %v2707 = vcvt.s32.f32 %v2705
      %v2708 = vcvt.s32.f32 %v2706
      %vm2741 = vcmask 1045504
      %v2742 = vrot.slane %v407, 2
      %v2743 = vrot.slane %v412, 2
      %v2744 = vsel %vm2741, %v2742, %v2743
      %v2745 = vrot.slane %v544, 2
      %v2746 = vrot.slane %v549, 2
      %v2747 = vsel %vm2741, %v2745, %v2746
      %v2748 = vrot.slane %v684, 2
      %v2749 = vrot.slane %v689, 2
      %v2750 = vsel %vm2741, %v2748, %v2749
      %v2751 = vrot.slane %v824, 2
      %v2752 = vrot.slane %v829, 2
      %v2753 = vsel %vm2741, %v2751, %v2752
      %v2754 = vrot.slane %v964, 2
      %v2755 = vrot.slane %v969, 2
      %v2756 = vsel %vm2741, %v2754, %v2755
      %v2757 = vrot.slane %v1104, 2
      %v2758 = vrot.slane %v1109, 2
      %v2759 = vsel %vm2741, %v2757, %v2758
      %v2760 = vrot.slane %v1244, 2
      %v2761 = vrot.slane %v1249, 2
      %v2762 = vsel %vm2741, %v2760, %v2761
      %v2763 = vrot.slane %v1384, 2
      %v2764 = vrot.slane %v1389, 2
      %v2765 = vsel %vm2741, %v2763, %v2764
      %v2766 = vrot.slane %v1524, 2
      %v2767 = vrot.slane %v1529, 2
      %v2768 = vsel %vm2741, %v2766, %v2767
      %v2769 = vrot.slane %v1664, 2
      %v2770 = vrot.slane %v1669, 2
      %v2771 = vsel %vm2741, %v2769, %v2770
      %v2772 = vrot.slane %v1804, 2
      %v2773 = vrot.slane %v1809, 2
      %v2774 = vsel %vm2741, %v2772, %v2773
      %v2775 = vrot.slane %v1944, 2
      %v2776 = vrot.slane %v1949, 2
      %v2777 = vsel %vm2741, %v2775, %v2776
      %v2778 = vrot.slane %v2084, 2
      %v2779 = vrot.slane %v2089, 2
      %v2780 = vsel %vm2741, %v2778, %v2779
      %v2781 = vrot.slane %v2224, 2
      %v2782 = vrot.slane %v2229, 2
      %v2783 = vsel %vm2741, %v2781, %v2782
      %v2784 = vrot.slane %v2364, 2
      %v2785 = vrot.slane %v2369, 2
      %v2786 = vsel %vm2741, %v2784, %v2785
      %v2787 = vrot.slane %v2504, 2
      %v2788 = vrot.slane %v2509, 2
      %v2789 = vsel %vm2741, %v2787, %v2788
      %2790 = vrot.lane.b32.xlu0 %v2744, 1
      %v2791 = vpop.permute.xlu0 %2790
      %2792 = vrot.lane.b32.xlu0 %v2747, 1
      %v2793 = vpop.permute.xlu0 %2792
      %2794 = vrot.lane.b32.xlu0 %v2750, 1
      %v2795 = vpop.permute.xlu0 %2794
      %2796 = vrot.lane.b32.xlu0 %v2753, 1
      %v2797 = vpop.permute.xlu0 %2796
      %2798 = vrot.lane.b32.xlu0 %v2756, 1
      %v2799 = vpop.permute.xlu0 %2798
      %2800 = vrot.lane.b32.xlu0 %v2759, 1
      %v2801 = vpop.permute.xlu0 %2800
      %2802 = vrot.lane.b32.xlu0 %v2762, 1
      %v2803 = vpop.permute.xlu0 %2802
      %2804 = vrot.lane.b32.xlu0 %v2765, 1
      %v2805 = vpop.permute.xlu0 %2804
      %2806 = vrot.lane.b32.xlu0 %v2768, 1
      %v2807 = vpop.permute.xlu0 %2806
      %2808 = vrot.lane.b32.xlu0 %v2771, 1
      %v2809 = vpop.permute.xlu0 %2808
      %2810 = vrot.lane.b32.xlu0 %v2774, 1
      %v2811 = vpop.permute.xlu0 %2810
      %2812 = vrot.lane.b32.xlu0 %v2777, 1
      %v2813 = vpop.permute.xlu0 %2812
      %2814 = vrot.lane.b32.xlu0 %v2780, 1
      %v2815 = vpop.permute.xlu0 %2814
      %2816 = vrot.lane.b32.xlu0 %v2783, 1
      %v2817 = vpop.permute.xlu0 %2816
      %2818 = vrot.lane.b32.xlu0 %v2786, 1
      %v2819 = vpop.permute.xlu0 %2818
      %2820 = vrot.lane.b32.xlu0 %v2789, 1
      %v2821 = vpop.permute.xlu0 %2820
      %v2838 = vadd.f32 %v412, %v2791
      %v2839 = vadd.f32 %v549, %v2793
      %v2840 = vadd.f32 %v689, %v2795
      %v2841 = vadd.f32 %v829, %v2797
      %v2842 = vadd.f32 %v969, %v2799
      %v2843 = vadd.f32 %v1109, %v2801
      %v2844 = vadd.f32 %v1249, %v2803
      %v2845 = vadd.f32 %v1389, %v2805
      %v2846 = vadd.f32 %v1529, %v2807
      %v2847 = vadd.f32 %v1669, %v2809
      %v2848 = vadd.f32 %v1809, %v2811
      %v2849 = vadd.f32 %v1949, %v2813
      %v2850 = vadd.f32 %v2089, %v2815
      %v2851 = vadd.f32 %v2229, %v2817
      %v2852 = vadd.f32 %v2369, %v2819
      %v2853 = vadd.f32 %v2509, %v2821
      %v2870 = vcombine.high %v402, %v402
      %v2872 = vunpack.c.l.s4 1983009808
      %v2873 = vunpack.c.0.s8 %v2872
      %v2874 = vlaneseq
      %v2875 = vshrl.u32 %v2874, 7
      %v2876 = vsub.s32 %v2873, %v2875
      %v2877 = vrot.slane %v402, %v2876
      %v2879 = vunpack.c.l.s4 1983009808
      %v2880 = vunpack.c.0.s8 %v2879
      %v2881 = vlaneseq
      %v2882 = vshrl.u32 %v2881, 7
      %v2883 = vsub.s32 %v2880, %v2882
      %v2884 = vrot.slane %v2870, %v2883
      %v2885 = vcombine.high %v2877, %v2877
      %v2886 = vcombine.high %v539, %v539
      %v2888 = vunpack.c.l.s4 1983009808
      %v2889 = vunpack.c.0.s8 %v2888
      %v2890 = vlaneseq
      %v2891 = vshrl.u32 %v2890, 7
      %v2892 = vsub.s32 %v2889, %v2891
      %v2893 = vrot.slane %v539, %v2892
      %v2895 = vunpack.c.l.s4 1983009808
      %v2896 = vunpack.c.0.s8 %v2895
      %v2897 = vlaneseq
      %v2898 = vshrl.u32 %v2897, 7
      %v2899 = vsub.s32 %v2896, %v2898
      %v2900 = vrot.slane %v2886, %v2899
      %v2901 = vcombine.high %v2893, %v2893
      %v2902 = vcombine.high %v679, %v679
      %v2904 = vunpack.c.l.s4 1983009808
      %v2905 = vunpack.c.0.s8 %v2904
      %v2906 = vlaneseq
      %v2907 = vshrl.u32 %v2906, 7
      %v2908 = vsub.s32 %v2905, %v2907
      %v2909 = vrot.slane %v679, %v2908
      %v2911 = vunpack.c.l.s4 1983009808
      %v2912 = vunpack.c.0.s8 %v2911
      %v2913 = vlaneseq
      %v2914 = vshrl.u32 %v2913, 7
      %v2915 = vsub.s32 %v2912, %v2914
      %v2916 = vrot.slane %v2902, %v2915
      %v2917 = vcombine.high %v2909, %v2909
      %v2918 = vcombine.high %v819, %v819
      %v2920 = vunpack.c.l.s4 1983009808
      %v2921 = vunpack.c.0.s8 %v2920
      %v2922 = vlaneseq
      %v2923 = vshrl.u32 %v2922, 7
      %v2924 = vsub.s32 %v2921, %v2923
      %v2925 = vrot.slane %v819, %v2924
      %v2927 = vunpack.c.l.s4 1983009808
      %v2928 = vunpack.c.0.s8 %v2927
      %v2929 = vlaneseq
      %v2930 = vshrl.u32 %v2929, 7
      %v2931 = vsub.s32 %v2928, %v2930
      %v2932 = vrot.slane %v2918, %v2931
      %v2933 = vcombine.high %v2925, %v2925
      %v2934 = vcombine.high %v959, %v959
      %v2936 = vunpack.c.l.s4 1983009808
      %v2937 = vunpack.c.0.s8 %v2936
      %v2938 = vlaneseq
      %v2939 = vshrl.u32 %v2938, 7
      %v2940 = vsub.s32 %v2937, %v2939
      %v2941 = vrot.slane %v959, %v2940
      %v2943 = vunpack.c.l.s4 1983009808
      %v2944 = vunpack.c.0.s8 %v2943
      %v2945 = vlaneseq
      %v2946 = vshrl.u32 %v2945, 7
      %v2947 = vsub.s32 %v2944, %v2946
      %v2948 = vrot.slane %v2934, %v2947
      %v2949 = vcombine.high %v2941, %v2941
      %v2950 = vcombine.high %v1099, %v1099
      %v2952 = vunpack.c.l.s4 1983009808
      %v2953 = vunpack.c.0.s8 %v2952
      %v2954 = vlaneseq
      %v2955 = vshrl.u32 %v2954, 7
      %v2956 = vsub.s32 %v2953, %v2955
      %v2957 = vrot.slane %v1099, %v2956
      %v2959 = vunpack.c.l.s4 1983009808
      %v2960 = vunpack.c.0.s8 %v2959
      %v2961 = vlaneseq
      %v2962 = vshrl.u32 %v2961, 7
      %v2963 = vsub.s32 %v2960, %v2962
      %v2964 = vrot.slane %v2950, %v2963
      %v2965 = vcombine.high %v2957, %v2957
      %v2966 = vcombine.high %v1239, %v1239
      %v2968 = vunpack.c.l.s4 1983009808
      %v2969 = vunpack.c.0.s8 %v2968
      %v2970 = vlaneseq
      %v2971 = vshrl.u32 %v2970, 7
      %v2972 = vsub.s32 %v2969, %v2971
      %v2973 = vrot.slane %v1239, %v2972
      %v2975 = vunpack.c.l.s4 1983009808
      %v2976 = vunpack.c.0.s8 %v2975
      %v2977 = vlaneseq
      %v2978 = vshrl.u32 %v2977, 7
      %v2979 = vsub.s32 %v2976, %v2978
      %v2980 = vrot.slane %v2966, %v2979
      %v2981 = vcombine.high %v2973, %v2973
      %v2982 = vcombine.high %v1379, %v1379
      %v2984 = vunpack.c.l.s4 1983009808
      %v2985 = vunpack.c.0.s8 %v2984
      %v2986 = vlaneseq
      %v2987 = vshrl.u32 %v2986, 7
      %v2988 = vsub.s32 %v2985, %v2987
      %v2989 = vrot.slane %v1379, %v2988
      %v2991 = vunpack.c.l.s4 1983009808
      %v2992 = vunpack.c.0.s8 %v2991
      %v2993 = vlaneseq
      %v2994 = vshrl.u32 %v2993, 7
      %v2995 = vsub.s32 %v2992, %v2994
      %v2996 = vrot.slane %v2982, %v2995
      %v2997 = vcombine.high %v2989, %v2989
      %v2998 = vcombine.high %v1519, %v1519
      %v3000 = vunpack.c.l.s4 1983009808
      %v3001 = vunpack.c.0.s8 %v3000
      %v3002 = vlaneseq
      %v3003 = vshrl.u32 %v3002, 7
      %v3004 = vsub.s32 %v3001, %v3003
      %v3005 = vrot.slane %v1519, %v3004
      %v3007 = vunpack.c.l.s4 1983009808
      %v3008 = vunpack.c.0.s8 %v3007
      %v3009 = vlaneseq
      %v3010 = vshrl.u32 %v3009, 7
      %v3011 = vsub.s32 %v3008, %v3010
      %v3012 = vrot.slane %v2998, %v3011
      %v3013 = vcombine.high %v3005, %v3005
      %v3014 = vcombine.high %v1659, %v1659
      %v3016 = vunpack.c.l.s4 1983009808
      %v3017 = vunpack.c.0.s8 %v3016
      %v3018 = vlaneseq
      %v3019 = vshrl.u32 %v3018, 7
      %v3020 = vsub.s32 %v3017, %v3019
      %v3021 = vrot.slane %v1659, %v3020
      %v3023 = vunpack.c.l.s4 1983009808
      %v3024 = vunpack.c.0.s8 %v3023
      %v3025 = vlaneseq
      %v3026 = vshrl.u32 %v3025, 7
      %v3027 = vsub.s32 %v3024, %v3026
      %v3028 = vrot.slane %v3014, %v3027
      %v3029 = vcombine.high %v3021, %v3021
      %v3030 = vcombine.high %v1799, %v1799
      %v3032 = vunpack.c.l.s4 1983009808
      %v3033 = vunpack.c.0.s8 %v3032
      %v3034 = vlaneseq
      %v3035 = vshrl.u32 %v3034, 7
      %v3036 = vsub.s32 %v3033, %v3035
      %v3037 = vrot.slane %v1799, %v3036
      %v3039 = vunpack.c.l.s4 1983009808
      %v3040 = vunpack.c.0.s8 %v3039
      %v3041 = vlaneseq
      %v3042 = vshrl.u32 %v3041, 7
      %v3043 = vsub.s32 %v3040, %v3042
      %v3044 = vrot.slane %v3030, %v3043
      %v3045 = vcombine.high %v3037, %v3037
      %v3046 = vcombine.high %v1939, %v1939
      %v3048 = vunpack.c.l.s4 1983009808
      %v3049 = vunpack.c.0.s8 %v3048
      %v3050 = vlaneseq
      %v3051 = vshrl.u32 %v3050, 7
      %v3052 = vsub.s32 %v3049, %v3051
      %v3053 = vrot.slane %v1939, %v3052
      %v3055 = vunpack.c.l.s4 1983009808
      %v3056 = vunpack.c.0.s8 %v3055
      %v3057 = vlaneseq
      %v3058 = vshrl.u32 %v3057, 7
      %v3059 = vsub.s32 %v3056, %v3058
      %v3060 = vrot.slane %v3046, %v3059
      %v3061 = vcombine.high %v3053, %v3053
      %v3062 = vcombine.high %v2079, %v2079
      %v3064 = vunpack.c.l.s4 1983009808
      %v3065 = vunpack.c.0.s8 %v3064
      %v3066 = vlaneseq
      %v3067 = vshrl.u32 %v3066, 7
      %v3068 = vsub.s32 %v3065, %v3067
      %v3069 = vrot.slane %v2079, %v3068
      %v3071 = vunpack.c.l.s4 1983009808
      %v3072 = vunpack.c.0.s8 %v3071
      %v3073 = vlaneseq
      %v3074 = vshrl.u32 %v3073, 7
      %v3075 = vsub.s32 %v3072, %v3074
      %v3076 = vrot.slane %v3062, %v3075
      %v3077 = vcombine.high %v3069, %v3069
      %v3078 = vcombine.high %v2219, %v2219
      %v3080 = vunpack.c.l.s4 1983009808
      %v3081 = vunpack.c.0.s8 %v3080
      %v3082 = vlaneseq
      %v3083 = vshrl.u32 %v3082, 7
      %v3084 = vsub.s32 %v3081, %v3083
      %v3085 = vrot.slane %v2219, %v3084
      %v3087 = vunpack.c.l.s4 1983009808
      %v3088 = vunpack.c.0.s8 %v3087
      %v3089 = vlaneseq
      %v3090 = vshrl.u32 %v3089, 7
      %v3091 = vsub.s32 %v3088, %v3090
      %v3092 = vrot.slane %v3078, %v3091
      %v3093 = vcombine.high %v3085, %v3085
      %v3094 = vcombine.high %v2359, %v2359
      %v3096 = vunpack.c.l.s4 1983009808
      %v3097 = vunpack.c.0.s8 %v3096
      %v3098 = vlaneseq
      %v3099 = vshrl.u32 %v3098, 7
      %v3100 = vsub.s32 %v3097, %v3099
      %v3101 = vrot.slane %v2359, %v3100
      %v3103 = vunpack.c.l.s4 1983009808
      %v3104 = vunpack.c.0.s8 %v3103
      %v3105 = vlaneseq
      %v3106 = vshrl.u32 %v3105, 7
      %v3107 = vsub.s32 %v3104, %v3106
      %v3108 = vrot.slane %v3094, %v3107
      %v3109 = vcombine.high %v3101, %v3101
      %v3110 = vcombine.high %v2499, %v2499
      %v3112 = vunpack.c.l.s4 1983009808
      %v3113 = vunpack.c.0.s8 %v3112
      %v3114 = vlaneseq
      %v3115 = vshrl.u32 %v3114, 7
      %v3116 = vsub.s32 %v3113, %v3115
      %v3117 = vrot.slane %v2499, %v3116
      %v3119 = vunpack.c.l.s4 1983009808
      %v3120 = vunpack.c.0.s8 %v3119
      %v3121 = vlaneseq
      %v3122 = vshrl.u32 %v3121, 7
      %v3123 = vsub.s32 %v3120, %v3122
      %v3124 = vrot.slane %v3110, %v3123
      %v3125 = vcombine.high %v3117, %v3117
      %v3142 = vcombine.high %v2838, %v2838
      %v3144 = vunpack.c.l.s4 1983009808
      %v3145 = vunpack.c.0.s8 %v3144
      %v3146 = vlaneseq
      %v3147 = vshrl.u32 %v3146, 7
      %v3148 = vsub.s32 %v3145, %v3147
      %v3149 = vrot.slane %v2838, %v3148
      %v3151 = vunpack.c.l.s4 1983009808
      %v3152 = vunpack.c.0.s8 %v3151
      %v3153 = vlaneseq
      %v3154 = vshrl.u32 %v3153, 7
      %v3155 = vsub.s32 %v3152, %v3154
      %v3156 = vrot.slane %v3142, %v3155
      %v3157 = vcombine.high %v3149, %v3149
      %v3158 = vcombine.high %v3156, %v3156
      %v3159 = vcombine.high %v2839, %v2839
      %v3161 = vunpack.c.l.s4 1983009808
      %v3162 = vunpack.c.0.s8 %v3161
      %v3163 = vlaneseq
      %v3164 = vshrl.u32 %v3163, 7
      %v3165 = vsub.s32 %v3162, %v3164
      %v3166 = vrot.slane %v2839, %v3165
      %v3168 = vunpack.c.l.s4 1983009808
      %v3169 = vunpack.c.0.s8 %v3168
      %v3170 = vlaneseq
      %v3171 = vshrl.u32 %v3170, 7
      %v3172 = vsub.s32 %v3169, %v3171
      %v3173 = vrot.slane %v3159, %v3172
      %v3174 = vcombine.high %v3166, %v3166
      %v3175 = vcombine.high %v3173, %v3173
      %v3176 = vcombine.high %v2840, %v2840
      %v3178 = vunpack.c.l.s4 1983009808
      %v3179 = vunpack.c.0.s8 %v3178
      %v3180 = vlaneseq
      %v3181 = vshrl.u32 %v3180, 7
      %v3182 = vsub.s32 %v3179, %v3181
      %v3183 = vrot.slane %v2840, %v3182
      %v3185 = vunpack.c.l.s4 1983009808
      %v3186 = vunpack.c.0.s8 %v3185
      %v3187 = vlaneseq
      %v3188 = vshrl.u32 %v3187, 7
      %v3189 = vsub.s32 %v3186, %v3188
      %v3190 = vrot.slane %v3176, %v3189
      %v3191 = vcombine.high %v3183, %v3183
      %v3192 = vcombine.high %v3190, %v3190
      %v3193 = vcombine.high %v2841, %v2841
      %v3195 = vunpack.c.l.s4 1983009808
      %v3196 = vunpack.c.0.s8 %v3195
      %v3197 = vlaneseq
      %v3198 = vshrl.u32 %v3197, 7
      %v3199 = vsub.s32 %v3196, %v3198
      %v3200 = vrot.slane %v2841, %v3199
      %v3202 = vunpack.c.l.s4 1983009808
      %v3203 = vunpack.c.0.s8 %v3202
      %v3204 = vlaneseq
      %v3205 = vshrl.u32 %v3204, 7
      %v3206 = vsub.s32 %v3203, %v3205
      %v3207 = vrot.slane %v3193, %v3206
      %v3208 = vcombine.high %v3200, %v3200
      %v3209 = vcombine.high %v3207, %v3207
      %v3210 = vcombine.high %v2842, %v2842
      %v3212 = vunpack.c.l.s4 1983009808
      %v3213 = vunpack.c.0.s8 %v3212
      %v3214 = vlaneseq
      %v3215 = vshrl.u32 %v3214, 7
      %v3216 = vsub.s32 %v3213, %v3215
      %v3217 = vrot.slane %v2842, %v3216
      %v3219 = vunpack.c.l.s4 1983009808
      %v3220 = vunpack.c.0.s8 %v3219
      %v3221 = vlaneseq
      %v3222 = vshrl.u32 %v3221, 7
      %v3223 = vsub.s32 %v3220, %v3222
      %v3224 = vrot.slane %v3210, %v3223
      %v3225 = vcombine.high %v3217, %v3217
      %v3226 = vcombine.high %v3224, %v3224
      %v3227 = vcombine.high %v2843, %v2843
      %v3229 = vunpack.c.l.s4 1983009808
      %v3230 = vunpack.c.0.s8 %v3229
      %v3231 = vlaneseq
      %v3232 = vshrl.u32 %v3231, 7
      %v3233 = vsub.s32 %v3230, %v3232
      %v3234 = vrot.slane %v2843, %v3233
      %v3236 = vunpack.c.l.s4 1983009808
      %v3237 = vunpack.c.0.s8 %v3236
      %v3238 = vlaneseq
      %v3239 = vshrl.u32 %v3238, 7
      %v3240 = vsub.s32 %v3237, %v3239
      %v3241 = vrot.slane %v3227, %v3240
      %v3242 = vcombine.high %v3234, %v3234
      %v3243 = vcombine.high %v3241, %v3241
      %v3244 = vcombine.high %v2844, %v2844
      %v3246 = vunpack.c.l.s4 1983009808
      %v3247 = vunpack.c.0.s8 %v3246
      %v3248 = vlaneseq
      %v3249 = vshrl.u32 %v3248, 7
      %v3250 = vsub.s32 %v3247, %v3249
      %v3251 = vrot.slane %v2844, %v3250
      %v3253 = vunpack.c.l.s4 1983009808
      %v3254 = vunpack.c.0.s8 %v3253
      %v3255 = vlaneseq
      %v3256 = vshrl.u32 %v3255, 7
      %v3257 = vsub.s32 %v3254, %v3256
      %v3258 = vrot.slane %v3244, %v3257
      %v3259 = vcombine.high %v3251, %v3251
      %v3260 = vcombine.high %v3258, %v3258
      %v3261 = vcombine.high %v2845, %v2845
      %v3263 = vunpack.c.l.s4 1983009808
      %v3264 = vunpack.c.0.s8 %v3263
      %v3265 = vlaneseq
      %v3266 = vshrl.u32 %v3265, 7
      %v3267 = vsub.s32 %v3264, %v3266
      %v3268 = vrot.slane %v2845, %v3267
      %v3270 = vunpack.c.l.s4 1983009808
      %v3271 = vunpack.c.0.s8 %v3270
      %v3272 = vlaneseq
      %v3273 = vshrl.u32 %v3272, 7
      %v3274 = vsub.s32 %v3271, %v3273
      %v3275 = vrot.slane %v3261, %v3274
      %v3276 = vcombine.high %v3268, %v3268
      %v3277 = vcombine.high %v3275, %v3275
      %v3278 = vcombine.high %v2846, %v2846
      %v3280 = vunpack.c.l.s4 1983009808
      %v3281 = vunpack.c.0.s8 %v3280
      %v3282 = vlaneseq
      %v3283 = vshrl.u32 %v3282, 7
      %v3284 = vsub.s32 %v3281, %v3283
      %v3285 = vrot.slane %v2846, %v3284
      %v3287 = vunpack.c.l.s4 1983009808
      %v3288 = vunpack.c.0.s8 %v3287
      %v3289 = vlaneseq
      %v3290 = vshrl.u32 %v3289, 7
      %v3291 = vsub.s32 %v3288, %v3290
      %v3292 = vrot.slane %v3278, %v3291
      %v3293 = vcombine.high %v3285, %v3285
      %v3294 = vcombine.high %v3292, %v3292
      %v3295 = vcombine.high %v2847, %v2847
      %v3297 = vunpack.c.l.s4 1983009808
      %v3298 = vunpack.c.0.s8 %v3297
      %v3299 = vlaneseq
      %v3300 = vshrl.u32 %v3299, 7
      %v3301 = vsub.s32 %v3298, %v3300
      %v3302 = vrot.slane %v2847, %v3301
      %v3304 = vunpack.c.l.s4 1983009808
      %v3305 = vunpack.c.0.s8 %v3304
      %v3306 = vlaneseq
      %v3307 = vshrl.u32 %v3306, 7
      %v3308 = vsub.s32 %v3305, %v3307
      %v3309 = vrot.slane %v3295, %v3308
      %v3310 = vcombine.high %v3302, %v3302
      %v3311 = vcombine.high %v3309, %v3309
      %v3312 = vcombine.high %v2848, %v2848
      %v3314 = vunpack.c.l.s4 1983009808
      %v3315 = vunpack.c.0.s8 %v3314
      %v3316 = vlaneseq
      %v3317 = vshrl.u32 %v3316, 7
      %v3318 = vsub.s32 %v3315, %v3317
      %v3319 = vrot.slane %v2848, %v3318
      %v3321 = vunpack.c.l.s4 1983009808
      %v3322 = vunpack.c.0.s8 %v3321
      %v3323 = vlaneseq
      %v3324 = vshrl.u32 %v3323, 7
      %v3325 = vsub.s32 %v3322, %v3324
      %v3326 = vrot.slane %v3312, %v3325
      %v3327 = vcombine.high %v3319, %v3319
      %v3328 = vcombine.high %v3326, %v3326
      %v3329 = vcombine.high %v2849, %v2849
      %v3331 = vunpack.c.l.s4 1983009808
      %v3332 = vunpack.c.0.s8 %v3331
      %v3333 = vlaneseq
      %v3334 = vshrl.u32 %v3333, 7
      %v3335 = vsub.s32 %v3332, %v3334
      %v3336 = vrot.slane %v2849, %v3335
      %v3338 = vunpack.c.l.s4 1983009808
      %v3339 = vunpack.c.0.s8 %v3338
      %v3340 = vlaneseq
      %v3341 = vshrl.u32 %v3340, 7
      %v3342 = vsub.s32 %v3339, %v3341
      %v3343 = vrot.slane %v3329, %v3342
      %v3344 = vcombine.high %v3336, %v3336
      %v3345 = vcombine.high %v3343, %v3343
      %v3346 = vcombine.high %v2850, %v2850
      %v3348 = vunpack.c.l.s4 1983009808
      %v3349 = vunpack.c.0.s8 %v3348
      %v3350 = vlaneseq
      %v3351 = vshrl.u32 %v3350, 7
      %v3352 = vsub.s32 %v3349, %v3351
      %v3353 = vrot.slane %v2850, %v3352
      %v3355 = vunpack.c.l.s4 1983009808
      %v3356 = vunpack.c.0.s8 %v3355
      %v3357 = vlaneseq
      %v3358 = vshrl.u32 %v3357, 7
      %v3359 = vsub.s32 %v3356, %v3358
      %v3360 = vrot.slane %v3346, %v3359
      %v3361 = vcombine.high %v3353, %v3353
      %v3362 = vcombine.high %v3360, %v3360
      %v3363 = vcombine.high %v2851, %v2851
      %v3365 = vunpack.c.l.s4 1983009808
      %v3366 = vunpack.c.0.s8 %v3365
      %v3367 = vlaneseq
      %v3368 = vshrl.u32 %v3367, 7
      %v3369 = vsub.s32 %v3366, %v3368
      %v3370 = vrot.slane %v2851, %v3369
      %v3372 = vunpack.c.l.s4 1983009808
      %v3373 = vunpack.c.0.s8 %v3372
      %v3374 = vlaneseq
      %v3375 = vshrl.u32 %v3374, 7
      %v3376 = vsub.s32 %v3373, %v3375
      %v3377 = vrot.slane %v3363, %v3376
      %v3378 = vcombine.high %v3370, %v3370
      %v3379 = vcombine.high %v3377, %v3377
      %v3380 = vcombine.high %v2852, %v2852
      %v3382 = vunpack.c.l.s4 1983009808
      %v3383 = vunpack.c.0.s8 %v3382
      %v3384 = vlaneseq
      %v3385 = vshrl.u32 %v3384, 7
      %v3386 = vsub.s32 %v3383, %v3385
      %v3387 = vrot.slane %v2852, %v3386
      %v3389 = vunpack.c.l.s4 1983009808
      %v3390 = vunpack.c.0.s8 %v3389
      %v3391 = vlaneseq
      %v3392 = vshrl.u32 %v3391, 7
      %v3393 = vsub.s32 %v3390, %v3392
      %v3394 = vrot.slane %v3380, %v3393
      %v3395 = vcombine.high %v3387, %v3387
      %v3396 = vcombine.high %v3394, %v3394
      %v3397 = vcombine.high %v2853, %v2853
      %v3399 = vunpack.c.l.s4 1983009808
      %v3400 = vunpack.c.0.s8 %v3399
      %v3401 = vlaneseq
      %v3402 = vshrl.u32 %v3401, 7
      %v3403 = vsub.s32 %v3400, %v3402
      %v3404 = vrot.slane %v2853, %v3403
      %v3406 = vunpack.c.l.s4 1983009808
      %v3407 = vunpack.c.0.s8 %v3406
      %v3408 = vlaneseq
      %v3409 = vshrl.u32 %v3408, 7
      %v3410 = vsub.s32 %v3407, %v3409
      %v3411 = vrot.slane %v3397, %v3410
      %v3412 = vcombine.high %v3404, %v3404
      %v3413 = vcombine.high %v3411, %v3411
      %v3414 = vcombine.low %v3157, %v3156
      %v3415 = vcombine.low %v3158, %v3174
      %v3417 = vunpack.c.l.s4 1983009808
      %v3418 = vunpack.c.0.s8 %v3417
      %v3419 = vlaneseq
      %v3420 = vshrl.u32 %v3419, 7
      %v3421 = vsub.s32 %v3418, %v3420
      %v3422 = vrot.slane %v3414, %v3421
      %v3424 = vunpack.c.l.s4 1983009808
      %v3425 = vunpack.c.0.s8 %v3424
      %v3426 = vlaneseq
      %v3427 = vshrl.u32 %v3426, 7
      %v3428 = vsub.s32 %v3425, %v3427
      %v3429 = vrot.slane %v3415, %v3428
      %v3430 = vcombine.low %v3422, %v3429
      %v3431 = vcombine.low %v3173, %v3175
      %v3432 = vcombine.low %v3191, %v3190
      %v3434 = vunpack.c.l.s4 1983009808
      %v3435 = vunpack.c.0.s8 %v3434
      %v3436 = vlaneseq
      %v3437 = vshrl.u32 %v3436, 7
      %v3438 = vsub.s32 %v3435, %v3437
      %v3439 = vrot.slane %v3431, %v3438
      %v3441 = vunpack.c.l.s4 1983009808
      %v3442 = vunpack.c.0.s8 %v3441
      %v3443 = vlaneseq
      %v3444 = vshrl.u32 %v3443, 7
      %v3445 = vsub.s32 %v3442, %v3444
      %v3446 = vrot.slane %v3432, %v3445
      %v3447 = vcombine.low %v3439, %v3446
      %v3448 = vcombine.low %v3192, %v3208
      %v3449 = vcombine.low %v3207, %v3209
      %v3451 = vunpack.c.l.s4 1983009808
      %v3452 = vunpack.c.0.s8 %v3451
      %v3453 = vlaneseq
      %v3454 = vshrl.u32 %v3453, 7
      %v3455 = vsub.s32 %v3452, %v3454
      %v3456 = vrot.slane %v3448, %v3455
      %v3458 = vunpack.c.l.s4 1983009808
      %v3459 = vunpack.c.0.s8 %v3458
      %v3460 = vlaneseq
      %v3461 = vshrl.u32 %v3460, 7
      %v3462 = vsub.s32 %v3459, %v3461
      %v3463 = vrot.slane %v3449, %v3462
      %v3464 = vcombine.low %v3456, %v3463
      %v3465 = vcombine.low %v3225, %v3224
      %v3466 = vcombine.low %v3226, %v3242
      %v3468 = vunpack.c.l.s4 1983009808
      %v3469 = vunpack.c.0.s8 %v3468
      %v3470 = vlaneseq
      %v3471 = vshrl.u32 %v3470, 7
      %v3472 = vsub.s32 %v3469, %v3471
      %v3473 = vrot.slane %v3465, %v3472
      %v3475 = vunpack.c.l.s4 1983009808
      %v3476 = vunpack.c.0.s8 %v3475
      %v3477 = vlaneseq
      %v3478 = vshrl.u32 %v3477, 7
      %v3479 = vsub.s32 %v3476, %v3478
      %v3480 = vrot.slane %v3466, %v3479
      %v3481 = vcombine.low %v3473, %v3480
      %v3482 = vcombine.low %v3241, %v3243
      %v3483 = vcombine.low %v3259, %v3258
      %v3485 = vunpack.c.l.s4 1983009808
      %v3486 = vunpack.c.0.s8 %v3485
      %v3487 = vlaneseq
      %v3488 = vshrl.u32 %v3487, 7
      %v3489 = vsub.s32 %v3486, %v3488
      %v3490 = vrot.slane %v3482, %v3489
      %v3492 = vunpack.c.l.s4 1983009808
      %v3493 = vunpack.c.0.s8 %v3492
      %v3494 = vlaneseq
      %v3495 = vshrl.u32 %v3494, 7
      %v3496 = vsub.s32 %v3493, %v3495
      %v3497 = vrot.slane %v3483, %v3496
      %v3498 = vcombine.low %v3490, %v3497
      %v3499 = vcombine.low %v3260, %v3276
      %v3500 = vcombine.low %v3275, %v3277
      %v3502 = vunpack.c.l.s4 1983009808
      %v3503 = vunpack.c.0.s8 %v3502
      %v3504 = vlaneseq
      %v3505 = vshrl.u32 %v3504, 7
      %v3506 = vsub.s32 %v3503, %v3505
      %v3507 = vrot.slane %v3499, %v3506
      %v3509 = vunpack.c.l.s4 1983009808
      %v3510 = vunpack.c.0.s8 %v3509
      %v3511 = vlaneseq
      %v3512 = vshrl.u32 %v3511, 7
      %v3513 = vsub.s32 %v3510, %v3512
      %v3514 = vrot.slane %v3500, %v3513
      %v3515 = vcombine.low %v3507, %v3514
      %v3516 = vcombine.low %v3293, %v3292
      %v3517 = vcombine.low %v3294, %v3310
      %v3519 = vunpack.c.l.s4 1983009808
      %v3520 = vunpack.c.0.s8 %v3519
      %v3521 = vlaneseq
      %v3522 = vshrl.u32 %v3521, 7
      %v3523 = vsub.s32 %v3520, %v3522
      %v3524 = vrot.slane %v3516, %v3523
      %v3526 = vunpack.c.l.s4 1983009808
      %v3527 = vunpack.c.0.s8 %v3526
      %v3528 = vlaneseq
      %v3529 = vshrl.u32 %v3528, 7
      %v3530 = vsub.s32 %v3527, %v3529
      %v3531 = vrot.slane %v3517, %v3530
      %v3532 = vcombine.low %v3524, %v3531
      %v3533 = vcombine.low %v3309, %v3311
      %v3534 = vcombine.low %v3327, %v3326
      %v3536 = vunpack.c.l.s4 1983009808
      %v3537 = vunpack.c.0.s8 %v3536
      %v3538 = vlaneseq
      %v3539 = vshrl.u32 %v3538, 7
      %v3540 = vsub.s32 %v3537, %v3539
      %v3541 = vrot.slane %v3533, %v3540
      %v3543 = vunpack.c.l.s4 1983009808
      %v3544 = vunpack.c.0.s8 %v3543
      %v3545 = vlaneseq
      %v3546 = vshrl.u32 %v3545, 7
      %v3547 = vsub.s32 %v3544, %v3546
      %v3548 = vrot.slane %v3534, %v3547
      %v3549 = vcombine.low %v3541, %v3548
      %v3550 = vcombine.low %v3328, %v3344
      %v3551 = vcombine.low %v3343, %v3345
      %v3553 = vunpack.c.l.s4 1983009808
      %v3554 = vunpack.c.0.s8 %v3553
      %v3555 = vlaneseq
      %v3556 = vshrl.u32 %v3555, 7
      %v3557 = vsub.s32 %v3554, %v3556
      %v3558 = vrot.slane %v3550, %v3557
      %v3560 = vunpack.c.l.s4 1983009808
      %v3561 = vunpack.c.0.s8 %v3560
      %v3562 = vlaneseq
      %v3563 = vshrl.u32 %v3562, 7
      %v3564 = vsub.s32 %v3561, %v3563
      %v3565 = vrot.slane %v3551, %v3564
      %v3566 = vcombine.low %v3558, %v3565
      %v3567 = vcombine.low %v3361, %v3360
      %v3568 = vcombine.low %v3362, %v3378
      %v3570 = vunpack.c.l.s4 1983009808
      %v3571 = vunpack.c.0.s8 %v3570
      %v3572 = vlaneseq
      %v3573 = vshrl.u32 %v3572, 7
      %v3574 = vsub.s32 %v3571, %v3573
      %v3575 = vrot.slane %v3567, %v3574
      %v3577 = vunpack.c.l.s4 1983009808
      %v3578 = vunpack.c.0.s8 %v3577
      %v3579 = vlaneseq
      %v3580 = vshrl.u32 %v3579, 7
      %v3581 = vsub.s32 %v3578, %v3580
      %v3582 = vrot.slane %v3568, %v3581
      %v3583 = vcombine.low %v3575, %v3582
      %v3584 = vcombine.low %v3377, %v3379
      %v3585 = vcombine.low %v3395, %v3394
      %v3587 = vunpack.c.l.s4 1983009808
      %v3588 = vunpack.c.0.s8 %v3587
      %v3589 = vlaneseq
      %v3590 = vshrl.u32 %v3589, 7
      %v3591 = vsub.s32 %v3588, %v3590
      %v3592 = vrot.slane %v3584, %v3591
      %v3594 = vunpack.c.l.s4 1983009808
      %v3595 = vunpack.c.0.s8 %v3594
      %v3596 = vlaneseq
      %v3597 = vshrl.u32 %v3596, 7
      %v3598 = vsub.s32 %v3595, %v3597
      %v3599 = vrot.slane %v3585, %v3598
      %v3600 = vcombine.low %v3592, %v3599
      %v3601 = vcombine.low %v3396, %v3412
      %v3602 = vcombine.low %v3411, %v3413
      %v3604 = vunpack.c.l.s4 1983009808
      %v3605 = vunpack.c.0.s8 %v3604
      %v3606 = vlaneseq
      %v3607 = vshrl.u32 %v3606, 7
      %v3608 = vsub.s32 %v3605, %v3607
      %v3609 = vrot.slane %v3601, %v3608
      %v3611 = vunpack.c.l.s4 1983009808
      %v3612 = vunpack.c.0.s8 %v3611
      %v3613 = vlaneseq
      %v3614 = vshrl.u32 %v3613, 7
      %v3615 = vsub.s32 %v3612, %v3614
      %v3616 = vrot.slane %v3602, %v3615
      %v3617 = vcombine.low %v3609, %v3616
      %3618 = vrot.lane.b32.xlu0 %v3430, 127
      %v3619 = vpop.permute.xlu0 %3618
      %3620 = vrot.lane.b32.xlu0 %v3447, 127
      %v3621 = vpop.permute.xlu0 %3620
      %3622 = vrot.lane.b32.xlu0 %v3464, 127
      %v3623 = vpop.permute.xlu0 %3622
      %3624 = vrot.lane.b32.xlu0 %v3481, 127
      %v3625 = vpop.permute.xlu0 %3624
      %3626 = vrot.lane.b32.xlu0 %v3498, 127
      %v3627 = vpop.permute.xlu0 %3626
      %3628 = vrot.lane.b32.xlu0 %v3515, 127
      %v3629 = vpop.permute.xlu0 %3628
      %3630 = vrot.lane.b32.xlu0 %v3532, 127
      %v3631 = vpop.permute.xlu0 %3630
      %3632 = vrot.lane.b32.xlu0 %v3549, 127
      %v3633 = vpop.permute.xlu0 %3632
      %3634 = vrot.lane.b32.xlu0 %v3566, 127
      %v3635 = vpop.permute.xlu0 %3634
      %3636 = vrot.lane.b32.xlu0 %v3583, 127
      %v3637 = vpop.permute.xlu0 %3636
      %3638 = vrot.lane.b32.xlu0 %v3600, 127
      %v3639 = vpop.permute.xlu0 %3638
      %3640 = vrot.lane.b32.xlu0 %v3617, 127
      %v3641 = vpop.permute.xlu0 %3640
      %vm3642 = vcmask 130048
      %v3643 = vsel %vm3642, %v3619, 0
      %v3645 = vsel %vm3642, %v3621, 0
      %v3647 = vsel %vm3642, %v3623, 0
      %v3649 = vsel %vm3642, %v3625, 0
      %v3651 = vsel %vm3642, %v3627, 0
      %v3653 = vsel %vm3642, %v3629, 0
      %v3655 = vsel %vm3642, %v3631, 0
      %v3657 = vsel %vm3642, %v3633, 0
      %v3659 = vsel %vm3642, %v3635, 0
      %v3661 = vsel %vm3642, %v3637, 0
      %v3663 = vsel %vm3642, %v3639, 0
      %v3665 = vsel %vm3642, %v3641, 0
      %3667 = vmatprep.subr.mxu0 0.0
      %3668 = vmatpush1.msra.mxu0 %v2707
      %3669 = vmatprep.subr.mxu0 0.0
      %3670 = vmatpush1.msra.mxu0 %v2708
      %3671 = vmatprep.subr.mxu0 0.0
      %3672 = vmatpush1.msra.mxu0 0.0
      %3673 = vmatprep.subr.mxu0 0.0
      %3674 = vmatpush1.msra.mxu0 0.0
      %3675 = vmatprep.subr.mxu0 0.0
      %3676 = vmatpush1.msra.mxu0 0.0
      %3677 = vmatprep.subr.mxu0 0.0
      %3678 = vmatpush1.msra.mxu0 0.0
      %3679 = vmatprep.subr.mxu0 0.0
      %3680 = vmatpush1.msra.mxu0 0.0
      %3681 = vmatprep.subr.mxu0 0.0
      %3682 = vmatpush1.msra.mxu0 0.0
      %3683 = vmatprep.subr.mxu0 0.0
      %3684 = vmatpush1.msra.mxu0 0.0
      %3685 = vmatprep.subr.mxu0 0.0
      %3686 = vmatpush1.msra.mxu0 0.0
      %3687 = vmatprep.subr.mxu0 0.0
      %3688 = vmatpush1.msra.mxu0 0.0
      %3689 = vmatprep.subr.mxu0 0.0
      %3690 = vmatpush1.msra.mxu0 0.0
      %3691 = vmatprep.subr.mxu0 0.0
      %3692 = vmatpush1.msra.mxu0 0.0
      %3693 = vmatprep.subr.mxu0 0.0
      %3694 = vmatpush1.msra.mxu0 0.0
      %3695 = vmatprep.subr.mxu0 0.0
      %3696 = vmatpush1.msra.mxu0 0.0
      %3697 = vmatprep.subr.mxu0 0.0
      %3698 = vmatpush1.msra.mxu0 0.0
      %3699 = vmatprep.subr.mxu0 0.0
      %3700 = vmatpush1.msra.mxu0 0.0
      %3701 = vmatprep.subr.mxu0 0.0
      %3702 = vmatpush1.msra.mxu0 0.0
      %3703 = vmatprep.subr.mxu0 0.0
      %3704 = vmatpush1.msra.mxu0 0.0
      %3705 = vmatprep.subr.mxu0 0.0
      %3706 = vmatpush1.msra.mxu0 0.0
      %3707 = vmatprep.subr.mxu0 0.0
      %3708 = vmatpush1.msra.mxu0 0.0
      %3709 = vmatprep.subr.mxu0 0.0
      %3710 = vmatpush1.msra.mxu0 0.0
      %3711 = vmatprep.subr.mxu0 0.0
      %3712 = vmatpush1.msra.mxu0 0.0
      %3713 = vmatprep.subr.mxu0 0.0
      %3714 = vmatpush1.msra.mxu0 0.0
      %3715 = vmatprep.subr.mxu0 0.0
      %3716 = vmatpush1.msra.mxu0 0.0
      %3717 = vmatprep.subr.mxu0 0.0
      %3718 = vmatpush1.msra.mxu0 0.0
      %3719 = vmatprep.subr.mxu0 0.0
      %3720 = vmatpush1.msra.mxu0 0.0
      %3721 = vmatprep.subr.mxu0 0.0
      %3722 = vmatpush1.msra.mxu0 0.0
      %3723 = vmatprep.subr.mxu0 0.0
      %3724 = vmatpush1.msra.mxu0 0.0
      %3725 = vmatprep.subr.mxu0 0.0
      %3726 = vmatpush1.msra.mxu0 0.0
      %3727 = vmatprep.subr.mxu0 0.0
      %3728 = vmatpush1.msra.mxu0 0.0
      %3729 = vmatprep.subr.mxu0 0.0
      %3730 = vmatpush1.msra.mxu0 0.0
      %3731 = vmatprep.mubr.f32.mxu0 0.0
      %3732 = vmatmul.mubr.f32.gmra.mrb[0].mxu0 %v3643
      %v3733 = vpop.f32.mrb[0].mxu0
      %v3734 = vadd.f32 0.0, %v3733
      %v3735 = vpop.f32.mrb[0].mxu0
      %3736 = vmatprep.mubr.f32.mxu0 0.0
      %3737 = vmatmul.mubr.f32.gmra.mrb[0].mxu0 %v3645
      %v3738 = vpop.f32.mrb[0].mxu0
      %v3739 = vadd.f32 0.0, %v3738
      %v3740 = vpop.f32.mrb[0].mxu0
      %3741 = vmatprep.mubr.f32.mxu0 0.0
      %3742 = vmatmul.mubr.f32.gmra.mrb[0].mxu0 %v3647
      %v3743 = vpop.f32.mrb[0].mxu0
      %v3744 = vadd.f32 0.0, %v3743
      %v3745 = vpop.f32.mrb[0].mxu0
      %3746 = vmatprep.mubr.f32.mxu0 0.0
      %3747 = vmatmul.mubr.f32.gmra.mrb[0].mxu0 %v3649
      %v3748 = vpop.f32.mrb[0].mxu0
      %v3749 = vadd.f32 0.0, %v3748
      %v3750 = vpop.f32.mrb[0].mxu0
      %3751 = vmatprep.mubr.f32.mxu0 0.0
      %3752 = vmatmul.mubr.f32.gmra.mrb[0].mxu0 %v3651
      %v3753 = vpop.f32.mrb[0].mxu0
      %v3754 = vadd.f32 0.0, %v3753
      %v3755 = vpop.f32.mrb[0].mxu0
      %3756 = vmatprep.mubr.f32.mxu0 0.0
      %3757 = vmatmul.mubr.f32.gmra.mrb[0].mxu0 %v3653
      %v3758 = vpop.f32.mrb[0].mxu0
      %v3759 = vadd.f32 0.0, %v3758
      %v3760 = vpop.f32.mrb[0].mxu0
      %3761 = vmatprep.mubr.f32.mxu0 0.0
      %3762 = vmatmul.mubr.f32.gmra.mrb[0].mxu0 %v3655
      %v3763 = vpop.f32.mrb[0].mxu0
      %v3764 = vadd.f32 0.0, %v3763
      %v3765 = vpop.f32.mrb[0].mxu0
      %3766 = vmatprep.mubr.f32.mxu0 0.0
      %3767 = vmatmul.mubr.f32.gmra.mrb[0].mxu0 %v3657
      %v3768 = vpop.f32.mrb[0].mxu0
      %v3769 = vadd.f32 0.0, %v3768
      %v3770 = vpop.f32.mrb[0].mxu0
      %3771 = vmatprep.mubr.f32.mxu0 0.0
      %3772 = vmatmul.mubr.f32.gmra.mrb[0].mxu0 %v3659
      %v3773 = vpop.f32.mrb[0].mxu0
      %v3774 = vadd.f32 0.0, %v3773
      %v3775 = vpop.f32.mrb[0].mxu0
      %3776 = vmatprep.mubr.f32.mxu0 0.0
      %3777 = vmatmul.mubr.f32.gmra.mrb[0].mxu0 %v3661
      %v3778 = vpop.f32.mrb[0].mxu0
      %v3779 = vadd.f32 0.0, %v3778
      %v3780 = vpop.f32.mrb[0].mxu0
      %3781 = vmatprep.mubr.f32.mxu0 0.0
      %3782 = vmatmul.mubr.f32.gmra.mrb[0].mxu0 %v3663
      %v3783 = vpop.f32.mrb[0].mxu0
      %v3784 = vadd.f32 0.0, %v3783
      %v3785 = vpop.f32.mrb[0].mxu0
      %3786 = vmatprep.mubr.f32.mxu0 0.0
      %3787 = vmatmul.mubr.f32.gmra.mrb[0].mxu0 %v3665
      %v3788 = vpop.f32.mrb[0].mxu0
      %v3789 = vadd.f32 0.0, %v3788
      %v3790 = vpop.f32.mrb[0].mxu0
      %3791 = vdwg.mxu0
      %v3792 = vcombine.low %v2877, %v2885
      %v3793 = vcombine.low %v2884, %v2893
      %v3795 = vunpack.c.l.s4 1983009808
      %v3796 = vunpack.c.0.s8 %v3795
      %v3797 = vlaneseq
      %v3798 = vshrl.u32 %v3797, 7
      %v3799 = vsub.s32 %v3796, %v3798
      %v3800 = vrot.slane %v3792, %v3799
      %v3802 = vunpack.c.l.s4 1983009808
      %v3803 = vunpack.c.0.s8 %v3802
      %v3804 = vlaneseq
      %v3805 = vshrl.u32 %v3804, 7
      %v3806 = vsub.s32 %v3803, %v3805
      %v3807 = vrot.slane %v3793, %v3806
      %v3808 = vcombine.low %v3800, %v3807
      %v3809 = vcombine.low %v2901, %v2900
      %v3810 = vcombine.low %v2909, %v2917
      %v3812 = vunpack.c.l.s4 1983009808
      %v3813 = vunpack.c.0.s8 %v3812
      %v3814 = vlaneseq
      %v3815 = vshrl.u32 %v3814, 7
      %v3816 = vsub.s32 %v3813, %v3815
      %v3817 = vrot.slane %v3809, %v3816
      %v3819 = vunpack.c.l.s4 1983009808
      %v3820 = vunpack.c.0.s8 %v3819
      %v3821 = vlaneseq
      %v3822 = vshrl.u32 %v3821, 7
      %v3823 = vsub.s32 %v3820, %v3822
      %v3824 = vrot.slane %v3810, %v3823
      %v3825 = vcombine.low %v3817, %v3824
      %v3826 = vcombine.low %v2916, %v2925
      %v3827 = vcombine.low %v2933, %v2932
      %v3829 = vunpack.c.l.s4 1983009808
      %v3830 = vunpack.c.0.s8 %v3829
      %v3831 = vlaneseq
      %v3832 = vshrl.u32 %v3831, 7
      %v3833 = vsub.s32 %v3830, %v3832
      %v3834 = vrot.slane %v3826, %v3833
      %v3836 = vunpack.c.l.s4 1983009808
      %v3837 = vunpack.c.0.s8 %v3836
      %v3838 = vlaneseq
      %v3839 = vshrl.u32 %v3838, 7
      %v3840 = vsub.s32 %v3837, %v3839
      %v3841 = vrot.slane %v3827, %v3840
      %v3842 = vcombine.low %v3834, %v3841
      %v3843 = vcombine.low %v2941, %v2949
      %v3844 = vcombine.low %v2948, %v2957
      %v3846 = vunpack.c.l.s4 1983009808
      %v3847 = vunpack.c.0.s8 %v3846
      %v3848 = vlaneseq
      %v3849 = vshrl.u32 %v3848, 7
      %v3850 = vsub.s32 %v3847, %v3849
      %v3851 = vrot.slane %v3843, %v3850
      %v3853 = vunpack.c.l.s4 1983009808
      %v3854 = vunpack.c.0.s8 %v3853
      %v3855 = vlaneseq
      %v3856 = vshrl.u32 %v3855, 7
      %v3857 = vsub.s32 %v3854, %v3856
      %v3858 = vrot.slane %v3844, %v3857
      %v3859 = vcombine.low %v3851, %v3858
      %v3860 = vcombine.low %v2965, %v2964
      %v3861 = vcombine.low %v2973, %v2981
      %v3863 = vunpack.c.l.s4 1983009808
      %v3864 = vunpack.c.0.s8 %v3863
      %v3865 = vlaneseq
      %v3866 = vshrl.u32 %v3865, 7
      %v3867 = vsub.s32 %v3864, %v3866
      %v3868 = vrot.slane %v3860, %v3867
      %v3870 = vunpack.c.l.s4 1983009808
      %v3871 = vunpack.c.0.s8 %v3870
      %v3872 = vlaneseq
      %v3873 = vshrl.u32 %v3872, 7
      %v3874 = vsub.s32 %v3871, %v3873
      %v3875 = vrot.slane %v3861, %v3874
      %v3876 = vcombine.low %v3868, %v3875
      %v3877 = vcombine.low %v2980, %v2989
      %v3878 = vcombine.low %v2997, %v2996
      %v3880 = vunpack.c.l.s4 1983009808
      %v3881 = vunpack.c.0.s8 %v3880
      %v3882 = vlaneseq
      %v3883 = vshrl.u32 %v3882, 7
      %v3884 = vsub.s32 %v3881, %v3883
      %v3885 = vrot.slane %v3877, %v3884
      %v3887 = vunpack.c.l.s4 1983009808
      %v3888 = vunpack.c.0.s8 %v3887
      %v3889 = vlaneseq
      %v3890 = vshrl.u32 %v3889, 7
      %v3891 = vsub.s32 %v3888, %v3890
      %v3892 = vrot.slane %v3878, %v3891
      %v3893 = vcombine.low %v3885, %v3892
      %v3894 = vcombine.low %v3005, %v3013
      %v3895 = vcombine.low %v3012, %v3021
      %v3897 = vunpack.c.l.s4 1983009808
      %v3898 = vunpack.c.0.s8 %v3897
      %v3899 = vlaneseq
      %v3900 = vshrl.u32 %v3899, 7
      %v3901 = vsub.s32 %v3898, %v3900
      %v3902 = vrot.slane %v3894, %v3901
      %v3904 = vunpack.c.l.s4 1983009808
      %v3905 = vunpack.c.0.s8 %v3904
      %v3906 = vlaneseq
      %v3907 = vshrl.u32 %v3906, 7
      %v3908 = vsub.s32 %v3905, %v3907
      %v3909 = vrot.slane %v3895, %v3908
      %v3910 = vcombine.low %v3902, %v3909
      %v3911 = vcombine.low %v3029, %v3028
      %v3912 = vcombine.low %v3037, %v3045
      %v3914 = vunpack.c.l.s4 1983009808
      %v3915 = vunpack.c.0.s8 %v3914
      %v3916 = vlaneseq
      %v3917 = vshrl.u32 %v3916, 7
      %v3918 = vsub.s32 %v3915, %v3917
      %v3919 = vrot.slane %v3911, %v3918
      %v3921 = vunpack.c.l.s4 1983009808
      %v3922 = vunpack.c.0.s8 %v3921
      %v3923 = vlaneseq
      %v3924 = vshrl.u32 %v3923, 7
      %v3925 = vsub.s32 %v3922, %v3924
      %v3926 = vrot.slane %v3912, %v3925
      %v3927 = vcombine.low %v3919, %v3926
      %v3928 = vcombine.low %v3044, %v3053
      %v3929 = vcombine.low %v3061, %v3060
      %v3931 = vunpack.c.l.s4 1983009808
      %v3932 = vunpack.c.0.s8 %v3931
      %v3933 = vlaneseq
      %v3934 = vshrl.u32 %v3933, 7
      %v3935 = vsub.s32 %v3932, %v3934
      %v3936 = vrot.slane %v3928, %v3935
      %v3938 = vunpack.c.l.s4 1983009808
      %v3939 = vunpack.c.0.s8 %v3938
      %v3940 = vlaneseq
      %v3941 = vshrl.u32 %v3940, 7
      %v3942 = vsub.s32 %v3939, %v3941
      %v3943 = vrot.slane %v3929, %v3942
      %v3944 = vcombine.low %v3936, %v3943
      %v3945 = vcombine.low %v3069, %v3077
      %v3946 = vcombine.low %v3076, %v3085
      %v3948 = vunpack.c.l.s4 1983009808
      %v3949 = vunpack.c.0.s8 %v3948
      %v3950 = vlaneseq
      %v3951 = vshrl.u32 %v3950, 7
      %v3952 = vsub.s32 %v3949, %v3951
      %v3953 = vrot.slane %v3945, %v3952
      %v3955 = vunpack.c.l.s4 1983009808
      %v3956 = vunpack.c.0.s8 %v3955
      %v3957 = vlaneseq
      %v3958 = vshrl.u32 %v3957, 7
      %v3959 = vsub.s32 %v3956, %v3958
      %v3960 = vrot.slane %v3946, %v3959
      %v3961 = vcombine.low %v3953, %v3960
      %v3962 = vcombine.low %v3093, %v3092
      %v3963 = vcombine.low %v3101, %v3109
      %v3965 = vunpack.c.l.s4 1983009808
      %v3966 = vunpack.c.0.s8 %v3965
      %v3967 = vlaneseq
      %v3968 = vshrl.u32 %v3967, 7
      %v3969 = vsub.s32 %v3966, %v3968
      %v3970 = vrot.slane %v3962, %v3969
      %v3972 = vunpack.c.l.s4 1983009808
      %v3973 = vunpack.c.0.s8 %v3972
      %v3974 = vlaneseq
      %v3975 = vshrl.u32 %v3974, 7
      %v3976 = vsub.s32 %v3973, %v3975
      %v3977 = vrot.slane %v3963, %v3976
      %v3978 = vcombine.low %v3970, %v3977
      %v3979 = vcombine.low %v3108, %v3117
      %v3980 = vcombine.low %v3125, %v3124
      %v3982 = vunpack.c.l.s4 1983009808
      %v3983 = vunpack.c.0.s8 %v3982
      %v3984 = vlaneseq
      %v3985 = vshrl.u32 %v3984, 7
      %v3986 = vsub.s32 %v3983, %v3985
      %v3987 = vrot.slane %v3979, %v3986
      %v3989 = vunpack.c.l.s4 1983009808
      %v3990 = vunpack.c.0.s8 %v3989
      %v3991 = vlaneseq
      %v3992 = vshrl.u32 %v3991, 7
      %v3993 = vsub.s32 %v3990, %v3992
      %v3994 = vrot.slane %v3980, %v3993
      %v3995 = vcombine.low %v3987, %v3994
      %v3996 = vsel %vm3642, %v3808, 0
      %v3998 = vsel %vm3642, %v3825, 0
      %v4000 = vsel %vm3642, %v3842, 0
      %v4002 = vsel %vm3642, %v3859, 0
      %v4004 = vsel %vm3642, %v3876, 0
      %v4006 = vsel %vm3642, %v3893, 0
      %v4008 = vsel %vm3642, %v3910, 0
      %v4010 = vsel %vm3642, %v3927, 0
      %v4012 = vsel %vm3642, %v3944, 0
      %v4014 = vsel %vm3642, %v3961, 0
      %v4016 = vsel %vm3642, %v3978, 0
      %v4018 = vsel %vm3642, %v3995, 0
      %4020 = vmatprep.subr.mxu0 0.0
      %4021 = vmatpush1.msra.mxu0 %v2699
      %4022 = vmatprep.subr.mxu0 0.0
      %4023 = vmatpush1.msra.mxu0 %v2700
      %4024 = vmatprep.subr.mxu0 0.0
      %4025 = vmatpush1.msra.mxu0 0.0
      %4026 = vmatprep.subr.mxu0 0.0
      %4027 = vmatpush1.msra.mxu0 0.0
      %4028 = vmatprep.subr.mxu0 0.0
      %4029 = vmatpush1.msra.mxu0 0.0
      %4030 = vmatprep.subr.mxu0 0.0
      %4031 = vmatpush1.msra.mxu0 0.0
      %4032 = vmatprep.subr.mxu0 0.0
      %4033 = vmatpush1.msra.mxu0 0.0
      %4034 = vmatprep.subr.mxu0 0.0
      %4035 = vmatpush1.msra.mxu0 0.0
      %4036 = vmatprep.subr.mxu0 0.0
      %4037 = vmatpush1.msra.mxu0 0.0
      %4038 = vmatprep.subr.mxu0 0.0
      %4039 = vmatpush1.msra.mxu0 0.0
      %4040 = vmatprep.subr.mxu0 0.0
      %4041 = vmatpush1.msra.mxu0 0.0
      %4042 = vmatprep.subr.mxu0 0.0
      %4043 = vmatpush1.msra.mxu0 0.0
      %4044 = vmatprep.subr.mxu0 0.0
      %4045 = vmatpush1.msra.mxu0 0.0
      %4046 = vmatprep.subr.mxu0 0.0
      %4047 = vmatpush1.msra.mxu0 0.0
      %4048 = vmatprep.subr.mxu0 0.0
      %4049 = vmatpush1.msra.mxu0 0.0
      %4050 = vmatprep.subr.mxu0 0.0
      %4051 = vmatpush1.msra.mxu0 0.0
      %4052 = vmatprep.subr.mxu0 0.0
      %4053 = vmatpush1.msra.mxu0 0.0
      %4054 = vmatprep.subr.mxu0 0.0
      %4055 = vmatpush1.msra.mxu0 0.0
      %4056 = vmatprep.subr.mxu0 0.0
      %4057 = vmatpush1.msra.mxu0 0.0
      %4058 = vmatprep.subr.mxu0 0.0
      %4059 = vmatpush1.msra.mxu0 0.0
      %4060 = vmatprep.subr.mxu0 0.0
      %4061 = vmatpush1.msra.mxu0 0.0
      %4062 = vmatprep.subr.mxu0 0.0
      %4063 = vmatpush1.msra.mxu0 0.0
      %4064 = vmatprep.subr.mxu0 0.0
      %4065 = vmatpush1.msra.mxu0 0.0
      %4066 = vmatprep.subr.mxu0 0.0
      %4067 = vmatpush1.msra.mxu0 0.0
      %4068 = vmatprep.subr.mxu0 0.0
      %4069 = vmatpush1.msra.mxu0 0.0
      %4070 = vmatprep.subr.mxu0 0.0
      %4071 = vmatpush1.msra.mxu0 0.0
      %4072 = vmatprep.subr.mxu0 0.0
      %4073 = vmatpush1.msra.mxu0 0.0
      %4074 = vmatprep.subr.mxu0 0.0
      %4075 = vmatpush1.msra.mxu0 0.0
      %4076 = vmatprep.subr.mxu0 0.0
      %4077 = vmatpush1.msra.mxu0 0.0
      %4078 = vmatprep.subr.mxu0 0.0
      %4079 = vmatpush1.msra.mxu0 0.0
      %4080 = vmatprep.subr.mxu0 0.0
      %4081 = vmatpush1.msra.mxu0 0.0
      %4082 = vmatprep.subr.mxu0 0.0
      %4083 = vmatpush1.msra.mxu0 0.0
      %4084 = vmatprep.mubr.f32.mxu0 0.0
      %4085 = vmatmul.mubr.f32.gmra.mrb[0].mxu0 %v3996
      %v4086 = vpop.f32.mrb[0].mxu0
      %v4087 = vadd.f32 %v3734, %v4086
      %v4088 = vpop.f32.mrb[0].mxu0
      %4089 = vmatprep.mubr.f32.mxu0 0.0
      %4090 = vmatmul.mubr.f32.gmra.mrb[0].mxu0 %v3998
      %v4091 = vpop.f32.mrb[0].mxu0
      %v4092 = vadd.f32 %v3739, %v4091
      %v4093 = vpop.f32.mrb[0].mxu0
      %4094 = vmatprep.mubr.f32.mxu0 0.0
      %4095 = vmatmul.mubr.f32.gmra.mrb[0].mxu0 %v4000
      %v4096 = vpop.f32.mrb[0].mxu0
      %v4097 = vadd.f32 %v3744, %v4096
      %v4098 = vpop.f32.mrb[0].mxu0
      %4099 = vmatprep.mubr.f32.mxu0 0.0
      %4100 = vmatmul.mubr.f32.gmra.mrb[0].mxu0 %v4002
      %v4101 = vpop.f32.mrb[0].mxu0
      %v4102 = vadd.f32 %v3749, %v4101
      %v4103 = vpop.f32.mrb[0].mxu0
      %4104 = vmatprep.mubr.f32.mxu0 0.0
      %4105 = vmatmul.mubr.f32.gmra.mrb[0].mxu0 %v4004
      %v4106 = vpop.f32.mrb[0].mxu0
      %v4107 = vadd.f32 %v3754, %v4106
      %v4108 = vpop.f32.mrb[0].mxu0
      %4109 = vmatprep.mubr.f32.mxu0 0.0
      %4110 = vmatmul.mubr.f32.gmra.mrb[0].mxu0 %v4006
      %v4111 = vpop.f32.mrb[0].mxu0
      %v4112 = vadd.f32 %v3759, %v4111
      %v4113 = vpop.f32.mrb[0].mxu0
      %4114 = vmatprep.mubr.f32.mxu0 0.0
      %4115 = vmatmul.mubr.f32.gmra.mrb[0].mxu0 %v4008
      %v4116 = vpop.f32.mrb[0].mxu0
      %v4117 = vadd.f32 %v3764, %v4116
      %v4118 = vpop.f32.mrb[0].mxu0
      %4119 = vmatprep.mubr.f32.mxu0 0.0
      %4120 = vmatmul.mubr.f32.gmra.mrb[0].mxu0 %v4010
      %v4121 = vpop.f32.mrb[0].mxu0
      %v4122 = vadd.f32 %v3769, %v4121
      %v4123 = vpop.f32.mrb[0].mxu0
      %4124 = vmatprep.mubr.f32.mxu0 0.0
      %4125 = vmatmul.mubr.f32.gmra.mrb[0].mxu0 %v4012
      %v4126 = vpop.f32.mrb[0].mxu0
      %v4127 = vadd.f32 %v3774, %v4126
      %v4128 = vpop.f32.mrb[0].mxu0
      %4129 = vmatprep.mubr.f32.mxu0 0.0
      %4130 = vmatmul.mubr.f32.gmra.mrb[0].mxu0 %v4014
      %v4131 = vpop.f32.mrb[0].mxu0
      %v4132 = vadd.f32 %v3779, %v4131
      %v4133 = vpop.f32.mrb[0].mxu0
      %4134 = vmatprep.mubr.f32.mxu0 0.0
      %4135 = vmatmul.mubr.f32.gmra.mrb[0].mxu0 %v4016
      %v4136 = vpop.f32.mrb[0].mxu0
      %v4137 = vadd.f32 %v3784, %v4136
      %v4138 = vpop.f32.mrb[0].mxu0
      %4139 = vmatprep.mubr.f32.mxu0 0.0
      %4140 = vmatmul.mubr.f32.gmra.mrb[0].mxu0 %v4018
      %v4141 = vpop.f32.mrb[0].mxu0
      %v4142 = vadd.f32 %v3789, %v4141
      %v4143 = vpop.f32.mrb[0].mxu0
      %4144 = vdwg.mxu0
      %v4145 = vadd.f32 %v581, %v429
      %v4146 = vadd.f32 %v721, %v566
      %v4147 = vadd.f32 %v861, %v706
      %v4148 = vadd.f32 %v1001, %v846
      %v4149 = vadd.f32 %v1141, %v986
      %v4150 = vadd.f32 %v1281, %v1126
      %v4151 = vadd.f32 %v1421, %v1266
      %v4152 = vadd.f32 %v1561, %v1406
      %v4153 = vadd.f32 %v1701, %v1546
      %v4154 = vadd.f32 %v1841, %v1686
      %v4155 = vadd.f32 %v1981, %v1826
      %v4156 = vadd.f32 %v2121, %v1966
      %v4157 = vadd.f32 %v2261, %v2106
      %v4158 = vadd.f32 %v2401, %v2246
      %v4159 = vadd.f32 %v2541, %v2386
      %v4160 = vadd.f32 %v2675, %v2526
      %v4193 = vrot.slane %v586, 2
      %v4194 = vrot.slane %v591, 2
      %v4195 = vsel %vm2741, %v4193, %v4194
      %v4196 = vrot.slane %v726, 2
      %v4197 = vrot.slane %v731, 2
      %v4198 = vsel %vm2741, %v4196, %v4197
      %v4199 = vrot.slane %v866, 2
      %v4200 = vrot.slane %v871, 2
      %v4201 = vsel %vm2741, %v4199, %v4200
      %v4202 = vrot.slane %v1006, 2
      %v4203 = vrot.slane %v1011, 2
      %v4204 = vsel %vm2741, %v4202, %v4203
      %v4205 = vrot.slane %v1146, 2
      %v4206 = vrot.slane %v1151, 2
      %v4207 = vsel %vm2741, %v4205, %v4206
      %v4208 = vrot.slane %v1286, 2
      %v4209 = vrot.slane %v1291, 2
      %v4210 = vsel %vm2741, %v4208, %v4209
      %v4211 = vrot.slane %v1426, 2
      %v4212 = vrot.slane %v1431, 2
      %v4213 = vsel %vm2741, %v4211, %v4212
      %v4214 = vrot.slane %v1566, 2
      %v4215 = vrot.slane %v1571, 2
      %v4216 = vsel %vm2741, %v4214, %v4215
      %v4217 = vrot.slane %v1706, 2
      %v4218 = vrot.slane %v1711, 2
      %v4219 = vsel %vm2741, %v4217, %v4218
      %v4220 = vrot.slane %v1846, 2
      %v4221 = vrot.slane %v1851, 2
      %v4222 = vsel %vm2741, %v4220, %v4221
      %v4223 = vrot.slane %v1986, 2
      %v4224 = vrot.slane %v1991, 2
      %v4225 = vsel %vm2741, %v4223, %v4224
      %v4226 = vrot.slane %v2126, 2
      %v4227 = vrot.slane %v2131, 2
      %v4228 = vsel %vm2741, %v4226, %v4227
      %v4229 = vrot.slane %v2266, 2
      %v4230 = vrot.slane %v2271, 2
      %v4231 = vsel %vm2741, %v4229, %v4230
      %v4232 = vrot.slane %v2406, 2
      %v4233 = vrot.slane %v2411, 2
      %v4234 = vsel %vm2741, %v4232, %v4233
      %v4235 = vrot.slane %v2546, 2
      %v4236 = vrot.slane %v2551, 2
      %v4237 = vsel %vm2741, %v4235, %v4236
      %v4238 = vrot.slane %v2680, 2
      %v4239 = vrot.slane %v2685, 2
      %v4240 = vsel %vm2741, %v4238, %v4239
      %4241 = vrot.lane.b32.xlu0 %v4195, 1
      %v4242 = vpop.permute.xlu0 %4241
      %4243 = vrot.lane.b32.xlu0 %v4198, 1
      %v4244 = vpop.permute.xlu0 %4243
      %4245 = vrot.lane.b32.xlu0 %v4201, 1
      %v4246 = vpop.permute.xlu0 %4245
      %4247 = vrot.lane.b32.xlu0 %v4204, 1
      %v4248 = vpop.permute.xlu0 %4247
      %4249 = vrot.lane.b32.xlu0 %v4207, 1
      %v4250 = vpop.permute.xlu0 %4249
      %4251 = vrot.lane.b32.xlu0 %v4210, 1
      %v4252 = vpop.permute.xlu0 %4251
      %4253 = vrot.lane.b32.xlu0 %v4213, 1
      %v4254 = vpop.permute.xlu0 %4253
      %4255 = vrot.lane.b32.xlu0 %v4216, 1
      %v4256 = vpop.permute.xlu0 %4255
      %4257 = vrot.lane.b32.xlu0 %v4219, 1
      %v4258 = vpop.permute.xlu0 %4257
      %4259 = vrot.lane.b32.xlu0 %v4222, 1
      %v4260 = vpop.permute.xlu0 %4259
      %4261 = vrot.lane.b32.xlu0 %v4225, 1
      %v4262 = vpop.permute.xlu0 %4261
      %4263 = vrot.lane.b32.xlu0 %v4228, 1
      %v4264 = vpop.permute.xlu0 %4263
      %4265 = vrot.lane.b32.xlu0 %v4231, 1
      %v4266 = vpop.permute.xlu0 %4265
      %4267 = vrot.lane.b32.xlu0 %v4234, 1
      %v4268 = vpop.permute.xlu0 %4267
      %4269 = vrot.lane.b32.xlu0 %v4237, 1
      %v4270 = vpop.permute.xlu0 %4269
      %4271 = vrot.lane.b32.xlu0 %v4240, 1
      %v4272 = vpop.permute.xlu0 %4271
      %v4289 = vadd.f32 %v591, %v4242
      %v4290 = vadd.f32 %v731, %v4244
      %v4291 = vadd.f32 %v871, %v4246
      %v4292 = vadd.f32 %v1011, %v4248
      %v4293 = vadd.f32 %v1151, %v4250
      %v4294 = vadd.f32 %v1291, %v4252
      %v4295 = vadd.f32 %v1431, %v4254
      %v4296 = vadd.f32 %v1571, %v4256
      %v4297 = vadd.f32 %v1711, %v4258
      %v4298 = vadd.f32 %v1851, %v4260
      %v4299 = vadd.f32 %v1991, %v4262
      %v4300 = vadd.f32 %v2131, %v4264
      %v4301 = vadd.f32 %v2271, %v4266
      %v4302 = vadd.f32 %v2411, %v4268
      %v4303 = vadd.f32 %v2551, %v4270
      %v4304 = vadd.f32 %v2685, %v4272
      %v4305 = vadd.f32 %v4289, %v439
      %v4306 = vadd.f32 %v4290, %v576
      %v4307 = vadd.f32 %v4291, %v716
      %v4308 = vadd.f32 %v4292, %v856
      %v4309 = vadd.f32 %v4293, %v996
      %v4310 = vadd.f32 %v4294, %v1136
      %v4311 = vadd.f32 %v4295, %v1276
      %v4312 = vadd.f32 %v4296, %v1416
      %v4313 = vadd.f32 %v4297, %v1556
      %v4314 = vadd.f32 %v4298, %v1696
      %v4315 = vadd.f32 %v4299, %v1836
      %v4316 = vadd.f32 %v4300, %v1976
      %v4317 = vadd.f32 %v4301, %v2116
      %v4318 = vadd.f32 %v4302, %v2256
      %v4319 = vadd.f32 %v4303, %v2396
      %v4320 = vadd.f32 %v4304, %v2536
      %v4353 = vrot.slane %v434, 2
      %v4354 = vrot.slane %v439, 2
      %v4355 = vsel %vm2741, %v4353, %v4354
      %v4356 = vrot.slane %v571, 2
      %v4357 = vrot.slane %v576, 2
      %v4358 = vsel %vm2741, %v4356, %v4357
      %v4359 = vrot.slane %v711, 2
      %v4360 = vrot.slane %v716, 2
      %v4361 = vsel %vm2741, %v4359, %v4360
      %v4362 = vrot.slane %v851, 2
      %v4363 = vrot.slane %v856, 2
      %v4364 = vsel %vm2741, %v4362, %v4363
      %v4365 = vrot.slane %v991, 2
      %v4366 = vrot.slane %v996, 2
      %v4367 = vsel %vm2741, %v4365, %v4366
      %v4368 = vrot.slane %v1131, 2
      %v4369 = vrot.slane %v1136, 2
      %v4370 = vsel %vm2741, %v4368, %v4369
      %v4371 = vrot.slane %v1271, 2
      %v4372 = vrot.slane %v1276, 2
      %v4373 = vsel %vm2741, %v4371, %v4372
      %v4374 = vrot.slane %v1411, 2
      %v4375 = vrot.slane %v1416, 2
      %v4376 = vsel %vm2741, %v4374, %v4375
      %v4377 = vrot.slane %v1551, 2
      %v4378 = vrot.slane %v1556, 2
      %v4379 = vsel %vm2741, %v4377, %v4378
      %v4380 = vrot.slane %v1691, 2
      %v4381 = vrot.slane %v1696, 2
      %v4382 = vsel %vm2741, %v4380, %v4381
      %v4383 = vrot.slane %v1831, 2
      %v4384 = vrot.slane %v1836, 2
      %v4385 = vsel %vm2741, %v4383, %v4384
      %v4386 = vrot.slane %v1971, 2
      %v4387 = vrot.slane %v1976, 2
      %v4388 = vsel %vm2741, %v4386, %v4387
      %v4389 = vrot.slane %v2111, 2
      %v4390 = vrot.slane %v2116, 2
      %v4391 = vsel %vm2741, %v4389, %v4390
      %v4392 = vrot.slane %v2251, 2
      %v4393 = vrot.slane %v2256, 2
      %v4394 = vsel %vm2741, %v4392, %v4393
      %v4395 = vrot.slane %v2391, 2
      %v4396 = vrot.slane %v2396, 2
      %v4397 = vsel %vm2741, %v4395, %v4396
      %v4398 = vrot.slane %v2531, 2
      %v4399 = vrot.slane %v2536, 2
      %v4400 = vsel %vm2741, %v4398, %v4399
      %4401 = vrot.lane.b32.xlu0 %v4355, 1
      %v4402 = vpop.permute.xlu0 %4401
      %4403 = vrot.lane.b32.xlu0 %v4358, 1
      %v4404 = vpop.permute.xlu0 %4403
      %4405 = vrot.lane.b32.xlu0 %v4361, 1
      %v4406 = vpop.permute.xlu0 %4405
      %4407 = vrot.lane.b32.xlu0 %v4364, 1
      %v4408 = vpop.permute.xlu0 %4407
      %4409 = vrot.lane.b32.xlu0 %v4367, 1
      %v4410 = vpop.permute.xlu0 %4409
      %4411 = vrot.lane.b32.xlu0 %v4370, 1
      %v4412 = vpop.permute.xlu0 %4411
      %4413 = vrot.lane.b32.xlu0 %v4373, 1
      %v4414 = vpop.permute.xlu0 %4413
      %4415 = vrot.lane.b32.xlu0 %v4376, 1
      %v4416 = vpop.permute.xlu0 %4415
      %4417 = vrot.lane.b32.xlu0 %v4379, 1
      %v4418 = vpop.permute.xlu0 %4417
      %4419 = vrot.lane.b32.xlu0 %v4382, 1
      %v4420 = vpop.permute.xlu0 %4419
      %4421 = vrot.lane.b32.xlu0 %v4385, 1
      %v4422 = vpop.permute.xlu0 %4421
      %4423 = vrot.lane.b32.xlu0 %v4388, 1
      %v4424 = vpop.permute.xlu0 %4423
      %4425 = vrot.lane.b32.xlu0 %v4391, 1
      %v4426 = vpop.permute.xlu0 %4425
      %4427 = vrot.lane.b32.xlu0 %v4394, 1
      %v4428 = vpop.permute.xlu0 %4427
      %4429 = vrot.lane.b32.xlu0 %v4397, 1
      %v4430 = vpop.permute.xlu0 %4429
      %4431 = vrot.lane.b32.xlu0 %v4400, 1
      %v4432 = vpop.permute.xlu0 %4431
      %v4449 = vadd.f32 %v4305, %v4402
      %v4450 = vadd.f32 %v4306, %v4404
      %v4451 = vadd.f32 %v4307, %v4406
      %v4452 = vadd.f32 %v4308, %v4408
      %v4453 = vadd.f32 %v4309, %v4410
      %v4454 = vadd.f32 %v4310, %v4412
      %v4455 = vadd.f32 %v4311, %v4414
      %v4456 = vadd.f32 %v4312, %v4416
      %v4457 = vadd.f32 %v4313, %v4418
      %v4458 = vadd.f32 %v4314, %v4420
      %v4459 = vadd.f32 %v4315, %v4422
      %v4460 = vadd.f32 %v4316, %v4424
      %v4461 = vadd.f32 %v4317, %v4426
      %v4462 = vadd.f32 %v4318, %v4428
      %v4463 = vadd.f32 %v4319, %v4430
      %v4464 = vadd.f32 %v4320, %v4432
      %v4481 = vcombine.high %v4145, %v4145
      %v4483 = vunpack.c.l.s4 1983009808
      %v4484 = vunpack.c.0.s8 %v4483
      %v4485 = vlaneseq
      %v4486 = vshrl.u32 %v4485, 7
      %v4487 = vsub.s32 %v4484, %v4486
      %v4488 = vrot.slane %v4145, %v4487
      %v4490 = vunpack.c.l.s4 1983009808
      %v4491 = vunpack.c.0.s8 %v4490
      %v4492 = vlaneseq
      %v4493 = vshrl.u32 %v4492, 7
      %v4494 = vsub.s32 %v4491, %v4493
      %v4495 = vrot.slane %v4481, %v4494
      %v4496 = vcombine.high %v4488, %v4488
      %v4497 = vcombine.high %v4146, %v4146
      %v4499 = vunpack.c.l.s4 1983009808
      %v4500 = vunpack.c.0.s8 %v4499
      %v4501 = vlaneseq
      %v4502 = vshrl.u32 %v4501, 7
      %v4503 = vsub.s32 %v4500, %v4502
      %v4504 = vrot.slane %v4146, %v4503
      %v4506 = vunpack.c.l.s4 1983009808
      %v4507 = vunpack.c.0.s8 %v4506
      %v4508 = vlaneseq
      %v4509 = vshrl.u32 %v4508, 7
      %v4510 = vsub.s32 %v4507, %v4509
      %v4511 = vrot.slane %v4497, %v4510
      %v4512 = vcombine.high %v4504, %v4504
      %v4513 = vcombine.high %v4147, %v4147
      %v4515 = vunpack.c.l.s4 1983009808
      %v4516 = vunpack.c.0.s8 %v4515
      %v4517 = vlaneseq
      %v4518 = vshrl.u32 %v4517, 7
      %v4519 = vsub.s32 %v4516, %v4518
      %v4520 = vrot.slane %v4147, %v4519
      %v4522 = vunpack.c.l.s4 1983009808
      %v4523 = vunpack.c.0.s8 %v4522
      %v4524 = vlaneseq
      %v4525 = vshrl.u32 %v4524, 7
      %v4526 = vsub.s32 %v4523, %v4525
      %v4527 = vrot.slane %v4513, %v4526
      %v4528 = vcombine.high %v4520, %v4520
      %v4529 = vcombine.high %v4148, %v4148
      %v4531 = vunpack.c.l.s4 1983009808
      %v4532 = vunpack.c.0.s8 %v4531
      %v4533 = vlaneseq
      %v4534 = vshrl.u32 %v4533, 7
      %v4535 = vsub.s32 %v4532, %v4534
      %v4536 = vrot.slane %v4148, %v4535
      %v4538 = vunpack.c.l.s4 1983009808
      %v4539 = vunpack.c.0.s8 %v4538
      %v4540 = vlaneseq
      %v4541 = vshrl.u32 %v4540, 7
      %v4542 = vsub.s32 %v4539, %v4541
      %v4543 = vrot.slane %v4529, %v4542
      %v4544 = vcombine.high %v4536, %v4536
      %v4545 = vcombine.high %v4149, %v4149
      %v4547 = vunpack.c.l.s4 1983009808
      %v4548 = vunpack.c.0.s8 %v4547
      %v4549 = vlaneseq
      %v4550 = vshrl.u32 %v4549, 7
      %v4551 = vsub.s32 %v4548, %v4550
      %v4552 = vrot.slane %v4149, %v4551
      %v4554 = vunpack.c.l.s4 1983009808
      %v4555 = vunpack.c.0.s8 %v4554
      %v4556 = vlaneseq
      %v4557 = vshrl.u32 %v4556, 7
      %v4558 = vsub.s32 %v4555, %v4557
      %v4559 = vrot.slane %v4545, %v4558
      %v4560 = vcombine.high %v4552, %v4552
      %v4561 = vcombine.high %v4150, %v4150
      %v4563 = vunpack.c.l.s4 1983009808
      %v4564 = vunpack.c.0.s8 %v4563
      %v4565 = vlaneseq
      %v4566 = vshrl.u32 %v4565, 7
      %v4567 = vsub.s32 %v4564, %v4566
      %v4568 = vrot.slane %v4150, %v4567
      %v4570 = vunpack.c.l.s4 1983009808
      %v4571 = vunpack.c.0.s8 %v4570
      %v4572 = vlaneseq
      %v4573 = vshrl.u32 %v4572, 7
      %v4574 = vsub.s32 %v4571, %v4573
      %v4575 = vrot.slane %v4561, %v4574
      %v4576 = vcombine.high %v4568, %v4568
      %v4577 = vcombine.high %v4151, %v4151
      %v4579 = vunpack.c.l.s4 1983009808
      %v4580 = vunpack.c.0.s8 %v4579
      %v4581 = vlaneseq
      %v4582 = vshrl.u32 %v4581, 7
      %v4583 = vsub.s32 %v4580, %v4582
      %v4584 = vrot.slane %v4151, %v4583
      %v4586 = vunpack.c.l.s4 1983009808
      %v4587 = vunpack.c.0.s8 %v4586
      %v4588 = vlaneseq
      %v4589 = vshrl.u32 %v4588, 7
      %v4590 = vsub.s32 %v4587, %v4589
      %v4591 = vrot.slane %v4577, %v4590
      %v4592 = vcombine.high %v4584, %v4584
      %v4593 = vcombine.high %v4152, %v4152
      %v4595 = vunpack.c.l.s4 1983009808
      %v4596 = vunpack.c.0.s8 %v4595
      %v4597 = vlaneseq
      %v4598 = vshrl.u32 %v4597, 7
      %v4599 = vsub.s32 %v4596, %v4598
      %v4600 = vrot.slane %v4152, %v4599
      %v4602 = vunpack.c.l.s4 1983009808
      %v4603 = vunpack.c.0.s8 %v4602
      %v4604 = vlaneseq
      %v4605 = vshrl.u32 %v4604, 7
      %v4606 = vsub.s32 %v4603, %v4605
      %v4607 = vrot.slane %v4593, %v4606
      %v4608 = vcombine.high %v4600, %v4600
      %v4609 = vcombine.high %v4153, %v4153
      %v4611 = vunpack.c.l.s4 1983009808
      %v4612 = vunpack.c.0.s8 %v4611
      %v4613 = vlaneseq
      %v4614 = vshrl.u32 %v4613, 7
      %v4615 = vsub.s32 %v4612, %v4614
      %v4616 = vrot.slane %v4153, %v4615
      %v4618 = vunpack.c.l.s4 1983009808
      %v4619 = vunpack.c.0.s8 %v4618
      %v4620 = vlaneseq
      %v4621 = vshrl.u32 %v4620, 7
      %v4622 = vsub.s32 %v4619, %v4621
      %v4623 = vrot.slane %v4609, %v4622
      %v4624 = vcombine.high %v4616, %v4616
      %v4625 = vcombine.high %v4154, %v4154
      %v4627 = vunpack.c.l.s4 1983009808
      %v4628 = vunpack.c.0.s8 %v4627
      %v4629 = vlaneseq
      %v4630 = vshrl.u32 %v4629, 7
      %v4631 = vsub.s32 %v4628, %v4630
      %v4632 = vrot.slane %v4154, %v4631
      %v4634 = vunpack.c.l.s4 1983009808
      %v4635 = vunpack.c.0.s8 %v4634
      %v4636 = vlaneseq
      %v4637 = vshrl.u32 %v4636, 7
      %v4638 = vsub.s32 %v4635, %v4637
      %v4639 = vrot.slane %v4625, %v4638
      %v4640 = vcombine.high %v4632, %v4632
      %v4641 = vcombine.high %v4155, %v4155
      %v4643 = vunpack.c.l.s4 1983009808
      %v4644 = vunpack.c.0.s8 %v4643
      %v4645 = vlaneseq
      %v4646 = vshrl.u32 %v4645, 7
      %v4647 = vsub.s32 %v4644, %v4646
      %v4648 = vrot.slane %v4155, %v4647
      %v4650 = vunpack.c.l.s4 1983009808
      %v4651 = vunpack.c.0.s8 %v4650
      %v4652 = vlaneseq
      %v4653 = vshrl.u32 %v4652, 7
      %v4654 = vsub.s32 %v4651, %v4653
      %v4655 = vrot.slane %v4641, %v4654
      %v4656 = vcombine.high %v4648, %v4648
      %v4657 = vcombine.high %v4156, %v4156
      %v4659 = vunpack.c.l.s4 1983009808
      %v4660 = vunpack.c.0.s8 %v4659
      %v4661 = vlaneseq
      %v4662 = vshrl.u32 %v4661, 7
      %v4663 = vsub.s32 %v4660, %v4662
      %v4664 = vrot.slane %v4156, %v4663
      %v4666 = vunpack.c.l.s4 1983009808
      %v4667 = vunpack.c.0.s8 %v4666
      %v4668 = vlaneseq
      %v4669 = vshrl.u32 %v4668, 7
      %v4670 = vsub.s32 %v4667, %v4669
      %v4671 = vrot.slane %v4657, %v4670
      %v4672 = vcombine.high %v4664, %v4664
      %v4673 = vcombine.high %v4157, %v4157
      %v4675 = vunpack.c.l.s4 1983009808
      %v4676 = vunpack.c.0.s8 %v4675
      %v4677 = vlaneseq
      %v4678 = vshrl.u32 %v4677, 7
      %v4679 = vsub.s32 %v4676, %v4678
      %v4680 = vrot.slane %v4157, %v4679
      %v4682 = vunpack.c.l.s4 1983009808
      %v4683 = vunpack.c.0.s8 %v4682
      %v4684 = vlaneseq
      %v4685 = vshrl.u32 %v4684, 7
      %v4686 = vsub.s32 %v4683, %v4685
      %v4687 = vrot.slane %v4673, %v4686
      %v4688 = vcombine.high %v4680, %v4680
      %v4689 = vcombine.high %v4158, %v4158
      %v4691 = vunpack.c.l.s4 1983009808
      %v4692 = vunpack.c.0.s8 %v4691
      %v4693 = vlaneseq
      %v4694 = vshrl.u32 %v4693, 7
      %v4695 = vsub.s32 %v4692, %v4694
      %v4696 = vrot.slane %v4158, %v4695
      %v4698 = vunpack.c.l.s4 1983009808
      %v4699 = vunpack.c.0.s8 %v4698
      %v4700 = vlaneseq
      %v4701 = vshrl.u32 %v4700, 7
      %v4702 = vsub.s32 %v4699, %v4701
      %v4703 = vrot.slane %v4689, %v4702
      %v4704 = vcombine.high %v4696, %v4696
      %v4705 = vcombine.high %v4159, %v4159
      %v4707 = vunpack.c.l.s4 1983009808
      %v4708 = vunpack.c.0.s8 %v4707
      %v4709 = vlaneseq
      %v4710 = vshrl.u32 %v4709, 7
      %v4711 = vsub.s32 %v4708, %v4710
      %v4712 = vrot.slane %v4159, %v4711
      %v4714 = vunpack.c.l.s4 1983009808
      %v4715 = vunpack.c.0.s8 %v4714
      %v4716 = vlaneseq
      %v4717 = vshrl.u32 %v4716, 7
      %v4718 = vsub.s32 %v4715, %v4717
      %v4719 = vrot.slane %v4705, %v4718
      %v4720 = vcombine.high %v4712, %v4712
      %v4721 = vcombine.high %v4160, %v4160
      %v4723 = vunpack.c.l.s4 1983009808
      %v4724 = vunpack.c.0.s8 %v4723
      %v4725 = vlaneseq
      %v4726 = vshrl.u32 %v4725, 7
      %v4727 = vsub.s32 %v4724, %v4726
      %v4728 = vrot.slane %v4160, %v4727
      %v4730 = vunpack.c.l.s4 1983009808
      %v4731 = vunpack.c.0.s8 %v4730
      %v4732 = vlaneseq
      %v4733 = vshrl.u32 %v4732, 7
      %v4734 = vsub.s32 %v4731, %v4733
      %v4735 = vrot.slane %v4721, %v4734
      %v4736 = vcombine.high %v4728, %v4728
      %v4753 = vcombine.high %v4449, %v4449
      %v4755 = vunpack.c.l.s4 1983009808
      %v4756 = vunpack.c.0.s8 %v4755
      %v4757 = vlaneseq
      %v4758 = vshrl.u32 %v4757, 7
      %v4759 = vsub.s32 %v4756, %v4758
      %v4760 = vrot.slane %v4449, %v4759
      %v4762 = vunpack.c.l.s4 1983009808
      %v4763 = vunpack.c.0.s8 %v4762
      %v4764 = vlaneseq
      %v4765 = vshrl.u32 %v4764, 7
      %v4766 = vsub.s32 %v4763, %v4765
      %v4767 = vrot.slane %v4753, %v4766
      %v4768 = vcombine.high %v4760, %v4760
      %v4769 = vcombine.high %v4767, %v4767
      %v4770 = vcombine.high %v4450, %v4450
      %v4772 = vunpack.c.l.s4 1983009808
      %v4773 = vunpack.c.0.s8 %v4772
      %v4774 = vlaneseq
      %v4775 = vshrl.u32 %v4774, 7
      %v4776 = vsub.s32 %v4773, %v4775
      %v4777 = vrot.slane %v4450, %v4776
      %v4779 = vunpack.c.l.s4 1983009808
      %v4780 = vunpack.c.0.s8 %v4779
      %v4781 = vlaneseq
      %v4782 = vshrl.u32 %v4781, 7
      %v4783 = vsub.s32 %v4780, %v4782
      %v4784 = vrot.slane %v4770, %v4783
      %v4785 = vcombine.high %v4777, %v4777
      %v4786 = vcombine.high %v4784, %v4784
      %v4787 = vcombine.high %v4451, %v4451
      %v4789 = vunpack.c.l.s4 1983009808
      %v4790 = vunpack.c.0.s8 %v4789
      %v4791 = vlaneseq
      %v4792 = vshrl.u32 %v4791, 7
      %v4793 = vsub.s32 %v4790, %v4792
      %v4794 = vrot.slane %v4451, %v4793
      %v4796 = vunpack.c.l.s4 1983009808
      %v4797 = vunpack.c.0.s8 %v4796
      %v4798 = vlaneseq
      %v4799 = vshrl.u32 %v4798, 7
      %v4800 = vsub.s32 %v4797, %v4799
      %v4801 = vrot.slane %v4787, %v4800
      %v4802 = vcombine.high %v4794, %v4794
      %v4803 = vcombine.high %v4801, %v4801
      %v4804 = vcombine.high %v4452, %v4452
      %v4806 = vunpack.c.l.s4 1983009808
      %v4807 = vunpack.c.0.s8 %v4806
      %v4808 = vlaneseq
      %v4809 = vshrl.u32 %v4808, 7
      %v4810 = vsub.s32 %v4807, %v4809
      %v4811 = vrot.slane %v4452, %v4810
      %v4813 = vunpack.c.l.s4 1983009808
      %v4814 = vunpack.c.0.s8 %v4813
      %v4815 = vlaneseq
      %v4816 = vshrl.u32 %v4815, 7
      %v4817 = vsub.s32 %v4814, %v4816
      %v4818 = vrot.slane %v4804, %v4817
      %v4819 = vcombine.high %v4811, %v4811
      %v4820 = vcombine.high %v4818, %v4818
      %v4821 = vcombine.high %v4453, %v4453
      %v4823 = vunpack.c.l.s4 1983009808
      %v4824 = vunpack.c.0.s8 %v4823
      %v4825 = vlaneseq
      %v4826 = vshrl.u32 %v4825, 7
      %v4827 = vsub.s32 %v4824, %v4826
      %v4828 = vrot.slane %v4453, %v4827
      %v4830 = vunpack.c.l.s4 1983009808
      %v4831 = vunpack.c.0.s8 %v4830
      %v4832 = vlaneseq
      %v4833 = vshrl.u32 %v4832, 7
      %v4834 = vsub.s32 %v4831, %v4833
      %v4835 = vrot.slane %v4821, %v4834
      %v4836 = vcombine.high %v4828, %v4828
      %v4837 = vcombine.high %v4835, %v4835
      %v4838 = vcombine.high %v4454, %v4454
      %v4840 = vunpack.c.l.s4 1983009808
      %v4841 = vunpack.c.0.s8 %v4840
      %v4842 = vlaneseq
      %v4843 = vshrl.u32 %v4842, 7
      %v4844 = vsub.s32 %v4841, %v4843
      %v4845 = vrot.slane %v4454, %v4844
      %v4847 = vunpack.c.l.s4 1983009808
      %v4848 = vunpack.c.0.s8 %v4847
      %v4849 = vlaneseq
      %v4850 = vshrl.u32 %v4849, 7
      %v4851 = vsub.s32 %v4848, %v4850
      %v4852 = vrot.slane %v4838, %v4851
      %v4853 = vcombine.high %v4845, %v4845
      %v4854 = vcombine.high %v4852, %v4852
      %v4855 = vcombine.high %v4455, %v4455
      %v4857 = vunpack.c.l.s4 1983009808
      %v4858 = vunpack.c.0.s8 %v4857
      %v4859 = vlaneseq
      %v4860 = vshrl.u32 %v4859, 7
      %v4861 = vsub.s32 %v4858, %v4860
      %v4862 = vrot.slane %v4455, %v4861
      %v4864 = vunpack.c.l.s4 1983009808
      %v4865 = vunpack.c.0.s8 %v4864
      %v4866 = vlaneseq
      %v4867 = vshrl.u32 %v4866, 7
      %v4868 = vsub.s32 %v4865, %v4867
      %v4869 = vrot.slane %v4855, %v4868
      %v4870 = vcombine.high %v4862, %v4862
      %v4871 = vcombine.high %v4869, %v4869
      %v4872 = vcombine.high %v4456, %v4456
      %v4874 = vunpack.c.l.s4 1983009808
      %v4875 = vunpack.c.0.s8 %v4874
      %v4876 = vlaneseq
      %v4877 = vshrl.u32 %v4876, 7
      %v4878 = vsub.s32 %v4875, %v4877
      %v4879 = vrot.slane %v4456, %v4878
      %v4881 = vunpack.c.l.s4 1983009808
      %v4882 = vunpack.c.0.s8 %v4881
      %v4883 = vlaneseq
      %v4884 = vshrl.u32 %v4883, 7
      %v4885 = vsub.s32 %v4882, %v4884
      %v4886 = vrot.slane %v4872, %v4885
      %v4887 = vcombine.high %v4879, %v4879
      %v4888 = vcombine.high %v4886, %v4886
      %v4889 = vcombine.high %v4457, %v4457
      %v4891 = vunpack.c.l.s4 1983009808
      %v4892 = vunpack.c.0.s8 %v4891
      %v4893 = vlaneseq
      %v4894 = vshrl.u32 %v4893, 7
      %v4895 = vsub.s32 %v4892, %v4894
      %v4896 = vrot.slane %v4457, %v4895
      %v4898 = vunpack.c.l.s4 1983009808
      %v4899 = vunpack.c.0.s8 %v4898
      %v4900 = vlaneseq
      %v4901 = vshrl.u32 %v4900, 7
      %v4902 = vsub.s32 %v4899, %v4901
      %v4903 = vrot.slane %v4889, %v4902
      %v4904 = vcombine.high %v4896, %v4896
      %v4905 = vcombine.high %v4903, %v4903
      %v4906 = vcombine.high %v4458, %v4458
      %v4908 = vunpack.c.l.s4 1983009808
      %v4909 = vunpack.c.0.s8 %v4908
      %v4910 = vlaneseq
      %v4911 = vshrl.u32 %v4910, 7
      %v4912 = vsub.s32 %v4909, %v4911
      %v4913 = vrot.slane %v4458, %v4912
      %v4915 = vunpack.c.l.s4 1983009808
      %v4916 = vunpack.c.0.s8 %v4915
      %v4917 = vlaneseq
      %v4918 = vshrl.u32 %v4917, 7
      %v4919 = vsub.s32 %v4916, %v4918
      %v4920 = vrot.slane %v4906, %v4919
      %v4921 = vcombine.high %v4913, %v4913
      %v4922 = vcombine.high %v4920, %v4920
      %v4923 = vcombine.high %v4459, %v4459
      %v4925 = vunpack.c.l.s4 1983009808
      %v4926 = vunpack.c.0.s8 %v4925
      %v4927 = vlaneseq
      %v4928 = vshrl.u32 %v4927, 7
      %v4929 = vsub.s32 %v4926, %v4928
      %v4930 = vrot.slane %v4459, %v4929
      %v4932 = vunpack.c.l.s4 1983009808
      %v4933 = vunpack.c.0.s8 %v4932
      %v4934 = vlaneseq
      %v4935 = vshrl.u32 %v4934, 7
      %v4936 = vsub.s32 %v4933, %v4935
      %v4937 = vrot.slane %v4923, %v4936
      %v4938 = vcombine.high %v4930, %v4930
      %v4939 = vcombine.high %v4937, %v4937
      %v4940 = vcombine.high %v4460, %v4460
      %v4942 = vunpack.c.l.s4 1983009808
      %v4943 = vunpack.c.0.s8 %v4942
      %v4944 = vlaneseq
      %v4945 = vshrl.u32 %v4944, 7
      %v4946 = vsub.s32 %v4943, %v4945
      %v4947 = vrot.slane %v4460, %v4946
      %v4949 = vunpack.c.l.s4 1983009808
      %v4950 = vunpack.c.0.s8 %v4949
      %v4951 = vlaneseq
      %v4952 = vshrl.u32 %v4951, 7
      %v4953 = vsub.s32 %v4950, %v4952
      %v4954 = vrot.slane %v4940, %v4953
      %v4955 = vcombine.high %v4947, %v4947
      %v4956 = vcombine.high %v4954, %v4954
      %v4957 = vcombine.high %v4461, %v4461
      %v4959 = vunpack.c.l.s4 1983009808
      %v4960 = vunpack.c.0.s8 %v4959
      %v4961 = vlaneseq
      %v4962 = vshrl.u32 %v4961, 7
      %v4963 = vsub.s32 %v4960, %v4962
      %v4964 = vrot.slane %v4461, %v4963
      %v4966 = vunpack.c.l.s4 1983009808
      %v4967 = vunpack.c.0.s8 %v4966
      %v4968 = vlaneseq
      %v4969 = vshrl.u32 %v4968, 7
      %v4970 = vsub.s32 %v4967, %v4969
      %v4971 = vrot.slane %v4957, %v4970
      %v4972 = vcombine.high %v4964, %v4964
      %v4973 = vcombine.high %v4971, %v4971
      %v4974 = vcombine.high %v4462, %v4462
      %v4976 = vunpack.c.l.s4 1983009808
      %v4977 = vunpack.c.0.s8 %v4976
      %v4978 = vlaneseq
      %v4979 = vshrl.u32 %v4978, 7
      %v4980 = vsub.s32 %v4977, %v4979
      %v4981 = vrot.slane %v4462, %v4980
      %v4983 = vunpack.c.l.s4 1983009808
      %v4984 = vunpack.c.0.s8 %v4983
      %v4985 = vlaneseq
      %v4986 = vshrl.u32 %v4985, 7
      %v4987 = vsub.s32 %v4984, %v4986
      %v4988 = vrot.slane %v4974, %v4987
      %v4989 = vcombine.high %v4981, %v4981
      %v4990 = vcombine.high %v4988, %v4988
      %v4991 = vcombine.high %v4463, %v4463
      %v4993 = vunpack.c.l.s4 1983009808
      %v4994 = vunpack.c.0.s8 %v4993
      %v4995 = vlaneseq
      %v4996 = vshrl.u32 %v4995, 7
      %v4997 = vsub.s32 %v4994, %v4996
      %v4998 = vrot.slane %v4463, %v4997
      %v5000 = vunpack.c.l.s4 1983009808
      %v5001 = vunpack.c.0.s8 %v5000
      %v5002 = vlaneseq
      %v5003 = vshrl.u32 %v5002, 7
      %v5004 = vsub.s32 %v5001, %v5003
      %v5005 = vrot.slane %v4991, %v5004
      %v5006 = vcombine.high %v4998, %v4998
      %v5007 = vcombine.high %v5005, %v5005
      %v5008 = vcombine.high %v4464, %v4464
      %v5010 = vunpack.c.l.s4 1983009808
      %v5011 = vunpack.c.0.s8 %v5010
      %v5012 = vlaneseq
      %v5013 = vshrl.u32 %v5012, 7
      %v5014 = vsub.s32 %v5011, %v5013
      %v5015 = vrot.slane %v4464, %v5014
      %v5017 = vunpack.c.l.s4 1983009808
      %v5018 = vunpack.c.0.s8 %v5017
      %v5019 = vlaneseq
      %v5020 = vshrl.u32 %v5019, 7
      %v5021 = vsub.s32 %v5018, %v5020
      %v5022 = vrot.slane %v5008, %v5021
      %v5023 = vcombine.high %v5015, %v5015
      %v5024 = vcombine.high %v5022, %v5022
      %v5025 = vcombine.low %v4768, %v4767
      %v5026 = vcombine.low %v4769, %v4785
      %v5028 = vunpack.c.l.s4 1983009808
      %v5029 = vunpack.c.0.s8 %v5028
      %v5030 = vlaneseq
      %v5031 = vshrl.u32 %v5030, 7
      %v5032 = vsub.s32 %v5029, %v5031
      %v5033 = vrot.slane %v5025, %v5032
      %v5035 = vunpack.c.l.s4 1983009808
      %v5036 = vunpack.c.0.s8 %v5035
      %v5037 = vlaneseq
      %v5038 = vshrl.u32 %v5037, 7
      %v5039 = vsub.s32 %v5036, %v5038
      %v5040 = vrot.slane %v5026, %v5039
      %v5041 = vcombine.low %v5033, %v5040
      %v5042 = vcombine.low %v4784, %v4786
      %v5043 = vcombine.low %v4802, %v4801
      %v5045 = vunpack.c.l.s4 1983009808
      %v5046 = vunpack.c.0.s8 %v5045
      %v5047 = vlaneseq
      %v5048 = vshrl.u32 %v5047, 7
      %v5049 = vsub.s32 %v5046, %v5048
      %v5050 = vrot.slane %v5042, %v5049
      %v5052 = vunpack.c.l.s4 1983009808
      %v5053 = vunpack.c.0.s8 %v5052
      %v5054 = vlaneseq
      %v5055 = vshrl.u32 %v5054, 7
      %v5056 = vsub.s32 %v5053, %v5055
      %v5057 = vrot.slane %v5043, %v5056
      %v5058 = vcombine.low %v5050, %v5057
      %v5059 = vcombine.low %v4803, %v4819
      %v5060 = vcombine.low %v4818, %v4820
      %v5062 = vunpack.c.l.s4 1983009808
      %v5063 = vunpack.c.0.s8 %v5062
      %v5064 = vlaneseq
      %v5065 = vshrl.u32 %v5064, 7
      %v5066 = vsub.s32 %v5063, %v5065
      %v5067 = vrot.slane %v5059, %v5066
      %v5069 = vunpack.c.l.s4 1983009808
      %v5070 = vunpack.c.0.s8 %v5069
      %v5071 = vlaneseq
      %v5072 = vshrl.u32 %v5071, 7
      %v5073 = vsub.s32 %v5070, %v5072
      %v5074 = vrot.slane %v5060, %v5073
      %v5075 = vcombine.low %v5067, %v5074
      %v5076 = vcombine.low %v4836, %v4835
      %v5077 = vcombine.low %v4837, %v4853
      %v5079 = vunpack.c.l.s4 1983009808
      %v5080 = vunpack.c.0.s8 %v5079
      %v5081 = vlaneseq
      %v5082 = vshrl.u32 %v5081, 7
      %v5083 = vsub.s32 %v5080, %v5082
      %v5084 = vrot.slane %v5076, %v5083
      %v5086 = vunpack.c.l.s4 1983009808
      %v5087 = vunpack.c.0.s8 %v5086
      %v5088 = vlaneseq
      %v5089 = vshrl.u32 %v5088, 7
      %v5090 = vsub.s32 %v5087, %v5089
      %v5091 = vrot.slane %v5077, %v5090
      %v5092 = vcombine.low %v5084, %v5091
      %v5093 = vcombine.low %v4852, %v4854
      %v5094 = vcombine.low %v4870, %v4869
      %v5096 = vunpack.c.l.s4 1983009808
      %v5097 = vunpack.c.0.s8 %v5096
      %v5098 = vlaneseq
      %v5099 = vshrl.u32 %v5098, 7
      %v5100 = vsub.s32 %v5097, %v5099
      %v5101 = vrot.slane %v5093, %v5100
      %v5103 = vunpack.c.l.s4 1983009808
      %v5104 = vunpack.c.0.s8 %v5103
      %v5105 = vlaneseq
      %v5106 = vshrl.u32 %v5105, 7
      %v5107 = vsub.s32 %v5104, %v5106
      %v5108 = vrot.slane %v5094, %v5107
      %v5109 = vcombine.low %v5101, %v5108
      %v5110 = vcombine.low %v4871, %v4887
      %v5111 = vcombine.low %v4886, %v4888
      %v5113 = vunpack.c.l.s4 1983009808
      %v5114 = vunpack.c.0.s8 %v5113
      %v5115 = vlaneseq
      %v5116 = vshrl.u32 %v5115, 7
      %v5117 = vsub.s32 %v5114, %v5116
      %v5118 = vrot.slane %v5110, %v5117
      %v5120 = vunpack.c.l.s4 1983009808
      %v5121 = vunpack.c.0.s8 %v5120
      %v5122 = vlaneseq
      %v5123 = vshrl.u32 %v5122, 7
      %v5124 = vsub.s32 %v5121, %v5123
      %v5125 = vrot.slane %v5111, %v5124
      %v5126 = vcombine.low %v5118, %v5125
      %v5127 = vcombine.low %v4904, %v4903
      %v5128 = vcombine.low %v4905, %v4921
      %v5130 = vunpack.c.l.s4 1983009808
      %v5131 = vunpack.c.0.s8 %v5130
      %v5132 = vlaneseq
      %v5133 = vshrl.u32 %v5132, 7
      %v5134 = vsub.s32 %v5131, %v5133
      %v5135 = vrot.slane %v5127, %v5134
      %v5137 = vunpack.c.l.s4 1983009808
      %v5138 = vunpack.c.0.s8 %v5137
      %v5139 = vlaneseq
      %v5140 = vshrl.u32 %v5139, 7
      %v5141 = vsub.s32 %v5138, %v5140
      %v5142 = vrot.slane %v5128, %v5141
      %v5143 = vcombine.low %v5135, %v5142
      %v5144 = vcombine.low %v4920, %v4922
      %v5145 = vcombine.low %v4938, %v4937
      %v5147 = vunpack.c.l.s4 1983009808
      %v5148 = vunpack.c.0.s8 %v5147
      %v5149 = vlaneseq
      %v5150 = vshrl.u32 %v5149, 7
      %v5151 = vsub.s32 %v5148, %v5150
      %v5152 = vrot.slane %v5144, %v5151
      %v5154 = vunpack.c.l.s4 1983009808
      %v5155 = vunpack.c.0.s8 %v5154
      %v5156 = vlaneseq
      %v5157 = vshrl.u32 %v5156, 7
      %v5158 = vsub.s32 %v5155, %v5157
      %v5159 = vrot.slane %v5145, %v5158
      %v5160 = vcombine.low %v5152, %v5159
      %v5161 = vcombine.low %v4939, %v4955
      %v5162 = vcombine.low %v4954, %v4956
      %v5164 = vunpack.c.l.s4 1983009808
      %v5165 = vunpack.c.0.s8 %v5164
      %v5166 = vlaneseq
      %v5167 = vshrl.u32 %v5166, 7
      %v5168 = vsub.s32 %v5165, %v5167
      %v5169 = vrot.slane %v5161, %v5168
      %v5171 = vunpack.c.l.s4 1983009808
      %v5172 = vunpack.c.0.s8 %v5171
      %v5173 = vlaneseq
      %v5174 = vshrl.u32 %v5173, 7
      %v5175 = vsub.s32 %v5172, %v5174
      %v5176 = vrot.slane %v5162, %v5175
      %v5177 = vcombine.low %v5169, %v5176
      %v5178 = vcombine.low %v4972, %v4971
      %v5179 = vcombine.low %v4973, %v4989
      %v5181 = vunpack.c.l.s4 1983009808
      %v5182 = vunpack.c.0.s8 %v5181
      %v5183 = vlaneseq
      %v5184 = vshrl.u32 %v5183, 7
      %v5185 = vsub.s32 %v5182, %v5184
      %v5186 = vrot.slane %v5178, %v5185
      %v5188 = vunpack.c.l.s4 1983009808
      %v5189 = vunpack.c.0.s8 %v5188
      %v5190 = vlaneseq
      %v5191 = vshrl.u32 %v5190, 7
      %v5192 = vsub.s32 %v5189, %v5191
      %v5193 = vrot.slane %v5179, %v5192
      %v5194 = vcombine.low %v5186, %v5193
      %v5195 = vcombine.low %v4988, %v4990
      %v5196 = vcombine.low %v5006, %v5005
      %v5198 = vunpack.c.l.s4 1983009808
      %v5199 = vunpack.c.0.s8 %v5198
      %v5200 = vlaneseq
      %v5201 = vshrl.u32 %v5200, 7
      %v5202 = vsub.s32 %v5199, %v5201
      %v5203 = vrot.slane %v5195, %v5202
      %v5205 = vunpack.c.l.s4 1983009808
      %v5206 = vunpack.c.0.s8 %v5205
      %v5207 = vlaneseq
      %v5208 = vshrl.u32 %v5207, 7
      %v5209 = vsub.s32 %v5206, %v5208
      %v5210 = vrot.slane %v5196, %v5209
      %v5211 = vcombine.low %v5203, %v5210
      %v5212 = vcombine.low %v5007, %v5023
      %v5213 = vcombine.low %v5022, %v5024
      %v5215 = vunpack.c.l.s4 1983009808
      %v5216 = vunpack.c.0.s8 %v5215
      %v5217 = vlaneseq
      %v5218 = vshrl.u32 %v5217, 7
      %v5219 = vsub.s32 %v5216, %v5218
      %v5220 = vrot.slane %v5212, %v5219
      %v5222 = vunpack.c.l.s4 1983009808
      %v5223 = vunpack.c.0.s8 %v5222
      %v5224 = vlaneseq
      %v5225 = vshrl.u32 %v5224, 7
      %v5226 = vsub.s32 %v5223, %v5225
      %v5227 = vrot.slane %v5213, %v5226
      %v5228 = vcombine.low %v5220, %v5227
      %5229 = vrot.lane.b32.xlu0 %v5041, 127
      %v5230 = vpop.permute.xlu0 %5229
      %5231 = vrot.lane.b32.xlu0 %v5058, 127
      %v5232 = vpop.permute.xlu0 %5231
      %5233 = vrot.lane.b32.xlu0 %v5075, 127
      %v5234 = vpop.permute.xlu0 %5233
      %5235 = vrot.lane.b32.xlu0 %v5092, 127
      %v5236 = vpop.permute.xlu0 %5235
      %5237 = vrot.lane.b32.xlu0 %v5109, 127
      %v5238 = vpop.permute.xlu0 %5237
      %5239 = vrot.lane.b32.xlu0 %v5126, 127
      %v5240 = vpop.permute.xlu0 %5239
      %5241 = vrot.lane.b32.xlu0 %v5143, 127
      %v5242 = vpop.permute.xlu0 %5241
      %5243 = vrot.lane.b32.xlu0 %v5160, 127
      %v5244 = vpop.permute.xlu0 %5243
      %5245 = vrot.lane.b32.xlu0 %v5177, 127
      %v5246 = vpop.permute.xlu0 %5245
      %5247 = vrot.lane.b32.xlu0 %v5194, 127
      %v5248 = vpop.permute.xlu0 %5247
      %5249 = vrot.lane.b32.xlu0 %v5211, 127
      %v5250 = vpop.permute.xlu0 %5249
      %5251 = vrot.lane.b32.xlu0 %v5228, 127
      %v5252 = vpop.permute.xlu0 %5251
      %v5253 = vsel %vm3642, %v5230, 0
      %v5255 = vsel %vm3642, %v5232, 0
      %v5257 = vsel %vm3642, %v5234, 0
      %v5259 = vsel %vm3642, %v5236, 0
      %v5261 = vsel %vm3642, %v5238, 0
      %v5263 = vsel %vm3642, %v5240, 0
      %v5265 = vsel %vm3642, %v5242, 0
      %v5267 = vsel %vm3642, %v5244, 0
      %v5269 = vsel %vm3642, %v5246, 0
      %v5271 = vsel %vm3642, %v5248, 0
      %v5273 = vsel %vm3642, %v5250, 0
      %v5275 = vsel %vm3642, %v5252, 0
      %5277 = vmatprep.subr.mxu0 0.0
      %5278 = vmatpush1.msra.mxu0 %v2707
      %5279 = vmatprep.subr.mxu0 0.0
      %5280 = vmatpush1.msra.mxu0 %v2708
      %5281 = vmatprep.subr.mxu0 0.0
      %5282 = vmatpush1.msra.mxu0 0.0
      %5283 = vmatprep.subr.mxu0 0.0
      %5284 = vmatpush1.msra.mxu0 0.0
      %5285 = vmatprep.subr.mxu0 0.0
      %5286 = vmatpush1.msra.mxu0 0.0
      %5287 = vmatprep.subr.mxu0 0.0
      %5288 = vmatpush1.msra.mxu0 0.0
      %5289 = vmatprep.subr.mxu0 0.0
      %5290 = vmatpush1.msra.mxu0 0.0
      %5291 = vmatprep.subr.mxu0 0.0
      %5292 = vmatpush1.msra.mxu0 0.0
      %5293 = vmatprep.subr.mxu0 0.0
      %5294 = vmatpush1.msra.mxu0 0.0
      %5295 = vmatprep.subr.mxu0 0.0
      %5296 = vmatpush1.msra.mxu0 0.0
      %5297 = vmatprep.subr.mxu0 0.0
      %5298 = vmatpush1.msra.mxu0 0.0
      %5299 = vmatprep.subr.mxu0 0.0
      %5300 = vmatpush1.msra.mxu0 0.0
      %5301 = vmatprep.subr.mxu0 0.0
      %5302 = vmatpush1.msra.mxu0 0.0
      %5303 = vmatprep.subr.mxu0 0.0
      %5304 = vmatpush1.msra.mxu0 0.0
      %5305 = vmatprep.subr.mxu0 0.0
      %5306 = vmatpush1.msra.mxu0 0.0
      %5307 = vmatprep.subr.mxu0 0.0
      %5308 = vmatpush1.msra.mxu0 0.0
      %5309 = vmatprep.subr.mxu0 0.0
      %5310 = vmatpush1.msra.mxu0 0.0
      %5311 = vmatprep.subr.mxu0 0.0
      %5312 = vmatpush1.msra.mxu0 0.0
      %5313 = vmatprep.subr.mxu0 0.0
      %5314 = vmatpush1.msra.mxu0 0.0
      %5315 = vmatprep.subr.mxu0 0.0
      %5316 = vmatpush1.msra.mxu0 0.0
      %5317 = vmatprep.subr.mxu0 0.0
      %5318 = vmatpush1.msra.mxu0 0.0
      %5319 = vmatprep.subr.mxu0 0.0
      %5320 = vmatpush1.msra.mxu0 0.0
      %5321 = vmatprep.subr.mxu0 0.0
      %5322 = vmatpush1.msra.mxu0 0.0
      %5323 = vmatprep.subr.mxu0 0.0
      %5324 = vmatpush1.msra.mxu0 0.0
      %5325 = vmatprep.subr.mxu0 0.0
      %5326 = vmatpush1.msra.mxu0 0.0
      %5327 = vmatprep.subr.mxu0 0.0
      %5328 = vmatpush1.msra.mxu0 0.0
      %5329 = vmatprep.subr.mxu0 0.0
      %5330 = vmatpush1.msra.mxu0 0.0
      %5331 = vmatprep.subr.mxu0 0.0
      %5332 = vmatpush1.msra.mxu0 0.0
      %5333 = vmatprep.subr.mxu0 0.0
      %5334 = vmatpush1.msra.mxu0 0.0
      %5335 = vmatprep.subr.mxu0 0.0
      %5336 = vmatpush1.msra.mxu0 0.0
      %5337 = vmatprep.subr.mxu0 0.0
      %5338 = vmatpush1.msra.mxu0 0.0
      %5339 = vmatprep.subr.mxu0 0.0
      %5340 = vmatpush1.msra.mxu0 0.0
      %5341 = vmatprep.mubr.f32.mxu0 0.0
      %5342 = vmatmul.mubr.f32.gmra.mrb[0].mxu0 %v5253
      %v5343 = vpop.f32.mrb[0].mxu0
      %v5344 = vadd.f32 0.0, %v5343
      %v5345 = vpop.f32.mrb[0].mxu0
      %5346 = vmatprep.mubr.f32.mxu0 0.0
      %5347 = vmatmul.mubr.f32.gmra.mrb[0].mxu0 %v5255
      %v5348 = vpop.f32.mrb[0].mxu0
      %v5349 = vadd.f32 0.0, %v5348
      %v5350 = vpop.f32.mrb[0].mxu0
      %5351 = vmatprep.mubr.f32.mxu0 0.0
      %5352 = vmatmul.mubr.f32.gmra.mrb[0].mxu0 %v5257
      %v5353 = vpop.f32.mrb[0].mxu0
      %v5354 = vadd.f32 0.0, %v5353
      %v5355 = vpop.f32.mrb[0].mxu0
      %5356 = vmatprep.mubr.f32.mxu0 0.0
      %5357 = vmatmul.mubr.f32.gmra.mrb[0].mxu0 %v5259
      %v5358 = vpop.f32.mrb[0].mxu0
      %v5359 = vadd.f32 0.0, %v5358
      %v5360 = vpop.f32.mrb[0].mxu0
      %5361 = vmatprep.mubr.f32.mxu0 0.0
      %5362 = vmatmul.mubr.f32.gmra.mrb[0].mxu0 %v5261
      %v5363 = vpop.f32.mrb[0].mxu0
      %v5364 = vadd.f32 0.0, %v5363
      %v5365 = vpop.f32.mrb[0].mxu0
      %5366 = vmatprep.mubr.f32.mxu0 0.0
      %5367 = vmatmul.mubr.f32.gmra.mrb[0].mxu0 %v5263
      %v5368 = vpop.f32.mrb[0].mxu0
      %v5369 = vadd.f32 0.0, %v5368
      %v5370 = vpop.f32.mrb[0].mxu0
      %5371 = vmatprep.mubr.f32.mxu0 0.0
      %5372 = vmatmul.mubr.f32.gmra.mrb[0].mxu0 %v5265
      %v5373 = vpop.f32.mrb[0].mxu0
      %v5374 = vadd.f32 0.0, %v5373
      %v5375 = vpop.f32.mrb[0].mxu0
      %5376 = vmatprep.mubr.f32.mxu0 0.0
      %5377 = vmatmul.mubr.f32.gmra.mrb[0].mxu0 %v5267
      %v5378 = vpop.f32.mrb[0].mxu0
      %v5379 = vadd.f32 0.0, %v5378
      %v5380 = vpop.f32.mrb[0].mxu0
      %5381 = vmatprep.mubr.f32.mxu0 0.0
      %5382 = vmatmul.mubr.f32.gmra.mrb[0].mxu0 %v5269
      %v5383 = vpop.f32.mrb[0].mxu0
      %v5384 = vadd.f32 0.0, %v5383
      %v5385 = vpop.f32.mrb[0].mxu0
      %5386 = vmatprep.mubr.f32.mxu0 0.0
      %5387 = vmatmul.mubr.f32.gmra.mrb[0].mxu0 %v5271
      %v5388 = vpop.f32.mrb[0].mxu0
      %v5389 = vadd.f32 0.0, %v5388
      %v5390 = vpop.f32.mrb[0].mxu0
      %5391 = vmatprep.mubr.f32.mxu0 0.0
      %5392 = vmatmul.mubr.f32.gmra.mrb[0].mxu0 %v5273
      %v5393 = vpop.f32.mrb[0].mxu0
      %v5394 = vadd.f32 0.0, %v5393
      %v5395 = vpop.f32.mrb[0].mxu0
      %5396 = vmatprep.mubr.f32.mxu0 0.0
      %5397 = vmatmul.mubr.f32.gmra.mrb[0].mxu0 %v5275
      %v5398 = vpop.f32.mrb[0].mxu0
      %v5399 = vadd.f32 0.0, %v5398
      %v5400 = vpop.f32.mrb[0].mxu0
      %5401 = vdwg.mxu0
      %v5402 = vcombine.low %v4488, %v4496
      %v5403 = vcombine.low %v4495, %v4504
      %v5405 = vunpack.c.l.s4 1983009808
      %v5406 = vunpack.c.0.s8 %v5405
      %v5407 = vlaneseq
      %v5408 = vshrl.u32 %v5407, 7
      %v5409 = vsub.s32 %v5406, %v5408
      %v5410 = vrot.slane %v5402, %v5409
      %v5412 = vunpack.c.l.s4 1983009808
      %v5413 = vunpack.c.0.s8 %v5412
      %v5414 = vlaneseq
      %v5415 = vshrl.u32 %v5414, 7
      %v5416 = vsub.s32 %v5413, %v5415
      %v5417 = vrot.slane %v5403, %v5416
      %v5418 = vcombine.low %v5410, %v5417
      %v5419 = vcombine.low %v4512, %v4511
      %v5420 = vcombine.low %v4520, %v4528
      %v5422 = vunpack.c.l.s4 1983009808
      %v5423 = vunpack.c.0.s8 %v5422
      %v5424 = vlaneseq
      %v5425 = vshrl.u32 %v5424, 7
      %v5426 = vsub.s32 %v5423, %v5425
      %v5427 = vrot.slane %v5419, %v5426
      %v5429 = vunpack.c.l.s4 1983009808
      %v5430 = vunpack.c.0.s8 %v5429
      %v5431 = vlaneseq
      %v5432 = vshrl.u32 %v5431, 7
      %v5433 = vsub.s32 %v5430, %v5432
      %v5434 = vrot.slane %v5420, %v5433
      %v5435 = vcombine.low %v5427, %v5434
      %v5436 = vcombine.low %v4527, %v4536
      %v5437 = vcombine.low %v4544, %v4543
      %v5439 = vunpack.c.l.s4 1983009808
      %v5440 = vunpack.c.0.s8 %v5439
      %v5441 = vlaneseq
      %v5442 = vshrl.u32 %v5441, 7
      %v5443 = vsub.s32 %v5440, %v5442
      %v5444 = vrot.slane %v5436, %v5443
      %v5446 = vunpack.c.l.s4 1983009808
      %v5447 = vunpack.c.0.s8 %v5446
      %v5448 = vlaneseq
      %v5449 = vshrl.u32 %v5448, 7
      %v5450 = vsub.s32 %v5447, %v5449
      %v5451 = vrot.slane %v5437, %v5450
      %v5452 = vcombine.low %v5444, %v5451
      %v5453 = vcombine.low %v4552, %v4560
      %v5454 = vcombine.low %v4559, %v4568
      %v5456 = vunpack.c.l.s4 1983009808
      %v5457 = vunpack.c.0.s8 %v5456
      %v5458 = vlaneseq
      %v5459 = vshrl.u32 %v5458, 7
      %v5460 = vsub.s32 %v5457, %v5459
      %v5461 = vrot.slane %v5453, %v5460
      %v5463 = vunpack.c.l.s4 1983009808
      %v5464 = vunpack.c.0.s8 %v5463
      %v5465 = vlaneseq
      %v5466 = vshrl.u32 %v5465, 7
      %v5467 = vsub.s32 %v5464, %v5466
      %v5468 = vrot.slane %v5454, %v5467
      %v5469 = vcombine.low %v5461, %v5468
      %v5470 = vcombine.low %v4576, %v4575
      %v5471 = vcombine.low %v4584, %v4592
      %v5473 = vunpack.c.l.s4 1983009808
      %v5474 = vunpack.c.0.s8 %v5473
      %v5475 = vlaneseq
      %v5476 = vshrl.u32 %v5475, 7
      %v5477 = vsub.s32 %v5474, %v5476
      %v5478 = vrot.slane %v5470, %v5477
      %v5480 = vunpack.c.l.s4 1983009808
      %v5481 = vunpack.c.0.s8 %v5480
      %v5482 = vlaneseq
      %v5483 = vshrl.u32 %v5482, 7
      %v5484 = vsub.s32 %v5481, %v5483
      %v5485 = vrot.slane %v5471, %v5484
      %v5486 = vcombine.low %v5478, %v5485
      %v5487 = vcombine.low %v4591, %v4600
      %v5488 = vcombine.low %v4608, %v4607
      %v5490 = vunpack.c.l.s4 1983009808
      %v5491 = vunpack.c.0.s8 %v5490
      %v5492 = vlaneseq
      %v5493 = vshrl.u32 %v5492, 7
      %v5494 = vsub.s32 %v5491, %v5493
      %v5495 = vrot.slane %v5487, %v5494
      %v5497 = vunpack.c.l.s4 1983009808
      %v5498 = vunpack.c.0.s8 %v5497
      %v5499 = vlaneseq
      %v5500 = vshrl.u32 %v5499, 7
      %v5501 = vsub.s32 %v5498, %v5500
      %v5502 = vrot.slane %v5488, %v5501
      %v5503 = vcombine.low %v5495, %v5502
      %v5504 = vcombine.low %v4616, %v4624
      %v5505 = vcombine.low %v4623, %v4632
      %v5507 = vunpack.c.l.s4 1983009808
      %v5508 = vunpack.c.0.s8 %v5507
      %v5509 = vlaneseq
      %v5510 = vshrl.u32 %v5509, 7
      %v5511 = vsub.s32 %v5508, %v5510
      %v5512 = vrot.slane %v5504, %v5511
      %v5514 = vunpack.c.l.s4 1983009808
      %v5515 = vunpack.c.0.s8 %v5514
      %v5516 = vlaneseq
      %v5517 = vshrl.u32 %v5516, 7
      %v5518 = vsub.s32 %v5515, %v5517
      %v5519 = vrot.slane %v5505, %v5518
      %v5520 = vcombine.low %v5512, %v5519
      %v5521 = vcombine.low %v4640, %v4639
      %v5522 = vcombine.low %v4648, %v4656
      %v5524 = vunpack.c.l.s4 1983009808
      %v5525 = vunpack.c.0.s8 %v5524
      %v5526 = vlaneseq
      %v5527 = vshrl.u32 %v5526, 7
      %v5528 = vsub.s32 %v5525, %v5527
      %v5529 = vrot.slane %v5521, %v5528
      %v5531 = vunpack.c.l.s4 1983009808
      %v5532 = vunpack.c.0.s8 %v5531
      %v5533 = vlaneseq
      %v5534 = vshrl.u32 %v5533, 7
      %v5535 = vsub.s32 %v5532, %v5534
      %v5536 = vrot.slane %v5522, %v5535
      %v5537 = vcombine.low %v5529, %v5536
      %v5538 = vcombine.low %v4655, %v4664
      %v5539 = vcombine.low %v4672, %v4671
      %v5541 = vunpack.c.l.s4 1983009808
      %v5542 = vunpack.c.0.s8 %v5541
      %v5543 = vlaneseq
      %v5544 = vshrl.u32 %v5543, 7
      %v5545 = vsub.s32 %v5542, %v5544
      %v5546 = vrot.slane %v5538, %v5545
      %v5548 = vunpack.c.l.s4 1983009808
      %v5549 = vunpack.c.0.s8 %v5548
      %v5550 = vlaneseq
      %v5551 = vshrl.u32 %v5550, 7
      %v5552 = vsub.s32 %v5549, %v5551
      %v5553 = vrot.slane %v5539, %v5552
      %v5554 = vcombine.low %v5546, %v5553
      %v5555 = vcombine.low %v4680, %v4688
      %v5556 = vcombine.low %v4687, %v4696
      %v5558 = vunpack.c.l.s4 1983009808
      %v5559 = vunpack.c.0.s8 %v5558
      %v5560 = vlaneseq
      %v5561 = vshrl.u32 %v5560, 7
      %v5562 = vsub.s32 %v5559, %v5561
      %v5563 = vrot.slane %v5555, %v5562
      %v5565 = vunpack.c.l.s4 1983009808
      %v5566 = vunpack.c.0.s8 %v5565
      %v5567 = vlaneseq
      %v5568 = vshrl.u32 %v5567, 7
      %v5569 = vsub.s32 %v5566, %v5568
      %v5570 = vrot.slane %v5556, %v5569
      %v5571 = vcombine.low %v5563, %v5570
      %v5572 = vcombine.low %v4704, %v4703
      %v5573 = vcombine.low %v4712, %v4720
      %v5575 = vunpack.c.l.s4 1983009808
      %v5576 = vunpack.c.0.s8 %v5575
      %v5577 = vlaneseq
      %v5578 = vshrl.u32 %v5577, 7
      %v5579 = vsub.s32 %v5576, %v5578
      %v5580 = vrot.slane %v5572, %v5579
      %v5582 = vunpack.c.l.s4 1983009808
      %v5583 = vunpack.c.0.s8 %v5582
      %v5584 = vlaneseq
      %v5585 = vshrl.u32 %v5584, 7
      %v5586 = vsub.s32 %v5583, %v5585
      %v5587 = vrot.slane %v5573, %v5586
      %v5588 = vcombine.low %v5580, %v5587
      %v5589 = vcombine.low %v4719, %v4728
      %v5590 = vcombine.low %v4736, %v4735
      %v5592 = vunpack.c.l.s4 1983009808
      %v5593 = vunpack.c.0.s8 %v5592
      %v5594 = vlaneseq
      %v5595 = vshrl.u32 %v5594, 7
      %v5596 = vsub.s32 %v5593, %v5595
      %v5597 = vrot.slane %v5589, %v5596
      %v5599 = vunpack.c.l.s4 1983009808
      %v5600 = vunpack.c.0.s8 %v5599
      %v5601 = vlaneseq
      %v5602 = vshrl.u32 %v5601, 7
      %v5603 = vsub.s32 %v5600, %v5602
      %v5604 = vrot.slane %v5590, %v5603
      %v5605 = vcombine.low %v5597, %v5604
      %v5606 = vsel %vm3642, %v5418, 0
      %v5608 = vsel %vm3642, %v5435, 0
      %v5610 = vsel %vm3642, %v5452, 0
      %v5612 = vsel %vm3642, %v5469, 0
      %v5614 = vsel %vm3642, %v5486, 0
      %v5616 = vsel %vm3642, %v5503, 0
      %v5618 = vsel %vm3642, %v5520, 0
      %v5620 = vsel %vm3642, %v5537, 0
      %v5622 = vsel %vm3642, %v5554, 0
      %v5624 = vsel %vm3642, %v5571, 0
      %v5626 = vsel %vm3642, %v5588, 0
      %v5628 = vsel %vm3642, %v5605, 0
      %5630 = vmatprep.subr.mxu0 0.0
      %5631 = vmatpush1.msra.mxu0 %v2699
      %5632 = vmatprep.subr.mxu0 0.0
      %5633 = vmatpush1.msra.mxu0 %v2700
      %5634 = vmatprep.subr.mxu0 0.0
      %5635 = vmatpush1.msra.mxu0 0.0
      %5636 = vmatprep.subr.mxu0 0.0
      %5637 = vmatpush1.msra.mxu0 0.0
      %5638 = vmatprep.subr.mxu0 0.0
      %5639 = vmatpush1.msra.mxu0 0.0
      %5640 = vmatprep.subr.mxu0 0.0
      %5641 = vmatpush1.msra.mxu0 0.0
      %5642 = vmatprep.subr.mxu0 0.0
      %5643 = vmatpush1.msra.mxu0 0.0
      %5644 = vmatprep.subr.mxu0 0.0
      %5645 = vmatpush1.msra.mxu0 0.0
      %5646 = vmatprep.subr.mxu0 0.0
      %5647 = vmatpush1.msra.mxu0 0.0
      %5648 = vmatprep.subr.mxu0 0.0
      %5649 = vmatpush1.msra.mxu0 0.0
      %5650 = vmatprep.subr.mxu0 0.0
      %5651 = vmatpush1.msra.mxu0 0.0
      %5652 = vmatprep.subr.mxu0 0.0
      %5653 = vmatpush1.msra.mxu0 0.0
      %5654 = vmatprep.subr.mxu0 0.0
      %5655 = vmatpush1.msra.mxu0 0.0
      %5656 = vmatprep.subr.mxu0 0.0
      %5657 = vmatpush1.msra.mxu0 0.0
      %5658 = vmatprep.subr.mxu0 0.0
      %5659 = vmatpush1.msra.mxu0 0.0
      %5660 = vmatprep.subr.mxu0 0.0
      %5661 = vmatpush1.msra.mxu0 0.0
      %5662 = vmatprep.subr.mxu0 0.0
      %5663 = vmatpush1.msra.mxu0 0.0
      %5664 = vmatprep.subr.mxu0 0.0
      %5665 = vmatpush1.msra.mxu0 0.0
      %5666 = vmatprep.subr.mxu0 0.0
      %5667 = vmatpush1.msra.mxu0 0.0
      %5668 = vmatprep.subr.mxu0 0.0
      %5669 = vmatpush1.msra.mxu0 0.0
      %5670 = vmatprep.subr.mxu0 0.0
      %5671 = vmatpush1.msra.mxu0 0.0
      %5672 = vmatprep.subr.mxu0 0.0
      %5673 = vmatpush1.msra.mxu0 0.0
      %5674 = vmatprep.subr.mxu0 0.0
      %5675 = vmatpush1.msra.mxu0 0.0
      %5676 = vmatprep.subr.mxu0 0.0
      %5677 = vmatpush1.msra.mxu0 0.0
      %5678 = vmatprep.subr.mxu0 0.0
      %5679 = vmatpush1.msra.mxu0 0.0
      %5680 = vmatprep.subr.mxu0 0.0
      %5681 = vmatpush1.msra.mxu0 0.0
      %5682 = vmatprep.subr.mxu0 0.0
      %5683 = vmatpush1.msra.mxu0 0.0
      %5684 = vmatprep.subr.mxu0 0.0
      %5685 = vmatpush1.msra.mxu0 0.0
      %5686 = vmatprep.subr.mxu0 0.0
      %5687 = vmatpush1.msra.mxu0 0.0
      %5688 = vmatprep.subr.mxu0 0.0
      %5689 = vmatpush1.msra.mxu0 0.0
      %5690 = vmatprep.subr.mxu0 0.0
      %5691 = vmatpush1.msra.mxu0 0.0
      %5692 = vmatprep.subr.mxu0 0.0
      %5693 = vmatpush1.msra.mxu0 0.0
      %5694 = vmatprep.mubr.f32.mxu0 0.0
      %5695 = vmatmul.mubr.f32.gmra.mrb[0].mxu0 %v5606
      %v5696 = vpop.f32.mrb[0].mxu0
      %v5697 = vadd.f32 %v5344, %v5696
      %v5698 = vpop.f32.mrb[0].mxu0
      %5699 = vmatprep.mubr.f32.mxu0 0.0
      %5700 = vmatmul.mubr.f32.gmra.mrb[0].mxu0 %v5608
      %v5701 = vpop.f32.mrb[0].mxu0
      %v5702 = vadd.f32 %v5349, %v5701
      %v5703 = vpop.f32.mrb[0].mxu0
      %5704 = vmatprep.mubr.f32.mxu0 0.0
      %5705 = vmatmul.mubr.f32.gmra.mrb[0].mxu0 %v5610
      %v5706 = vpop.f32.mrb[0].mxu0
      %v5707 = vadd.f32 %v5354, %v5706
      %v5708 = vpop.f32.mrb[0].mxu0
      %5709 = vmatprep.mubr.f32.mxu0 0.0
      %5710 = vmatmul.mubr.f32.gmra.mrb[0].mxu0 %v5612
      %v5711 = vpop.f32.mrb[0].mxu0
      %v5712 = vadd.f32 %v5359, %v5711
      %v5713 = vpop.f32.mrb[0].mxu0
      %5714 = vmatprep.mubr.f32.mxu0 0.0
      %5715 = vmatmul.mubr.f32.gmra.mrb[0].mxu0 %v5614
      %v5716 = vpop.f32.mrb[0].mxu0
      %v5717 = vadd.f32 %v5364, %v5716
      %v5718 = vpop.f32.mrb[0].mxu0
      %5719 = vmatprep.mubr.f32.mxu0 0.0
      %5720 = vmatmul.mubr.f32.gmra.mrb[0].mxu0 %v5616
      %v5721 = vpop.f32.mrb[0].mxu0
      %v5722 = vadd.f32 %v5369, %v5721
      %v5723 = vpop.f32.mrb[0].mxu0
      %5724 = vmatprep.mubr.f32.mxu0 0.0
      %5725 = vmatmul.mubr.f32.gmra.mrb[0].mxu0 %v5618
      %v5726 = vpop.f32.mrb[0].mxu0
      %v5727 = vadd.f32 %v5374, %v5726
      %v5728 = vpop.f32.mrb[0].mxu0
      %5729 = vmatprep.mubr.f32.mxu0 0.0
      %5730 = vmatmul.mubr.f32.gmra.mrb[0].mxu0 %v5620
      %v5731 = vpop.f32.mrb[0].mxu0
      %v5732 = vadd.f32 %v5379, %v5731
      %v5733 = vpop.f32.mrb[0].mxu0
      %5734 = vmatprep.mubr.f32.mxu0 0.0
      %5735 = vmatmul.mubr.f32.gmra.mrb[0].mxu0 %v5622
      %v5736 = vpop.f32.mrb[0].mxu0
      %v5737 = vadd.f32 %v5384, %v5736
      %v5738 = vpop.f32.mrb[0].mxu0
      %5739 = vmatprep.mubr.f32.mxu0 0.0
      %5740 = vmatmul.mubr.f32.gmra.mrb[0].mxu0 %v5624
      %v5741 = vpop.f32.mrb[0].mxu0
      %v5742 = vadd.f32 %v5389, %v5741
      %v5743 = vpop.f32.mrb[0].mxu0
      %5744 = vmatprep.mubr.f32.mxu0 0.0
      %5745 = vmatmul.mubr.f32.gmra.mrb[0].mxu0 %v5626
      %v5746 = vpop.f32.mrb[0].mxu0
      %v5747 = vadd.f32 %v5394, %v5746
      %v5748 = vpop.f32.mrb[0].mxu0
      %5749 = vmatprep.mubr.f32.mxu0 0.0
      %5750 = vmatmul.mubr.f32.gmra.mrb[0].mxu0 %v5628
      %v5751 = vpop.f32.mrb[0].mxu0
      %v5752 = vadd.f32 %v5399, %v5751
      %v5753 = vpop.f32.mrb[0].mxu0
      %5754 = vdwg.mxu0
      %v5767 = vcombine.high %v4087, %v4087
      %v5769 = vunpack.c.l.s4 1983009808
      %v5770 = vunpack.c.0.s8 %v5769
      %v5771 = vlaneseq
      %v5772 = vshrl.u32 %v5771, 7
      %v5773 = vsub.s32 %v5770, %v5772
      %v5774 = vrot.slane %v4087, %v5773
      %v5776 = vunpack.c.l.s4 1983009808
      %v5777 = vunpack.c.0.s8 %v5776
      %v5778 = vlaneseq
      %v5779 = vshrl.u32 %v5778, 7
      %v5780 = vsub.s32 %v5777, %v5779
      %v5781 = vrot.slane %v5767, %v5780
      %v5782 = vcombine.high %v5774, %v5774
      %v5783 = vcombine.high %v5781, %v5781
      %v5784 = vcombine.high %v4092, %v4092
      %v5786 = vunpack.c.l.s4 1983009808
      %v5787 = vunpack.c.0.s8 %v5786
      %v5788 = vlaneseq
      %v5789 = vshrl.u32 %v5788, 7
      %v5790 = vsub.s32 %v5787, %v5789
      %v5791 = vrot.slane %v4092, %v5790
      %v5793 = vunpack.c.l.s4 1983009808
      %v5794 = vunpack.c.0.s8 %v5793
      %v5795 = vlaneseq
      %v5796 = vshrl.u32 %v5795, 7
      %v5797 = vsub.s32 %v5794, %v5796
      %v5798 = vrot.slane %v5784, %v5797
      %v5799 = vcombine.high %v5791, %v5791
      %v5800 = vcombine.high %v5798, %v5798
      %v5801 = vcombine.high %v4097, %v4097
      %v5803 = vunpack.c.l.s4 1983009808
      %v5804 = vunpack.c.0.s8 %v5803
      %v5805 = vlaneseq
      %v5806 = vshrl.u32 %v5805, 7
      %v5807 = vsub.s32 %v5804, %v5806
      %v5808 = vrot.slane %v4097, %v5807
      %v5810 = vunpack.c.l.s4 1983009808
      %v5811 = vunpack.c.0.s8 %v5810
      %v5812 = vlaneseq
      %v5813 = vshrl.u32 %v5812, 7
      %v5814 = vsub.s32 %v5811, %v5813
      %v5815 = vrot.slane %v5801, %v5814
      %v5816 = vcombine.high %v5808, %v5808
      %v5817 = vcombine.high %v5815, %v5815
      %v5818 = vcombine.high %v4102, %v4102
      %v5820 = vunpack.c.l.s4 1983009808
      %v5821 = vunpack.c.0.s8 %v5820
      %v5822 = vlaneseq
      %v5823 = vshrl.u32 %v5822, 7
      %v5824 = vsub.s32 %v5821, %v5823
      %v5825 = vrot.slane %v4102, %v5824
      %v5827 = vunpack.c.l.s4 1983009808
      %v5828 = vunpack.c.0.s8 %v5827
      %v5829 = vlaneseq
      %v5830 = vshrl.u32 %v5829, 7
      %v5831 = vsub.s32 %v5828, %v5830
      %v5832 = vrot.slane %v5818, %v5831
      %v5833 = vcombine.high %v5825, %v5825
      %v5834 = vcombine.high %v5832, %v5832
      %v5835 = vcombine.high %v4107, %v4107
      %v5837 = vunpack.c.l.s4 1983009808
      %v5838 = vunpack.c.0.s8 %v5837
      %v5839 = vlaneseq
      %v5840 = vshrl.u32 %v5839, 7
      %v5841 = vsub.s32 %v5838, %v5840
      %v5842 = vrot.slane %v4107, %v5841
      %v5844 = vunpack.c.l.s4 1983009808
      %v5845 = vunpack.c.0.s8 %v5844
      %v5846 = vlaneseq
      %v5847 = vshrl.u32 %v5846, 7
      %v5848 = vsub.s32 %v5845, %v5847
      %v5849 = vrot.slane %v5835, %v5848
      %v5850 = vcombine.high %v5842, %v5842
      %v5851 = vcombine.high %v5849, %v5849
      %v5852 = vcombine.high %v4112, %v4112
      %v5854 = vunpack.c.l.s4 1983009808
      %v5855 = vunpack.c.0.s8 %v5854
      %v5856 = vlaneseq
      %v5857 = vshrl.u32 %v5856, 7
      %v5858 = vsub.s32 %v5855, %v5857
      %v5859 = vrot.slane %v4112, %v5858
      %v5861 = vunpack.c.l.s4 1983009808
      %v5862 = vunpack.c.0.s8 %v5861
      %v5863 = vlaneseq
      %v5864 = vshrl.u32 %v5863, 7
      %v5865 = vsub.s32 %v5862, %v5864
      %v5866 = vrot.slane %v5852, %v5865
      %v5867 = vcombine.high %v5859, %v5859
      %v5868 = vcombine.high %v5866, %v5866
      %v5869 = vcombine.high %v4117, %v4117
      %v5871 = vunpack.c.l.s4 1983009808
      %v5872 = vunpack.c.0.s8 %v5871
      %v5873 = vlaneseq
      %v5874 = vshrl.u32 %v5873, 7
      %v5875 = vsub.s32 %v5872, %v5874
      %v5876 = vrot.slane %v4117, %v5875
      %v5878 = vunpack.c.l.s4 1983009808
      %v5879 = vunpack.c.0.s8 %v5878
      %v5880 = vlaneseq
      %v5881 = vshrl.u32 %v5880, 7
      %v5882 = vsub.s32 %v5879, %v5881
      %v5883 = vrot.slane %v5869, %v5882
      %v5884 = vcombine.high %v5876, %v5876
      %v5885 = vcombine.high %v5883, %v5883
      %v5886 = vcombine.high %v4122, %v4122
      %v5888 = vunpack.c.l.s4 1983009808
      %v5889 = vunpack.c.0.s8 %v5888
      %v5890 = vlaneseq
      %v5891 = vshrl.u32 %v5890, 7
      %v5892 = vsub.s32 %v5889, %v5891
      %v5893 = vrot.slane %v4122, %v5892
      %v5895 = vunpack.c.l.s4 1983009808
      %v5896 = vunpack.c.0.s8 %v5895
      %v5897 = vlaneseq
      %v5898 = vshrl.u32 %v5897, 7
      %v5899 = vsub.s32 %v5896, %v5898
      %v5900 = vrot.slane %v5886, %v5899
      %v5901 = vcombine.high %v5893, %v5893
      %v5902 = vcombine.high %v5900, %v5900
      %v5903 = vcombine.high %v4127, %v4127
      %v5905 = vunpack.c.l.s4 1983009808
      %v5906 = vunpack.c.0.s8 %v5905
      %v5907 = vlaneseq
      %v5908 = vshrl.u32 %v5907, 7
      %v5909 = vsub.s32 %v5906, %v5908
      %v5910 = vrot.slane %v4127, %v5909
      %v5912 = vunpack.c.l.s4 1983009808
      %v5913 = vunpack.c.0.s8 %v5912
      %v5914 = vlaneseq
      %v5915 = vshrl.u32 %v5914, 7
      %v5916 = vsub.s32 %v5913, %v5915
      %v5917 = vrot.slane %v5903, %v5916
      %v5918 = vcombine.high %v5910, %v5910
      %v5919 = vcombine.high %v5917, %v5917
      %v5920 = vcombine.high %v4132, %v4132
      %v5922 = vunpack.c.l.s4 1983009808
      %v5923 = vunpack.c.0.s8 %v5922
      %v5924 = vlaneseq
      %v5925 = vshrl.u32 %v5924, 7
      %v5926 = vsub.s32 %v5923, %v5925
      %v5927 = vrot.slane %v4132, %v5926
      %v5929 = vunpack.c.l.s4 1983009808
      %v5930 = vunpack.c.0.s8 %v5929
      %v5931 = vlaneseq
      %v5932 = vshrl.u32 %v5931, 7
      %v5933 = vsub.s32 %v5930, %v5932
      %v5934 = vrot.slane %v5920, %v5933
      %v5935 = vcombine.high %v5927, %v5927
      %v5936 = vcombine.high %v5934, %v5934
      %v5937 = vcombine.high %v4137, %v4137
      %v5939 = vunpack.c.l.s4 1983009808
      %v5940 = vunpack.c.0.s8 %v5939
      %v5941 = vlaneseq
      %v5942 = vshrl.u32 %v5941, 7
      %v5943 = vsub.s32 %v5940, %v5942
      %v5944 = vrot.slane %v4137, %v5943
      %v5946 = vunpack.c.l.s4 1983009808
      %v5947 = vunpack.c.0.s8 %v5946
      %v5948 = vlaneseq
      %v5949 = vshrl.u32 %v5948, 7
      %v5950 = vsub.s32 %v5947, %v5949
      %v5951 = vrot.slane %v5937, %v5950
      %v5952 = vcombine.high %v5944, %v5944
      %v5953 = vcombine.high %v5951, %v5951
      %v5954 = vcombine.high %v4142, %v4142
      %v5956 = vunpack.c.l.s4 1983009808
      %v5957 = vunpack.c.0.s8 %v5956
      %v5958 = vlaneseq
      %v5959 = vshrl.u32 %v5958, 7
      %v5960 = vsub.s32 %v5957, %v5959
      %v5961 = vrot.slane %v4142, %v5960
      %v5963 = vunpack.c.l.s4 1983009808
      %v5964 = vunpack.c.0.s8 %v5963
      %v5965 = vlaneseq
      %v5966 = vshrl.u32 %v5965, 7
      %v5967 = vsub.s32 %v5964, %v5966
      %v5968 = vrot.slane %v5954, %v5967
      %v5969 = vcombine.high %v5961, %v5961
      %v5970 = vcombine.high %v5968, %v5968
      %v6031 = vcombine.high %v5697, %v5697
      %v6033 = vunpack.c.l.s4 1983009808
      %v6034 = vunpack.c.0.s8 %v6033
      %v6035 = vlaneseq
      %v6036 = vshrl.u32 %v6035, 7
      %v6037 = vsub.s32 %v6034, %v6036
      %v6038 = vrot.slane %v5697, %v6037
      %v6040 = vunpack.c.l.s4 1983009808
      %v6041 = vunpack.c.0.s8 %v6040
      %v6042 = vlaneseq
      %v6043 = vshrl.u32 %v6042, 7
      %v6044 = vsub.s32 %v6041, %v6043
      %v6045 = vrot.slane %v6031, %v6044
      %v6046 = vcombine.high %v6038, %v6038
      %v6047 = vcombine.high %v6045, %v6045
      %v6048 = vcombine.high %v5702, %v5702
      %v6050 = vunpack.c.l.s4 1983009808
      %v6051 = vunpack.c.0.s8 %v6050
      %v6052 = vlaneseq
      %v6053 = vshrl.u32 %v6052, 7
      %v6054 = vsub.s32 %v6051, %v6053
      %v6055 = vrot.slane %v5702, %v6054
      %v6057 = vunpack.c.l.s4 1983009808
      %v6058 = vunpack.c.0.s8 %v6057
      %v6059 = vlaneseq
      %v6060 = vshrl.u32 %v6059, 7
      %v6061 = vsub.s32 %v6058, %v6060
      %v6062 = vrot.slane %v6048, %v6061
      %v6063 = vcombine.high %v6055, %v6055
      %v6064 = vcombine.high %v6062, %v6062
      %v6065 = vcombine.high %v5707, %v5707
      %v6067 = vunpack.c.l.s4 1983009808
      %v6068 = vunpack.c.0.s8 %v6067
      %v6069 = vlaneseq
      %v6070 = vshrl.u32 %v6069, 7
      %v6071 = vsub.s32 %v6068, %v6070
      %v6072 = vrot.slane %v5707, %v6071
      %v6074 = vunpack.c.l.s4 1983009808
      %v6075 = vunpack.c.0.s8 %v6074
      %v6076 = vlaneseq
      %v6077 = vshrl.u32 %v6076, 7
      %v6078 = vsub.s32 %v6075, %v6077
      %v6079 = vrot.slane %v6065, %v6078
      %v6080 = vcombine.high %v6072, %v6072
      %v6081 = vcombine.high %v6079, %v6079
      %v6082 = vcombine.high %v5712, %v5712
      %v6084 = vunpack.c.l.s4 1983009808
      %v6085 = vunpack.c.0.s8 %v6084
      %v6086 = vlaneseq
      %v6087 = vshrl.u32 %v6086, 7
      %v6088 = vsub.s32 %v6085, %v6087
      %v6089 = vrot.slane %v5712, %v6088
      %v6091 = vunpack.c.l.s4 1983009808
      %v6092 = vunpack.c.0.s8 %v6091
      %v6093 = vlaneseq
      %v6094 = vshrl.u32 %v6093, 7
      %v6095 = vsub.s32 %v6092, %v6094
      %v6096 = vrot.slane %v6082, %v6095
      %v6097 = vcombine.high %v6089, %v6089
      %v6098 = vcombine.high %v6096, %v6096
      %v6099 = vcombine.high %v5717, %v5717
      %v6101 = vunpack.c.l.s4 1983009808
      %v6102 = vunpack.c.0.s8 %v6101
      %v6103 = vlaneseq
      %v6104 = vshrl.u32 %v6103, 7
      %v6105 = vsub.s32 %v6102, %v6104
      %v6106 = vrot.slane %v5717, %v6105
      %v6108 = vunpack.c.l.s4 1983009808
      %v6109 = vunpack.c.0.s8 %v6108
      %v6110 = vlaneseq
      %v6111 = vshrl.u32 %v6110, 7
      %v6112 = vsub.s32 %v6109, %v6111
      %v6113 = vrot.slane %v6099, %v6112
      %v6114 = vcombine.high %v6106, %v6106
      %v6115 = vcombine.high %v6113, %v6113
      %v6116 = vcombine.high %v5722, %v5722
      %v6118 = vunpack.c.l.s4 1983009808
      %v6119 = vunpack.c.0.s8 %v6118
      %v6120 = vlaneseq
      %v6121 = vshrl.u32 %v6120, 7
      %v6122 = vsub.s32 %v6119, %v6121
      %v6123 = vrot.slane %v5722, %v6122
      %v6125 = vunpack.c.l.s4 1983009808
      %v6126 = vunpack.c.0.s8 %v6125
      %v6127 = vlaneseq
      %v6128 = vshrl.u32 %v6127, 7
      %v6129 = vsub.s32 %v6126, %v6128
      %v6130 = vrot.slane %v6116, %v6129
      %v6131 = vcombine.high %v6123, %v6123
      %v6132 = vcombine.high %v6130, %v6130
      %v6133 = vcombine.high %v5727, %v5727
      %v6135 = vunpack.c.l.s4 1983009808
      %v6136 = vunpack.c.0.s8 %v6135
      %v6137 = vlaneseq
      %v6138 = vshrl.u32 %v6137, 7
      %v6139 = vsub.s32 %v6136, %v6138
      %v6140 = vrot.slane %v5727, %v6139
      %v6142 = vunpack.c.l.s4 1983009808
      %v6143 = vunpack.c.0.s8 %v6142
      %v6144 = vlaneseq
      %v6145 = vshrl.u32 %v6144, 7
      %v6146 = vsub.s32 %v6143, %v6145
      %v6147 = vrot.slane %v6133, %v6146
      %v6148 = vcombine.high %v6140, %v6140
      %v6149 = vcombine.high %v6147, %v6147
      %v6150 = vcombine.high %v5732, %v5732
      %v6152 = vunpack.c.l.s4 1983009808
      %v6153 = vunpack.c.0.s8 %v6152
      %v6154 = vlaneseq
      %v6155 = vshrl.u32 %v6154, 7
      %v6156 = vsub.s32 %v6153, %v6155
      %v6157 = vrot.slane %v5732, %v6156
      %v6159 = vunpack.c.l.s4 1983009808
      %v6160 = vunpack.c.0.s8 %v6159
      %v6161 = vlaneseq
      %v6162 = vshrl.u32 %v6161, 7
      %v6163 = vsub.s32 %v6160, %v6162
      %v6164 = vrot.slane %v6150, %v6163
      %v6165 = vcombine.high %v6157, %v6157
      %v6166 = vcombine.high %v6164, %v6164
      %v6167 = vcombine.high %v5737, %v5737
      %v6169 = vunpack.c.l.s4 1983009808
      %v6170 = vunpack.c.0.s8 %v6169
      %v6171 = vlaneseq
      %v6172 = vshrl.u32 %v6171, 7
      %v6173 = vsub.s32 %v6170, %v6172
      %v6174 = vrot.slane %v5737, %v6173
      %v6176 = vunpack.c.l.s4 1983009808
      %v6177 = vunpack.c.0.s8 %v6176
      %v6178 = vlaneseq
      %v6179 = vshrl.u32 %v6178, 7
      %v6180 = vsub.s32 %v6177, %v6179
      %v6181 = vrot.slane %v6167, %v6180
      %v6182 = vcombine.high %v6174, %v6174
      %v6183 = vcombine.high %v6181, %v6181
      %v6184 = vcombine.high %v5742, %v5742
      %v6186 = vunpack.c.l.s4 1983009808
      %v6187 = vunpack.c.0.s8 %v6186
      %v6188 = vlaneseq
      %v6189 = vshrl.u32 %v6188, 7
      %v6190 = vsub.s32 %v6187, %v6189
      %v6191 = vrot.slane %v5742, %v6190
      %v6193 = vunpack.c.l.s4 1983009808
      %v6194 = vunpack.c.0.s8 %v6193
      %v6195 = vlaneseq
      %v6196 = vshrl.u32 %v6195, 7
      %v6197 = vsub.s32 %v6194, %v6196
      %v6198 = vrot.slane %v6184, %v6197
      %v6199 = vcombine.high %v6191, %v6191
      %v6200 = vcombine.high %v6198, %v6198
      %v6201 = vcombine.high %v5747, %v5747
      %v6203 = vunpack.c.l.s4 1983009808
      %v6204 = vunpack.c.0.s8 %v6203
      %v6205 = vlaneseq
      %v6206 = vshrl.u32 %v6205, 7
      %v6207 = vsub.s32 %v6204, %v6206
      %v6208 = vrot.slane %v5747, %v6207
      %v6210 = vunpack.c.l.s4 1983009808
      %v6211 = vunpack.c.0.s8 %v6210
      %v6212 = vlaneseq
      %v6213 = vshrl.u32 %v6212, 7
      %v6214 = vsub.s32 %v6211, %v6213
      %v6215 = vrot.slane %v6201, %v6214
      %v6216 = vcombine.high %v6208, %v6208
      %v6217 = vcombine.high %v6215, %v6215
      %v6218 = vcombine.high %v5752, %v5752
      %v6220 = vunpack.c.l.s4 1983009808
      %v6221 = vunpack.c.0.s8 %v6220
      %v6222 = vlaneseq
      %v6223 = vshrl.u32 %v6222, 7
      %v6224 = vsub.s32 %v6221, %v6223
      %v6225 = vrot.slane %v5752, %v6224
      %v6227 = vunpack.c.l.s4 1983009808
      %v6228 = vunpack.c.0.s8 %v6227
      %v6229 = vlaneseq
      %v6230 = vshrl.u32 %v6229, 7
      %v6231 = vsub.s32 %v6228, %v6230
      %v6232 = vrot.slane %v6218, %v6231
      %v6233 = vcombine.high %v6225, %v6225
      %v6234 = vcombine.high %v6232, %v6232
      %v6283 = vld [vmem:[%s248] sm:$0x3f]
      %6285 = vset.pattern.permute.xlu0 0
      %6286 = vperm.xlu0 %6285, %v6283
      %v6287 = vpop.permute.xlu0 %6286
      %v6289 = vunpack.c.l.s4 269488144
      %v6290 = vunpack.c.0.s8 %v6289
      %v6291 = vlaneseq
      %v6292 = vshrl.u32 %v6291, 7
      %v6293 = vsub.s32 %v6290, %v6292
      %v6294 = vrot.slane %v6287, %v6293
      %v6296 = vunpack.c.l.s4 842150450
      %v6297 = vunpack.c.0.s8 %v6296
      %v6298 = vlaneseq
      %v6299 = vshrl.u32 %v6298, 7
      %v6300 = vsub.s32 %v6297, %v6299
      %v6301 = vrot.slane %v6287, %v6300
      %v6303 = vunpack.c.l.s4 1414812756
      %v6304 = vunpack.c.0.s8 %v6303
      %v6305 = vlaneseq
      %v6306 = vshrl.u32 %v6305, 7
      %v6307 = vsub.s32 %v6304, %v6306
      %v6308 = vrot.slane %v6287, %v6307
      %v6312 = vadd.f32 %v5774, %v6294
      %v6313 = vadd.f32 %v5782, %v6301
      %v6314 = vadd.f32 %v5781, %v6308
      %v6315 = vadd.f32 %v6038, %v6294
      %v6316 = vadd.f32 %v6046, %v6301
      %v6317 = vadd.f32 %v6045, %v6308
      %v6318 = vadd.f32 %v5783, %v6294
      %v6319 = vadd.f32 %v5791, %v6301
      %v6320 = vadd.f32 %v5799, %v6308
      %v6321 = vadd.f32 %v6047, %v6294
      %v6322 = vadd.f32 %v6055, %v6301
      %v6323 = vadd.f32 %v6063, %v6308
      %v6324 = vadd.f32 %v5798, %v6294
      %v6325 = vadd.f32 %v5800, %v6301
      %v6326 = vadd.f32 %v5808, %v6308
      %v6327 = vadd.f32 %v6062, %v6294
      %v6328 = vadd.f32 %v6064, %v6301
      %v6329 = vadd.f32 %v6072, %v6308
      %v6330 = vadd.f32 %v5816, %v6294
      %v6331 = vadd.f32 %v5815, %v6301
      %v6332 = vadd.f32 %v5817, %v6308
      %v6333 = vadd.f32 %v6080, %v6294
      %v6334 = vadd.f32 %v6079, %v6301
      %v6335 = vadd.f32 %v6081, %v6308
      %v6336 = vadd.f32 %v5825, %v6294
      %v6337 = vadd.f32 %v5833, %v6301
      %v6338 = vadd.f32 %v5832, %v6308
      %v6339 = vadd.f32 %v6089, %v6294
      %v6340 = vadd.f32 %v6097, %v6301
      %v6341 = vadd.f32 %v6096, %v6308
      %v6342 = vadd.f32 %v5834, %v6294
      %v6343 = vadd.f32 %v5842, %v6301
      %v6344 = vadd.f32 %v5850, %v6308
      %v6345 = vadd.f32 %v6098, %v6294
      %v6346 = vadd.f32 %v6106, %v6301
      %v6347 = vadd.f32 %v6114, %v6308
      %v6348 = vadd.f32 %v5849, %v6294
      %v6349 = vadd.f32 %v5851, %v6301
      %v6350 = vadd.f32 %v5859, %v6308
      %v6351 = vadd.f32 %v6113, %v6294
      %v6352 = vadd.f32 %v6115, %v6301
      %v6353 = vadd.f32 %v6123, %v6308
      %v6354 = vadd.f32 %v5867, %v6294
      %v6355 = vadd.f32 %v5866, %v6301
      %v6356 = vadd.f32 %v5868, %v6308
      %v6357 = vadd.f32 %v6131, %v6294
      %v6358 = vadd.f32 %v6130, %v6301
      %v6359 = vadd.f32 %v6132, %v6308
      %v6360 = vadd.f32 %v5876, %v6294
      %v6361 = vadd.f32 %v5884, %v6301
      %v6362 = vadd.f32 %v5883, %v6308
      %v6363 = vadd.f32 %v6140, %v6294
      %v6364 = vadd.f32 %v6148, %v6301
      %v6365 = vadd.f32 %v6147, %v6308
      %v6366 = vadd.f32 %v5885, %v6294
      %v6367 = vadd.f32 %v5893, %v6301
      %v6368 = vadd.f32 %v5901, %v6308
      %v6369 = vadd.f32 %v6149, %v6294
      %v6370 = vadd.f32 %v6157, %v6301
      %v6371 = vadd.f32 %v6165, %v6308
      %v6372 = vadd.f32 %v5900, %v6294
      %v6373 = vadd.f32 %v5902, %v6301
      %v6374 = vadd.f32 %v5910, %v6308
      %v6375 = vadd.f32 %v6164, %v6294
      %v6376 = vadd.f32 %v6166, %v6301
      %v6377 = vadd.f32 %v6174, %v6308
      %v6378 = vadd.f32 %v5918, %v6294
      %v6379 = vadd.f32 %v5917, %v6301
      %v6380 = vadd.f32 %v5919, %v6308
      %v6381 = vadd.f32 %v6182, %v6294
      %v6382 = vadd.f32 %v6181, %v6301
      %v6383 = vadd.f32 %v6183, %v6308
      %v6384 = vadd.f32 %v5927, %v6294
      %v6385 = vadd.f32 %v5935, %v6301
      %v6386 = vadd.f32 %v5934, %v6308
      %v6387 = vadd.f32 %v6191, %v6294
      %v6388 = vadd.f32 %v6199, %v6301
      %v6389 = vadd.f32 %v6198, %v6308
      %v6390 = vadd.f32 %v5936, %v6294
      %v6391 = vadd.f32 %v5944, %v6301
      %v6392 = vadd.f32 %v5952, %v6308
      %v6393 = vadd.f32 %v6200, %v6294
      %v6394 = vadd.f32 %v6208, %v6301
      %v6395 = vadd.f32 %v6216, %v6308
      %v6396 = vadd.f32 %v5951, %v6294
      %v6397 = vadd.f32 %v5953, %v6301
      %v6398 = vadd.f32 %v5961, %v6308
      %v6399 = vadd.f32 %v6215, %v6294
      %v6400 = vadd.f32 %v6217, %v6301
      %v6401 = vadd.f32 %v6225, %v6308
      %v6402 = vadd.f32 %v5969, %v6294
      %v6403 = vadd.f32 %v5968, %v6301
      %v6404 = vadd.f32 %v5970, %v6308
      %v6405 = vadd.f32 %v6233, %v6294
      %v6406 = vadd.f32 %v6232, %v6301
      %v6407 = vadd.f32 %v6234, %v6308
      %v6504 = vcombine.low %v6312, %v6313
      %v6506 = vunpack.c.l.s4 1983009808
      %v6507 = vunpack.c.0.s8 %v6506
      %v6508 = vlaneseq
      %v6509 = vshrl.u32 %v6508, 7
      %v6510 = vsub.s32 %v6507, %v6509
      %v6511 = vrot.slane %v6504, %v6510
      %v6513 = vunpack.c.l.s4 1983009808
      %v6514 = vunpack.c.0.s8 %v6513
      %v6515 = vlaneseq
      %v6516 = vshrl.u32 %v6515, 7
      %v6517 = vsub.s32 %v6514, %v6516
      %v6518 = vrot.slane %v6314, %v6517
      %v6519 = vcombine.low %v6511, %v6518
      %v6520 = vcombine.low %v6315, %v6316
      %v6522 = vunpack.c.l.s4 1983009808
      %v6523 = vunpack.c.0.s8 %v6522
      %v6524 = vlaneseq
      %v6525 = vshrl.u32 %v6524, 7
      %v6526 = vsub.s32 %v6523, %v6525
      %v6527 = vrot.slane %v6520, %v6526
      %v6529 = vunpack.c.l.s4 1983009808
      %v6530 = vunpack.c.0.s8 %v6529
      %v6531 = vlaneseq
      %v6532 = vshrl.u32 %v6531, 7
      %v6533 = vsub.s32 %v6530, %v6532
      %v6534 = vrot.slane %v6317, %v6533
      %v6535 = vcombine.low %v6527, %v6534
      %v6536 = vcombine.low %v6318, %v6319
      %v6538 = vunpack.c.l.s4 1983009808
      %v6539 = vunpack.c.0.s8 %v6538
      %v6540 = vlaneseq
      %v6541 = vshrl.u32 %v6540, 7
      %v6542 = vsub.s32 %v6539, %v6541
      %v6543 = vrot.slane %v6536, %v6542
      %v6545 = vunpack.c.l.s4 1983009808
      %v6546 = vunpack.c.0.s8 %v6545
      %v6547 = vlaneseq
      %v6548 = vshrl.u32 %v6547, 7
      %v6549 = vsub.s32 %v6546, %v6548
      %v6550 = vrot.slane %v6320, %v6549
      %v6551 = vcombine.low %v6543, %v6550
      %v6552 = vcombine.low %v6321, %v6322
      %v6554 = vunpack.c.l.s4 1983009808
      %v6555 = vunpack.c.0.s8 %v6554
      %v6556 = vlaneseq
      %v6557 = vshrl.u32 %v6556, 7
      %v6558 = vsub.s32 %v6555, %v6557
      %v6559 = vrot.slane %v6552, %v6558
      %v6561 = vunpack.c.l.s4 1983009808
      %v6562 = vunpack.c.0.s8 %v6561
      %v6563 = vlaneseq
      %v6564 = vshrl.u32 %v6563, 7
      %v6565 = vsub.s32 %v6562, %v6564
      %v6566 = vrot.slane %v6323, %v6565
      %v6567 = vcombine.low %v6559, %v6566
      %v6568 = vcombine.low %v6324, %v6325
      %v6570 = vunpack.c.l.s4 1983009808
      %v6571 = vunpack.c.0.s8 %v6570
      %v6572 = vlaneseq
      %v6573 = vshrl.u32 %v6572, 7
      %v6574 = vsub.s32 %v6571, %v6573
      %v6575 = vrot.slane %v6568, %v6574
      %v6577 = vunpack.c.l.s4 1983009808
      %v6578 = vunpack.c.0.s8 %v6577
      %v6579 = vlaneseq
      %v6580 = vshrl.u32 %v6579, 7
      %v6581 = vsub.s32 %v6578, %v6580
      %v6582 = vrot.slane %v6326, %v6581
      %v6583 = vcombine.low %v6575, %v6582
      %v6584 = vcombine.low %v6327, %v6328
      %v6586 = vunpack.c.l.s4 1983009808
      %v6587 = vunpack.c.0.s8 %v6586
      %v6588 = vlaneseq
      %v6589 = vshrl.u32 %v6588, 7
      %v6590 = vsub.s32 %v6587, %v6589
      %v6591 = vrot.slane %v6584, %v6590
      %v6593 = vunpack.c.l.s4 1983009808
      %v6594 = vunpack.c.0.s8 %v6593
      %v6595 = vlaneseq
      %v6596 = vshrl.u32 %v6595, 7
      %v6597 = vsub.s32 %v6594, %v6596
      %v6598 = vrot.slane %v6329, %v6597
      %v6599 = vcombine.low %v6591, %v6598
      %v6600 = vcombine.low %v6330, %v6331
      %v6602 = vunpack.c.l.s4 1983009808
      %v6603 = vunpack.c.0.s8 %v6602
      %v6604 = vlaneseq
      %v6605 = vshrl.u32 %v6604, 7
      %v6606 = vsub.s32 %v6603, %v6605
      %v6607 = vrot.slane %v6600, %v6606
      %v6609 = vunpack.c.l.s4 1983009808
      %v6610 = vunpack.c.0.s8 %v6609
      %v6611 = vlaneseq
      %v6612 = vshrl.u32 %v6611, 7
      %v6613 = vsub.s32 %v6610, %v6612
      %v6614 = vrot.slane %v6332, %v6613
      %v6615 = vcombine.low %v6607, %v6614
      %v6616 = vcombine.low %v6333, %v6334
      %v6618 = vunpack.c.l.s4 1983009808
      %v6619 = vunpack.c.0.s8 %v6618
      %v6620 = vlaneseq
      %v6621 = vshrl.u32 %v6620, 7
      %v6622 = vsub.s32 %v6619, %v6621
      %v6623 = vrot.slane %v6616, %v6622
      %v6625 = vunpack.c.l.s4 1983009808
      %v6626 = vunpack.c.0.s8 %v6625
      %v6627 = vlaneseq
      %v6628 = vshrl.u32 %v6627, 7
      %v6629 = vsub.s32 %v6626, %v6628
      %v6630 = vrot.slane %v6335, %v6629
      %v6631 = vcombine.low %v6623, %v6630
      %v6632 = vcombine.low %v6336, %v6337
      %v6634 = vunpack.c.l.s4 1983009808
      %v6635 = vunpack.c.0.s8 %v6634
      %v6636 = vlaneseq
      %v6637 = vshrl.u32 %v6636, 7
      %v6638 = vsub.s32 %v6635, %v6637
      %v6639 = vrot.slane %v6632, %v6638
      %v6641 = vunpack.c.l.s4 1983009808
      %v6642 = vunpack.c.0.s8 %v6641
      %v6643 = vlaneseq
      %v6644 = vshrl.u32 %v6643, 7
      %v6645 = vsub.s32 %v6642, %v6644
      %v6646 = vrot.slane %v6338, %v6645
      %v6647 = vcombine.low %v6639, %v6646
      %v6648 = vcombine.low %v6339, %v6340
      %v6650 = vunpack.c.l.s4 1983009808
      %v6651 = vunpack.c.0.s8 %v6650
      %v6652 = vlaneseq
      %v6653 = vshrl.u32 %v6652, 7
      %v6654 = vsub.s32 %v6651, %v6653
      %v6655 = vrot.slane %v6648, %v6654
      %v6657 = vunpack.c.l.s4 1983009808
      %v6658 = vunpack.c.0.s8 %v6657
      %v6659 = vlaneseq
      %v6660 = vshrl.u32 %v6659, 7
      %v6661 = vsub.s32 %v6658, %v6660
      %v6662 = vrot.slane %v6341, %v6661
      %v6663 = vcombine.low %v6655, %v6662
      %v6664 = vcombine.low %v6342, %v6343
      %v6666 = vunpack.c.l.s4 1983009808
      %v6667 = vunpack.c.0.s8 %v6666
      %v6668 = vlaneseq
      %v6669 = vshrl.u32 %v6668, 7
      %v6670 = vsub.s32 %v6667, %v6669
      %v6671 = vrot.slane %v6664, %v6670
      %v6673 = vunpack.c.l.s4 1983009808
      %v6674 = vunpack.c.0.s8 %v6673
      %v6675 = vlaneseq
      %v6676 = vshrl.u32 %v6675, 7
      %v6677 = vsub.s32 %v6674, %v6676
      %v6678 = vrot.slane %v6344, %v6677
      %v6679 = vcombine.low %v6671, %v6678
      %v6680 = vcombine.low %v6345, %v6346
      %v6682 = vunpack.c.l.s4 1983009808
      %v6683 = vunpack.c.0.s8 %v6682
      %v6684 = vlaneseq
      %v6685 = vshrl.u32 %v6684, 7
      %v6686 = vsub.s32 %v6683, %v6685
      %v6687 = vrot.slane %v6680, %v6686
      %v6689 = vunpack.c.l.s4 1983009808
      %v6690 = vunpack.c.0.s8 %v6689
      %v6691 = vlaneseq
      %v6692 = vshrl.u32 %v6691, 7
      %v6693 = vsub.s32 %v6690, %v6692
      %v6694 = vrot.slane %v6347, %v6693
      %v6695 = vcombine.low %v6687, %v6694
      %v6696 = vcombine.low %v6348, %v6349
      %v6698 = vunpack.c.l.s4 1983009808
      %v6699 = vunpack.c.0.s8 %v6698
      %v6700 = vlaneseq
      %v6701 = vshrl.u32 %v6700, 7
      %v6702 = vsub.s32 %v6699, %v6701
      %v6703 = vrot.slane %v6696, %v6702
      %v6705 = vunpack.c.l.s4 1983009808
      %v6706 = vunpack.c.0.s8 %v6705
      %v6707 = vlaneseq
      %v6708 = vshrl.u32 %v6707, 7
      %v6709 = vsub.s32 %v6706, %v6708
      %v6710 = vrot.slane %v6350, %v6709
      %v6711 = vcombine.low %v6703, %v6710
      %v6712 = vcombine.low %v6351, %v6352
      %v6714 = vunpack.c.l.s4 1983009808
      %v6715 = vunpack.c.0.s8 %v6714
      %v6716 = vlaneseq
      %v6717 = vshrl.u32 %v6716, 7
      %v6718 = vsub.s32 %v6715, %v6717
      %v6719 = vrot.slane %v6712, %v6718
      %v6721 = vunpack.c.l.s4 1983009808
      %v6722 = vunpack.c.0.s8 %v6721
      %v6723 = vlaneseq
      %v6724 = vshrl.u32 %v6723, 7
      %v6725 = vsub.s32 %v6722, %v6724
      %v6726 = vrot.slane %v6353, %v6725
      %v6727 = vcombine.low %v6719, %v6726
      %v6728 = vcombine.low %v6354, %v6355
      %v6730 = vunpack.c.l.s4 1983009808
      %v6731 = vunpack.c.0.s8 %v6730
      %v6732 = vlaneseq
      %v6733 = vshrl.u32 %v6732, 7
      %v6734 = vsub.s32 %v6731, %v6733
      %v6735 = vrot.slane %v6728, %v6734
      %v6737 = vunpack.c.l.s4 1983009808
      %v6738 = vunpack.c.0.s8 %v6737
      %v6739 = vlaneseq
      %v6740 = vshrl.u32 %v6739, 7
      %v6741 = vsub.s32 %v6738, %v6740
      %v6742 = vrot.slane %v6356, %v6741
      %v6743 = vcombine.low %v6735, %v6742
      %v6744 = vcombine.low %v6357, %v6358
      %v6746 = vunpack.c.l.s4 1983009808
      %v6747 = vunpack.c.0.s8 %v6746
      %v6748 = vlaneseq
      %v6749 = vshrl.u32 %v6748, 7
      %v6750 = vsub.s32 %v6747, %v6749
      %v6751 = vrot.slane %v6744, %v6750
      %v6753 = vunpack.c.l.s4 1983009808
      %v6754 = vunpack.c.0.s8 %v6753
      %v6755 = vlaneseq
      %v6756 = vshrl.u32 %v6755, 7
      %v6757 = vsub.s32 %v6754, %v6756
      %v6758 = vrot.slane %v6359, %v6757
      %v6759 = vcombine.low %v6751, %v6758
      %v6760 = vcombine.low %v6360, %v6361
      %v6762 = vunpack.c.l.s4 1983009808
      %v6763 = vunpack.c.0.s8 %v6762
      %v6764 = vlaneseq
      %v6765 = vshrl.u32 %v6764, 7
      %v6766 = vsub.s32 %v6763, %v6765
      %v6767 = vrot.slane %v6760, %v6766
      %v6769 = vunpack.c.l.s4 1983009808
      %v6770 = vunpack.c.0.s8 %v6769
      %v6771 = vlaneseq
      %v6772 = vshrl.u32 %v6771, 7
      %v6773 = vsub.s32 %v6770, %v6772
      %v6774 = vrot.slane %v6362, %v6773
      %v6775 = vcombine.low %v6767, %v6774
      %v6776 = vcombine.low %v6363, %v6364
      %v6778 = vunpack.c.l.s4 1983009808
      %v6779 = vunpack.c.0.s8 %v6778
      %v6780 = vlaneseq
      %v6781 = vshrl.u32 %v6780, 7
      %v6782 = vsub.s32 %v6779, %v6781
      %v6783 = vrot.slane %v6776, %v6782
      %v6785 = vunpack.c.l.s4 1983009808
      %v6786 = vunpack.c.0.s8 %v6785
      %v6787 = vlaneseq
      %v6788 = vshrl.u32 %v6787, 7
      %v6789 = vsub.s32 %v6786, %v6788
      %v6790 = vrot.slane %v6365, %v6789
      %v6791 = vcombine.low %v6783, %v6790
      %v6792 = vcombine.low %v6366, %v6367
      %v6794 = vunpack.c.l.s4 1983009808
      %v6795 = vunpack.c.0.s8 %v6794
      %v6796 = vlaneseq
      %v6797 = vshrl.u32 %v6796, 7
      %v6798 = vsub.s32 %v6795, %v6797
      %v6799 = vrot.slane %v6792, %v6798
      %v6801 = vunpack.c.l.s4 1983009808
      %v6802 = vunpack.c.0.s8 %v6801
      %v6803 = vlaneseq
      %v6804 = vshrl.u32 %v6803, 7
      %v6805 = vsub.s32 %v6802, %v6804
      %v6806 = vrot.slane %v6368, %v6805
      %v6807 = vcombine.low %v6799, %v6806
      %v6808 = vcombine.low %v6369, %v6370
      %v6810 = vunpack.c.l.s4 1983009808
      %v6811 = vunpack.c.0.s8 %v6810
      %v6812 = vlaneseq
      %v6813 = vshrl.u32 %v6812, 7
      %v6814 = vsub.s32 %v6811, %v6813
      %v6815 = vrot.slane %v6808, %v6814
      %v6817 = vunpack.c.l.s4 1983009808
      %v6818 = vunpack.c.0.s8 %v6817
      %v6819 = vlaneseq
      %v6820 = vshrl.u32 %v6819, 7
      %v6821 = vsub.s32 %v6818, %v6820
      %v6822 = vrot.slane %v6371, %v6821
      %v6823 = vcombine.low %v6815, %v6822
      %v6824 = vcombine.low %v6372, %v6373
      %v6826 = vunpack.c.l.s4 1983009808
      %v6827 = vunpack.c.0.s8 %v6826
      %v6828 = vlaneseq
      %v6829 = vshrl.u32 %v6828, 7
      %v6830 = vsub.s32 %v6827, %v6829
      %v6831 = vrot.slane %v6824, %v6830
      %v6833 = vunpack.c.l.s4 1983009808
      %v6834 = vunpack.c.0.s8 %v6833
      %v6835 = vlaneseq
      %v6836 = vshrl.u32 %v6835, 7
      %v6837 = vsub.s32 %v6834, %v6836
      %v6838 = vrot.slane %v6374, %v6837
      %v6839 = vcombine.low %v6831, %v6838
      %v6840 = vcombine.low %v6375, %v6376
      %v6842 = vunpack.c.l.s4 1983009808
      %v6843 = vunpack.c.0.s8 %v6842
      %v6844 = vlaneseq
      %v6845 = vshrl.u32 %v6844, 7
      %v6846 = vsub.s32 %v6843, %v6845
      %v6847 = vrot.slane %v6840, %v6846
      %v6849 = vunpack.c.l.s4 1983009808
      %v6850 = vunpack.c.0.s8 %v6849
      %v6851 = vlaneseq
      %v6852 = vshrl.u32 %v6851, 7
      %v6853 = vsub.s32 %v6850, %v6852
      %v6854 = vrot.slane %v6377, %v6853
      %v6855 = vcombine.low %v6847, %v6854
      %v6856 = vcombine.low %v6378, %v6379
      %v6858 = vunpack.c.l.s4 1983009808
      %v6859 = vunpack.c.0.s8 %v6858
      %v6860 = vlaneseq
      %v6861 = vshrl.u32 %v6860, 7
      %v6862 = vsub.s32 %v6859, %v6861
      %v6863 = vrot.slane %v6856, %v6862
      %v6865 = vunpack.c.l.s4 1983009808
      %v6866 = vunpack.c.0.s8 %v6865
      %v6867 = vlaneseq
      %v6868 = vshrl.u32 %v6867, 7
      %v6869 = vsub.s32 %v6866, %v6868
      %v6870 = vrot.slane %v6380, %v6869
      %v6871 = vcombine.low %v6863, %v6870
      %v6872 = vcombine.low %v6381, %v6382
      %v6874 = vunpack.c.l.s4 1983009808
      %v6875 = vunpack.c.0.s8 %v6874
      %v6876 = vlaneseq
      %v6877 = vshrl.u32 %v6876, 7
      %v6878 = vsub.s32 %v6875, %v6877
      %v6879 = vrot.slane %v6872, %v6878
      %v6881 = vunpack.c.l.s4 1983009808
      %v6882 = vunpack.c.0.s8 %v6881
      %v6883 = vlaneseq
      %v6884 = vshrl.u32 %v6883, 7
      %v6885 = vsub.s32 %v6882, %v6884
      %v6886 = vrot.slane %v6383, %v6885
      %v6887 = vcombine.low %v6879, %v6886
      %v6888 = vcombine.low %v6384, %v6385
      %v6890 = vunpack.c.l.s4 1983009808
      %v6891 = vunpack.c.0.s8 %v6890
      %v6892 = vlaneseq
      %v6893 = vshrl.u32 %v6892, 7
      %v6894 = vsub.s32 %v6891, %v6893
      %v6895 = vrot.slane %v6888, %v6894
      %v6897 = vunpack.c.l.s4 1983009808
      %v6898 = vunpack.c.0.s8 %v6897
      %v6899 = vlaneseq
      %v6900 = vshrl.u32 %v6899, 7
      %v6901 = vsub.s32 %v6898, %v6900
      %v6902 = vrot.slane %v6386, %v6901
      %v6903 = vcombine.low %v6895, %v6902
      %v6904 = vcombine.low %v6387, %v6388
      %v6906 = vunpack.c.l.s4 1983009808
      %v6907 = vunpack.c.0.s8 %v6906
      %v6908 = vlaneseq
      %v6909 = vshrl.u32 %v6908, 7
      %v6910 = vsub.s32 %v6907, %v6909
      %v6911 = vrot.slane %v6904, %v6910
      %v6913 = vunpack.c.l.s4 1983009808
      %v6914 = vunpack.c.0.s8 %v6913
      %v6915 = vlaneseq
      %v6916 = vshrl.u32 %v6915, 7
      %v6917 = vsub.s32 %v6914, %v6916
      %v6918 = vrot.slane %v6389, %v6917
      %v6919 = vcombine.low %v6911, %v6918
      %v6920 = vcombine.low %v6390, %v6391
      %v6922 = vunpack.c.l.s4 1983009808
      %v6923 = vunpack.c.0.s8 %v6922
      %v6924 = vlaneseq
      %v6925 = vshrl.u32 %v6924, 7
      %v6926 = vsub.s32 %v6923, %v6925
      %v6927 = vrot.slane %v6920, %v6926
      %v6929 = vunpack.c.l.s4 1983009808
      %v6930 = vunpack.c.0.s8 %v6929
      %v6931 = vlaneseq
      %v6932 = vshrl.u32 %v6931, 7
      %v6933 = vsub.s32 %v6930, %v6932
      %v6934 = vrot.slane %v6392, %v6933
      %v6935 = vcombine.low %v6927, %v6934
      %v6936 = vcombine.low %v6393, %v6394
      %v6938 = vunpack.c.l.s4 1983009808
      %v6939 = vunpack.c.0.s8 %v6938
      %v6940 = vlaneseq
      %v6941 = vshrl.u32 %v6940, 7
      %v6942 = vsub.s32 %v6939, %v6941
      %v6943 = vrot.slane %v6936, %v6942
      %v6945 = vunpack.c.l.s4 1983009808
      %v6946 = vunpack.c.0.s8 %v6945
      %v6947 = vlaneseq
      %v6948 = vshrl.u32 %v6947, 7
      %v6949 = vsub.s32 %v6946, %v6948
      %v6950 = vrot.slane %v6395, %v6949
      %v6951 = vcombine.low %v6943, %v6950
      %v6952 = vcombine.low %v6396, %v6397
      %v6954 = vunpack.c.l.s4 1983009808
      %v6955 = vunpack.c.0.s8 %v6954
      %v6956 = vlaneseq
      %v6957 = vshrl.u32 %v6956, 7
      %v6958 = vsub.s32 %v6955, %v6957
      %v6959 = vrot.slane %v6952, %v6958
      %v6961 = vunpack.c.l.s4 1983009808
      %v6962 = vunpack.c.0.s8 %v6961
      %v6963 = vlaneseq
      %v6964 = vshrl.u32 %v6963, 7
      %v6965 = vsub.s32 %v6962, %v6964
      %v6966 = vrot.slane %v6398, %v6965
      %v6967 = vcombine.low %v6959, %v6966
      %v6968 = vcombine.low %v6399, %v6400
      %v6970 = vunpack.c.l.s4 1983009808
      %v6971 = vunpack.c.0.s8 %v6970
      %v6972 = vlaneseq
      %v6973 = vshrl.u32 %v6972, 7
      %v6974 = vsub.s32 %v6971, %v6973
      %v6975 = vrot.slane %v6968, %v6974
      %v6977 = vunpack.c.l.s4 1983009808
      %v6978 = vunpack.c.0.s8 %v6977
      %v6979 = vlaneseq
      %v6980 = vshrl.u32 %v6979, 7
      %v6981 = vsub.s32 %v6978, %v6980
      %v6982 = vrot.slane %v6401, %v6981
      %v6983 = vcombine.low %v6975, %v6982
      %v6984 = vcombine.low %v6402, %v6403
      %v6986 = vunpack.c.l.s4 1983009808
      %v6987 = vunpack.c.0.s8 %v6986
      %v6988 = vlaneseq
      %v6989 = vshrl.u32 %v6988, 7
      %v6990 = vsub.s32 %v6987, %v6989
      %v6991 = vrot.slane %v6984, %v6990
      %v6993 = vunpack.c.l.s4 1983009808
      %v6994 = vunpack.c.0.s8 %v6993
      %v6995 = vlaneseq
      %v6996 = vshrl.u32 %v6995, 7
      %v6997 = vsub.s32 %v6994, %v6996
      %v6998 = vrot.slane %v6404, %v6997
      %v6999 = vcombine.low %v6991, %v6998
      %v7000 = vcombine.low %v6405, %v6406
      %v7002 = vunpack.c.l.s4 1983009808
      %v7003 = vunpack.c.0.s8 %v7002
      %v7004 = vlaneseq
      %v7005 = vshrl.u32 %v7004, 7
      %v7006 = vsub.s32 %v7003, %v7005
      %v7007 = vrot.slane %v7000, %v7006
      %v7009 = vunpack.c.l.s4 1983009808
      %v7010 = vunpack.c.0.s8 %v7009
      %v7011 = vlaneseq
      %v7012 = vshrl.u32 %v7011, 7
      %v7013 = vsub.s32 %v7010, %v7012
      %v7014 = vrot.slane %v6407, %v7013
      %v7015 = vcombine.low %v7007, %v7014
      %vm7048 = vcmask 259072
      %7049 = vst.msk [vmem:[%s262] sm:$0x3f] %vm7048, %v6519
      %7050 = vst.msk [vmem:[%s262 + $0x8] sm:$0x3f] %vm7048, %v6535
      %7051 = vst.msk [vmem:[%s262 + $0x10] sm:$0x3f] %vm7048, %v6551
      %7052 = vst.msk [vmem:[%s262 + $0x18] sm:$0x3f] %vm7048, %v6567
      %7053 = vst.msk [vmem:[%s262 + $0x20] sm:$0x3f] %vm7048, %v6583
      %7054 = vst.msk [vmem:[%s262 + $0x28] sm:$0x3f] %vm7048, %v6599
      %7055 = vst.msk [vmem:[%s262 + $0x30] sm:$0x3f] %vm7048, %v6615
      %7056 = vst.msk [vmem:[%s262 + $0x38] sm:$0x3f] %vm7048, %v6631
      %7057 = vst.msk [vmem:[%s262 + $0x40] sm:$0x3f] %vm7048, %v6647
      %7058 = vst.msk [vmem:[%s262 + $0x48] sm:$0x3f] %vm7048, %v6663
      %7059 = vst.msk [vmem:[%s262 + $0x50] sm:$0x3f] %vm7048, %v6679
      %7060 = vst.msk [vmem:[%s262 + $0x58] sm:$0x3f] %vm7048, %v6695
      %7061 = vst.msk [vmem:[%s262 + $0x60] sm:$0x3f] %vm7048, %v6711
      %7062 = vst.msk [vmem:[%s262 + $0x68] sm:$0x3f] %vm7048, %v6727
      %7063 = vst.msk [vmem:[%s262 + $0x70] sm:$0x3f] %vm7048, %v6743
      %7064 = vst.msk [vmem:[%s262 + $0x78] sm:$0x3f] %vm7048, %v6759
      %7065 = vst.msk [vmem:[%s262 + $0x80] sm:$0x3f] %vm7048, %v6775
      %7066 = vst.msk [vmem:[%s262 + $0x88] sm:$0x3f] %vm7048, %v6791
      %7067 = vst.msk [vmem:[%s262 + $0x90] sm:$0x3f] %vm7048, %v6807
      %7068 = vst.msk [vmem:[%s262 + $0x98] sm:$0x3f] %vm7048, %v6823
      %7069 = vst.msk [vmem:[%s262 + $0xa0] sm:$0x3f] %vm7048, %v6839
      %7070 = vst.msk [vmem:[%s262 + $0xa8] sm:$0x3f] %vm7048, %v6855
      %7071 = vst.msk [vmem:[%s262 + $0xb0] sm:$0x3f] %vm7048, %v6871
      %7072 = vst.msk [vmem:[%s262 + $0xb8] sm:$0x3f] %vm7048, %v6887
      %7073 = vst.msk [vmem:[%s262 + $0xc0] sm:$0x3f] %vm7048, %v6903
      %7074 = vst.msk [vmem:[%s262 + $0xc8] sm:$0x3f] %vm7048, %v6919
      %7075 = vst.msk [vmem:[%s262 + $0xd0] sm:$0x3f] %vm7048, %v6935
      %7076 = vst.msk [vmem:[%s262 + $0xd8] sm:$0x3f] %vm7048, %v6951
      %7077 = vst.msk [vmem:[%s262 + $0xe0] sm:$0x3f] %vm7048, %v6967
      %7078 = vst.msk [vmem:[%s262 + $0xe8] sm:$0x3f] %vm7048, %v6983
      %7079 = vst.msk [vmem:[%s262 + $0xf0] sm:$0x3f] %vm7048, %v6999
      %7080 = vst.msk [vmem:[%s262 + $0xf8] sm:$0x3f] %vm7048, %v7015
      %s7081 = smul.u32 16, %s21
      %p7082 = scmp.lt.s32.totalorder %s19, 1
      %s7083 = scalar_select %p7082, %s19, 1
      %p7084 = scmp.lt.s32.totalorder %s20, 0
      %s7085 = scalar_select %p7084, %s20, 0
      %p7086 = scmp.lt.s32.totalorder %s7081, 15
      %s7087 = scalar_select %p7086, %s7081, 15
      %s7088 = smul.addr %s7087, 2
      %s7089 = smul.addr %s7085, 32
      %s7090 = sadd.s32 %s7088, %s7089
      %s7091 = smul.addr %s7083, 32
      %s7092 = sadd.s32 %s7090, %s7091
      %s7093 = smul.addr %s7092, 8
      %s7094 = scalar_lea.vmem %s3, %s7093
      // Predicated region
      $region33: #{_lambda_.1} parent=31 // pred_check
        %p7095 = pneg %p135
      $region34: #{_lambda_.1} parent=31 // pred_check_branch
        %7097 = sbr.rel (%p7095) target = $region36
      $region35: #{_lambda_.1} parent=31 // pred_region
        %s7098 = smul.u32 16, %s21
      $region36: #{_lambda_.1} parent=31 // pred_fallthru
        _
    $region32: #{_lambda_.1} parent=5 // pred_fallthru
      _
    %p7099 = scmp.le.s32.totalorder 2, %s9
    // Predicated region
    $region37: #{_lambda_.1} parent=5 // pred_check
      %p7100 = pneg %p7099
    $region38: #{_lambda_.1} parent=5 // pred_check_branch
      %7102 = sbr.rel (%p7100) target = $region40
    $region39: #{_lambda_.1} parent=5 // pred_region
      %s7103 = ssub.s32 %s9, 2
      // Predicated region
      $region41: #{_lambda_.1} parent=39 // pred_check
        %p7104 = pneg %p141
      $region42: #{_lambda_.1} parent=39 // pred_check_branch
        %7106 = sbr.rel (%p7104) target = $region44
      $region43: #{_lambda_.1} parent=39 // pred_region
        %s7107 = smul.u32 16, %s24
        %p7108 = scmp.lt.s32.totalorder %s22, 1
        %s7109 = scalar_select %p7108, %s22, 1
        %p7110 = scmp.lt.s32.totalorder %s23, 0
        %s7111 = scalar_select %p7110, %s23, 0
        %p7112 = scmp.lt.s32.totalorder %s7107, 15
        %s7113 = scalar_select %p7112, %s7107, 15
        %s7114 = smul.addr %s7113, 2
        %s7115 = smul.addr %s7111, 32
        %s7116 = sadd.s32 %s7114, %s7115
        %s7117 = smul.addr %s7109, 32
        %s7118 = sadd.s32 %s7116, %s7117
        %s7119 = smul.addr %s7118, 8
        %s7120 = scalar_lea.vmem %s3, %s7119
      $region44: #{_lambda_.1} parent=39 // pred_fallthru
        _
    $region40: #{_lambda_.1} parent=5 // pred_fallthru
      _
  $region6: #{_lambda_.1} parent=0 // loop_footer
    %s13 = sadd.s32 1, %s9
  $region7: #{_lambda_.1} parent=0 // loop_footer_branch
    %8 = sbr.rel target = $region3
  $region8: #{_lambda_.1} parent=0 // loop_exit
    _

</llo_original>
